<compile_context>
chip_gen: v6e
topology: v6e:2x2x1
jax: 0.10.0
libtpu: 0.0.40
codegen_flags: <defaults>
</compile_context>

<pallas_src>
import jax
import jax.numpy as jnp
from jax import lax
from jax.experimental import pallas as pl
from jax.experimental.pallas import tpu as pltpu

# Small demo shapes consistent with the module structure (real CLIP is
# vocab=49408, D=768, S=77, H=12, 12 layers — scaled down here).
B = 4            # batch
S = 64           # sequence length (n_tokens)
D = 128          # n_embed
H = 4            # n_head
DH = D // H      # head dim
VOCAB = 1000     # n_vocab
N_LAYERS = 2     # number of CLIPLayers
EPS = 1e-5       # nn.LayerNorm default eps
NEG_INF = jnp.float32(-1e30)

N_CHUNKS = 2                     # leading "parallel" grid axis (v7x: 2 TCs)
assert B % N_CHUNKS == 0
BC = B // N_CHUNKS               # batches per chunk
S_PAD = ((S + 7) // 8) * 8       # sublane-aligned sequence length
MC = BC * S_PAD                  # rows per chunk slab (demo: 128 -> fills MXU)


def _layer_norm(x, g, b):
    mu = jnp.mean(x, axis=-1, keepdims=True)
    var = jnp.mean((x - mu) ** 2, axis=-1, keepdims=True)
    return (x - mu) * lax.rsqrt(var + EPS) * g + b


def _bf16_dot(a_f32, w_ref, b_ref):
    """x @ W + b with bf16 MXU operands and f32 accumulation."""
    return (jnp.dot(a_f32.astype(jnp.bfloat16), w_ref[...],
                    preferred_element_type=jnp.float32) + b_ref[...])


def clip_stack_kernel(mask_ref, x_ref,
                      ln1g_ref, ln1b_ref, wqkv_ref, bqkv_ref, wo_ref, bo_ref,
                      ln2g_ref, ln2b_ref, w1_ref, b1_ref, w2_ref, b2_ref,
                      lng_ref, lnb_ref,
                      o_ref, state_ref):
    layer = pl.program_id(1)

    # Load this chunk's embedded tokens into the resident VMEM slab once.
    @pl.when(layer == 0)
    def _():
        state_ref[...] = x_ref[...]

    x = state_ref[...]                     # (MC, D) f32, resident across layers
    residue = x

    # --- LayerNorm 1 + fused QKV projection (scale folded into wq/bq) ---
    h = _layer_norm(x, ln1g_ref[...], ln1b_ref[...])
    qkv = _bf16_dot(h, wqkv_ref, bqkv_ref)            # (MC, 3D) f32

    bias = mask_ref[...]                               # (S_PAD, S_PAD) additive causal bias
    wo = wo_ref[...]                                   # (D, D) bf16, loaded once
    contract_last = (((1,), (1,)), ((), ()))           # q @ k.T without a transpose

    # Per-batch (S, S) scores (no wasted cross-batch work); per-head context
    # folded straight into the output projection via Wo row-slices so no
    # lane-offset masked stores and no attn assembly scratch are needed.
    # TODO(synk): at real CLIP (H=12, larger B) use lax.fori_loop here.
    attn_blocks = []
    for b in range(BC):
        r0 = b * S_PAD
        acc_b = jnp.zeros((S_PAD, D), jnp.float32)
        for hh in range(H):
            c = hh * DH
            qh = qkv[r0:r0 + S_PAD, c:c + DH].astype(jnp.bfloat16)
            kh = qkv[r0:r0 + S_PAD, D + c:D + c + DH].astype(jnp.bfloat16)
            vh = qkv[r0:r0 + S_PAD, 2 * D + c:2 * D + c + DH].astype(jnp.bfloat16)
            s = lax.dot_general(qh, kh, contract_last,
                                preferred_element_type=jnp.float32)  # (S, S) f32
            s = s + bias                               # mask applied to f32 scores
            s = s - jnp.max(s, axis=-1, keepdims=True)
            p = jnp.exp(s)
            p = p / jnp.sum(p, axis=-1, keepdims=True)  # exact division
            ctx = jnp.dot(p.astype(jnp.bfloat16), vh,
                          preferred_element_type=jnp.float32)        # (S, DH)
            acc_b = acc_b + jnp.dot(ctx.astype(jnp.bfloat16),
                                    wo[c:c + DH, :],
                                    preferred_element_type=jnp.float32)
        attn_blocks.append(acc_b)
    attn = attn_blocks[0] if BC == 1 else jnp.concatenate(attn_blocks, axis=0)
    attn = attn + bo_ref[...]

    x = attn + residue
    residue2 = x

    # --- LayerNorm 2 + QuickGELU MLP ---
    h2 = _layer_norm(x, ln2g_ref[...], ln2b_ref[...])
    h2 = _bf16_dot(h2, w1_ref, b1_ref)
    h2 = h2 * jax.nn.sigmoid(1.702 * h2)               # x * sigmoid(1.702 * x)
    h2 = _bf16_dot(h2, w2_ref, b2_ref)

    new_state = h2 + residue2
    state_ref[...] = new_state

    # Final LayerNorm, applied once after the last layer, written lane-dense.
    @pl.when(layer == pl.num_programs(1) - 1)
    def _():
        o_ref[...] = _layer_norm(new_state, lng_ref[...], lnb_ref[...])


def _stacked_spec(arr):
    """Stream layer l's slab of a (N_LAYERS, ...) stacked parameter array."""
    nrest = arr.ndim - 1
    block = (None,) + arr.shape[1:]                     # squeeze the layer axis
    return pl.BlockSpec(block, lambda c, l, _n=nrest: (l,) + (0,) * _n)


def _resident_spec(arr):
    return pl.BlockSpec(arr.shape, lambda c, l, _n=arr.ndim: (0,) * _n)


def clip_forward(tokens, token_emb, pos_emb, stacked, lng, lnb):
    tokens = tokens.astype(jnp.int32)
    # CLIPEmbedding: token lookup + positional embedding (JAX glue; the gather
    # is not the hot path).
    x = jnp.take(token_emb, tokens, axis=0) + pos_emb[None, :, :]   # (B, S, D)
    if S_PAD != S:
        # Pad the sequence to a sublane multiple; padded key columns are
        # masked by causality for valid rows, padded rows are dropped below.
        x = jnp.pad(x, ((0, 0), (0, S_PAD - S), (0, 0)))
    x = x.reshape(N_CHUNKS * MC, D)                      # fold batch into M

    # Precomputed per-batch additive causal bias (layer-invariant, resident).
    row = lax.broadcasted_iota(jnp.int32, (S_PAD, S_PAD), 0)
    col = lax.broadcasted_iota(jnp.int32, (S_PAD, S_PAD), 1)
    mask = jnp.where(col <= row, jnp.float32(0.0), NEG_INF)

    in_specs = [_resident_spec(mask),
                pl.BlockSpec((MC, D), lambda c, l: (c, 0))]
    in_specs += [_stacked_spec(p) for p in stacked]
    in_specs += [_resident_spec(lng), _resident_spec(lnb)]

    out = pl.pallas_call(
        clip_stack_kernel,
        out_shape=jax.ShapeDtypeStruct((N_CHUNKS * MC, D), jnp.float32),
        grid=(N_CHUNKS, N_LAYERS),
        in_specs=in_specs,
        out_specs=pl.BlockSpec((MC, D), lambda c, l: (c, 0)),
        scratch_shapes=[pltpu.VMEM((MC, D), jnp.float32)],   # resident activations
        compiler_params=pltpu.CompilerParams(
            dimension_semantics=("parallel", "arbitrary"),   # chunks || layers seq
            vmem_limit_bytes=48 * 1024 * 1024),
    )(mask, x, *stacked, lng, lnb)

    out = out.reshape(B, S_PAD, D)
    return out[:, :S, :]


def init_params(key):
    """Deterministic synthetic parameters matching the module's shapes.

    Per-layer parameters are stacked along a leading layer axis so the fused
    kernel can stream them; matmul weights are stored bf16; the attention
    scale is folded (in f32) into the q slice of the fused QKV projection.
    """
    keys = jax.random.split(key, 1 + 4 * N_LAYERS)
    it = iter(keys)
    scale = 0.02
    attn_scale = 1.0 / (DH ** 0.5)

    token_emb = scale * jax.random.normal(next(it), (VOCAB, D), jnp.float32)
    pos_emb = jnp.zeros((S, D), jnp.float32)       # torch.zeros(n_tokens, n_embed)

    names = ("ln1g", "ln1b", "wqkv", "bqkv", "wo", "bo",
             "ln2g", "ln2b", "w1", "b1", "w2", "b2")
    cols = {name: [] for name in names}
    for _ in range(N_LAYERS):
        cols["ln1g"].append(jnp.ones((1, D), jnp.float32))
        cols["ln1b"].append(jnp.zeros((1, D), jnp.float32))
        w = scale * jax.random.normal(next(it), (D, 3 * D), jnp.float32)
        b = jnp.zeros((1, 3 * D), jnp.float32)
        w = w.at[:, :D].multiply(attn_scale)       # fold 1/sqrt(DH) into wq
        b = b.at[:, :D].multiply(attn_scale)       # ... and into bq
        cols["wqkv"].append(w.astype(jnp.bfloat16))
        cols["bqkv"].append(b)
        cols["wo"].append((scale * jax.random.normal(next(it), (D, D),
                                                     jnp.float32)).astype(jnp.bfloat16))
        cols["bo"].append(jnp.zeros((1, D), jnp.float32))
        cols["ln2g"].append(jnp.ones((1, D), jnp.float32))
        cols["ln2b"].append(jnp.zeros((1, D), jnp.float32))
        cols["w1"].append((scale * jax.random.normal(next(it), (D, 4 * D),
                                                     jnp.float32)).astype(jnp.bfloat16))
        cols["b1"].append(jnp.zeros((1, 4 * D), jnp.float32))
        cols["w2"].append((scale * jax.random.normal(next(it), (4 * D, D),
                                                     jnp.float32)).astype(jnp.bfloat16))
        cols["b2"].append(jnp.zeros((1, D), jnp.float32))

    stacked = tuple(jnp.stack(cols[name]) for name in names)
    lng = jnp.ones((1, D), jnp.float32)
    lnb = jnp.zeros((1, D), jnp.float32)
    return token_emb, pos_emb, stacked, lng, lnb


if __name__ == "__main__":
    key = jax.random.PRNGKey(0)
    k_tok, k_par = jax.random.split(key)
    tokens = jax.random.randint(k_tok, (B, S), 0, VOCAB, dtype=jnp.int32)
    token_emb, pos_emb, stacked, lng, lnb = init_params(k_par)

    out = clip_forward(tokens, token_emb, pos_emb, stacked, lng, lnb)
    out = jax.block_until_ready(out)
    assert out.shape == (B, S, D) and out.dtype == jnp.float32
    assert bool(jnp.all(jnp.isfinite(out)))
    print("KERNEL_OK")
</pallas_src>

<mosaic_0001>
module attributes {stable_mosaic.version = 11 : i64} {
  func.func @clip_stack_kernel(%arg0: i32, %arg1: i32, %arg2: memref<64x64xf32, #tpu.memory_space<vmem>>, %arg3: memref<128x128xf32, #tpu.memory_space<vmem>>, %arg4: memref<1x1x128xf32, #tpu.memory_space<vmem>>, %arg5: memref<1x1x128xf32, #tpu.memory_space<vmem>>, %arg6: memref<1x128x384xbf16, #tpu.memory_space<vmem>>, %arg7: memref<1x1x384xf32, #tpu.memory_space<vmem>>, %arg8: memref<1x128x128xbf16, #tpu.memory_space<vmem>>, %arg9: memref<1x1x128xf32, #tpu.memory_space<vmem>>, %arg10: memref<1x1x128xf32, #tpu.memory_space<vmem>>, %arg11: memref<1x1x128xf32, #tpu.memory_space<vmem>>, %arg12: memref<1x128x512xbf16, #tpu.memory_space<vmem>>, %arg13: memref<1x1x512xf32, #tpu.memory_space<vmem>>, %arg14: memref<1x512x128xbf16, #tpu.memory_space<vmem>>, %arg15: memref<1x1x128xf32, #tpu.memory_space<vmem>>, %arg16: memref<1x128xf32, #tpu.memory_space<vmem>>, %arg17: memref<1x128xf32, #tpu.memory_space<vmem>>, %arg18: memref<128x128xf32, #tpu.memory_space<vmem>>, %arg19: memref<128x128xf32, #tpu.memory_space<vmem>>) attributes {dimension_semantics = [#tpu.dimension_semantics<parallel>, #tpu.dimension_semantics<arbitrary>], iteration_bounds = array<i64: 2, 2>, scalar_prefetch = 0 : i64, scratch_operands = 1 : i64, tpu.core_type = #tpu.core_type<tc>, window_params = [{pipeline_mode = #tpu.pipeline_mode<synchronous>, transform_indices = @transform_0, window_bounds = array<i64: 64, 64>}, {transform_indices = @transform_1, window_bounds = array<i64: 128, 128>}, {transform_indices = @transform_2, window_bounds = array<i64: 1, 1, 128>}, {transform_indices = @transform_3, window_bounds = array<i64: 1, 1, 128>}, {transform_indices = @transform_4, window_bounds = array<i64: 1, 128, 384>}, {transform_indices = @transform_5, window_bounds = array<i64: 1, 1, 384>}, {transform_indices = @transform_6, window_bounds = array<i64: 1, 128, 128>}, {transform_indices = @transform_7, window_bounds = array<i64: 1, 1, 128>}, {transform_indices = @transform_8, window_bounds = array<i64: 1, 1, 128>}, {transform_indices = @transform_9, window_bounds = array<i64: 1, 1, 128>}, {transform_indices = @transform_10, window_bounds = array<i64: 1, 128, 512>}, {transform_indices = @transform_11, window_bounds = array<i64: 1, 1, 512>}, {transform_indices = @transform_12, window_bounds = array<i64: 1, 512, 128>}, {transform_indices = @transform_13, window_bounds = array<i64: 1, 1, 128>}, {pipeline_mode = #tpu.pipeline_mode<synchronous>, transform_indices = @transform_14, window_bounds = array<i64: 1, 128>}, {pipeline_mode = #tpu.pipeline_mode<synchronous>, transform_indices = @transform_15, window_bounds = array<i64: 1, 128>}, {transform_indices = @transform_16, window_bounds = array<i64: 128, 128>}]} {
    %c0_i32 = arith.constant 0 : i32
    %0 = arith.cmpi eq, %arg1, %c0_i32 : i32
    %1 = arith.extui %0 : i1 to i32
    %c0_i32_0 = arith.constant 0 : i32
    %2 = arith.cmpi ne, %1, %c0_i32_0 : i32
    scf.if %2 {
      %c0_99 = arith.constant 0 : index
      %c0_100 = arith.constant 0 : index
      %288 = vector.load %arg3[%c0_99, %c0_100] : memref<128x128xf32, #tpu.memory_space<vmem>>, vector<128x128xf32>
      %c0_101 = arith.constant 0 : index
      %c0_102 = arith.constant 0 : index
      %289 = vector.load %arg19[%c0_101, %c0_102] : memref<128x128xf32, #tpu.memory_space<vmem>>, vector<128x128xf32>
      tpu.vector_store %arg19[%c0_101, %c0_102], %288 {strides = array<i32>} : memref<128x128xf32, #tpu.memory_space<vmem>>, vector<128x128xf32>,
    } else {
    }
    %c0 = arith.constant 0 : index
    %c0_1 = arith.constant 0 : index
    %3 = vector.load %arg19[%c0, %c0_1] : memref<128x128xf32, #tpu.memory_space<vmem>>, vector<128x128xf32>
    %c0_2 = arith.constant 0 : index
    %c0_3 = arith.constant 0 : index
    %c0_4 = arith.constant 0 : index
    %4 = vector.load %arg4[%c0_2, %c0_3, %c0_4] : memref<1x1x128xf32, #tpu.memory_space<vmem>>, vector<1x1x128xf32>
    %5 = vector.shape_cast %4 : vector<1x1x128xf32> to vector<1x128xf32>
    %c0_5 = arith.constant 0 : index
    %c0_6 = arith.constant 0 : index
    %c0_7 = arith.constant 0 : index
    %6 = vector.load %arg5[%c0_5, %c0_6, %c0_7] : memref<1x1x128xf32, #tpu.memory_space<vmem>>, vector<1x1x128xf32>
    %7 = vector.shape_cast %6 : vector<1x1x128xf32> to vector<1x128xf32>
    %cst = arith.constant dense<0.000000e+00> : vector<128xf32>
    %8 = vector.multi_reduction <add>, %3, %cst [1] : vector<128x128xf32> to vector<128xf32>
    %9 = vector.shape_cast %8 : vector<128xf32> to vector<128x1xf32>
    %cst_8 = arith.constant 1.280000e+02 : f32
    %10 = vector.broadcast %cst_8 : f32 to vector<128x1xf32>
    %11 = arith.divf %9, %10 : vector<128x1xf32>
    %12 = vector.broadcast %11 : vector<128x1xf32> to vector<128x128xf32>
    %13 = arith.subf %3, %12 : vector<128x128xf32>
    %14 = arith.mulf %13, %13 : vector<128x128xf32>
    %cst_9 = arith.constant dense<0.000000e+00> : vector<128xf32>
    %15 = vector.multi_reduction <add>, %14, %cst_9 [1] : vector<128x128xf32> to vector<128xf32>
    %16 = vector.shape_cast %15 : vector<128xf32> to vector<128x1xf32>
    %cst_10 = arith.constant 1.280000e+02 : f32
    %17 = vector.broadcast %cst_10 : f32 to vector<128x1xf32>
    %18 = arith.divf %16, %17 : vector<128x1xf32>
    %19 = vector.broadcast %11 : vector<128x1xf32> to vector<128x128xf32>
    %20 = arith.subf %3, %19 : vector<128x128xf32>
    %cst_11 = arith.constant 9.99999974E-6 : f32
    %21 = vector.broadcast %cst_11 : f32 to vector<128x1xf32>
    %22 = arith.addf %18, %21 : vector<128x1xf32>
    %23 = math.rsqrt %22 : vector<128x1xf32>
    %24 = vector.broadcast %23 : vector<128x1xf32> to vector<128x128xf32>
    %25 = arith.mulf %20, %24 : vector<128x128xf32>
    %26 = vector.broadcast %5 : vector<1x128xf32> to vector<128x128xf32>
    %27 = arith.mulf %25, %26 : vector<128x128xf32>
    %28 = vector.broadcast %7 : vector<1x128xf32> to vector<128x128xf32>
    %29 = arith.addf %27, %28 : vector<128x128xf32>
    %30 = arith.truncf %29 : vector<128x128xf32> to vector<128x128xbf16>
    %c0_12 = arith.constant 0 : index
    %c0_13 = arith.constant 0 : index
    %c0_14 = arith.constant 0 : index
    %31 = vector.load %arg6[%c0_12, %c0_13, %c0_14] : memref<1x128x384xbf16, #tpu.memory_space<vmem>>, vector<1x128x384xbf16>
    %32 = vector.shape_cast %31 : vector<1x128x384xbf16> to vector<128x384xbf16>
    %cst_15 = arith.constant dense<0.000000e+00> : vector<128x384xf32>
    %33 = tpu.matmul %30, %32, %cst_15 {dimension_numbers = #tpu.dot_dimension_numbers<[1], [0], [0], [1], [0, 0, 1, 1], [], []>} : vector<128x128xbf16>, vector<128x384xbf16>, vector<128x384xf32> -> vector<128x384xf32>
    %c0_16 = arith.constant 0 : index
    %c0_17 = arith.constant 0 : index
    %c0_18 = arith.constant 0 : index
    %34 = vector.load %arg7[%c0_16, %c0_17, %c0_18] : memref<1x1x384xf32, #tpu.memory_space<vmem>>, vector<1x1x384xf32>
    %35 = vector.shape_cast %34 : vector<1x1x384xf32> to vector<1x384xf32>
    %36 = vector.broadcast %35 : vector<1x384xf32> to vector<128x384xf32>
    %37 = arith.addf %33, %36 : vector<128x384xf32>
    %c0_19 = arith.constant 0 : index
    %c0_20 = arith.constant 0 : index
    %38 = vector.load %arg2[%c0_19, %c0_20] : memref<64x64xf32, #tpu.memory_space<vmem>>, vector<64x64xf32>
    %c0_21 = arith.constant 0 : index
    %c0_22 = arith.constant 0 : index
    %c0_23 = arith.constant 0 : index
    %39 = vector.load %arg8[%c0_21, %c0_22, %c0_23] : memref<1x128x128xbf16, #tpu.memory_space<vmem>>, vector<1x128x128xbf16>
    %40 = vector.shape_cast %39 : vector<1x128x128xbf16> to vector<128x128xbf16>
    %cst_24 = arith.constant 0.000000e+00 : f32
    %41 = vector.broadcast %cst_24 : f32 to vector<64x128xf32>
    %42 = vector.extract_strided_slice %37 {offsets = [0, 0], sizes = [64, 32], strides = [1, 1]} : vector<128x384xf32> to vector<64x32xf32>
    %43 = arith.truncf %42 : vector<64x32xf32> to vector<64x32xbf16>
    %44 = vector.extract_strided_slice %37 {offsets = [0, 128], sizes = [64, 32], strides = [1, 1]} : vector<128x384xf32> to vector<64x32xf32>
    %45 = arith.truncf %44 : vector<64x32xf32> to vector<64x32xbf16>
    %46 = vector.extract_strided_slice %37 {offsets = [0, 256], sizes = [64, 32], strides = [1, 1]} : vector<128x384xf32> to vector<64x32xf32>
    %47 = arith.truncf %46 : vector<64x32xf32> to vector<64x32xbf16>
    %cst_25 = arith.constant dense<0.000000e+00> : vector<64x64xf32>
    %48 = tpu.matmul %43, %45, %cst_25 {dimension_numbers = #tpu.dot_dimension_numbers<[1], [1], [0], [0], [0, 0, 1, 0], [], []>} : vector<64x32xbf16>, vector<64x32xbf16>, vector<64x64xf32> -> vector<64x64xf32>
    %49 = arith.addf %48, %38 : vector<64x64xf32>
    %cst_26 = arith.constant dense<0xFF800000> : vector<64xf32>
    %50 = vector.multi_reduction <maximumf>, %49, %cst_26 [1] : vector<64x64xf32> to vector<64xf32>
    %51 = vector.shape_cast %50 : vector<64xf32> to vector<64x1xf32>
    %52 = vector.broadcast %51 : vector<64x1xf32> to vector<64x64xf32>
    %53 = arith.subf %49, %52 : vector<64x64xf32>
    %54 = math.exp %53 : vector<64x64xf32>
    %cst_27 = arith.constant dense<0.000000e+00> : vector<64xf32>
    %55 = vector.multi_reduction <add>, %54, %cst_27 [1] : vector<64x64xf32> to vector<64xf32>
    %56 = vector.shape_cast %55 : vector<64xf32> to vector<64x1xf32>
    %57 = vector.broadcast %56 : vector<64x1xf32> to vector<64x64xf32>
    %58 = arith.divf %54, %57 : vector<64x64xf32>
    %59 = arith.truncf %58 : vector<64x64xf32> to vector<64x64xbf16>
    %cst_28 = arith.constant dense<0.000000e+00> : vector<64x32xf32>
    %60 = tpu.matmul %59, %47, %cst_28 {dimension_numbers = #tpu.dot_dimension_numbers<[1], [0], [0], [1], [0, 0, 1, 1], [], []>} : vector<64x64xbf16>, vector<64x32xbf16>, vector<64x32xf32> -> vector<64x32xf32>
    %61 = arith.truncf %60 : vector<64x32xf32> to vector<64x32xbf16>
    %62 = vector.extract_strided_slice %40 {offsets = [0, 0], sizes = [32, 128], strides = [1, 1]} : vector<128x128xbf16> to vector<32x128xbf16>
    %cst_29 = arith.constant dense<0.000000e+00> : vector<64x128xf32>
    %63 = tpu.matmul %61, %62, %cst_29 {dimension_numbers = #tpu.dot_dimension_numbers<[1], [0], [0], [1], [0, 0, 1, 1], [], []>} : vector<64x32xbf16>, vector<32x128xbf16>, vector<64x128xf32> -> vector<64x128xf32>
    %64 = arith.addf %41, %63 : vector<64x128xf32>
    %65 = vector.extract_strided_slice %37 {offsets = [0, 32], sizes = [64, 32], strides = [1, 1]} : vector<128x384xf32> to vector<64x32xf32>
    %66 = arith.truncf %65 : vector<64x32xf32> to vector<64x32xbf16>
    %67 = vector.extract_strided_slice %37 {offsets = [0, 160], sizes = [64, 32], strides = [1, 1]} : vector<128x384xf32> to vector<64x32xf32>
    %68 = arith.truncf %67 : vector<64x32xf32> to vector<64x32xbf16>
    %69 = vector.extract_strided_slice %37 {offsets = [0, 288], sizes = [64, 32], strides = [1, 1]} : vector<128x384xf32> to vector<64x32xf32>
    %70 = arith.truncf %69 : vector<64x32xf32> to vector<64x32xbf16>
    %cst_30 = arith.constant dense<0.000000e+00> : vector<64x64xf32>
    %71 = tpu.matmul %66, %68, %cst_30 {dimension_numbers = #tpu.dot_dimension_numbers<[1], [1], [0], [0], [0, 0, 1, 0], [], []>} : vector<64x32xbf16>, vector<64x32xbf16>, vector<64x64xf32> -> vector<64x64xf32>
    %72 = arith.addf %71, %38 : vector<64x64xf32>
    %cst_31 = arith.constant dense<0xFF800000> : vector<64xf32>
    %73 = vector.multi_reduction <maximumf>, %72, %cst_31 [1] : vector<64x64xf32> to vector<64xf32>
    %74 = vector.shape_cast %73 : vector<64xf32> to vector<64x1xf32>
    %75 = vector.broadcast %74 : vector<64x1xf32> to vector<64x64xf32>
    %76 = arith.subf %72, %75 : vector<64x64xf32>
    %77 = math.exp %76 : vector<64x64xf32>
    %cst_32 = arith.constant dense<0.000000e+00> : vector<64xf32>
    %78 = vector.multi_reduction <add>, %77, %cst_32 [1] : vector<64x64xf32> to vector<64xf32>
    %79 = vector.shape_cast %78 : vector<64xf32> to vector<64x1xf32>
    %80 = vector.broadcast %79 : vector<64x1xf32> to vector<64x64xf32>
    %81 = arith.divf %77, %80 : vector<64x64xf32>
    %82 = arith.truncf %81 : vector<64x64xf32> to vector<64x64xbf16>
    %cst_33 = arith.constant dense<0.000000e+00> : vector<64x32xf32>
    %83 = tpu.matmul %82, %70, %cst_33 {dimension_numbers = #tpu.dot_dimension_numbers<[1], [0], [0], [1], [0, 0, 1, 1], [], []>} : vector<64x64xbf16>, vector<64x32xbf16>, vector<64x32xf32> -> vector<64x32xf32>
    %84 = arith.truncf %83 : vector<64x32xf32> to vector<64x32xbf16>
    %85 = vector.extract_strided_slice %40 {offsets = [32, 0], sizes = [32, 128], strides = [1, 1]} : vector<128x128xbf16> to vector<32x128xbf16>
    %cst_34 = arith.constant dense<0.000000e+00> : vector<64x128xf32>
    %86 = tpu.matmul %84, %85, %cst_34 {dimension_numbers = #tpu.dot_dimension_numbers<[1], [0], [0], [1], [0, 0, 1, 1], [], []>} : vector<64x32xbf16>, vector<32x128xbf16>, vector<64x128xf32> -> vector<64x128xf32>
    %87 = arith.addf %64, %86 : vector<64x128xf32>
    %88 = vector.extract_strided_slice %37 {offsets = [0, 64], sizes = [64, 32], strides = [1, 1]} : vector<128x384xf32> to vector<64x32xf32>
    %89 = arith.truncf %88 : vector<64x32xf32> to vector<64x32xbf16>
    %90 = vector.extract_strided_slice %37 {offsets = [0, 192], sizes = [64, 32], strides = [1, 1]} : vector<128x384xf32> to vector<64x32xf32>
    %91 = arith.truncf %90 : vector<64x32xf32> to vector<64x32xbf16>
    %92 = vector.extract_strided_slice %37 {offsets = [0, 320], sizes = [64, 32], strides = [1, 1]} : vector<128x384xf32> to vector<64x32xf32>
    %93 = arith.truncf %92 : vector<64x32xf32> to vector<64x32xbf16>
    %cst_35 = arith.constant dense<0.000000e+00> : vector<64x64xf32>
    %94 = tpu.matmul %89, %91, %cst_35 {dimension_numbers = #tpu.dot_dimension_numbers<[1], [1], [0], [0], [0, 0, 1, 0], [], []>} : vector<64x32xbf16>, vector<64x32xbf16>, vector<64x64xf32> -> vector<64x64xf32>
    %95 = arith.addf %94, %38 : vector<64x64xf32>
    %cst_36 = arith.constant dense<0xFF800000> : vector<64xf32>
    %96 = vector.multi_reduction <maximumf>, %95, %cst_36 [1] : vector<64x64xf32> to vector<64xf32>
    %97 = vector.shape_cast %96 : vector<64xf32> to vector<64x1xf32>
    %98 = vector.broadcast %97 : vector<64x1xf32> to vector<64x64xf32>
    %99 = arith.subf %95, %98 : vector<64x64xf32>
    %100 = math.exp %99 : vector<64x64xf32>
    %cst_37 = arith.constant dense<0.000000e+00> : vector<64xf32>
    %101 = vector.multi_reduction <add>, %100, %cst_37 [1] : vector<64x64xf32> to vector<64xf32>
    %102 = vector.shape_cast %101 : vector<64xf32> to vector<64x1xf32>
    %103 = vector.broadcast %102 : vector<64x1xf32> to vector<64x64xf32>
    %104 = arith.divf %100, %103 : vector<64x64xf32>
    %105 = arith.truncf %104 : vector<64x64xf32> to vector<64x64xbf16>
    %cst_38 = arith.constant dense<0.000000e+00> : vector<64x32xf32>
    %106 = tpu.matmul %105, %93, %cst_38 {dimension_numbers = #tpu.dot_dimension_numbers<[1], [0], [0], [1], [0, 0, 1, 1], [], []>} : vector<64x64xbf16>, vector<64x32xbf16>, vector<64x32xf32> -> vector<64x32xf32>
    %107 = arith.truncf %106 : vector<64x32xf32> to vector<64x32xbf16>
    %108 = vector.extract_strided_slice %40 {offsets = [64, 0], sizes = [32, 128], strides = [1, 1]} : vector<128x128xbf16> to vector<32x128xbf16>
    %cst_39 = arith.constant dense<0.000000e+00> : vector<64x128xf32>
    %109 = tpu.matmul %107, %108, %cst_39 {dimension_numbers = #tpu.dot_dimension_numbers<[1], [0], [0], [1], [0, 0, 1, 1], [], []>} : vector<64x32xbf16>, vector<32x128xbf16>, vector<64x128xf32> -> vector<64x128xf32>
    %110 = arith.addf %87, %109 : vector<64x128xf32>
    %111 = vector.extract_strided_slice %37 {offsets = [0, 96], sizes = [64, 32], strides = [1, 1]} : vector<128x384xf32> to vector<64x32xf32>
    %112 = arith.truncf %111 : vector<64x32xf32> to vector<64x32xbf16>
    %113 = vector.extract_strided_slice %37 {offsets = [0, 224], sizes = [64, 32], strides = [1, 1]} : vector<128x384xf32> to vector<64x32xf32>
    %114 = arith.truncf %113 : vector<64x32xf32> to vector<64x32xbf16>
    %115 = vector.extract_strided_slice %37 {offsets = [0, 352], sizes = [64, 32], strides = [1, 1]} : vector<128x384xf32> to vector<64x32xf32>
    %116 = arith.truncf %115 : vector<64x32xf32> to vector<64x32xbf16>
    %cst_40 = arith.constant dense<0.000000e+00> : vector<64x64xf32>
    %117 = tpu.matmul %112, %114, %cst_40 {dimension_numbers = #tpu.dot_dimension_numbers<[1], [1], [0], [0], [0, 0, 1, 0], [], []>} : vector<64x32xbf16>, vector<64x32xbf16>, vector<64x64xf32> -> vector<64x64xf32>
    %118 = arith.addf %117, %38 : vector<64x64xf32>
    %cst_41 = arith.constant dense<0xFF800000> : vector<64xf32>
    %119 = vector.multi_reduction <maximumf>, %118, %cst_41 [1] : vector<64x64xf32> to vector<64xf32>
    %120 = vector.shape_cast %119 : vector<64xf32> to vector<64x1xf32>
    %121 = vector.broadcast %120 : vector<64x1xf32> to vector<64x64xf32>
    %122 = arith.subf %118, %121 : vector<64x64xf32>
    %123 = math.exp %122 : vector<64x64xf32>
    %cst_42 = arith.constant dense<0.000000e+00> : vector<64xf32>
    %124 = vector.multi_reduction <add>, %123, %cst_42 [1] : vector<64x64xf32> to vector<64xf32>
    %125 = vector.shape_cast %124 : vector<64xf32> to vector<64x1xf32>
    %126 = vector.broadcast %125 : vector<64x1xf32> to vector<64x64xf32>
    %127 = arith.divf %123, %126 : vector<64x64xf32>
    %128 = arith.truncf %127 : vector<64x64xf32> to vector<64x64xbf16>
    %cst_43 = arith.constant dense<0.000000e+00> : vector<64x32xf32>
    %129 = tpu.matmul %128, %116, %cst_43 {dimension_numbers = #tpu.dot_dimension_numbers<[1], [0], [0], [1], [0, 0, 1, 1], [], []>} : vector<64x64xbf16>, vector<64x32xbf16>, vector<64x32xf32> -> vector<64x32xf32>
    %130 = arith.truncf %129 : vector<64x32xf32> to vector<64x32xbf16>
    %131 = vector.extract_strided_slice %40 {offsets = [96, 0], sizes = [32, 128], strides = [1, 1]} : vector<128x128xbf16> to vector<32x128xbf16>
    %cst_44 = arith.constant dense<0.000000e+00> : vector<64x128xf32>
    %132 = tpu.matmul %130, %131, %cst_44 {dimension_numbers = #tpu.dot_dimension_numbers<[1], [0], [0], [1], [0, 0, 1, 1], [], []>} : vector<64x32xbf16>, vector<32x128xbf16>, vector<64x128xf32> -> vector<64x128xf32>
    %133 = arith.addf %110, %132 : vector<64x128xf32>
    %cst_45 = arith.constant 0.000000e+00 : f32
    %134 = vector.broadcast %cst_45 : f32 to vector<64x128xf32>
    %135 = vector.extract_strided_slice %37 {offsets = [64, 0], sizes = [64, 32], strides = [1, 1]} : vector<128x384xf32> to vector<64x32xf32>
    %136 = arith.truncf %135 : vector<64x32xf32> to vector<64x32xbf16>
    %137 = vector.extract_strided_slice %37 {offsets = [64, 128], sizes = [64, 32], strides = [1, 1]} : vector<128x384xf32> to vector<64x32xf32>
    %138 = arith.truncf %137 : vector<64x32xf32> to vector<64x32xbf16>
    %139 = vector.extract_strided_slice %37 {offsets = [64, 256], sizes = [64, 32], strides = [1, 1]} : vector<128x384xf32> to vector<64x32xf32>
    %140 = arith.truncf %139 : vector<64x32xf32> to vector<64x32xbf16>
    %cst_46 = arith.constant dense<0.000000e+00> : vector<64x64xf32>
    %141 = tpu.matmul %136, %138, %cst_46 {dimension_numbers = #tpu.dot_dimension_numbers<[1], [1], [0], [0], [0, 0, 1, 0], [], []>} : vector<64x32xbf16>, vector<64x32xbf16>, vector<64x64xf32> -> vector<64x64xf32>
    %142 = arith.addf %141, %38 : vector<64x64xf32>
    %cst_47 = arith.constant dense<0xFF800000> : vector<64xf32>
    %143 = vector.multi_reduction <maximumf>, %142, %cst_47 [1] : vector<64x64xf32> to vector<64xf32>
    %144 = vector.shape_cast %143 : vector<64xf32> to vector<64x1xf32>
    %145 = vector.broadcast %144 : vector<64x1xf32> to vector<64x64xf32>
    %146 = arith.subf %142, %145 : vector<64x64xf32>
    %147 = math.exp %146 : vector<64x64xf32>
    %cst_48 = arith.constant dense<0.000000e+00> : vector<64xf32>
    %148 = vector.multi_reduction <add>, %147, %cst_48 [1] : vector<64x64xf32> to vector<64xf32>
    %149 = vector.shape_cast %148 : vector<64xf32> to vector<64x1xf32>
    %150 = vector.broadcast %149 : vector<64x1xf32> to vector<64x64xf32>
    %151 = arith.divf %147, %150 : vector<64x64xf32>
    %152 = arith.truncf %151 : vector<64x64xf32> to vector<64x64xbf16>
    %cst_49 = arith.constant dense<0.000000e+00> : vector<64x32xf32>
    %153 = tpu.matmul %152, %140, %cst_49 {dimension_numbers = #tpu.dot_dimension_numbers<[1], [0], [0], [1], [0, 0, 1, 1], [], []>} : vector<64x64xbf16>, vector<64x32xbf16>, vector<64x32xf32> -> vector<64x32xf32>
    %154 = arith.truncf %153 : vector<64x32xf32> to vector<64x32xbf16>
    %155 = vector.extract_strided_slice %40 {offsets = [0, 0], sizes = [32, 128], strides = [1, 1]} : vector<128x128xbf16> to vector<32x128xbf16>
    %cst_50 = arith.constant dense<0.000000e+00> : vector<64x128xf32>
    %156 = tpu.matmul %154, %155, %cst_50 {dimension_numbers = #tpu.dot_dimension_numbers<[1], [0], [0], [1], [0, 0, 1, 1], [], []>} : vector<64x32xbf16>, vector<32x128xbf16>, vector<64x128xf32> -> vector<64x128xf32>
    %157 = arith.addf %134, %156 : vector<64x128xf32>
    %158 = vector.extract_strided_slice %37 {offsets = [64, 32], sizes = [64, 32], strides = [1, 1]} : vector<128x384xf32> to vector<64x32xf32>
    %159 = arith.truncf %158 : vector<64x32xf32> to vector<64x32xbf16>
    %160 = vector.extract_strided_slice %37 {offsets = [64, 160], sizes = [64, 32], strides = [1, 1]} : vector<128x384xf32> to vector<64x32xf32>
    %161 = arith.truncf %160 : vector<64x32xf32> to vector<64x32xbf16>
    %162 = vector.extract_strided_slice %37 {offsets = [64, 288], sizes = [64, 32], strides = [1, 1]} : vector<128x384xf32> to vector<64x32xf32>
    %163 = arith.truncf %162 : vector<64x32xf32> to vector<64x32xbf16>
    %cst_51 = arith.constant dense<0.000000e+00> : vector<64x64xf32>
    %164 = tpu.matmul %159, %161, %cst_51 {dimension_numbers = #tpu.dot_dimension_numbers<[1], [1], [0], [0], [0, 0, 1, 0], [], []>} : vector<64x32xbf16>, vector<64x32xbf16>, vector<64x64xf32> -> vector<64x64xf32>
    %165 = arith.addf %164, %38 : vector<64x64xf32>
    %cst_52 = arith.constant dense<0xFF800000> : vector<64xf32>
    %166 = vector.multi_reduction <maximumf>, %165, %cst_52 [1] : vector<64x64xf32> to vector<64xf32>
    %167 = vector.shape_cast %166 : vector<64xf32> to vector<64x1xf32>
    %168 = vector.broadcast %167 : vector<64x1xf32> to vector<64x64xf32>
    %169 = arith.subf %165, %168 : vector<64x64xf32>
    %170 = math.exp %169 : vector<64x64xf32>
    %cst_53 = arith.constant dense<0.000000e+00> : vector<64xf32>
    %171 = vector.multi_reduction <add>, %170, %cst_53 [1] : vector<64x64xf32> to vector<64xf32>
    %172 = vector.shape_cast %171 : vector<64xf32> to vector<64x1xf32>
    %173 = vector.broadcast %172 : vector<64x1xf32> to vector<64x64xf32>
    %174 = arith.divf %170, %173 : vector<64x64xf32>
    %175 = arith.truncf %174 : vector<64x64xf32> to vector<64x64xbf16>
    %cst_54 = arith.constant dense<0.000000e+00> : vector<64x32xf32>
    %176 = tpu.matmul %175, %163, %cst_54 {dimension_numbers = #tpu.dot_dimension_numbers<[1], [0], [0], [1], [0, 0, 1, 1], [], []>} : vector<64x64xbf16>, vector<64x32xbf16>, vector<64x32xf32> -> vector<64x32xf32>
    %177 = arith.truncf %176 : vector<64x32xf32> to vector<64x32xbf16>
    %178 = vector.extract_strided_slice %40 {offsets = [32, 0], sizes = [32, 128], strides = [1, 1]} : vector<128x128xbf16> to vector<32x128xbf16>
    %cst_55 = arith.constant dense<0.000000e+00> : vector<64x128xf32>
    %179 = tpu.matmul %177, %178, %cst_55 {dimension_numbers = #tpu.dot_dimension_numbers<[1], [0], [0], [1], [0, 0, 1, 1], [], []>} : vector<64x32xbf16>, vector<32x128xbf16>, vector<64x128xf32> -> vector<64x128xf32>
    %180 = arith.addf %157, %179 : vector<64x128xf32>
    %181 = vector.extract_strided_slice %37 {offsets = [64, 64], sizes = [64, 32], strides = [1, 1]} : vector<128x384xf32> to vector<64x32xf32>
    %182 = arith.truncf %181 : vector<64x32xf32> to vector<64x32xbf16>
    %183 = vector.extract_strided_slice %37 {offsets = [64, 192], sizes = [64, 32], strides = [1, 1]} : vector<128x384xf32> to vector<64x32xf32>
    %184 = arith.truncf %183 : vector<64x32xf32> to vector<64x32xbf16>
    %185 = vector.extract_strided_slice %37 {offsets = [64, 320], sizes = [64, 32], strides = [1, 1]} : vector<128x384xf32> to vector<64x32xf32>
    %186 = arith.truncf %185 : vector<64x32xf32> to vector<64x32xbf16>
    %cst_56 = arith.constant dense<0.000000e+00> : vector<64x64xf32>
    %187 = tpu.matmul %182, %184, %cst_56 {dimension_numbers = #tpu.dot_dimension_numbers<[1], [1], [0], [0], [0, 0, 1, 0], [], []>} : vector<64x32xbf16>, vector<64x32xbf16>, vector<64x64xf32> -> vector<64x64xf32>
    %188 = arith.addf %187, %38 : vector<64x64xf32>
    %cst_57 = arith.constant dense<0xFF800000> : vector<64xf32>
    %189 = vector.multi_reduction <maximumf>, %188, %cst_57 [1] : vector<64x64xf32> to vector<64xf32>
    %190 = vector.shape_cast %189 : vector<64xf32> to vector<64x1xf32>
    %191 = vector.broadcast %190 : vector<64x1xf32> to vector<64x64xf32>
    %192 = arith.subf %188, %191 : vector<64x64xf32>
    %193 = math.exp %192 : vector<64x64xf32>
    %cst_58 = arith.constant dense<0.000000e+00> : vector<64xf32>
    %194 = vector.multi_reduction <add>, %193, %cst_58 [1] : vector<64x64xf32> to vector<64xf32>
    %195 = vector.shape_cast %194 : vector<64xf32> to vector<64x1xf32>
    %196 = vector.broadcast %195 : vector<64x1xf32> to vector<64x64xf32>
    %197 = arith.divf %193, %196 : vector<64x64xf32>
    %198 = arith.truncf %197 : vector<64x64xf32> to vector<64x64xbf16>
    %cst_59 = arith.constant dense<0.000000e+00> : vector<64x32xf32>
    %199 = tpu.matmul %198, %186, %cst_59 {dimension_numbers = #tpu.dot_dimension_numbers<[1], [0], [0], [1], [0, 0, 1, 1], [], []>} : vector<64x64xbf16>, vector<64x32xbf16>, vector<64x32xf32> -> vector<64x32xf32>
    %200 = arith.truncf %199 : vector<64x32xf32> to vector<64x32xbf16>
    %201 = vector.extract_strided_slice %40 {offsets = [64, 0], sizes = [32, 128], strides = [1, 1]} : vector<128x128xbf16> to vector<32x128xbf16>
    %cst_60 = arith.constant dense<0.000000e+00> : vector<64x128xf32>
    %202 = tpu.matmul %200, %201, %cst_60 {dimension_numbers = #tpu.dot_dimension_numbers<[1], [0], [0], [1], [0, 0, 1, 1], [], []>} : vector<64x32xbf16>, vector<32x128xbf16>, vector<64x128xf32> -> vector<64x128xf32>
    %203 = arith.addf %180, %202 : vector<64x128xf32>
    %204 = vector.extract_strided_slice %37 {offsets = [64, 96], sizes = [64, 32], strides = [1, 1]} : vector<128x384xf32> to vector<64x32xf32>
    %205 = arith.truncf %204 : vector<64x32xf32> to vector<64x32xbf16>
    %206 = vector.extract_strided_slice %37 {offsets = [64, 224], sizes = [64, 32], strides = [1, 1]} : vector<128x384xf32> to vector<64x32xf32>
    %207 = arith.truncf %206 : vector<64x32xf32> to vector<64x32xbf16>
    %208 = vector.extract_strided_slice %37 {offsets = [64, 352], sizes = [64, 32], strides = [1, 1]} : vector<128x384xf32> to vector<64x32xf32>
    %209 = arith.truncf %208 : vector<64x32xf32> to vector<64x32xbf16>
    %cst_61 = arith.constant dense<0.000000e+00> : vector<64x64xf32>
    %210 = tpu.matmul %205, %207, %cst_61 {dimension_numbers = #tpu.dot_dimension_numbers<[1], [1], [0], [0], [0, 0, 1, 0], [], []>} : vector<64x32xbf16>, vector<64x32xbf16>, vector<64x64xf32> -> vector<64x64xf32>
    %211 = arith.addf %210, %38 : vector<64x64xf32>
    %cst_62 = arith.constant dense<0xFF800000> : vector<64xf32>
    %212 = vector.multi_reduction <maximumf>, %211, %cst_62 [1] : vector<64x64xf32> to vector<64xf32>
    %213 = vector.shape_cast %212 : vector<64xf32> to vector<64x1xf32>
    %214 = vector.broadcast %213 : vector<64x1xf32> to vector<64x64xf32>
    %215 = arith.subf %211, %214 : vector<64x64xf32>
    %216 = math.exp %215 : vector<64x64xf32>
    %cst_63 = arith.constant dense<0.000000e+00> : vector<64xf32>
    %217 = vector.multi_reduction <add>, %216, %cst_63 [1] : vector<64x64xf32> to vector<64xf32>
    %218 = vector.shape_cast %217 : vector<64xf32> to vector<64x1xf32>
    %219 = vector.broadcast %218 : vector<64x1xf32> to vector<64x64xf32>
    %220 = arith.divf %216, %219 : vector<64x64xf32>
    %221 = arith.truncf %220 : vector<64x64xf32> to vector<64x64xbf16>
    %cst_64 = arith.constant dense<0.000000e+00> : vector<64x32xf32>
    %222 = tpu.matmul %221, %209, %cst_64 {dimension_numbers = #tpu.dot_dimension_numbers<[1], [0], [0], [1], [0, 0, 1, 1], [], []>} : vector<64x64xbf16>, vector<64x32xbf16>, vector<64x32xf32> -> vector<64x32xf32>
    %223 = arith.truncf %222 : vector<64x32xf32> to vector<64x32xbf16>
    %224 = vector.extract_strided_slice %40 {offsets = [96, 0], sizes = [32, 128], strides = [1, 1]} : vector<128x128xbf16> to vector<32x128xbf16>
    %cst_65 = arith.constant dense<0.000000e+00> : vector<64x128xf32>
    %225 = tpu.matmul %223, %224, %cst_65 {dimension_numbers = #tpu.dot_dimension_numbers<[1], [0], [0], [1], [0, 0, 1, 1], [], []>} : vector<64x32xbf16>, vector<32x128xbf16>, vector<64x128xf32> -> vector<64x128xf32>
    %226 = arith.addf %203, %225 : vector<64x128xf32>
    %227 = tpu.concatenate %133, %226 in 0 : vector<64x128xf32>, vector<64x128xf32> -> vector<128x128xf32>
    %c0_66 = arith.constant 0 : index
    %c0_67 = arith.constant 0 : index
    %c0_68 = arith.constant 0 : index
    %228 = vector.load %arg9[%c0_66, %c0_67, %c0_68] : memref<1x1x128xf32, #tpu.memory_space<vmem>>, vector<1x1x128xf32>
    %229 = vector.shape_cast %228 : vector<1x1x128xf32> to vector<1x128xf32>
    %230 = vector.broadcast %229 : vector<1x128xf32> to vector<128x128xf32>
    %231 = arith.addf %227, %230 : vector<128x128xf32>
    %232 = arith.addf %231, %3 : vector<128x128xf32>
    %c0_69 = arith.constant 0 : index
    %c0_70 = arith.constant 0 : index
    %c0_71 = arith.constant 0 : index
    %233 = vector.load %arg10[%c0_69, %c0_70, %c0_71] : memref<1x1x128xf32, #tpu.memory_space<vmem>>, vector<1x1x128xf32>
    %234 = vector.shape_cast %233 : vector<1x1x128xf32> to vector<1x128xf32>
    %c0_72 = arith.constant 0 : index
    %c0_73 = arith.constant 0 : index
    %c0_74 = arith.constant 0 : index
    %235 = vector.load %arg11[%c0_72, %c0_73, %c0_74] : memref<1x1x128xf32, #tpu.memory_space<vmem>>, vector<1x1x128xf32>
    %236 = vector.shape_cast %235 : vector<1x1x128xf32> to vector<1x128xf32>
    %cst_75 = arith.constant dense<0.000000e+00> : vector<128xf32>
    %237 = vector.multi_reduction <add>, %232, %cst_75 [1] : vector<128x128xf32> to vector<128xf32>
    %238 = vector.shape_cast %237 : vector<128xf32> to vector<128x1xf32>
    %cst_76 = arith.constant 1.280000e+02 : f32
    %239 = vector.broadcast %cst_76 : f32 to vector<128x1xf32>
    %240 = arith.divf %238, %239 : vector<128x1xf32>
    %241 = vector.broadcast %240 : vector<128x1xf32> to vector<128x128xf32>
    %242 = arith.subf %232, %241 : vector<128x128xf32>
    %243 = arith.mulf %242, %242 : vector<128x128xf32>
    %cst_77 = arith.constant dense<0.000000e+00> : vector<128xf32>
    %244 = vector.multi_reduction <add>, %243, %cst_77 [1] : vector<128x128xf32> to vector<128xf32>
    %245 = vector.shape_cast %244 : vector<128xf32> to vector<128x1xf32>
    %cst_78 = arith.constant 1.280000e+02 : f32
    %246 = vector.broadcast %cst_78 : f32 to vector<128x1xf32>
    %247 = arith.divf %245, %246 : vector<128x1xf32>
    %248 = vector.broadcast %240 : vector<128x1xf32> to vector<128x128xf32>
    %249 = arith.subf %232, %248 : vector<128x128xf32>
    %cst_79 = arith.constant 9.99999974E-6 : f32
    %250 = vector.broadcast %cst_79 : f32 to vector<128x1xf32>
    %251 = arith.addf %247, %250 : vector<128x1xf32>
    %252 = math.rsqrt %251 : vector<128x1xf32>
    %253 = vector.broadcast %252 : vector<128x1xf32> to vector<128x128xf32>
    %254 = arith.mulf %249, %253 : vector<128x128xf32>
    %255 = vector.broadcast %234 : vector<1x128xf32> to vector<128x128xf32>
    %256 = arith.mulf %254, %255 : vector<128x128xf32>
    %257 = vector.broadcast %236 : vector<1x128xf32> to vector<128x128xf32>
    %258 = arith.addf %256, %257 : vector<128x128xf32>
    %259 = arith.truncf %258 : vector<128x128xf32> to vector<128x128xbf16>
    %c0_80 = arith.constant 0 : index
    %c0_81 = arith.constant 0 : index
    %c0_82 = arith.constant 0 : index
    %260 = vector.load %arg12[%c0_80, %c0_81, %c0_82] : memref<1x128x512xbf16, #tpu.memory_space<vmem>>, vector<1x128x512xbf16>
    %261 = vector.shape_cast %260 : vector<1x128x512xbf16> to vector<128x512xbf16>
    %cst_83 = arith.constant dense<0.000000e+00> : vector<128x512xf32>
    %262 = tpu.matmul %259, %261, %cst_83 {dimension_numbers = #tpu.dot_dimension_numbers<[1], [0], [0], [1], [0, 0, 1, 1], [], []>} : vector<128x128xbf16>, vector<128x512xbf16>, vector<128x512xf32> -> vector<128x512xf32>
    %c0_84 = arith.constant 0 : index
    %c0_85 = arith.constant 0 : index
    %c0_86 = arith.constant 0 : index
    %263 = vector.load %arg13[%c0_84, %c0_85, %c0_86] : memref<1x1x512xf32, #tpu.memory_space<vmem>>, vector<1x1x512xf32>
    %264 = vector.shape_cast %263 : vector<1x1x512xf32> to vector<1x512xf32>
    %265 = vector.broadcast %264 : vector<1x512xf32> to vector<128x512xf32>
    %266 = arith.addf %262, %265 : vector<128x512xf32>
    %cst_87 = arith.constant 1.702000e+00 : f32
    %267 = vector.broadcast %cst_87 : f32 to vector<128x512xf32>
    %268 = arith.mulf %267, %266 : vector<128x512xf32>
    %269 = arith.negf %268 : vector<128x512xf32>
    %270 = math.exp %269 : vector<128x512xf32>
    %cst_88 = arith.constant 1.000000e+00 : f32
    %271 = vector.broadcast %cst_88 : f32 to vector<128x512xf32>
    %272 = arith.addf %271, %270 : vector<128x512xf32>
    %273 = arith.divf %271, %272 : vector<128x512xf32>
    %274 = arith.mulf %266, %273 : vector<128x512xf32>
    %275 = arith.truncf %274 : vector<128x512xf32> to vector<128x512xbf16>
    %c0_89 = arith.constant 0 : index
    %c0_90 = arith.constant 0 : index
    %c0_91 = arith.constant 0 : index
    %276 = vector.load %arg14[%c0_89, %c0_90, %c0_91] : memref<1x512x128xbf16, #tpu.memory_space<vmem>>, vector<1x512x128xbf16>
    %277 = vector.shape_cast %276 : vector<1x512x128xbf16> to vector<512x128xbf16>
    %cst_92 = arith.constant dense<0.000000e+00> : vector<128x128xf32>
    %278 = tpu.matmul %275, %277, %cst_92 {dimension_numbers = #tpu.dot_dimension_numbers<[1], [0], [0], [1], [0, 0, 1, 1], [], []>} : vector<128x512xbf16>, vector<512x128xbf16>, vector<128x128xf32> -> vector<128x128xf32>
    %c0_93 = arith.constant 0 : index
    %c0_94 = arith.constant 0 : index
    %c0_95 = arith.constant 0 : index
    %279 = vector.load %arg15[%c0_93, %c0_94, %c0_95] : memref<1x1x128xf32, #tpu.memory_space<vmem>>, vector<1x1x128xf32>
    %280 = vector.shape_cast %279 : vector<1x1x128xf32> to vector<1x128xf32>
    %281 = vector.broadcast %280 : vector<1x128xf32> to vector<128x128xf32>
    %282 = arith.addf %278, %281 : vector<128x128xf32>
    %283 = arith.addf %282, %232 : vector<128x128xf32>
    %c0_96 = arith.constant 0 : index
    %c0_97 = arith.constant 0 : index
    %284 = vector.load %arg19[%c0_96, %c0_97] : memref<128x128xf32, #tpu.memory_space<vmem>>, vector<128x128xf32>
    tpu.vector_store %arg19[%c0_96, %c0_97], %283 {strides = array<i32>} : memref<128x128xf32, #tpu.memory_space<vmem>>, vector<128x128xf32>,
    %c1_i32 = arith.constant 1 : i32
    %285 = arith.cmpi eq, %arg1, %c1_i32 : i32
    %286 = arith.extui %285 : i1 to i32
    %c0_i32_98 = arith.constant 0 : i32
    %287 = arith.cmpi ne, %286, %c0_i32_98 : i32
    scf.if %287 {
      %c0_99 = arith.constant 0 : index
      %c0_100 = arith.constant 0 : index
      %288 = vector.load %arg16[%c0_99, %c0_100] : memref<1x128xf32, #tpu.memory_space<vmem>>, vector<1x128xf32>
      %c0_101 = arith.constant 0 : index
      %c0_102 = arith.constant 0 : index
      %289 = vector.load %arg17[%c0_101, %c0_102] : memref<1x128xf32, #tpu.memory_space<vmem>>, vector<1x128xf32>
      %cst_103 = arith.constant dense<0.000000e+00> : vector<128xf32>
      %290 = vector.multi_reduction <add>, %283, %cst_103 [1] : vector<128x128xf32> to vector<128xf32>
      %291 = vector.shape_cast %290 : vector<128xf32> to vector<128x1xf32>
      %cst_104 = arith.constant 1.280000e+02 : f32
      %292 = vector.broadcast %cst_104 : f32 to vector<128x1xf32>
      %293 = arith.divf %291, %292 : vector<128x1xf32>
      %294 = vector.broadcast %293 : vector<128x1xf32> to vector<128x128xf32>
      %295 = arith.subf %283, %294 : vector<128x128xf32>
      %296 = arith.mulf %295, %295 : vector<128x128xf32>
      %cst_105 = arith.constant dense<0.000000e+00> : vector<128xf32>
      %297 = vector.multi_reduction <add>, %296, %cst_105 [1] : vector<128x128xf32> to vector<128xf32>
      %298 = vector.shape_cast %297 : vector<128xf32> to vector<128x1xf32>
      %cst_106 = arith.constant 1.280000e+02 : f32
      %299 = vector.broadcast %cst_106 : f32 to vector<128x1xf32>
      %300 = arith.divf %298, %299 : vector<128x1xf32>
      %301 = vector.broadcast %293 : vector<128x1xf32> to vector<128x128xf32>
      %302 = arith.subf %283, %301 : vector<128x128xf32>
      %cst_107 = arith.constant 9.99999974E-6 : f32
      %303 = vector.broadcast %cst_107 : f32 to vector<128x1xf32>
      %304 = arith.addf %300, %303 : vector<128x1xf32>
      %305 = math.rsqrt %304 : vector<128x1xf32>
      %306 = vector.broadcast %305 : vector<128x1xf32> to vector<128x128xf32>
      %307 = arith.mulf %302, %306 : vector<128x128xf32>
      %308 = vector.broadcast %288 : vector<1x128xf32> to vector<128x128xf32>
      %309 = arith.mulf %307, %308 : vector<128x128xf32>
      %310 = vector.broadcast %289 : vector<1x128xf32> to vector<128x128xf32>
      %311 = arith.addf %309, %310 : vector<128x128xf32>
      %c0_108 = arith.constant 0 : index
      %c0_109 = arith.constant 0 : index
      %312 = vector.load %arg18[%c0_108, %c0_109] : memref<128x128xf32, #tpu.memory_space<vmem>>, vector<128x128xf32>
      tpu.vector_store %arg18[%c0_108, %c0_109], %311 {strides = array<i32>} : memref<128x128xf32, #tpu.memory_space<vmem>>, vector<128x128xf32>,
    } else {
    }
    return
  }
  func.func @transform_0(%arg0: i32, %arg1: i32) -> (i32, i32) {
    %c0_i32 = arith.constant 0 : i32
    %c0_i32_0 = arith.constant 0 : i32
    %c0_i32_1 = arith.constant 0 : i32
    return %c0_i32, %c0_i32_0 : i32, i32
  }
  func.func @transform_1(%arg0: i32, %arg1: i32) -> (i32, i32) {
    %c0_i32 = arith.constant 0 : i32
    %c0_i32_0 = arith.constant 0 : i32
    return %arg0, %c0_i32 : i32, i32
  }
  func.func @transform_2(%arg0: i32, %arg1: i32) -> (i32, i32, i32) {
    %c0_i32 = arith.constant 0 : i32
    %c0_i32_0 = arith.constant 0 : i32
    %c0_i32_1 = arith.constant 0 : i32
    return %arg1, %c0_i32, %c0_i32_0 : i32, i32, i32
  }
  func.func @transform_3(%arg0: i32, %arg1: i32) -> (i32, i32, i32) {
    %c0_i32 = arith.constant 0 : i32
    %c0_i32_0 = arith.constant 0 : i32
    %c0_i32_1 = arith.constant 0 : i32
    return %arg1, %c0_i32, %c0_i32_0 : i32, i32, i32
  }
  func.func @transform_4(%arg0: i32, %arg1: i32) -> (i32, i32, i32) {
    %c0_i32 = arith.constant 0 : i32
    %c0_i32_0 = arith.constant 0 : i32
    %c0_i32_1 = arith.constant 0 : i32
    return %arg1, %c0_i32, %c0_i32_0 : i32, i32, i32
  }
  func.func @transform_5(%arg0: i32, %arg1: i32) -> (i32, i32, i32) {
    %c0_i32 = arith.constant 0 : i32
    %c0_i32_0 = arith.constant 0 : i32
    %c0_i32_1 = arith.constant 0 : i32
    return %arg1, %c0_i32, %c0_i32_0 : i32, i32, i32
  }
  func.func @transform_6(%arg0: i32, %arg1: i32) -> (i32, i32, i32) {
    %c0_i32 = arith.constant 0 : i32
    %c0_i32_0 = arith.constant 0 : i32
    %c0_i32_1 = arith.constant 0 : i32
    return %arg1, %c0_i32, %c0_i32_0 : i32, i32, i32
  }
  func.func @transform_7(%arg0: i32, %arg1: i32) -> (i32, i32, i32) {
    %c0_i32 = arith.constant 0 : i32
    %c0_i32_0 = arith.constant 0 : i32
    %c0_i32_1 = arith.constant 0 : i32
    return %arg1, %c0_i32, %c0_i32_0 : i32, i32, i32
  }
  func.func @transform_8(%arg0: i32, %arg1: i32) -> (i32, i32, i32) {
    %c0_i32 = arith.constant 0 : i32
    %c0_i32_0 = arith.constant 0 : i32
    %c0_i32_1 = arith.constant 0 : i32
    return %arg1, %c0_i32, %c0_i32_0 : i32, i32, i32
  }
  func.func @transform_9(%arg0: i32, %arg1: i32) -> (i32, i32, i32) {
    %c0_i32 = arith.constant 0 : i32
    %c0_i32_0 = arith.constant 0 : i32
    %c0_i32_1 = arith.constant 0 : i32
    return %arg1, %c0_i32, %c0_i32_0 : i32, i32, i32
  }
  func.func @transform_10(%arg0: i32, %arg1: i32) -> (i32, i32, i32) {
    %c0_i32 = arith.constant 0 : i32
    %c0_i32_0 = arith.constant 0 : i32
    %c0_i32_1 = arith.constant 0 : i32
    return %arg1, %c0_i32, %c0_i32_0 : i32, i32, i32
  }
  func.func @transform_11(%arg0: i32, %arg1: i32) -> (i32, i32, i32) {
    %c0_i32 = arith.constant 0 : i32
    %c0_i32_0 = arith.constant 0 : i32
    %c0_i32_1 = arith.constant 0 : i32
    return %arg1, %c0_i32, %c0_i32_0 : i32, i32, i32
  }
  func.func @transform_12(%arg0: i32, %arg1: i32) -> (i32, i32, i32) {
    %c0_i32 = arith.constant 0 : i32
    %c0_i32_0 = arith.constant 0 : i32
    %c0_i32_1 = arith.constant 0 : i32
    return %arg1, %c0_i32, %c0_i32_0 : i32, i32, i32
  }
  func.func @transform_13(%arg0: i32, %arg1: i32) -> (i32, i32, i32) {
    %c0_i32 = arith.constant 0 : i32
    %c0_i32_0 = arith.constant 0 : i32
    %c0_i32_1 = arith.constant 0 : i32
    return %arg1, %c0_i32, %c0_i32_0 : i32, i32, i32
  }
  func.func @transform_14(%arg0: i32, %arg1: i32) -> (i32, i32) {
    %c0_i32 = arith.constant 0 : i32
    %c0_i32_0 = arith.constant 0 : i32
    %c0_i32_1 = arith.constant 0 : i32
    return %c0_i32, %c0_i32_0 : i32, i32
  }
  func.func @transform_15(%arg0: i32, %arg1: i32) -> (i32, i32) {
    %c0_i32 = arith.constant 0 : i32
    %c0_i32_0 = arith.constant 0 : i32
    %c0_i32_1 = arith.constant 0 : i32
    return %c0_i32, %c0_i32_0 : i32, i32
  }
  func.func @transform_16(%arg0: i32, %arg1: i32) -> (i32, i32) {
    %c0_i32 = arith.constant 0 : i32
    %c0_i32_0 = arith.constant 0 : i32
    return %arg0, %c0_i32 : i32, i32
  }
}

</mosaic_0001>

<llo_original>
// kernel: tpu_custom_call.1
$region0: #{tpu_custom_call.1}
  #allocation0 [shape = 'u32[]', space=smem, size = 0x4, offset = 0x4, fixed_abs, tag = 'smem constant byte address 0x4 - core index']
  #allocation1 [shape = 'u32[144,128]{1,0:T(1,128)}', space=vmem, size = 0x12000, scoped, tag = 'internal scratch']
  #allocation2 [shape = 'f32[128,128]{1,0:T(8,128)}', space=vmem, size = 0x10000, scoped, tag = 'scratch operand']
  %s0 = inlined_call_operand.hbm [shape: f32[64,64], index: 0, kind: input, shape index: {}]
  %s1 = inlined_call_operand.hbm [shape: f32[256,128], index: 1, kind: input, shape index: {}]
  %s2 = inlined_call_operand.vmem [shape: f32[2,1,128], index: 2, kind: input, shape index: {}]
  %s3 = inlined_call_operand.hbm [shape: f32[2,1,128], index: 3, kind: input, shape index: {}]
  %s4 = inlined_call_operand.hbm [shape: bf16[2,128,384], index: 4, kind: input, shape index: {}]
  %s5 = inlined_call_operand.vmem [shape: f32[2,1,384], index: 5, kind: input, shape index: {}]
  %s6 = inlined_call_operand.hbm [shape: bf16[2,128,128], index: 6, kind: input, shape index: {}]
  %s7 = inlined_call_operand.hbm [shape: f32[2,1,128], index: 7, kind: input, shape index: {}]
  %s8 = inlined_call_operand.hbm [shape: f32[2,1,128], index: 8, kind: input, shape index: {}]
  %s9 = inlined_call_operand.hbm [shape: f32[2,1,128], index: 9, kind: input, shape index: {}]
  %s10 = inlined_call_operand.hbm [shape: bf16[2,128,512], index: 10, kind: input, shape index: {}]
  %s11 = inlined_call_operand.vmem [shape: f32[2,1,512], index: 11, kind: input, shape index: {}]
  %s12 = inlined_call_operand.hbm [shape: bf16[2,512,128], index: 12, kind: input, shape index: {}]
  %s13 = inlined_call_operand.vmem [shape: f32[2,1,128], index: 13, kind: input, shape index: {}]
  %s14 = inlined_call_operand.vmem [shape: f32[1,128], index: 14, kind: input, shape index: {}]
  %s15 = inlined_call_operand.vmem [shape: f32[1,128], index: 15, kind: input, shape index: {}]
  %s16 = inlined_call_operand.hbm [shape: f32[256,128], index: 16, kind: output, shape index: {}]
  %s17 = sld [smem:[#allocation0]]
  $region145: #{tpu_custom_call.1} parent=0
    _
  %s19 = ssub.s32 1, %s17
  %s20 = scalar_select 0, %s19, %s17
  $region1: #{tpu_custom_call.1} parent=0
    #allocation3 [shape = 'u8[32768]{0}', space=vmem, size = 0x8000, scoped, tag = 'input window, operand 0, single buffered']
    #allocation4 [shape = 's32[2]{0}', space=sflag, size = 0x8, scoped, tag = 'scoped memory for tpu_custom_call.1']
    #allocation5 [shape = 's32[2]{0}', space=sflag, size = 0x8, scoped, tag = 'scoped memory for tpu_custom_call.1']
    #allocation6 [shape = 'u8[131072]{0}', space=vmem, size = 0x20000, scoped, tag = 'input window, operand 1']
    #allocation7 [shape = 's32[2]{0}', space=sflag, size = 0x8, scoped, tag = 'scoped memory for tpu_custom_call.1']
    #allocation8 [shape = 'u8[1024]{0}', space=vmem, size = 0x400, scoped, tag = 'input window, operand 3']
    #allocation9 [shape = 'u8[196608]{0}', space=vmem, size = 0x30000, scoped, tag = 'input window, operand 4']
    #allocation10 [shape = 's32[2]{0}', space=sflag, size = 0x8, scoped, tag = 'scoped memory for tpu_custom_call.1']
    #allocation11 [shape = 'u8[65536]{0}', space=vmem, size = 0x10000, scoped, tag = 'input window, operand 6']
    #allocation12 [shape = 'u8[1024]{0}', space=vmem, size = 0x400, scoped, tag = 'input window, operand 7']
    #allocation13 [shape = 's32[2]{0}', space=sflag, size = 0x8, scoped, tag = 'scoped memory for tpu_custom_call.1']
    #allocation14 [shape = 'u8[1024]{0}', space=vmem, size = 0x400, scoped, tag = 'input window, operand 8']
    #allocation15 [shape = 'u8[1024]{0}', space=vmem, size = 0x400, scoped, tag = 'input window, operand 9']
    #allocation16 [shape = 's32[2]{0}', space=sflag, size = 0x8, scoped, tag = 'scoped memory for tpu_custom_call.1']
    #allocation17 [shape = 'u8[262144]{0}', space=vmem, size = 0x40000, scoped, tag = 'input window, operand 10']
    #allocation18 [shape = 'u8[262144]{0}', space=vmem, size = 0x40000, scoped, tag = 'input window, operand 12']
    #allocation19 [shape = 's32[2]{0}', space=sflag, size = 0x8, scoped, tag = 'scoped memory for tpu_custom_call.1']
    #allocation20 [shape = 'u8[131072]{0}', space=vmem, size = 0x20000, scoped, tag = 'output window, operand 0']
    %21 = vsyncpa [#allocation4], 0
    %22 = vsyncpa [#allocation7], 0
    %s23 = scalar_lea.sflag [#allocation7], 1
    %24 = vsyncpa %s23, 0
    %25 = vsyncpa [#allocation10], 0
    %s26 = scalar_lea.sflag [#allocation10], 1
    %27 = vsyncpa %s26, 0
    %28 = vsyncpa [#allocation13], 0
    %s29 = scalar_lea.sflag [#allocation13], 1
    %30 = vsyncpa %s29, 0
    %31 = vsyncpa [#allocation16], 0
    %s32 = scalar_lea.sflag [#allocation16], 1
    %33 = vsyncpa %s32, 0
    %34 = vsyncpa [#allocation19], 0
    %s35 = scalar_lea.sflag [#allocation19], 1
    %36 = vsyncpa %s35, 0
    %37 = vsyncpa [#allocation5], 0
    %s38 = scalar_lea.sflag [#allocation5], 1
    %39 = vsyncpa %s38, 0
    loop: start=0, step=1, limit=6
    $region2: #{tpu_custom_call.1} parent=1 // loop_pre_header
      _
    $region3: #{tpu_custom_call.1} parent=1 // loop_header
      %s41 = sphi 0, %s45
      %p42 = scmp.ge.s32.totalorder %s41, 6
      %s48 = sphi 0, %s60
      %s49 = sphi 0, %s56
      %s50 = sphi 0, %s48
      %s51 = sphi 0, %s49
      %s52 = sphi 0, %s50
      %s53 = sphi 0, %s51
      %s61 = sphi 0, %s61
      %s63 = sphi 0, %s61
      %s64 = sphi 0, %s63
      %s78 = sphi 0, %s64
      %s84 = sphi 0, %s86
      %s87 = sphi 0, %s84
      %s88 = sphi 0, %s87
      %s104 = sphi 0, %s88
      %s110 = sphi 0, %s112
      %s113 = sphi 0, %s110
      %s114 = sphi 0, %s113
      %s130 = sphi 0, %s114
      %s136 = sphi 0, %s138
      %s139 = sphi 0, %s136
      %s140 = sphi 0, %s139
      %s156 = sphi 0, %s140
      %s162 = sphi 0, %s164
      %s165 = sphi 0, %s162
      %s166 = sphi 0, %s165
      %s182 = sphi 0, %s166
      %s188 = sphi 0, %s190
      %s191 = sphi 0, %s188
      %s192 = sphi 0, %s191
      %s208 = sphi 0, %s192
      %s214 = sphi 0, %s216
      %s217 = sphi 0, %s214
      %s218 = sphi 0, %s217
      %s234 = sphi 0, %s218
      %s240 = sphi 0, %s242
      %s243 = sphi 0, %s240
      %s244 = sphi 0, %s243
      %s260 = sphi 0, %s244
      %s266 = sphi 0, %s268
      %s269 = sphi 0, %s266
      %s270 = sphi 0, %s269
      %s286 = sphi 0, %s270
      %s292 = sphi 0, %s294
      %s295 = sphi 0, %s292
      %s296 = sphi 0, %s295
      %s312 = sphi 0, %s296
      %s318 = sphi 0, %s320
      %s321 = sphi 0, %s318
      %s322 = sphi 0, %s321
      %s338 = sphi 0, %s322
      %s344 = sphi 0, %s346
      %s347 = sphi 0, %s344
      %s348 = sphi 0, %s347
      %s364 = sphi 0, %s348
      %s370 = sphi 0, %s372
      %s373 = sphi 0, %s370
      %s374 = sphi 0, %s373
      %s390 = sphi 0, %s374
      %s396 = sphi 0, %s398
      %s399 = sphi 0, %s396
      %s400 = sphi 0, %s399
      %s416 = sphi 0, %s400
      %s420 = sphi 0, %s420
      %s422 = sphi 0, %s420
      %s423 = sphi 0, %s422
      %s437 = sphi 0, %s423
      %s441 = sphi 0, %s441
      %s443 = sphi 0, %s441
      %s444 = sphi 0, %s443
      %s458 = sphi 0, %s444
      %s464 = sphi 0, %s466
      %s467 = sphi 0, %s464
      %s468 = sphi 0, %s467
      %s484 = sphi 0, %s468
    $region4: #{tpu_custom_call.1} parent=1 // loop_header_branch
      %44 = sbr.rel (%p42) target = $region8
    $region5: #{tpu_custom_call.1} parent=1 // loop_body
      %s46 = ssub.s32 %s41, 1
      %s47 = ssub.s32 %s41, 2
      %s54 = sadd.s32 1, %s49
      %p55 = scmp.ge.s32.totalorder %s54, 2
      %s56 = scalar_select %p55, 0, %s54
      %s57 = sadd.s32 1, %s48
      %s58 = scalar_select %p55, %s57, %s48
      %p59 = scmp.ge.s32.totalorder %s58, 2
      %s60 = scalar_select %p59, 0, %s58
      %s62 = sadd.s32 %s61, 1
      %p65 = scmp.eq.s32.totalorder %s41, 3
      %p66 = scmp.ne.s32.totalorder %s61, %s63
      %p67 = scmp.eq.s32.totalorder %s41, 0
      %p68 = por %p66, %p67
      %p69 = scmp.ne.s32.totalorder %s61, %s63
      %p70 = scmp.eq.s32.totalorder %s46, 3
      %p71 = por %p69, %p70
      %p72 = scmp.ne.s32.totalorder %s63, %s64
      %p73 = scmp.eq.s32.totalorder %s46, 0
      %p74 = por %p72, %p73
      %p75 = scmp.ne.s32.totalorder %s63, %s64
      %p76 = scmp.eq.s32.totalorder %s47, 3
      %p77 = por %p75, %p76
      %p79 = scmp.ne.s32.totalorder %s64, %s78
      %p80 = scmp.eq.s32.totalorder %s47, 0
      %p81 = por %p79, %p80
      %s82 = ssub.s32 %s48, %s60
      %p83 = scmp.eq.s32.totalorder %s82, 0
      %s85 = sadd.s32 %s84, 1
      %s86 = scalar_select %p83, %s84, %s85
      %p89 = pneg %p83
      %p90 = scmp.eq.s32.totalorder %s41, 3
      %p91 = por %p89, %p90
      %p92 = scmp.ne.s32.totalorder %s84, %s87
      %p93 = scmp.eq.s32.totalorder %s41, 0
      %p94 = por %p92, %p93
      %p95 = scmp.ne.s32.totalorder %s84, %s87
      %p96 = scmp.eq.s32.totalorder %s46, 3
      %p97 = por %p95, %p96
      %p98 = scmp.ne.s32.totalorder %s87, %s88
      %p99 = scmp.eq.s32.totalorder %s46, 0
      %p100 = por %p98, %p99
      %p101 = scmp.ne.s32.totalorder %s87, %s88
      %p102 = scmp.eq.s32.totalorder %s47, 3
      %p103 = por %p101, %p102
      %p105 = scmp.ne.s32.totalorder %s88, %s104
      %p106 = scmp.eq.s32.totalorder %s47, 0
      %p107 = por %p105, %p106
      %s108 = ssub.s32 %s49, %s56
      %p109 = scmp.eq.s32.totalorder %s108, 0
      %s111 = sadd.s32 %s110, 1
      %s112 = scalar_select %p109, %s110, %s111
      %p115 = pneg %p109
      %p116 = scmp.eq.s32.totalorder %s41, 3
      %p117 = por %p115, %p116
      %p118 = scmp.ne.s32.totalorder %s110, %s113
      %p119 = scmp.eq.s32.totalorder %s41, 0
      %p120 = por %p118, %p119
      %p121 = scmp.ne.s32.totalorder %s110, %s113
      %p122 = scmp.eq.s32.totalorder %s46, 3
      %p123 = por %p121, %p122
      %p124 = scmp.ne.s32.totalorder %s113, %s114
      %p125 = scmp.eq.s32.totalorder %s46, 0
      %p126 = por %p124, %p125
      %p127 = scmp.ne.s32.totalorder %s113, %s114
      %p128 = scmp.eq.s32.totalorder %s47, 3
      %p129 = por %p127, %p128
      %p131 = scmp.ne.s32.totalorder %s114, %s130
      %p132 = scmp.eq.s32.totalorder %s47, 0
      %p133 = por %p131, %p132
      %s134 = ssub.s32 %s49, %s56
      %p135 = scmp.eq.s32.totalorder %s134, 0
      %s137 = sadd.s32 %s136, 1
      %s138 = scalar_select %p135, %s136, %s137
      %p141 = pneg %p135
      %p142 = scmp.eq.s32.totalorder %s41, 3
      %p143 = por %p141, %p142
      %p144 = scmp.ne.s32.totalorder %s136, %s139
      %p145 = scmp.eq.s32.totalorder %s41, 0
      %p146 = por %p144, %p145
      %p147 = scmp.ne.s32.totalorder %s136, %s139
      %p148 = scmp.eq.s32.totalorder %s46, 3
      %p149 = por %p147, %p148
      %p150 = scmp.ne.s32.totalorder %s139, %s140
      %p151 = scmp.eq.s32.totalorder %s46, 0
      %p152 = por %p150, %p151
      %p153 = scmp.ne.s32.totalorder %s139, %s140
      %p154 = scmp.eq.s32.totalorder %s47, 3
      %p155 = por %p153, %p154
      %p157 = scmp.ne.s32.totalorder %s140, %s156
      %p158 = scmp.eq.s32.totalorder %s47, 0
      %p159 = por %p157, %p158
      %s160 = ssub.s32 %s49, %s56
      %p161 = scmp.eq.s32.totalorder %s160, 0
      %s163 = sadd.s32 %s162, 1
      %s164 = scalar_select %p161, %s162, %s163
      %p167 = pneg %p161
      %p168 = scmp.eq.s32.totalorder %s41, 3
      %p169 = por %p167, %p168
      %p170 = scmp.ne.s32.totalorder %s162, %s165
      %p171 = scmp.eq.s32.totalorder %s41, 0
      %p172 = por %p170, %p171
      %p173 = scmp.ne.s32.totalorder %s162, %s165
      %p174 = scmp.eq.s32.totalorder %s46, 3
      %p175 = por %p173, %p174
      %p176 = scmp.ne.s32.totalorder %s165, %s166
      %p177 = scmp.eq.s32.totalorder %s46, 0
      %p178 = por %p176, %p177
      %p179 = scmp.ne.s32.totalorder %s165, %s166
      %p180 = scmp.eq.s32.totalorder %s47, 3
      %p181 = por %p179, %p180
      %p183 = scmp.ne.s32.totalorder %s166, %s182
      %p184 = scmp.eq.s32.totalorder %s47, 0
      %p185 = por %p183, %p184
      %s186 = ssub.s32 %s49, %s56
      %p187 = scmp.eq.s32.totalorder %s186, 0
      %s189 = sadd.s32 %s188, 1
      %s190 = scalar_select %p187, %s188, %s189
      %p193 = pneg %p187
      %p194 = scmp.eq.s32.totalorder %s41, 3
      %p195 = por %p193, %p194
      %p196 = scmp.ne.s32.totalorder %s188, %s191
      %p197 = scmp.eq.s32.totalorder %s41, 0
      %p198 = por %p196, %p197
      %p199 = scmp.ne.s32.totalorder %s188, %s191
      %p200 = scmp.eq.s32.totalorder %s46, 3
      %p201 = por %p199, %p200
      %p202 = scmp.ne.s32.totalorder %s191, %s192
      %p203 = scmp.eq.s32.totalorder %s46, 0
      %p204 = por %p202, %p203
      %p205 = scmp.ne.s32.totalorder %s191, %s192
      %p206 = scmp.eq.s32.totalorder %s47, 3
      %p207 = por %p205, %p206
      %p209 = scmp.ne.s32.totalorder %s192, %s208
      %p210 = scmp.eq.s32.totalorder %s47, 0
      %p211 = por %p209, %p210
      %s212 = ssub.s32 %s49, %s56
      %p213 = scmp.eq.s32.totalorder %s212, 0
      %s215 = sadd.s32 %s214, 1
      %s216 = scalar_select %p213, %s214, %s215
      %p219 = pneg %p213
      %p220 = scmp.eq.s32.totalorder %s41, 3
      %p221 = por %p219, %p220
      %p222 = scmp.ne.s32.totalorder %s214, %s217
      %p223 = scmp.eq.s32.totalorder %s41, 0
      %p224 = por %p222, %p223
      %p225 = scmp.ne.s32.totalorder %s214, %s217
      %p226 = scmp.eq.s32.totalorder %s46, 3
      %p227 = por %p225, %p226
      %p228 = scmp.ne.s32.totalorder %s217, %s218
      %p229 = scmp.eq.s32.totalorder %s46, 0
      %p230 = por %p228, %p229
      %p231 = scmp.ne.s32.totalorder %s217, %s218
      %p232 = scmp.eq.s32.totalorder %s47, 3
      %p233 = por %p231, %p232
      %p235 = scmp.ne.s32.totalorder %s218, %s234
      %p236 = scmp.eq.s32.totalorder %s47, 0
      %p237 = por %p235, %p236
      %s238 = ssub.s32 %s49, %s56
      %p239 = scmp.eq.s32.totalorder %s238, 0
      %s241 = sadd.s32 %s240, 1
      %s242 = scalar_select %p239, %s240, %s241
      %p245 = pneg %p239
      %p246 = scmp.eq.s32.totalorder %s41, 3
      %p247 = por %p245, %p246
      %p248 = scmp.ne.s32.totalorder %s240, %s243
      %p249 = scmp.eq.s32.totalorder %s41, 0
      %p250 = por %p248, %p249
      %p251 = scmp.ne.s32.totalorder %s240, %s243
      %p252 = scmp.eq.s32.totalorder %s46, 3
      %p253 = por %p251, %p252
      %p254 = scmp.ne.s32.totalorder %s243, %s244
      %p255 = scmp.eq.s32.totalorder %s46, 0
      %p256 = por %p254, %p255
      %p257 = scmp.ne.s32.totalorder %s243, %s244
      %p258 = scmp.eq.s32.totalorder %s47, 3
      %p259 = por %p257, %p258
      %p261 = scmp.ne.s32.totalorder %s244, %s260
      %p262 = scmp.eq.s32.totalorder %s47, 0
      %p263 = por %p261, %p262
      %s264 = ssub.s32 %s49, %s56
      %p265 = scmp.eq.s32.totalorder %s264, 0
      %s267 = sadd.s32 %s266, 1
      %s268 = scalar_select %p265, %s266, %s267
      %p271 = pneg %p265
      %p272 = scmp.eq.s32.totalorder %s41, 3
      %p273 = por %p271, %p272
      %p274 = scmp.ne.s32.totalorder %s266, %s269
      %p275 = scmp.eq.s32.totalorder %s41, 0
      %p276 = por %p274, %p275
      %p277 = scmp.ne.s32.totalorder %s266, %s269
      %p278 = scmp.eq.s32.totalorder %s46, 3
      %p279 = por %p277, %p278
      %p280 = scmp.ne.s32.totalorder %s269, %s270
      %p281 = scmp.eq.s32.totalorder %s46, 0
      %p282 = por %p280, %p281
      %p283 = scmp.ne.s32.totalorder %s269, %s270
      %p284 = scmp.eq.s32.totalorder %s47, 3
      %p285 = por %p283, %p284
      %p287 = scmp.ne.s32.totalorder %s270, %s286
      %p288 = scmp.eq.s32.totalorder %s47, 0
      %p289 = por %p287, %p288
      %s290 = ssub.s32 %s49, %s56
      %p291 = scmp.eq.s32.totalorder %s290, 0
      %s293 = sadd.s32 %s292, 1
      %s294 = scalar_select %p291, %s292, %s293
      %p297 = pneg %p291
      %p298 = scmp.eq.s32.totalorder %s41, 3
      %p299 = por %p297, %p298
      %p300 = scmp.ne.s32.totalorder %s292, %s295
      %p301 = scmp.eq.s32.totalorder %s41, 0
      %p302 = por %p300, %p301
      %p303 = scmp.ne.s32.totalorder %s292, %s295
      %p304 = scmp.eq.s32.totalorder %s46, 3
      %p305 = por %p303, %p304
      %p306 = scmp.ne.s32.totalorder %s295, %s296
      %p307 = scmp.eq.s32.totalorder %s46, 0
      %p308 = por %p306, %p307
      %p309 = scmp.ne.s32.totalorder %s295, %s296
      %p310 = scmp.eq.s32.totalorder %s47, 3
      %p311 = por %p309, %p310
      %p313 = scmp.ne.s32.totalorder %s296, %s312
      %p314 = scmp.eq.s32.totalorder %s47, 0
      %p315 = por %p313, %p314
      %s316 = ssub.s32 %s49, %s56
      %p317 = scmp.eq.s32.totalorder %s316, 0
      %s319 = sadd.s32 %s318, 1
      %s320 = scalar_select %p317, %s318, %s319
      %p323 = pneg %p317
      %p324 = scmp.eq.s32.totalorder %s41, 3
      %p325 = por %p323, %p324
      %p326 = scmp.ne.s32.totalorder %s318, %s321
      %p327 = scmp.eq.s32.totalorder %s41, 0
      %p328 = por %p326, %p327
      %p329 = scmp.ne.s32.totalorder %s318, %s321
      %p330 = scmp.eq.s32.totalorder %s46, 3
      %p331 = por %p329, %p330
      %p332 = scmp.ne.s32.totalorder %s321, %s322
      %p333 = scmp.eq.s32.totalorder %s46, 0
      %p334 = por %p332, %p333
      %p335 = scmp.ne.s32.totalorder %s321, %s322
      %p336 = scmp.eq.s32.totalorder %s47, 3
      %p337 = por %p335, %p336
      %p339 = scmp.ne.s32.totalorder %s322, %s338
      %p340 = scmp.eq.s32.totalorder %s47, 0
      %p341 = por %p339, %p340
      %s342 = ssub.s32 %s49, %s56
      %p343 = scmp.eq.s32.totalorder %s342, 0
      %s345 = sadd.s32 %s344, 1
      %s346 = scalar_select %p343, %s344, %s345
      %p349 = pneg %p343
      %p350 = scmp.eq.s32.totalorder %s41, 3
      %p351 = por %p349, %p350
      %p352 = scmp.ne.s32.totalorder %s344, %s347
      %p353 = scmp.eq.s32.totalorder %s41, 0
      %p354 = por %p352, %p353
      %p355 = scmp.ne.s32.totalorder %s344, %s347
      %p356 = scmp.eq.s32.totalorder %s46, 3
      %p357 = por %p355, %p356
      %p358 = scmp.ne.s32.totalorder %s347, %s348
      %p359 = scmp.eq.s32.totalorder %s46, 0
      %p360 = por %p358, %p359
      %p361 = scmp.ne.s32.totalorder %s347, %s348
      %p362 = scmp.eq.s32.totalorder %s47, 3
      %p363 = por %p361, %p362
      %p365 = scmp.ne.s32.totalorder %s348, %s364
      %p366 = scmp.eq.s32.totalorder %s47, 0
      %p367 = por %p365, %p366
      %s368 = ssub.s32 %s49, %s56
      %p369 = scmp.eq.s32.totalorder %s368, 0
      %s371 = sadd.s32 %s370, 1
      %s372 = scalar_select %p369, %s370, %s371
      %p375 = pneg %p369
      %p376 = scmp.eq.s32.totalorder %s41, 3
      %p377 = por %p375, %p376
      %p378 = scmp.ne.s32.totalorder %s370, %s373
      %p379 = scmp.eq.s32.totalorder %s41, 0
      %p380 = por %p378, %p379
      %p381 = scmp.ne.s32.totalorder %s370, %s373
      %p382 = scmp.eq.s32.totalorder %s46, 3
      %p383 = por %p381, %p382
      %p384 = scmp.ne.s32.totalorder %s373, %s374
      %p385 = scmp.eq.s32.totalorder %s46, 0
      %p386 = por %p384, %p385
      %p387 = scmp.ne.s32.totalorder %s373, %s374
      %p388 = scmp.eq.s32.totalorder %s47, 3
      %p389 = por %p387, %p388
      %p391 = scmp.ne.s32.totalorder %s374, %s390
      %p392 = scmp.eq.s32.totalorder %s47, 0
      %p393 = por %p391, %p392
      %s394 = ssub.s32 %s49, %s56
      %p395 = scmp.eq.s32.totalorder %s394, 0
      %s397 = sadd.s32 %s396, 1
      %s398 = scalar_select %p395, %s396, %s397
      %p401 = pneg %p395
      %p402 = scmp.eq.s32.totalorder %s41, 3
      %p403 = por %p401, %p402
      %p404 = scmp.ne.s32.totalorder %s396, %s399
      %p405 = scmp.eq.s32.totalorder %s41, 0
      %p406 = por %p404, %p405
      %p407 = scmp.ne.s32.totalorder %s396, %s399
      %p408 = scmp.eq.s32.totalorder %s46, 3
      %p409 = por %p407, %p408
      %p410 = scmp.ne.s32.totalorder %s399, %s400
      %p411 = scmp.eq.s32.totalorder %s46, 0
      %p412 = por %p410, %p411
      %p413 = scmp.ne.s32.totalorder %s399, %s400
      %p414 = scmp.eq.s32.totalorder %s47, 3
      %p415 = por %p413, %p414
      %p417 = scmp.ne.s32.totalorder %s400, %s416
      %p418 = scmp.eq.s32.totalorder %s47, 0
      %p419 = por %p417, %p418
      %s421 = sadd.s32 %s420, 1
      %p424 = scmp.eq.s32.totalorder %s41, 3
      %p425 = scmp.ne.s32.totalorder %s420, %s422
      %p426 = scmp.eq.s32.totalorder %s41, 0
      %p427 = por %p425, %p426
      %p428 = scmp.ne.s32.totalorder %s420, %s422
      %p429 = scmp.eq.s32.totalorder %s46, 3
      %p430 = por %p428, %p429
      %p431 = scmp.ne.s32.totalorder %s422, %s423
      %p432 = scmp.eq.s32.totalorder %s46, 0
      %p433 = por %p431, %p432
      %p434 = scmp.ne.s32.totalorder %s422, %s423
      %p435 = scmp.eq.s32.totalorder %s47, 3
      %p436 = por %p434, %p435
      %p438 = scmp.ne.s32.totalorder %s423, %s437
      %p439 = scmp.eq.s32.totalorder %s47, 0
      %p440 = por %p438, %p439
      %s442 = sadd.s32 %s441, 1
      %p445 = scmp.eq.s32.totalorder %s41, 3
      %p446 = scmp.ne.s32.totalorder %s441, %s443
      %p447 = scmp.eq.s32.totalorder %s41, 0
      %p448 = por %p446, %p447
      %p449 = scmp.ne.s32.totalorder %s441, %s443
      %p450 = scmp.eq.s32.totalorder %s46, 3
      %p451 = por %p449, %p450
      %p452 = scmp.ne.s32.totalorder %s443, %s444
      %p453 = scmp.eq.s32.totalorder %s46, 0
      %p454 = por %p452, %p453
      %p455 = scmp.ne.s32.totalorder %s443, %s444
      %p456 = scmp.eq.s32.totalorder %s47, 3
      %p457 = por %p455, %p456
      %p459 = scmp.ne.s32.totalorder %s444, %s458
      %p460 = scmp.eq.s32.totalorder %s47, 0
      %p461 = por %p459, %p460
      %s462 = ssub.s32 %s48, %s60
      %p463 = scmp.eq.s32.totalorder %s462, 0
      %s465 = sadd.s32 %s464, 1
      %s466 = scalar_select %p463, %s464, %s465
      %p469 = pneg %p463
      %p470 = scmp.eq.s32.totalorder %s41, 3
      %p471 = por %p469, %p470
      %p472 = scmp.ne.s32.totalorder %s464, %s467
      %p473 = scmp.eq.s32.totalorder %s41, 0
      %p474 = por %p472, %p473
      %p475 = scmp.ne.s32.totalorder %s464, %s467
      %p476 = scmp.eq.s32.totalorder %s46, 3
      %p477 = por %p475, %p476
      %p478 = scmp.ne.s32.totalorder %s467, %s468
      %p479 = scmp.eq.s32.totalorder %s46, 0
      %p480 = por %p478, %p479
      %p481 = scmp.ne.s32.totalorder %s467, %s468
      %p482 = scmp.eq.s32.totalorder %s47, 3
      %p483 = por %p481, %p482
      %p485 = scmp.ne.s32.totalorder %s468, %s484
      %p486 = scmp.eq.s32.totalorder %s47, 0
      %p487 = por %p485, %p486
      %p488 = scmp.le.s32.totalorder 1, %s41
      %p489 = scmp.lt.s32.totalorder %s41, 5
      %p490 = pnand %p488, %p489
      %p491 = pneg %p490
      // Predicated region
      $region9: #{tpu_custom_call.1} parent=5 // pred_check
        _
      $region10: #{tpu_custom_call.1} parent=5 // pred_check_branch
        %493 = sbr.rel (%p490) target = $region12
      $region11: #{tpu_custom_call.1} parent=5 // pred_region
        %s494 = ssub.s32 %s41, 1
        // Predicated region
        $region13: #{tpu_custom_call.1} parent=11 // pred_check
          %p495 = pneg %p74
        $region14: #{tpu_custom_call.1} parent=11 // pred_check_branch
          %497 = sbr.rel (%p495) target = $region16
        $region15: #{tpu_custom_call.1} parent=11 // pred_region
          %s499 = ssub.s32 1024, 1024
          %500 = vsyncadd [#allocation4], %s499
          %s501 = sshll.u32 [#allocation3], 4
          %s502 = int_to_ptr.vmem [resolvable:$true] %s501
          %507 = dma.hbm_to_vmem [thread:$0]  %s0, 1024, %s502, [#allocation4], 128, 128, 8
        $region16: #{tpu_custom_call.1} parent=11 // pred_fallthru
          _
        // Predicated region
        $region17: #{tpu_custom_call.1} parent=11 // pred_check
          %p508 = pneg %p433
        $region18: #{tpu_custom_call.1} parent=11 // pred_check_branch
          %510 = sbr.rel (%p508) target = $region20
        $region19: #{tpu_custom_call.1} parent=11 // pred_region
          _
        $region20: #{tpu_custom_call.1} parent=11 // pred_fallthru
          _
        // Predicated region
        $region21: #{tpu_custom_call.1} parent=11 // pred_check
          %p511 = pneg %p454
        $region22: #{tpu_custom_call.1} parent=11 // pred_check_branch
          %513 = sbr.rel (%p511) target = $region24
        $region23: #{tpu_custom_call.1} parent=11 // pred_region
          _
        $region24: #{tpu_custom_call.1} parent=11 // pred_fallthru
          _
      $region12: #{tpu_custom_call.1} parent=5 // pred_fallthru
        _
      %p514 = scmp.lt.s32.totalorder %s41, 4
      // Predicated region
      $region25: #{tpu_custom_call.1} parent=5 // pred_check
        %p515 = pneg %p514
      $region26: #{tpu_custom_call.1} parent=5 // pred_check_branch
        %517 = sbr.rel (%p515) target = $region28
      $region27: #{tpu_custom_call.1} parent=5 // pred_region
        // Predicated region
        $region29: #{tpu_custom_call.1} parent=27 // pred_check
          %p518 = pneg %p94
        $region30: #{tpu_custom_call.1} parent=27 // pred_check_branch
          %520 = sbr.rel (%p518) target = $region32
        $region31: #{tpu_custom_call.1} parent=27 // pred_region
          %s521 = sand.u32 %s41, 1
          %s522 = scalar_lea.sflag [#allocation7], %s521
          %s523 = sand.u32 %s84, 1
          %s524 = smul.addr %s523, 128
          %s525 = scalar_lea.vmem [#allocation6], %s524
          %s526 = smul.u32 16, %s48
          %s528 = ssub.s32 2048, 2048
          %529 = vsyncadd %s522, %s528
          %s530 = smul.addr %s526, 128
          %s531 = scalar_lea.hbm %s1, %s530
          %s532 = sshll.u32 %s525, 4
          %s533 = int_to_ptr.vmem [resolvable:$true] %s532
          %538 = dma.hbm_to_vmem [thread:$0]  %s531, 2048, %s533, %s522, 128, 128, 8
        $region32: #{tpu_custom_call.1} parent=27 // pred_fallthru
          _
        // Predicated region
        $region33: #{tpu_custom_call.1} parent=27 // pred_check
          %p539 = pneg %p120
        $region34: #{tpu_custom_call.1} parent=27 // pred_check_branch
          %541 = sbr.rel (%p539) target = $region36
        $region35: #{tpu_custom_call.1} parent=27 // pred_region
          %p542 = scmp.lt.s32.totalorder %s49, 1
          %s543 = scalar_select %p542, %s49, 1
          %s544 = scalar_lea.vmem %s2, %s543
        $region36: #{tpu_custom_call.1} parent=27 // pred_fallthru
          _
        // Predicated region
        $region37: #{tpu_custom_call.1} parent=27 // pred_check
          %p545 = pneg %p146
        $region38: #{tpu_custom_call.1} parent=27 // pred_check_branch
          %547 = sbr.rel (%p545) target = $region40
        $region39: #{tpu_custom_call.1} parent=27 // pred_region
          %s548 = sand.u32 %s41, 1
          %s549 = scalar_lea.sflag [#allocation7], %s548
          %s550 = sand.u32 %s136, 1
          %s551 = scalar_lea.vmem [#allocation8], %s550
          %s553 = ssub.s32 16, 16
          %554 = vsyncadd %s549, %s553
          %s555 = smul.addr %s49, 16
          %s556 = scalar_lea.hbm %s3, %s555
          %s558 = sshll.u32 %s551, 4
          %s559 = int_to_ptr.vmem [resolvable:$true] %s558
          %561 = dma.hbm_to_vmem [thread:$0]  %s556, 16, %s559, %s549
        $region40: #{tpu_custom_call.1} parent=27 // pred_fallthru
          _
        // Predicated region
        $region41: #{tpu_custom_call.1} parent=27 // pred_check
          %p562 = pneg %p172
        $region42: #{tpu_custom_call.1} parent=27 // pred_check_branch
          %564 = sbr.rel (%p562) target = $region44
        $region43: #{tpu_custom_call.1} parent=27 // pred_region
          %s565 = sand.u32 %s41, 1
          %s566 = scalar_lea.sflag [#allocation10], %s565
          %s567 = sand.u32 %s162, 1
          %s568 = smul.addr %s567, 192
          %s569 = scalar_lea.vmem [#allocation9], %s568
          %s571 = ssub.s32 3072, 3072
          %572 = vsyncadd %s566, %s571
          %s573 = smul.addr %s49, 48
          %s574 = smul.addr %s573, 64
          %s575 = scalar_lea.hbm %s4, %s574
          %s576 = sshll.u32 %s569, 4
          %s577 = int_to_ptr.vmem [resolvable:$true] %s576
          %582 = dma.hbm_to_vmem [thread:$0]  %s575, 3072, %s577, %s566, 192, 192, 12
        $region44: #{tpu_custom_call.1} parent=27 // pred_fallthru
          _
        // Predicated region
        $region45: #{tpu_custom_call.1} parent=27 // pred_check
          %p583 = pneg %p198
        $region46: #{tpu_custom_call.1} parent=27 // pred_check_branch
          %585 = sbr.rel (%p583) target = $region48
        $region47: #{tpu_custom_call.1} parent=27 // pred_region
          %p586 = scmp.lt.s32.totalorder %s49, 1
          %s587 = scalar_select %p586, %s49, 1
          %s588 = smul.addr %s587, 3
          %s589 = scalar_lea.vmem %s5, %s588
        $region48: #{tpu_custom_call.1} parent=27 // pred_fallthru
          _
        // Predicated region
        $region49: #{tpu_custom_call.1} parent=27 // pred_check
          %p590 = pneg %p224
        $region50: #{tpu_custom_call.1} parent=27 // pred_check_branch
          %592 = sbr.rel (%p590) target = $region52
        $region51: #{tpu_custom_call.1} parent=27 // pred_region
          %s593 = sand.u32 %s41, 1
          %s594 = scalar_lea.sflag [#allocation10], %s593
          %s595 = sand.u32 %s214, 1
          %s596 = smul.addr %s595, 64
          %s597 = scalar_lea.vmem [#allocation11], %s596
          %s599 = ssub.s32 1024, 1024
          %600 = vsyncadd %s594, %s599
          %s601 = smul.addr %s49, 16
          %s602 = smul.addr %s601, 64
          %s603 = scalar_lea.hbm %s6, %s602
          %s604 = sshll.u32 %s597, 4
          %s605 = int_to_ptr.vmem [resolvable:$true] %s604
          %610 = dma.hbm_to_vmem [thread:$0]  %s603, 1024, %s605, %s594, 64, 64, 4
        $region52: #{tpu_custom_call.1} parent=27 // pred_fallthru
          _
        // Predicated region
        $region53: #{tpu_custom_call.1} parent=27 // pred_check
          %p611 = pneg %p250
        $region54: #{tpu_custom_call.1} parent=27 // pred_check_branch
          %613 = sbr.rel (%p611) target = $region56
        $region55: #{tpu_custom_call.1} parent=27 // pred_region
          %s614 = sand.u32 %s41, 1
          %s615 = scalar_lea.sflag [#allocation13], %s614
          %s616 = sand.u32 %s240, 1
          %s617 = scalar_lea.vmem [#allocation12], %s616
          %s619 = ssub.s32 16, 16
          %620 = vsyncadd %s615, %s619
          %s621 = smul.addr %s49, 16
          %s622 = scalar_lea.hbm %s7, %s621
          %s624 = sshll.u32 %s617, 4
          %s625 = int_to_ptr.vmem [resolvable:$true] %s624
          %627 = dma.hbm_to_vmem [thread:$0]  %s622, 16, %s625, %s615
        $region56: #{tpu_custom_call.1} parent=27 // pred_fallthru
          _
        // Predicated region
        $region57: #{tpu_custom_call.1} parent=27 // pred_check
          %p628 = pneg %p276
        $region58: #{tpu_custom_call.1} parent=27 // pred_check_branch
          %630 = sbr.rel (%p628) target = $region60
        $region59: #{tpu_custom_call.1} parent=27 // pred_region
          %s631 = sand.u32 %s41, 1
          %s632 = scalar_lea.sflag [#allocation13], %s631
          %s633 = sand.u32 %s266, 1
          %s634 = scalar_lea.vmem [#allocation14], %s633
          %s636 = ssub.s32 16, 16
          %637 = vsyncadd %s632, %s636
          %s638 = smul.addr %s49, 16
          %s639 = scalar_lea.hbm %s8, %s638
          %s641 = sshll.u32 %s634, 4
          %s642 = int_to_ptr.vmem [resolvable:$true] %s641
          %644 = dma.hbm_to_vmem [thread:$0]  %s639, 16, %s642, %s632
        $region60: #{tpu_custom_call.1} parent=27 // pred_fallthru
          _
        // Predicated region
        $region61: #{tpu_custom_call.1} parent=27 // pred_check
          %p645 = pneg %p302
        $region62: #{tpu_custom_call.1} parent=27 // pred_check_branch
          %647 = sbr.rel (%p645) target = $region64
        $region63: #{tpu_custom_call.1} parent=27 // pred_region
          %s648 = sand.u32 %s41, 1
          %s649 = scalar_lea.sflag [#allocation16], %s648
          %s650 = sand.u32 %s292, 1
          %s651 = scalar_lea.vmem [#allocation15], %s650
          %s653 = ssub.s32 16, 16
          %654 = vsyncadd %s649, %s653
          %s655 = smul.addr %s49, 16
          %s656 = scalar_lea.hbm %s9, %s655
          %s658 = sshll.u32 %s651, 4
          %s659 = int_to_ptr.vmem [resolvable:$true] %s658
          %661 = dma.hbm_to_vmem [thread:$0]  %s656, 16, %s659, %s649
        $region64: #{tpu_custom_call.1} parent=27 // pred_fallthru
          _
        // Predicated region
        $region65: #{tpu_custom_call.1} parent=27 // pred_check
          %p662 = pneg %p328
        $region66: #{tpu_custom_call.1} parent=27 // pred_check_branch
          %664 = sbr.rel (%p662) target = $region68
        $region67: #{tpu_custom_call.1} parent=27 // pred_region
          %s665 = sand.u32 %s41, 1
          %s666 = scalar_lea.sflag [#allocation16], %s665
          %s667 = sand.u32 %s318, 1
          %s668 = smul.addr %s667, 256
          %s669 = scalar_lea.vmem [#allocation17], %s668
          %s671 = ssub.s32 4096, 4096
          %672 = vsyncadd %s666, %s671
          %s673 = smul.addr %s49, 64
          %s674 = smul.addr %s673, 64
          %s675 = scalar_lea.hbm %s10, %s674
          %s676 = sshll.u32 %s669, 4
          %s677 = int_to_ptr.vmem [resolvable:$true] %s676
          %682 = dma.hbm_to_vmem [thread:$0]  %s675, 4096, %s677, %s666, 256, 256, 16
        $region68: #{tpu_custom_call.1} parent=27 // pred_fallthru
          _
        // Predicated region
        $region69: #{tpu_custom_call.1} parent=27 // pred_check
          %p683 = pneg %p354
        $region70: #{tpu_custom_call.1} parent=27 // pred_check_branch
          %685 = sbr.rel (%p683) target = $region72
        $region71: #{tpu_custom_call.1} parent=27 // pred_region
          %p686 = scmp.lt.s32.totalorder %s49, 1
          %s687 = scalar_select %p686, %s49, 1
          %s688 = smul.addr %s687, 4
          %s689 = scalar_lea.vmem %s11, %s688
        $region72: #{tpu_custom_call.1} parent=27 // pred_fallthru
          _
        // Predicated region
        $region73: #{tpu_custom_call.1} parent=27 // pred_check
          %p690 = pneg %p380
        $region74: #{tpu_custom_call.1} parent=27 // pred_check_branch
          %692 = sbr.rel (%p690) target = $region76
        $region75: #{tpu_custom_call.1} parent=27 // pred_region
          %s693 = sand.u32 %s370, 1
          %s694 = scalar_lea.sflag [#allocation19], %s693
          %s695 = sand.u32 %s370, 1
          %s696 = smul.addr %s695, 256
          %s697 = scalar_lea.vmem [#allocation18], %s696
          %s699 = ssub.s32 4096, 4096
          %700 = vsyncadd %s694, %s699
          %s701 = smul.addr %s49, 64
          %s702 = smul.addr %s701, 64
          %s703 = scalar_lea.hbm %s12, %s702
          %s704 = sshll.u32 %s697, 4
          %s705 = int_to_ptr.vmem [resolvable:$true] %s704
          %710 = dma.hbm_to_vmem [thread:$0]  %s703, 4096, %s705, %s694, 64, 64, 4
        $region76: #{tpu_custom_call.1} parent=27 // pred_fallthru
          _
        // Predicated region
        $region77: #{tpu_custom_call.1} parent=27 // pred_check
          %p711 = pneg %p406
        $region78: #{tpu_custom_call.1} parent=27 // pred_check_branch
          %713 = sbr.rel (%p711) target = $region80
        $region79: #{tpu_custom_call.1} parent=27 // pred_region
          %p714 = scmp.lt.s32.totalorder %s49, 1
          %s715 = scalar_select %p714, %s49, 1
          %s716 = scalar_lea.vmem %s13, %s715
        $region80: #{tpu_custom_call.1} parent=27 // pred_fallthru
          _
      $region28: #{tpu_custom_call.1} parent=5 // pred_fallthru
        _
      %p717 = scmp.le.s32.totalorder 1, %s41
      %p718 = scmp.lt.s32.totalorder %s41, 5
      %p719 = pnand %p717, %p718
      %p720 = pneg %p719
      // Predicated region
      $region81: #{tpu_custom_call.1} parent=5 // pred_check
        _
      $region82: #{tpu_custom_call.1} parent=5 // pred_check_branch
        %722 = sbr.rel (%p719) target = $region84
      $region83: #{tpu_custom_call.1} parent=5 // pred_region
        %s723 = ssub.s32 %s41, 1
        // Predicated region
        $region85: #{tpu_custom_call.1} parent=83 // pred_check
          %p724 = pneg %p74
        $region86: #{tpu_custom_call.1} parent=83 // pred_check_branch
          %726 = sbr.rel (%p724) target = $region88
        $region87: #{tpu_custom_call.1} parent=83 // pred_region
          %727 = dma.done [#allocation4], 1024
        $region88: #{tpu_custom_call.1} parent=83 // pred_fallthru
          _
        %s728 = sand.u32 %s46, 1
        %s729 = scalar_lea.sflag [#allocation7], %s728
        %s730 = sand.u32 %s87, 1
        %s731 = smul.addr %s730, 128
        %s732 = scalar_lea.vmem [#allocation6], %s731
        // Predicated region
        $region89: #{tpu_custom_call.1} parent=83 // pred_check
          %p733 = pneg %p100
        $region90: #{tpu_custom_call.1} parent=83 // pred_check_branch
          %735 = sbr.rel (%p733) target = $region92
        $region91: #{tpu_custom_call.1} parent=83 // pred_region
          %736 = dma.done %s729, 2048
        $region92: #{tpu_custom_call.1} parent=83 // pred_fallthru
          _
        %s737 = sand.u32 %s46, 1
        %s738 = scalar_lea.sflag [#allocation7], %s737
        %s739 = sand.u32 %s139, 1
        %s740 = scalar_lea.vmem [#allocation8], %s739
        // Predicated region
        $region93: #{tpu_custom_call.1} parent=83 // pred_check
          %p741 = pneg %p152
        $region94: #{tpu_custom_call.1} parent=83 // pred_check_branch
          %743 = sbr.rel (%p741) target = $region96
        $region95: #{tpu_custom_call.1} parent=83 // pred_region
          %744 = dma.done %s738, 16
        $region96: #{tpu_custom_call.1} parent=83 // pred_fallthru
          _
        %s745 = sand.u32 %s46, 1
        %s746 = scalar_lea.sflag [#allocation10], %s745
        %s747 = sand.u32 %s165, 1
        %s748 = smul.addr %s747, 192
        %s749 = scalar_lea.vmem [#allocation9], %s748
        // Predicated region
        $region97: #{tpu_custom_call.1} parent=83 // pred_check
          %p750 = pneg %p178
        $region98: #{tpu_custom_call.1} parent=83 // pred_check_branch
          %752 = sbr.rel (%p750) target = $region100
        $region99: #{tpu_custom_call.1} parent=83 // pred_region
          %753 = dma.done %s746, 3072
        $region100: #{tpu_custom_call.1} parent=83 // pred_fallthru
          _
        %s754 = sand.u32 %s46, 1
        %s755 = scalar_lea.sflag [#allocation10], %s754
        %s756 = sand.u32 %s217, 1
        %s757 = smul.addr %s756, 64
        %s758 = scalar_lea.vmem [#allocation11], %s757
        // Predicated region
        $region101: #{tpu_custom_call.1} parent=83 // pred_check
          %p759 = pneg %p230
        $region102: #{tpu_custom_call.1} parent=83 // pred_check_branch
          %761 = sbr.rel (%p759) target = $region104
        $region103: #{tpu_custom_call.1} parent=83 // pred_region
          %762 = dma.done %s755, 1024
        $region104: #{tpu_custom_call.1} parent=83 // pred_fallthru
          _
        %s763 = sand.u32 %s46, 1
        %s764 = scalar_lea.sflag [#allocation13], %s763
        %s765 = sand.u32 %s243, 1
        %s766 = scalar_lea.vmem [#allocation12], %s765
        // Predicated region
        $region105: #{tpu_custom_call.1} parent=83 // pred_check
          %p767 = pneg %p256
        $region106: #{tpu_custom_call.1} parent=83 // pred_check_branch
          %769 = sbr.rel (%p767) target = $region108
        $region107: #{tpu_custom_call.1} parent=83 // pred_region
          %770 = dma.done %s764, 16
        $region108: #{tpu_custom_call.1} parent=83 // pred_fallthru
          _
        %s771 = sand.u32 %s46, 1
        %s772 = scalar_lea.sflag [#allocation13], %s771
        %s773 = sand.u32 %s269, 1
        %s774 = scalar_lea.vmem [#allocation14], %s773
        // Predicated region
        $region109: #{tpu_custom_call.1} parent=83 // pred_check
          %p775 = pneg %p282
        $region110: #{tpu_custom_call.1} parent=83 // pred_check_branch
          %777 = sbr.rel (%p775) target = $region112
        $region111: #{tpu_custom_call.1} parent=83 // pred_region
          %778 = dma.done %s772, 16
        $region112: #{tpu_custom_call.1} parent=83 // pred_fallthru
          _
        %s779 = sand.u32 %s46, 1
        %s780 = scalar_lea.sflag [#allocation16], %s779
        %s781 = sand.u32 %s295, 1
        %s782 = scalar_lea.vmem [#allocation15], %s781
        // Predicated region
        $region113: #{tpu_custom_call.1} parent=83 // pred_check
          %p783 = pneg %p308
        $region114: #{tpu_custom_call.1} parent=83 // pred_check_branch
          %785 = sbr.rel (%p783) target = $region116
        $region115: #{tpu_custom_call.1} parent=83 // pred_region
          %786 = dma.done %s780, 16
        $region116: #{tpu_custom_call.1} parent=83 // pred_fallthru
          _
        %s787 = sand.u32 %s46, 1
        %s788 = scalar_lea.sflag [#allocation16], %s787
        %s789 = sand.u32 %s321, 1
        %s790 = smul.addr %s789, 256
        %s791 = scalar_lea.vmem [#allocation17], %s790
        // Predicated region
        $region117: #{tpu_custom_call.1} parent=83 // pred_check
          %p792 = pneg %p334
        $region118: #{tpu_custom_call.1} parent=83 // pred_check_branch
          %794 = sbr.rel (%p792) target = $region120
        $region119: #{tpu_custom_call.1} parent=83 // pred_region
          %795 = dma.done %s788, 4096
        $region120: #{tpu_custom_call.1} parent=83 // pred_fallthru
          _
        %s796 = sand.u32 %s373, 1
        %s797 = scalar_lea.sflag [#allocation19], %s796
        %s798 = sand.u32 %s373, 1
        %s799 = smul.addr %s798, 256
        %s800 = scalar_lea.vmem [#allocation18], %s799
        // Predicated region
        $region121: #{tpu_custom_call.1} parent=83 // pred_check
          %p801 = pneg %p386
        $region122: #{tpu_custom_call.1} parent=83 // pred_check_branch
          %803 = sbr.rel (%p801) target = $region124
        $region123: #{tpu_custom_call.1} parent=83 // pred_region
          %804 = dma.done %s797, 4096
        $region124: #{tpu_custom_call.1} parent=83 // pred_fallthru
          _
        %p805 = pneg %p74
        %p806 = pneg %p71
        %s807 = sand.u32 %s46, 1
        %s808 = scalar_lea.sflag [#allocation7], %s807
        %s809 = sand.u32 %s87, 1
        %s810 = smul.addr %s809, 128
        %s811 = scalar_lea.vmem [#allocation6], %s810
        %p812 = pneg %p100
        %p813 = pneg %p97
        %p814 = scmp.lt.s32.totalorder %s51, 1
        %s815 = scalar_select %p814, %s51, 1
        %s816 = scalar_lea.vmem %s2, %s815
        %p817 = pneg %p126
        %p818 = pneg %p123
        %s819 = sand.u32 %s46, 1
        %s820 = scalar_lea.sflag [#allocation7], %s819
        %s821 = sand.u32 %s139, 1
        %s822 = scalar_lea.vmem [#allocation8], %s821
        %p823 = pneg %p152
        %p824 = pneg %p149
        %s825 = sand.u32 %s46, 1
        %s826 = scalar_lea.sflag [#allocation10], %s825
        %s827 = sand.u32 %s165, 1
        %s828 = smul.addr %s827, 192
        %s829 = scalar_lea.vmem [#allocation9], %s828
        %p830 = pneg %p178
        %p831 = pneg %p175
        %p832 = scmp.lt.s32.totalorder %s51, 1
        %s833 = scalar_select %p832, %s51, 1
        %s834 = smul.addr %s833, 3
        %s835 = scalar_lea.vmem %s5, %s834
        %p836 = pneg %p204
        %p837 = pneg %p201
        %s838 = sand.u32 %s46, 1
        %s839 = scalar_lea.sflag [#allocation10], %s838
        %s840 = sand.u32 %s217, 1
        %s841 = smul.addr %s840, 64
        %s842 = scalar_lea.vmem [#allocation11], %s841
        %p843 = pneg %p230
        %p844 = pneg %p227
        %s845 = sand.u32 %s46, 1
        %s846 = scalar_lea.sflag [#allocation13], %s845
        %s847 = sand.u32 %s243, 1
        %s848 = scalar_lea.vmem [#allocation12], %s847
        %p849 = pneg %p256
        %p850 = pneg %p253
        %s851 = sand.u32 %s46, 1
        %s852 = scalar_lea.sflag [#allocation13], %s851
        %s853 = sand.u32 %s269, 1
        %s854 = scalar_lea.vmem [#allocation14], %s853
        %p855 = pneg %p282
        %p856 = pneg %p279
        %s857 = sand.u32 %s46, 1
        %s858 = scalar_lea.sflag [#allocation16], %s857
        %s859 = sand.u32 %s295, 1
        %s860 = scalar_lea.vmem [#allocation15], %s859
        %p861 = pneg %p308
        %p862 = pneg %p305
        %s863 = sand.u32 %s46, 1
        %s864 = scalar_lea.sflag [#allocation16], %s863
        %s865 = sand.u32 %s321, 1
        %s866 = smul.addr %s865, 256
        %s867 = scalar_lea.vmem [#allocation17], %s866
        %p868 = pneg %p334
        %p869 = pneg %p331
        %p870 = scmp.lt.s32.totalorder %s51, 1
        %s871 = scalar_select %p870, %s51, 1
        %s872 = smul.addr %s871, 4
        %s873 = scalar_lea.vmem %s11, %s872
        %p874 = pneg %p360
        %p875 = pneg %p357
        %s876 = sand.u32 %s373, 1
        %s877 = scalar_lea.sflag [#allocation19], %s876
        %s878 = sand.u32 %s373, 1
        %s879 = smul.addr %s878, 256
        %s880 = scalar_lea.vmem [#allocation18], %s879
        %p881 = pneg %p386
        %p882 = pneg %p383
        %p883 = scmp.lt.s32.totalorder %s51, 1
        %s884 = scalar_select %p883, %s51, 1
        %s885 = scalar_lea.vmem %s13, %s884
        %p886 = pneg %p412
        %p887 = pneg %p409
        %p888 = pneg %p433
        %p889 = pneg %p430
        %p890 = pneg %p454
        %p891 = pneg %p451
        %p892 = pneg %p480
        %p893 = pneg %p477
        %s894 = sand.u32 %s467, 1
        %s895 = scalar_lea.sflag [#allocation5], %s894
        %s896 = sand.u32 %s467, 1
        %s897 = smul.addr %s896, 128
        %s898 = scalar_lea.vmem [#allocation20], %s897
        %s899 = smul.u32 16, %s50
        %p900 = scmp.lt.s32.totalorder %s51, 1
        %s901 = scalar_select %p900, %s51, 1
        %s902 = scalar_lea.vmem %s2, %s901
        %p903 = scmp.lt.s32.totalorder %s51, 1
        %s904 = scalar_select %p903, %s51, 1
        %s905 = smul.addr %s904, 3
        %s906 = scalar_lea.vmem %s5, %s905
        %p907 = scmp.lt.s32.totalorder %s51, 1
        %s908 = scalar_select %p907, %s51, 1
        %s909 = smul.addr %s908, 4
        %s910 = scalar_lea.vmem %s11, %s909
        %p911 = scmp.lt.s32.totalorder %s51, 1
        %s912 = scalar_select %p911, %s51, 1
        %s913 = scalar_lea.vmem %s13, %s912
        %s914 = smul.u32 16, %s50
        %p916 = scmp.eq.s32.totalorder %s51, 0
        // Predicated region
        $region125: #{tpu_custom_call.1} parent=83 // pred_check
          %p917 = pneg %p916
        $region126: #{tpu_custom_call.1} parent=83 // pred_check_branch
          %919 = sbr.rel (%p917) target = $region128
        $region127: #{tpu_custom_call.1} parent=83 // pred_region
          %v920 = vld [vmem:[%s732] sm:$0xff]
          %v921 = vld [vmem:[%s732 + $0x8] sm:$0xff]
          %v922 = vld [vmem:[%s732 + $0x10] sm:$0xff]
          %v923 = vld [vmem:[%s732 + $0x18] sm:$0xff]
          %v924 = vld [vmem:[%s732 + $0x20] sm:$0xff]
          %v925 = vld [vmem:[%s732 + $0x28] sm:$0xff]
          %v926 = vld [vmem:[%s732 + $0x30] sm:$0xff]
          %v927 = vld [vmem:[%s732 + $0x38] sm:$0xff]
          %v928 = vld [vmem:[%s732 + $0x40] sm:$0xff]
          %v929 = vld [vmem:[%s732 + $0x48] sm:$0xff]
          %v930 = vld [vmem:[%s732 + $0x50] sm:$0xff]
          %v931 = vld [vmem:[%s732 + $0x58] sm:$0xff]
          %v932 = vld [vmem:[%s732 + $0x60] sm:$0xff]
          %v933 = vld [vmem:[%s732 + $0x68] sm:$0xff]
          %v934 = vld [vmem:[%s732 + $0x70] sm:$0xff]
          %v935 = vld [vmem:[%s732 + $0x78] sm:$0xff]
          %936 = vst [vmem:[#allocation2] sm:$0xff] %v920
          %937 = vst [vmem:[#allocation2 + $0x8] sm:$0xff] %v921
          %938 = vst [vmem:[#allocation2 + $0x10] sm:$0xff] %v922
          %939 = vst [vmem:[#allocation2 + $0x18] sm:$0xff] %v923
          %940 = vst [vmem:[#allocation2 + $0x20] sm:$0xff] %v924
          %941 = vst [vmem:[#allocation2 + $0x28] sm:$0xff] %v925
          %942 = vst [vmem:[#allocation2 + $0x30] sm:$0xff] %v926
          %943 = vst [vmem:[#allocation2 + $0x38] sm:$0xff] %v927
          %944 = vst [vmem:[#allocation2 + $0x40] sm:$0xff] %v928
          %945 = vst [vmem:[#allocation2 + $0x48] sm:$0xff] %v929
          %946 = vst [vmem:[#allocation2 + $0x50] sm:$0xff] %v930
          %947 = vst [vmem:[#allocation2 + $0x58] sm:$0xff] %v931
          %948 = vst [vmem:[#allocation2 + $0x60] sm:$0xff] %v932
          %949 = vst [vmem:[#allocation2 + $0x68] sm:$0xff] %v933
          %950 = vst [vmem:[#allocation2 + $0x70] sm:$0xff] %v934
          %951 = vst [vmem:[#allocation2 + $0x78] sm:$0xff] %v935
        $region128: #{tpu_custom_call.1} parent=83 // pred_fallthru
          _
        %v952 = vld [vmem:[#allocation2] sm:$0xff]
        %v953 = vld [vmem:[#allocation2 + $0x8] sm:$0xff]
        %v954 = vld [vmem:[#allocation2 + $0x10] sm:$0xff]
        %v955 = vld [vmem:[#allocation2 + $0x18] sm:$0xff]
        %v956 = vld [vmem:[#allocation2 + $0x20] sm:$0xff]
        %v957 = vld [vmem:[#allocation2 + $0x28] sm:$0xff]
        %v958 = vld [vmem:[#allocation2 + $0x30] sm:$0xff]
        %v959 = vld [vmem:[#allocation2 + $0x38] sm:$0xff]
        %v960 = vld [vmem:[#allocation2 + $0x40] sm:$0xff]
        %v961 = vld [vmem:[#allocation2 + $0x48] sm:$0xff]
        %v962 = vld [vmem:[#allocation2 + $0x50] sm:$0xff]
        %v963 = vld [vmem:[#allocation2 + $0x58] sm:$0xff]
        %v964 = vld [vmem:[#allocation2 + $0x60] sm:$0xff]
        %v965 = vld [vmem:[#allocation2 + $0x68] sm:$0xff]
        %v966 = vld [vmem:[#allocation2 + $0x70] sm:$0xff]
        %v967 = vld [vmem:[#allocation2 + $0x78] sm:$0xff]
        %v968 = vld [vmem:[%s902] sm:$0x1]
        %v969 = vld [vmem:[%s740] sm:$0x1]
        %970 = vadd.xlane.f32.xlu0 %v952
        %v971 = vpop.xlane.xlu0 %970
        %972 = vadd.xlane.f32.xlu0 %v953
        %v973 = vpop.xlane.xlu0 %972
        %974 = vadd.xlane.f32.xlu0 %v954
        %v975 = vpop.xlane.xlu0 %974
        %976 = vadd.xlane.f32.xlu0 %v955
        %v977 = vpop.xlane.xlu0 %976
        %978 = vadd.xlane.f32.xlu0 %v956
        %v979 = vpop.xlane.xlu0 %978
        %980 = vadd.xlane.f32.xlu0 %v957
        %v981 = vpop.xlane.xlu0 %980
        %982 = vadd.xlane.f32.xlu0 %v958
        %v983 = vpop.xlane.xlu0 %982
        %984 = vadd.xlane.f32.xlu0 %v959
        %v985 = vpop.xlane.xlu0 %984
        %986 = vadd.xlane.f32.xlu0 %v960
        %v987 = vpop.xlane.xlu0 %986
        %988 = vadd.xlane.f32.xlu0 %v961
        %v989 = vpop.xlane.xlu0 %988
        %990 = vadd.xlane.f32.xlu0 %v962
        %v991 = vpop.xlane.xlu0 %990
        %992 = vadd.xlane.f32.xlu0 %v963
        %v993 = vpop.xlane.xlu0 %992
        %994 = vadd.xlane.f32.xlu0 %v964
        %v995 = vpop.xlane.xlu0 %994
        %996 = vadd.xlane.f32.xlu0 %v965
        %v997 = vpop.xlane.xlu0 %996
        %998 = vadd.xlane.f32.xlu0 %v966
        %v999 = vpop.xlane.xlu0 %998
        %1000 = vadd.xlane.f32.xlu0 %v967
        %v1001 = vpop.xlane.xlu0 %1000
        %v1002 = vrcp.pop 128.0
        %v1003 = vmul.f32 %v971, %v1002
        %v1004 = vmul.f32 %v973, %v1002
        %v1005 = vmul.f32 %v975, %v1002
        %v1006 = vmul.f32 %v977, %v1002
        %v1007 = vmul.f32 %v979, %v1002
        %v1008 = vmul.f32 %v981, %v1002
        %v1009 = vmul.f32 %v983, %v1002
        %v1010 = vmul.f32 %v985, %v1002
        %v1011 = vmul.f32 %v987, %v1002
        %v1012 = vmul.f32 %v989, %v1002
        %v1013 = vmul.f32 %v991, %v1002
        %v1014 = vmul.f32 %v993, %v1002
        %v1015 = vmul.f32 %v995, %v1002
        %v1016 = vmul.f32 %v997, %v1002
        %v1017 = vmul.f32 %v999, %v1002
        %v1018 = vmul.f32 %v1001, %v1002
        %v1019 = vsub.f32 %v952, %v1003
        %v1020 = vsub.f32 %v953, %v1004
        %v1021 = vsub.f32 %v954, %v1005
        %v1022 = vsub.f32 %v955, %v1006
        %v1023 = vsub.f32 %v956, %v1007
        %v1024 = vsub.f32 %v957, %v1008
        %v1025 = vsub.f32 %v958, %v1009
        %v1026 = vsub.f32 %v959, %v1010
        %v1027 = vsub.f32 %v960, %v1011
        %v1028 = vsub.f32 %v961, %v1012
        %v1029 = vsub.f32 %v962, %v1013
        %v1030 = vsub.f32 %v963, %v1014
        %v1031 = vsub.f32 %v964, %v1015
        %v1032 = vsub.f32 %v965, %v1016
        %v1033 = vsub.f32 %v966, %v1017
        %v1034 = vsub.f32 %v967, %v1018
        %v1035 = vmul.f32 %v1019, %v1019
        %v1036 = vmul.f32 %v1020, %v1020
        %v1037 = vmul.f32 %v1021, %v1021
        %v1038 = vmul.f32 %v1022, %v1022
        %v1039 = vmul.f32 %v1023, %v1023
        %v1040 = vmul.f32 %v1024, %v1024
        %v1041 = vmul.f32 %v1025, %v1025
        %v1042 = vmul.f32 %v1026, %v1026
        %v1043 = vmul.f32 %v1027, %v1027
        %v1044 = vmul.f32 %v1028, %v1028
        %v1045 = vmul.f32 %v1029, %v1029
        %v1046 = vmul.f32 %v1030, %v1030
        %v1047 = vmul.f32 %v1031, %v1031
        %v1048 = vmul.f32 %v1032, %v1032
        %v1049 = vmul.f32 %v1033, %v1033
        %v1050 = vmul.f32 %v1034, %v1034
        %1051 = vadd.xlane.f32.xlu0 %v1035
        %v1052 = vpop.xlane.xlu0 %1051
        %1053 = vadd.xlane.f32.xlu0 %v1036
        %v1054 = vpop.xlane.xlu0 %1053
        %1055 = vadd.xlane.f32.xlu0 %v1037
        %v1056 = vpop.xlane.xlu0 %1055
        %1057 = vadd.xlane.f32.xlu0 %v1038
        %v1058 = vpop.xlane.xlu0 %1057
        %1059 = vadd.xlane.f32.xlu0 %v1039
        %v1060 = vpop.xlane.xlu0 %1059
        %1061 = vadd.xlane.f32.xlu0 %v1040
        %v1062 = vpop.xlane.xlu0 %1061
        %1063 = vadd.xlane.f32.xlu0 %v1041
        %v1064 = vpop.xlane.xlu0 %1063
        %1065 = vadd.xlane.f32.xlu0 %v1042
        %v1066 = vpop.xlane.xlu0 %1065
        %1067 = vadd.xlane.f32.xlu0 %v1043
        %v1068 = vpop.xlane.xlu0 %1067
        %1069 = vadd.xlane.f32.xlu0 %v1044
        %v1070 = vpop.xlane.xlu0 %1069
        %1071 = vadd.xlane.f32.xlu0 %v1045
        %v1072 = vpop.xlane.xlu0 %1071
        %1073 = vadd.xlane.f32.xlu0 %v1046
        %v1074 = vpop.xlane.xlu0 %1073
        %1075 = vadd.xlane.f32.xlu0 %v1047
        %v1076 = vpop.xlane.xlu0 %1075
        %1077 = vadd.xlane.f32.xlu0 %v1048
        %v1078 = vpop.xlane.xlu0 %1077
        %1079 = vadd.xlane.f32.xlu0 %v1049
        %v1080 = vpop.xlane.xlu0 %1079
        %1081 = vadd.xlane.f32.xlu0 %v1050
        %v1082 = vpop.xlane.xlu0 %1081
        %v1083 = vmul.f32 %v1052, %v1002
        %v1084 = vmul.f32 %v1054, %v1002
        %v1085 = vmul.f32 %v1056, %v1002
        %v1086 = vmul.f32 %v1058, %v1002
        %v1087 = vmul.f32 %v1060, %v1002
        %v1088 = vmul.f32 %v1062, %v1002
        %v1089 = vmul.f32 %v1064, %v1002
        %v1090 = vmul.f32 %v1066, %v1002
        %v1091 = vmul.f32 %v1068, %v1002
        %v1092 = vmul.f32 %v1070, %v1002
        %v1093 = vmul.f32 %v1072, %v1002
        %v1094 = vmul.f32 %v1074, %v1002
        %v1095 = vmul.f32 %v1076, %v1002
        %v1096 = vmul.f32 %v1078, %v1002
        %v1097 = vmul.f32 %v1080, %v1002
        %v1098 = vmul.f32 %v1082, %v1002
        %v1099 = vadd.f32 %v1083, 1e-05
        %v1100 = vadd.f32 %v1084, 1e-05
        %v1101 = vadd.f32 %v1085, 1e-05
        %v1102 = vadd.f32 %v1086, 1e-05
        %v1103 = vadd.f32 %v1087, 1e-05
        %v1104 = vadd.f32 %v1088, 1e-05
        %v1105 = vadd.f32 %v1089, 1e-05
        %v1106 = vadd.f32 %v1090, 1e-05
        %v1107 = vadd.f32 %v1091, 1e-05
        %v1108 = vadd.f32 %v1092, 1e-05
        %v1109 = vadd.f32 %v1093, 1e-05
        %v1110 = vadd.f32 %v1094, 1e-05
        %v1111 = vadd.f32 %v1095, 1e-05
        %v1112 = vadd.f32 %v1096, 1e-05
        %v1113 = vadd.f32 %v1097, 1e-05
        %v1114 = vadd.f32 %v1098, 1e-05
        %v1115 = vrsqrt.pop %v1099
        %v1116 = vrsqrt.pop %v1100
        %v1117 = vrsqrt.pop %v1101
        %v1118 = vrsqrt.pop %v1102
        %v1119 = vrsqrt.pop %v1103
        %v1120 = vrsqrt.pop %v1104
        %v1121 = vrsqrt.pop %v1105
        %v1122 = vrsqrt.pop %v1106
        %v1123 = vrsqrt.pop %v1107
        %v1124 = vrsqrt.pop %v1108
        %v1125 = vrsqrt.pop %v1109
        %v1126 = vrsqrt.pop %v1110
        %v1127 = vrsqrt.pop %v1111
        %v1128 = vrsqrt.pop %v1112
        %v1129 = vrsqrt.pop %v1113
        %v1130 = vrsqrt.pop %v1114
        %v1131 = vmul.f32 %v1019, %v1115
        %v1132 = vmul.f32 %v1020, %v1116
        %v1133 = vmul.f32 %v1021, %v1117
        %v1134 = vmul.f32 %v1022, %v1118
        %v1135 = vmul.f32 %v1023, %v1119
        %v1136 = vmul.f32 %v1024, %v1120
        %v1137 = vmul.f32 %v1025, %v1121
        %v1138 = vmul.f32 %v1026, %v1122
        %v1139 = vmul.f32 %v1027, %v1123
        %v1140 = vmul.f32 %v1028, %v1124
        %v1141 = vmul.f32 %v1029, %v1125
        %v1142 = vmul.f32 %v1030, %v1126
        %v1143 = vmul.f32 %v1031, %v1127
        %v1144 = vmul.f32 %v1032, %v1128
        %v1145 = vmul.f32 %v1033, %v1129
        %v1146 = vmul.f32 %v1034, %v1130
        %v1148 = vlaneseq
        %v1149 = vshrl.u32 %v1148, 7
        %v1150 = vsub.s32 0, %v1149
        %v1151 = vrot.slane %v968, %v1150
        %v1153 = vmul.f32 %v1131, %v1151
        %v1154 = vmul.f32 %v1132, %v1151
        %v1155 = vmul.f32 %v1133, %v1151
        %v1156 = vmul.f32 %v1134, %v1151
        %v1157 = vmul.f32 %v1135, %v1151
        %v1158 = vmul.f32 %v1136, %v1151
        %v1159 = vmul.f32 %v1137, %v1151
        %v1160 = vmul.f32 %v1138, %v1151
        %v1161 = vmul.f32 %v1139, %v1151
        %v1162 = vmul.f32 %v1140, %v1151
        %v1163 = vmul.f32 %v1141, %v1151
        %v1164 = vmul.f32 %v1142, %v1151
        %v1165 = vmul.f32 %v1143, %v1151
        %v1166 = vmul.f32 %v1144, %v1151
        %v1167 = vmul.f32 %v1145, %v1151
        %v1168 = vmul.f32 %v1146, %v1151
        %v1170 = vlaneseq
        %v1171 = vshrl.u32 %v1170, 7
        %v1172 = vsub.s32 0, %v1171
        %v1173 = vrot.slane %v969, %v1172
        %v1175 = vadd.f32 %v1153, %v1173
        %v1176 = vadd.f32 %v1154, %v1173
        %v1177 = vadd.f32 %v1155, %v1173
        %v1178 = vadd.f32 %v1156, %v1173
        %v1179 = vadd.f32 %v1157, %v1173
        %v1180 = vadd.f32 %v1158, %v1173
        %v1181 = vadd.f32 %v1159, %v1173
        %v1182 = vadd.f32 %v1160, %v1173
        %v1183 = vadd.f32 %v1161, %v1173
        %v1184 = vadd.f32 %v1162, %v1173
        %v1185 = vadd.f32 %v1163, %v1173
        %v1186 = vadd.f32 %v1164, %v1173
        %v1187 = vadd.f32 %v1165, %v1173
        %v1188 = vadd.f32 %v1166, %v1173
        %v1189 = vadd.f32 %v1167, %v1173
        %v1190 = vadd.f32 %v1168, %v1173
        %v1191 = vpack.c.bf16 %v1176, %v1175
        %v1192 = vpack.c.bf16 %v1178, %v1177
        %v1193 = vpack.c.bf16 %v1180, %v1179
        %v1194 = vpack.c.bf16 %v1182, %v1181
        %v1195 = vpack.c.bf16 %v1184, %v1183
        %v1196 = vpack.c.bf16 %v1186, %v1185
        %v1197 = vpack.c.bf16 %v1188, %v1187
        %v1198 = vpack.c.bf16 %v1190, %v1189
        %v1199 = vld [vmem:[%s749] sm:$0xff]
        %v1200 = vld [vmem:[%s749 + $0x8] sm:$0xf]
        %v1201 = vld [vmem:[%s749 + $0xc] sm:$0xff]
        %v1202 = vld [vmem:[%s749 + $0x14] sm:$0xf]
        %v1203 = vld [vmem:[%s749 + $0x18] sm:$0xff]
        %v1204 = vld [vmem:[%s749 + $0x20] sm:$0xf]
        %v1205 = vld [vmem:[%s749 + $0x24] sm:$0xff]
        %v1206 = vld [vmem:[%s749 + $0x2c] sm:$0xf]
        %v1207 = vld [vmem:[%s749 + $0x30] sm:$0xff]
        %v1208 = vld [vmem:[%s749 + $0x38] sm:$0xf]
        %v1209 = vld [vmem:[%s749 + $0x3c] sm:$0xff]
        %v1210 = vld [vmem:[%s749 + $0x44] sm:$0xf]
        %v1211 = vld [vmem:[%s749 + $0x48] sm:$0xff]
        %v1212 = vld [vmem:[%s749 + $0x50] sm:$0xf]
        %v1213 = vld [vmem:[%s749 + $0x54] sm:$0xff]
        %v1214 = vld [vmem:[%s749 + $0x5c] sm:$0xf]
        %v1215 = vld [vmem:[%s749 + $0x60] sm:$0xff]
        %v1216 = vld [vmem:[%s749 + $0x68] sm:$0xf]
        %v1217 = vld [vmem:[%s749 + $0x6c] sm:$0xff]
        %v1218 = vld [vmem:[%s749 + $0x74] sm:$0xf]
        %v1219 = vld [vmem:[%s749 + $0x78] sm:$0xff]
        %v1220 = vld [vmem:[%s749 + $0x80] sm:$0xf]
        %v1221 = vld [vmem:[%s749 + $0x84] sm:$0xff]
        %v1222 = vld [vmem:[%s749 + $0x8c] sm:$0xf]
        %v1223 = vld [vmem:[%s749 + $0x90] sm:$0xff]
        %v1224 = vld [vmem:[%s749 + $0x98] sm:$0xf]
        %v1225 = vld [vmem:[%s749 + $0x9c] sm:$0xff]
        %v1226 = vld [vmem:[%s749 + $0xa4] sm:$0xf]
        %v1227 = vld [vmem:[%s749 + $0xa8] sm:$0xff]
        %v1228 = vld [vmem:[%s749 + $0xb0] sm:$0xf]
        %v1229 = vld [vmem:[%s749 + $0xb4] sm:$0xff]
        %v1230 = vld [vmem:[%s749 + $0xbc] sm:$0xf]
        %v1231 = vld [vmem:[%s906] sm:$0x7]
        %v1233 = vlaneseq
        %v1234 = vshrl.u32 %v1233, 7
        %v1235 = vsub.s32 0, %v1234
        %v1236 = vrot.slane %v1231, %v1235
        %v1237 = vlaneseq
        %v1238 = vshrl.u32 %v1237, 7
        %v1239 = vsub.s32 1, %v1238
        %v1240 = vrot.slane %v1231, %v1239
        %v1241 = vlaneseq
        %v1242 = vshrl.u32 %v1241, 7
        %v1243 = vsub.s32 2, %v1242
        %v1244 = vrot.slane %v1231, %v1243
        %v1280 = vunpack.c.l.b16 %v1199
        %v1281 = vunpack.c.h.b16 %v1199
        %v1282 = vunpack.c.l.b16 %v1200
        %v1283 = vunpack.c.l.b16 %v1201
        %v1284 = vunpack.c.h.b16 %v1201
        %v1285 = vunpack.c.l.b16 %v1202
        %v1286 = vunpack.c.l.b16 %v1203
        %v1287 = vunpack.c.h.b16 %v1203
        %v1288 = vunpack.c.l.b16 %v1204
        %v1289 = vunpack.c.l.b16 %v1205
        %v1290 = vunpack.c.h.b16 %v1205
        %v1291 = vunpack.c.l.b16 %v1206
        %v1292 = vunpack.c.l.b16 %v1207
        %v1293 = vunpack.c.h.b16 %v1207
        %v1294 = vunpack.c.l.b16 %v1208
        %v1295 = vunpack.c.l.b16 %v1209
        %v1296 = vunpack.c.h.b16 %v1209
        %v1297 = vunpack.c.l.b16 %v1210
        %v1298 = vunpack.c.l.b16 %v1211
        %v1299 = vunpack.c.h.b16 %v1211
        %v1300 = vunpack.c.l.b16 %v1212
        %v1301 = vunpack.c.l.b16 %v1213
        %v1302 = vunpack.c.h.b16 %v1213
        %v1303 = vunpack.c.l.b16 %v1214
        %v1304 = vunpack.c.l.b16 %v1215
        %v1305 = vunpack.c.h.b16 %v1215
        %v1306 = vunpack.c.l.b16 %v1216
        %v1307 = vunpack.c.l.b16 %v1217
        %v1308 = vunpack.c.h.b16 %v1217
        %v1309 = vunpack.c.l.b16 %v1218
        %v1310 = vunpack.c.l.b16 %v1219
        %v1311 = vunpack.c.h.b16 %v1219
        %v1312 = vunpack.c.l.b16 %v1220
        %v1313 = vunpack.c.l.b16 %v1221
        %v1314 = vunpack.c.h.b16 %v1221
        %v1315 = vunpack.c.l.b16 %v1222
        %v1316 = vunpack.c.l.b16 %v1223
        %v1317 = vunpack.c.h.b16 %v1223
        %v1318 = vunpack.c.l.b16 %v1224
        %v1319 = vunpack.c.l.b16 %v1225
        %v1320 = vunpack.c.h.b16 %v1225
        %v1321 = vunpack.c.l.b16 %v1226
        %v1322 = vunpack.c.l.b16 %v1227
        %v1323 = vunpack.c.h.b16 %v1227
        %v1324 = vunpack.c.l.b16 %v1228
        %v1325 = vunpack.c.l.b16 %v1229
        %v1326 = vunpack.c.h.b16 %v1229
        %v1327 = vunpack.c.l.b16 %v1230
        %v1328 = vpack.c.b16 %v1283, %v1280
        %v1329 = vpack.c.b16 %v1284, %v1281
        %v1330 = vpack.c.b16 %v1285, %v1282
        %v1331 = vpack.c.b16 %v1289, %v1286
        %v1332 = vpack.c.b16 %v1290, %v1287
        %v1333 = vpack.c.b16 %v1291, %v1288
        %v1334 = vpack.c.b16 %v1295, %v1292
        %v1335 = vpack.c.b16 %v1296, %v1293
        %v1336 = vpack.c.b16 %v1297, %v1294
        %v1337 = vpack.c.b16 %v1301, %v1298
        %v1338 = vpack.c.b16 %v1302, %v1299
        %v1339 = vpack.c.b16 %v1303, %v1300
        %v1340 = vpack.c.b16 %v1307, %v1304
        %v1341 = vpack.c.b16 %v1308, %v1305
        %v1342 = vpack.c.b16 %v1309, %v1306
        %v1343 = vpack.c.b16 %v1313, %v1310
        %v1344 = vpack.c.b16 %v1314, %v1311
        %v1345 = vpack.c.b16 %v1315, %v1312
        %v1346 = vpack.c.b16 %v1319, %v1316
        %v1347 = vpack.c.b16 %v1320, %v1317
        %v1348 = vpack.c.b16 %v1321, %v1318
        %v1349 = vpack.c.b16 %v1325, %v1322
        %v1350 = vpack.c.b16 %v1326, %v1323
        %v1351 = vpack.c.b16 %v1327, %v1324
        %1376 = vmatprep.subr.bf16.mxu0 %v1350
        %1377 = vmatpush1.bf16.msra.mxu0 %v1349
        %1378 = vmatprep.subr.bf16.mxu0 %v1347
        %1379 = vmatpush1.bf16.msra.mxu0 %v1346
        %1380 = vmatprep.subr.bf16.mxu0 %v1344
        %1381 = vmatpush1.bf16.msra.mxu0 %v1343
        %1382 = vmatprep.subr.bf16.mxu0 %v1341
        %1383 = vmatpush1.bf16.msra.mxu0 %v1340
        %1384 = vmatprep.subr.bf16.mxu0 %v1338
        %1385 = vmatpush1.bf16.msra.mxu0 %v1337
        %1386 = vmatprep.subr.bf16.mxu0 %v1335
        %1387 = vmatpush1.bf16.msra.mxu0 %v1334
        %1388 = vmatprep.subr.bf16.mxu0 %v1332
        %1389 = vmatpush1.bf16.msra.mxu0 %v1331
        %1390 = vmatprep.subr.bf16.mxu0 %v1329
        %1391 = vmatpush1.bf16.msra.mxu0 %v1328
        %1392 = vmatprep.subr.bf16.mxu0 0
        %1393 = vmatpush2.bf16.msra.mxu0 0
        %1394 = vmatprep.subr.bf16.mxu0 0
        %1395 = vmatpush2.bf16.msra.mxu0 0
        %1396 = vmatprep.subr.bf16.mxu0 0
        %1397 = vmatpush2.bf16.msra.mxu0 0
        %1398 = vmatprep.subr.bf16.mxu0 0
        %1399 = vmatpush2.bf16.msra.mxu0 0
        %1400 = vmatprep.subr.bf16.mxu0 0
        %1401 = vmatpush2.bf16.msra.mxu0 0
        %1402 = vmatprep.subr.bf16.mxu0 0
        %1403 = vmatpush2.bf16.msra.mxu0 0
        %1404 = vmatprep.subr.bf16.mxu0 0
        %1405 = vmatpush2.bf16.msra.mxu0 0
        %1406 = vmatprep.subr.bf16.mxu0 0
        %1407 = vmatpush2.bf16.msra.mxu0 0
        %1408 = vmatprep.mubr.bf16.mxu0 0
        %1409 = vmatmul.mubr.bf16.gmra.mxu0 %v1191
        %v1410 = vpop.f32.mrf.mxu0
        %v1411 = vadd.f32 %v1236, %v1410
        %v1412 = vpop.f32.mrf.mxu0
        %v1413 = vadd.f32 %v1240, %v1412
        %v1414 = vpop.f32.mrf.mxu0
        %v1415 = vadd.f32 %v1236, %v1414
        %v1416 = vpop.f32.mrf.mxu0
        %v1417 = vadd.f32 %v1240, %v1416
        %1418 = vmatprep.mubr.bf16.mxu0 0
        %1419 = vmatmul.mubr.bf16.gmra.mxu0 %v1192
        %v1420 = vpop.f32.mrf.mxu0
        %v1421 = vadd.f32 %v1236, %v1420
        %v1422 = vpop.f32.mrf.mxu0
        %v1423 = vadd.f32 %v1240, %v1422
        %v1424 = vpop.f32.mrf.mxu0
        %v1425 = vadd.f32 %v1236, %v1424
        %v1426 = vpop.f32.mrf.mxu0
        %v1427 = vadd.f32 %v1240, %v1426
        %1428 = vmatprep.mubr.bf16.mxu0 0
        %1429 = vmatmul.mubr.bf16.gmra.mxu0 %v1193
        %v1430 = vpop.f32.mrf.mxu0
        %v1431 = vadd.f32 %v1236, %v1430
        %v1432 = vpop.f32.mrf.mxu0
        %v1433 = vadd.f32 %v1240, %v1432
        %v1434 = vpop.f32.mrf.mxu0
        %v1435 = vadd.f32 %v1236, %v1434
        %v1436 = vpop.f32.mrf.mxu0
        %v1437 = vadd.f32 %v1240, %v1436
        %1438 = vmatprep.mubr.bf16.mxu0 0
        %1439 = vmatmul.mubr.bf16.gmra.mxu0 %v1194
        %v1440 = vpop.f32.mrf.mxu0
        %v1441 = vadd.f32 %v1236, %v1440
        %v1442 = vpop.f32.mrf.mxu0
        %v1443 = vadd.f32 %v1240, %v1442
        %v1444 = vpop.f32.mrf.mxu0
        %v1445 = vadd.f32 %v1236, %v1444
        %v1446 = vpop.f32.mrf.mxu0
        %v1447 = vadd.f32 %v1240, %v1446
        %1448 = vmatprep.mubr.bf16.mxu0 0
        %1449 = vmatmul.mubr.bf16.gmra.mxu0 %v1195
        %v1450 = vpop.f32.mrf.mxu0
        %v1451 = vadd.f32 %v1236, %v1450
        %v1452 = vpop.f32.mrf.mxu0
        %v1453 = vadd.f32 %v1240, %v1452
        %v1454 = vpop.f32.mrf.mxu0
        %v1455 = vadd.f32 %v1236, %v1454
        %v1456 = vpop.f32.mrf.mxu0
        %v1457 = vadd.f32 %v1240, %v1456
        %1458 = vmatprep.mubr.bf16.mxu0 0
        %1459 = vmatmul.mubr.bf16.gmra.mxu0 %v1196
        %v1460 = vpop.f32.mrf.mxu0
        %v1461 = vadd.f32 %v1236, %v1460
        %v1462 = vpop.f32.mrf.mxu0
        %v1463 = vadd.f32 %v1240, %v1462
        %v1464 = vpop.f32.mrf.mxu0
        %v1465 = vadd.f32 %v1236, %v1464
        %v1466 = vpop.f32.mrf.mxu0
        %v1467 = vadd.f32 %v1240, %v1466
        %1468 = vmatprep.mubr.bf16.mxu0 0
        %1469 = vmatmul.mubr.bf16.gmra.mxu0 %v1197
        %v1470 = vpop.f32.mrf.mxu0
        %v1471 = vadd.f32 %v1236, %v1470
        %v1472 = vpop.f32.mrf.mxu0
        %v1473 = vadd.f32 %v1240, %v1472
        %v1474 = vpop.f32.mrf.mxu0
        %v1475 = vadd.f32 %v1236, %v1474
        %v1476 = vpop.f32.mrf.mxu0
        %v1477 = vadd.f32 %v1240, %v1476
        %1478 = vmatprep.mubr.bf16.mxu0 0
        %1479 = vmatmul.mubr.bf16.gmra.mxu0 %v1198
        %v1480 = vpop.f32.mrf.mxu0
        %v1481 = vadd.f32 %v1236, %v1480
        %v1482 = vpop.f32.mrf.mxu0
        %v1483 = vadd.f32 %v1240, %v1482
        %v1484 = vpop.f32.mrf.mxu0
        %v1485 = vadd.f32 %v1236, %v1484
        %v1486 = vpop.f32.mrf.mxu0
        %v1487 = vadd.f32 %v1240, %v1486
        %1488 = vdwg.mxu0
        %1489 = vmatprep.subr.bf16.mxu0 0
        %1490 = vmatpush1.bf16.msra.mxu0 %v1351
        %1491 = vmatprep.subr.bf16.mxu0 0
        %1492 = vmatpush1.bf16.msra.mxu0 %v1348
        %1493 = vmatprep.subr.bf16.mxu0 0
        %1494 = vmatpush1.bf16.msra.mxu0 %v1345
        %1495 = vmatprep.subr.bf16.mxu0 0
        %1496 = vmatpush1.bf16.msra.mxu0 %v1342
        %1497 = vmatprep.subr.bf16.mxu0 0
        %1498 = vmatpush1.bf16.msra.mxu0 %v1339
        %1499 = vmatprep.subr.bf16.mxu0 0
        %1500 = vmatpush1.bf16.msra.mxu0 %v1336
        %1501 = vmatprep.subr.bf16.mxu0 0
        %1502 = vmatpush1.bf16.msra.mxu0 %v1333
        %1503 = vmatprep.subr.bf16.mxu0 0
        %1504 = vmatpush1.bf16.msra.mxu0 %v1330
        %1505 = vmatprep.subr.bf16.mxu0 0
        %1506 = vmatpush2.bf16.msra.mxu0 0
        %1507 = vmatprep.subr.bf16.mxu0 0
        %1508 = vmatpush2.bf16.msra.mxu0 0
        %1509 = vmatprep.subr.bf16.mxu0 0
        %1510 = vmatpush2.bf16.msra.mxu0 0
        %1511 = vmatprep.subr.bf16.mxu0 0
        %1512 = vmatpush2.bf16.msra.mxu0 0
        %1513 = vmatprep.subr.bf16.mxu0 0
        %1514 = vmatpush2.bf16.msra.mxu0 0
        %1515 = vmatprep.subr.bf16.mxu0 0
        %1516 = vmatpush2.bf16.msra.mxu0 0
        %1517 = vmatprep.subr.bf16.mxu0 0
        %1518 = vmatpush2.bf16.msra.mxu0 0
        %1519 = vmatprep.subr.bf16.mxu0 0
        %1520 = vmatpush2.bf16.msra.mxu0 0
        %1521 = vmatprep.mubr.bf16.mxu0 0
        %1522 = vmatmul.mubr.bf16.gmra.mxu0 %v1191
        %v1523 = vpop.f32.mrf.mxu0
        %v1524 = vadd.f32 %v1244, %v1523
        %v1525 = vpop.f32.mrf.mxu0
        %v1526 = vpop.f32.mrf.mxu0
        %v1527 = vadd.f32 %v1244, %v1526
        %v1528 = vpop.f32.mrf.mxu0
        %1529 = vmatprep.mubr.bf16.mxu0 0
        %1530 = vmatmul.mubr.bf16.gmra.mxu0 %v1192
        %v1531 = vpop.f32.mrf.mxu0
        %v1532 = vadd.f32 %v1244, %v1531
        %v1533 = vpop.f32.mrf.mxu0
        %v1534 = vpop.f32.mrf.mxu0
        %v1535 = vadd.f32 %v1244, %v1534
        %v1536 = vpop.f32.mrf.mxu0
        %1537 = vmatprep.mubr.bf16.mxu0 0
        %1538 = vmatmul.mubr.bf16.gmra.mxu0 %v1193
        %v1539 = vpop.f32.mrf.mxu0
        %v1540 = vadd.f32 %v1244, %v1539
        %v1541 = vpop.f32.mrf.mxu0
        %v1542 = vpop.f32.mrf.mxu0
        %v1543 = vadd.f32 %v1244, %v1542
        %v1544 = vpop.f32.mrf.mxu0
        %1545 = vmatprep.mubr.bf16.mxu0 0
        %1546 = vmatmul.mubr.bf16.gmra.mxu0 %v1194
        %v1547 = vpop.f32.mrf.mxu0
        %v1548 = vadd.f32 %v1244, %v1547
        %v1549 = vpop.f32.mrf.mxu0
        %v1550 = vpop.f32.mrf.mxu0
        %v1551 = vadd.f32 %v1244, %v1550
        %v1552 = vpop.f32.mrf.mxu0
        %1553 = vmatprep.mubr.bf16.mxu0 0
        %1554 = vmatmul.mubr.bf16.gmra.mxu0 %v1195
        %v1555 = vpop.f32.mrf.mxu0
        %v1556 = vadd.f32 %v1244, %v1555
        %v1557 = vpop.f32.mrf.mxu0
        %v1558 = vpop.f32.mrf.mxu0
        %v1559 = vadd.f32 %v1244, %v1558
        %v1560 = vpop.f32.mrf.mxu0
        %1561 = vmatprep.mubr.bf16.mxu0 0
        %1562 = vmatmul.mubr.bf16.gmra.mxu0 %v1196
        %v1563 = vpop.f32.mrf.mxu0
        %v1564 = vadd.f32 %v1244, %v1563
        %v1565 = vpop.f32.mrf.mxu0
        %v1566 = vpop.f32.mrf.mxu0
        %v1567 = vadd.f32 %v1244, %v1566
        %v1568 = vpop.f32.mrf.mxu0
        %1569 = vmatprep.mubr.bf16.mxu0 0
        %1570 = vmatmul.mubr.bf16.gmra.mxu0 %v1197
        %v1571 = vpop.f32.mrf.mxu0
        %v1572 = vadd.f32 %v1244, %v1571
        %v1573 = vpop.f32.mrf.mxu0
        %v1574 = vpop.f32.mrf.mxu0
        %v1575 = vadd.f32 %v1244, %v1574
        %v1576 = vpop.f32.mrf.mxu0
        %1577 = vmatprep.mubr.bf16.mxu0 0
        %1578 = vmatmul.mubr.bf16.gmra.mxu0 %v1198
        %v1579 = vpop.f32.mrf.mxu0
        %v1580 = vadd.f32 %v1244, %v1579
        %v1581 = vpop.f32.mrf.mxu0
        %v1582 = vpop.f32.mrf.mxu0
        %v1583 = vadd.f32 %v1244, %v1582
        %v1584 = vpop.f32.mrf.mxu0
        %1585 = vdwg.mxu0
        %v1586 = vld [vmem:[#allocation3] sm:$0xff]
        %v1587 = vld [vmem:[#allocation3 + $0x8] sm:$0xff]
        %v1588 = vld [vmem:[#allocation3 + $0x10] sm:$0xff]
        %v1589 = vld [vmem:[#allocation3 + $0x18] sm:$0xff]
        %v1590 = vld [vmem:[#allocation3 + $0x20] sm:$0xff]
        %v1591 = vld [vmem:[#allocation3 + $0x28] sm:$0xff]
        %v1592 = vld [vmem:[#allocation3 + $0x30] sm:$0xff]
        %v1593 = vld [vmem:[#allocation3 + $0x38] sm:$0xff]
        %v1594 = vld [vmem:[%s758] sm:$0xf]
        %v1595 = vld [vmem:[%s758 + $0x4] sm:$0xf]
        %v1596 = vld [vmem:[%s758 + $0x8] sm:$0xf]
        %v1597 = vld [vmem:[%s758 + $0xc] sm:$0xf]
        %v1598 = vld [vmem:[%s758 + $0x10] sm:$0xf]
        %v1599 = vld [vmem:[%s758 + $0x14] sm:$0xf]
        %v1600 = vld [vmem:[%s758 + $0x18] sm:$0xf]
        %v1601 = vld [vmem:[%s758 + $0x1c] sm:$0xf]
        %v1602 = vld [vmem:[%s758 + $0x20] sm:$0xf]
        %v1603 = vld [vmem:[%s758 + $0x24] sm:$0xf]
        %v1604 = vld [vmem:[%s758 + $0x28] sm:$0xf]
        %v1605 = vld [vmem:[%s758 + $0x2c] sm:$0xf]
        %v1606 = vld [vmem:[%s758 + $0x30] sm:$0xf]
        %v1607 = vld [vmem:[%s758 + $0x34] sm:$0xf]
        %v1608 = vld [vmem:[%s758 + $0x38] sm:$0xf]
        %v1609 = vld [vmem:[%s758 + $0x3c] sm:$0xf]
        %v1610 = vpack.c.bf16 %v1415, %v1411
        %v1611 = vpack.c.bf16 %v1425, %v1421
        %v1612 = vpack.c.bf16 %v1435, %v1431
        %v1613 = vpack.c.bf16 %v1445, %v1441
        %v1614 = vpack.c.bf16 %v1417, %v1413
        %v1615 = vpack.c.bf16 %v1427, %v1423
        %v1616 = vpack.c.bf16 %v1437, %v1433
        %v1617 = vpack.c.bf16 %v1447, %v1443
        %v1618 = vpack.c.bf16 %v1527, %v1524
        %v1619 = vpack.c.bf16 %v1535, %v1532
        %v1620 = vpack.c.bf16 %v1543, %v1540
        %v1621 = vpack.c.bf16 %v1551, %v1548
        %vm1622 = vcmask 261120
        %v1624 = vsel %vm1622, %v1610, 0
        %v1627 = vsel %vm1622, %v1611, 0
        %v1630 = vsel %vm1622, %v1612, 0
        %v1633 = vsel %vm1622, %v1613, 0
        %v1636 = vsel %vm1622, %v1614, 0
        %v1639 = vsel %vm1622, %v1615, 0
        %v1642 = vsel %vm1622, %v1616, 0
        %v1645 = vsel %vm1622, %v1617, 0
        %1647 = vmatprep.subr.bf16.mxu0 0
        %1648 = vmatpush1.bf16.xpose.msra.mxu0 0
        %1649 = vmatprep.subr.bf16.mxu0 0
        %1650 = vmatpush1.bf16.xpose.msra.mxu0 0
        %1651 = vmatprep.subr.bf16.mxu0 0
        %1652 = vmatpush1.bf16.xpose.msra.mxu0 0
        %1653 = vmatprep.subr.bf16.mxu0 0
        %1654 = vmatpush1.bf16.xpose.msra.mxu0 0
        %1655 = vmatprep.subr.bf16.mxu0 0
        %1656 = vmatpush1.bf16.xpose.msra.mxu0 %v1645
        %1657 = vmatprep.subr.bf16.mxu0 0
        %1658 = vmatpush1.bf16.xpose.msra.mxu0 %v1642
        %1659 = vmatprep.subr.bf16.mxu0 0
        %1660 = vmatpush1.bf16.xpose.msra.mxu0 %v1639
        %1661 = vmatprep.subr.bf16.mxu0 0
        %1662 = vmatpush1.bf16.xpose.msra.mxu0 %v1636
        %1663 = vmatprep.subr.bf16.mxu0 0
        %1664 = vmatpush2.bf16.xpose.msra.mxu0 0
        %1665 = vmatprep.subr.bf16.mxu0 0
        %1666 = vmatpush2.bf16.xpose.msra.mxu0 0
        %1667 = vmatprep.subr.bf16.mxu0 0
        %1668 = vmatpush2.bf16.xpose.msra.mxu0 0
        %1669 = vmatprep.subr.bf16.mxu0 0
        %1670 = vmatpush2.bf16.xpose.msra.mxu0 0
        %1671 = vmatprep.subr.bf16.mxu0 0
        %1672 = vmatpush2.bf16.xpose.msra.mxu0 0
        %1673 = vmatprep.subr.bf16.mxu0 0
        %1674 = vmatpush2.bf16.xpose.msra.mxu0 0
        %1675 = vmatprep.subr.bf16.mxu0 0
        %1676 = vmatpush2.bf16.xpose.msra.mxu0 0
        %1677 = vmatprep.subr.bf16.mxu0 0
        %1678 = vmatpush2.bf16.xpose.msra.mxu0 0
        %1679 = vmatprep.mubr.bf16.mxu0 0
        %1680 = vmatmul.mubr.bf16.gmra.mxu0 %v1624
        %v1681 = vpop.f32.mrf.mxu0
        %v1682 = vadd.f32 %v1586, %v1681
        %v1683 = vpop.f32.mrf.mxu0
        %v1684 = vpop.f32.mrf.mxu0
        %v1685 = vadd.f32 %v1587, %v1684
        %v1686 = vpop.f32.mrf.mxu0
        %1687 = vmatprep.mubr.bf16.mxu0 0
        %1688 = vmatmul.mubr.bf16.gmra.mxu0 %v1627
        %v1689 = vpop.f32.mrf.mxu0
        %v1690 = vadd.f32 %v1588, %v1689
        %v1691 = vpop.f32.mrf.mxu0
        %v1692 = vpop.f32.mrf.mxu0
        %v1693 = vadd.f32 %v1589, %v1692
        %v1694 = vpop.f32.mrf.mxu0
        %1695 = vmatprep.mubr.bf16.mxu0 0
        %1696 = vmatmul.mubr.bf16.gmra.mxu0 %v1630
        %v1697 = vpop.f32.mrf.mxu0
        %v1698 = vadd.f32 %v1590, %v1697
        %v1699 = vpop.f32.mrf.mxu0
        %v1700 = vpop.f32.mrf.mxu0
        %v1701 = vadd.f32 %v1591, %v1700
        %v1702 = vpop.f32.mrf.mxu0
        %1703 = vmatprep.mubr.bf16.mxu0 0
        %1704 = vmatmul.mubr.bf16.gmra.mxu0 %v1633
        %v1705 = vpop.f32.mrf.mxu0
        %v1706 = vadd.f32 %v1592, %v1705
        %v1707 = vpop.f32.mrf.mxu0
        %v1708 = vpop.f32.mrf.mxu0
        %v1709 = vadd.f32 %v1593, %v1708
        %v1710 = vpop.f32.mrf.mxu0
        %1711 = vdwg.mxu0
        %vm1712 = vcmask 523264
        %v1713 = vsel %vm1712, %v1682, -inf
        %1714 = vmax.xlane.f32.xlu0 %v1713
        %v1715 = vpop.xlane.xlu0 %1714
        %v1716 = vsel %vm1712, %v1685, -inf
        %1717 = vmax.xlane.f32.xlu0 %v1716
        %v1718 = vpop.xlane.xlu0 %1717
        %v1719 = vsel %vm1712, %v1690, -inf
        %1720 = vmax.xlane.f32.xlu0 %v1719
        %v1721 = vpop.xlane.xlu0 %1720
        %v1722 = vsel %vm1712, %v1693, -inf
        %1723 = vmax.xlane.f32.xlu0 %v1722
        %v1724 = vpop.xlane.xlu0 %1723
        %v1725 = vsel %vm1712, %v1698, -inf
        %1726 = vmax.xlane.f32.xlu0 %v1725
        %v1727 = vpop.xlane.xlu0 %1726
        %v1728 = vsel %vm1712, %v1701, -inf
        %1729 = vmax.xlane.f32.xlu0 %v1728
        %v1730 = vpop.xlane.xlu0 %1729
        %v1731 = vsel %vm1712, %v1706, -inf
        %1732 = vmax.xlane.f32.xlu0 %v1731
        %v1733 = vpop.xlane.xlu0 %1732
        %v1734 = vsel %vm1712, %v1709, -inf
        %1735 = vmax.xlane.f32.xlu0 %v1734
        %v1736 = vpop.xlane.xlu0 %1735
        %v1737 = vsub.f32 %v1682, %v1715
        %v1738 = vsub.f32 %v1685, %v1718
        %v1739 = vsub.f32 %v1690, %v1721
        %v1740 = vsub.f32 %v1693, %v1724
        %v1741 = vsub.f32 %v1698, %v1727
        %v1742 = vsub.f32 %v1701, %v1730
        %v1743 = vsub.f32 %v1706, %v1733
        %v1744 = vsub.f32 %v1709, %v1736
        %v1745 = vmul.f32 %v1737, 1.442695
        %v1746 = vpow.pop %v1745
        %v1747 = vmul.f32 %v1738, 1.442695
        %v1748 = vpow.pop %v1747
        %v1749 = vmul.f32 %v1739, 1.442695
        %v1750 = vpow.pop %v1749
        %v1751 = vmul.f32 %v1740, 1.442695
        %v1752 = vpow.pop %v1751
        %v1753 = vmul.f32 %v1741, 1.442695
        %v1754 = vpow.pop %v1753
        %v1755 = vmul.f32 %v1742, 1.442695
        %v1756 = vpow.pop %v1755
        %v1757 = vmul.f32 %v1743, 1.442695
        %v1758 = vpow.pop %v1757
        %v1759 = vmul.f32 %v1744, 1.442695
        %v1760 = vpow.pop %v1759
        %v1761 = vsel %vm1712, %v1746, 0.0
        %1762 = vadd.xlane.f32.xlu0 %v1761
        %v1763 = vpop.xlane.xlu0 %1762
        %v1764 = vsel %vm1712, %v1748, 0.0
        %1765 = vadd.xlane.f32.xlu0 %v1764
        %v1766 = vpop.xlane.xlu0 %1765
        %v1767 = vsel %vm1712, %v1750, 0.0
        %1768 = vadd.xlane.f32.xlu0 %v1767
        %v1769 = vpop.xlane.xlu0 %1768
        %v1770 = vsel %vm1712, %v1752, 0.0
        %1771 = vadd.xlane.f32.xlu0 %v1770
        %v1772 = vpop.xlane.xlu0 %1771
        %v1773 = vsel %vm1712, %v1754, 0.0
        %1774 = vadd.xlane.f32.xlu0 %v1773
        %v1775 = vpop.xlane.xlu0 %1774
        %v1776 = vsel %vm1712, %v1756, 0.0
        %1777 = vadd.xlane.f32.xlu0 %v1776
        %v1778 = vpop.xlane.xlu0 %1777
        %v1779 = vsel %vm1712, %v1758, 0.0
        %1780 = vadd.xlane.f32.xlu0 %v1779
        %v1781 = vpop.xlane.xlu0 %1780
        %v1782 = vsel %vm1712, %v1760, 0.0
        %1783 = vadd.xlane.f32.xlu0 %v1782
        %v1784 = vpop.xlane.xlu0 %1783
        %v1785 = vrcp.pop %v1763
        %v1786 = vmul.f32 %v1746, %v1785
        %v1787 = vrcp.pop %v1766
        %v1788 = vmul.f32 %v1748, %v1787
        %v1789 = vrcp.pop %v1769
        %v1790 = vmul.f32 %v1750, %v1789
        %v1791 = vrcp.pop %v1772
        %v1792 = vmul.f32 %v1752, %v1791
        %v1793 = vrcp.pop %v1775
        %v1794 = vmul.f32 %v1754, %v1793
        %v1795 = vrcp.pop %v1778
        %v1796 = vmul.f32 %v1756, %v1795
        %v1797 = vrcp.pop %v1781
        %v1798 = vmul.f32 %v1758, %v1797
        %v1799 = vrcp.pop %v1784
        %v1800 = vmul.f32 %v1760, %v1799
        %v1801 = vpack.c.bf16 %v1788, %v1786
        %v1802 = vpack.c.bf16 %v1792, %v1790
        %v1803 = vpack.c.bf16 %v1796, %v1794
        %v1804 = vpack.c.bf16 %v1800, %v1798
        %v1806 = vsel %vm1712, %v1801, 0
        %v1809 = vsel %vm1712, %v1802, 0
        %v1812 = vsel %vm1712, %v1803, 0
        %v1815 = vsel %vm1712, %v1804, 0
        %1817 = vmatprep.subr.bf16.mxu0 0
        %1818 = vmatpush1.bf16.msra.mxu0 0
        %1819 = vmatprep.subr.bf16.mxu0 0
        %1820 = vmatpush1.bf16.msra.mxu0 0
        %1821 = vmatprep.subr.bf16.mxu0 0
        %1822 = vmatpush1.bf16.msra.mxu0 0
        %1823 = vmatprep.subr.bf16.mxu0 0
        %1824 = vmatpush1.bf16.msra.mxu0 0
        %1825 = vmatprep.subr.bf16.mxu0 0
        %1826 = vmatpush1.bf16.msra.mxu0 %v1621
        %1827 = vmatprep.subr.bf16.mxu0 0
        %1828 = vmatpush1.bf16.msra.mxu0 %v1620
        %1829 = vmatprep.subr.bf16.mxu0 0
        %1830 = vmatpush1.bf16.msra.mxu0 %v1619
        %1831 = vmatprep.subr.bf16.mxu0 0
        %1832 = vmatpush1.bf16.msra.mxu0 %v1618
        %1833 = vmatprep.subr.bf16.mxu0 0
        %1834 = vmatpush2.bf16.msra.mxu0 0
        %1835 = vmatprep.subr.bf16.mxu0 0
        %1836 = vmatpush2.bf16.msra.mxu0 0
        %1837 = vmatprep.subr.bf16.mxu0 0
        %1838 = vmatpush2.bf16.msra.mxu0 0
        %1839 = vmatprep.subr.bf16.mxu0 0
        %1840 = vmatpush2.bf16.msra.mxu0 0
        %1841 = vmatprep.subr.bf16.mxu0 0
        %1842 = vmatpush2.bf16.msra.mxu0 0
        %1843 = vmatprep.subr.bf16.mxu0 0
        %1844 = vmatpush2.bf16.msra.mxu0 0
        %1845 = vmatprep.subr.bf16.mxu0 0
        %1846 = vmatpush2.bf16.msra.mxu0 0
        %1847 = vmatprep.subr.bf16.mxu0 0
        %1848 = vmatpush2.bf16.msra.mxu0 0
        %1849 = vmatprep.mubr.bf16.mxu0 0
        %1850 = vmatmul.mubr.bf16.gmra.mxu0 %v1806
        %v1851 = vpop.f32.mrf.mxu0
        %v1852 = vadd.f32 0.0, %v1851
        %v1853 = vpop.f32.mrf.mxu0
        %v1854 = vpop.f32.mrf.mxu0
        %v1855 = vadd.f32 0.0, %v1854
        %v1856 = vpop.f32.mrf.mxu0
        %1857 = vmatprep.mubr.bf16.mxu0 0
        %1858 = vmatmul.mubr.bf16.gmra.mxu0 %v1809
        %v1859 = vpop.f32.mrf.mxu0
        %v1860 = vadd.f32 0.0, %v1859
        %v1861 = vpop.f32.mrf.mxu0
        %v1862 = vpop.f32.mrf.mxu0
        %v1863 = vadd.f32 0.0, %v1862
        %v1864 = vpop.f32.mrf.mxu0
        %1865 = vmatprep.mubr.bf16.mxu0 0
        %1866 = vmatmul.mubr.bf16.gmra.mxu0 %v1812
        %v1867 = vpop.f32.mrf.mxu0
        %v1868 = vadd.f32 0.0, %v1867
        %v1869 = vpop.f32.mrf.mxu0
        %v1870 = vpop.f32.mrf.mxu0
        %v1871 = vadd.f32 0.0, %v1870
        %v1872 = vpop.f32.mrf.mxu0
        %1873 = vmatprep.mubr.bf16.mxu0 0
        %1874 = vmatmul.mubr.bf16.gmra.mxu0 %v1815
        %v1875 = vpop.f32.mrf.mxu0
        %v1876 = vadd.f32 0.0, %v1875
        %v1877 = vpop.f32.mrf.mxu0
        %v1878 = vpop.f32.mrf.mxu0
        %v1879 = vadd.f32 0.0, %v1878
        %v1880 = vpop.f32.mrf.mxu0
        %1881 = vdwg.mxu0
        %v1882 = vpack.c.bf16 %v1855, %v1852
        %v1883 = vpack.c.bf16 %v1863, %v1860
        %v1884 = vpack.c.bf16 %v1871, %v1868
        %v1885 = vpack.c.bf16 %v1879, %v1876
        %1890 = vrot.lane.b32.xlu0 %v1610, 96
        %v1891 = vpop.permute.xlu0 %1890
        %1892 = vrot.lane.b32.xlu0 %v1611, 96
        %v1893 = vpop.permute.xlu0 %1892
        %1894 = vrot.lane.b32.xlu0 %v1612, 96
        %v1895 = vpop.permute.xlu0 %1894
        %1896 = vrot.lane.b32.xlu0 %v1613, 96
        %v1897 = vpop.permute.xlu0 %1896
        %1902 = vrot.lane.b32.xlu0 %v1614, 96
        %v1903 = vpop.permute.xlu0 %1902
        %1904 = vrot.lane.b32.xlu0 %v1615, 96
        %v1905 = vpop.permute.xlu0 %1904
        %1906 = vrot.lane.b32.xlu0 %v1616, 96
        %v1907 = vpop.permute.xlu0 %1906
        %1908 = vrot.lane.b32.xlu0 %v1617, 96
        %v1909 = vpop.permute.xlu0 %1908
        %v1911 = vsel %vm1622, %v1891, 0
        %v1914 = vsel %vm1622, %v1893, 0
        %v1917 = vsel %vm1622, %v1895, 0
        %v1920 = vsel %vm1622, %v1897, 0
        %v1923 = vsel %vm1622, %v1903, 0
        %v1926 = vsel %vm1622, %v1905, 0
        %v1929 = vsel %vm1622, %v1907, 0
        %v1932 = vsel %vm1622, %v1909, 0
        %1934 = vmatprep.subr.bf16.mxu0 0
        %1935 = vmatpush1.bf16.xpose.msra.mxu0 0
        %1936 = vmatprep.subr.bf16.mxu0 0
        %1937 = vmatpush1.bf16.xpose.msra.mxu0 0
        %1938 = vmatprep.subr.bf16.mxu0 0
        %1939 = vmatpush1.bf16.xpose.msra.mxu0 0
        %1940 = vmatprep.subr.bf16.mxu0 0
        %1941 = vmatpush1.bf16.xpose.msra.mxu0 0
        %1942 = vmatprep.subr.bf16.mxu0 0
        %1943 = vmatpush1.bf16.xpose.msra.mxu0 %v1932
        %1944 = vmatprep.subr.bf16.mxu0 0
        %1945 = vmatpush1.bf16.xpose.msra.mxu0 %v1929
        %1946 = vmatprep.subr.bf16.mxu0 0
        %1947 = vmatpush1.bf16.xpose.msra.mxu0 %v1926
        %1948 = vmatprep.subr.bf16.mxu0 0
        %1949 = vmatpush1.bf16.xpose.msra.mxu0 %v1923
        %1950 = vmatprep.subr.bf16.mxu0 0
        %1951 = vmatpush2.bf16.xpose.msra.mxu0 0
        %1952 = vmatprep.subr.bf16.mxu0 0
        %1953 = vmatpush2.bf16.xpose.msra.mxu0 0
        %1954 = vmatprep.subr.bf16.mxu0 0
        %1955 = vmatpush2.bf16.xpose.msra.mxu0 0
        %1956 = vmatprep.subr.bf16.mxu0 0
        %1957 = vmatpush2.bf16.xpose.msra.mxu0 0
        %1958 = vmatprep.subr.bf16.mxu0 0
        %1959 = vmatpush2.bf16.xpose.msra.mxu0 0
        %1960 = vmatprep.subr.bf16.mxu0 0
        %1961 = vmatpush2.bf16.xpose.msra.mxu0 0
        %1962 = vmatprep.subr.bf16.mxu0 0
        %1963 = vmatpush2.bf16.xpose.msra.mxu0 0
        %1964 = vmatprep.subr.bf16.mxu0 0
        %1965 = vmatpush2.bf16.xpose.msra.mxu0 0
        %1966 = vmatprep.mubr.bf16.mxu0 0
        %1967 = vmatmul.mubr.bf16.gmra.mxu0 %v1911
        %v1968 = vpop.f32.mrf.mxu0
        %v1969 = vadd.f32 %v1586, %v1968
        %v1970 = vpop.f32.mrf.mxu0
        %v1971 = vpop.f32.mrf.mxu0
        %v1972 = vadd.f32 %v1587, %v1971
        %v1973 = vpop.f32.mrf.mxu0
        %1974 = vmatprep.mubr.bf16.mxu0 0
        %1975 = vmatmul.mubr.bf16.gmra.mxu0 %v1914
        %v1976 = vpop.f32.mrf.mxu0
        %v1977 = vadd.f32 %v1588, %v1976
        %v1978 = vpop.f32.mrf.mxu0
        %v1979 = vpop.f32.mrf.mxu0
        %v1980 = vadd.f32 %v1589, %v1979
        %v1981 = vpop.f32.mrf.mxu0
        %1982 = vmatprep.mubr.bf16.mxu0 0
        %1983 = vmatmul.mubr.bf16.gmra.mxu0 %v1917
        %v1984 = vpop.f32.mrf.mxu0
        %v1985 = vadd.f32 %v1590, %v1984
        %v1986 = vpop.f32.mrf.mxu0
        %v1987 = vpop.f32.mrf.mxu0
        %v1988 = vadd.f32 %v1591, %v1987
        %v1989 = vpop.f32.mrf.mxu0
        %1990 = vmatprep.mubr.bf16.mxu0 0
        %1991 = vmatmul.mubr.bf16.gmra.mxu0 %v1920
        %v1992 = vpop.f32.mrf.mxu0
        %v1993 = vadd.f32 %v1592, %v1992
        %v1994 = vpop.f32.mrf.mxu0
        %v1995 = vpop.f32.mrf.mxu0
        %v1996 = vadd.f32 %v1593, %v1995
        %v1997 = vpop.f32.mrf.mxu0
        %1998 = vdwg.mxu0
        %v1999 = vsel %vm1712, %v1969, -inf
        %2000 = vmax.xlane.f32.xlu0 %v1999
        %v2001 = vpop.xlane.xlu0 %2000
        %v2002 = vsel %vm1712, %v1972, -inf
        %2003 = vmax.xlane.f32.xlu0 %v2002
        %v2004 = vpop.xlane.xlu0 %2003
        %v2005 = vsel %vm1712, %v1977, -inf
        %2006 = vmax.xlane.f32.xlu0 %v2005
        %v2007 = vpop.xlane.xlu0 %2006
        %v2008 = vsel %vm1712, %v1980, -inf
        %2009 = vmax.xlane.f32.xlu0 %v2008
        %v2010 = vpop.xlane.xlu0 %2009
        %v2011 = vsel %vm1712, %v1985, -inf
        %2012 = vmax.xlane.f32.xlu0 %v2011
        %v2013 = vpop.xlane.xlu0 %2012
        %v2014 = vsel %vm1712, %v1988, -inf
        %2015 = vmax.xlane.f32.xlu0 %v2014
        %v2016 = vpop.xlane.xlu0 %2015
        %v2017 = vsel %vm1712, %v1993, -inf
        %2018 = vmax.xlane.f32.xlu0 %v2017
        %v2019 = vpop.xlane.xlu0 %2018
        %v2020 = vsel %vm1712, %v1996, -inf
        %2021 = vmax.xlane.f32.xlu0 %v2020
        %v2022 = vpop.xlane.xlu0 %2021
        %v2023 = vsub.f32 %v1969, %v2001
        %v2024 = vsub.f32 %v1972, %v2004
        %v2025 = vsub.f32 %v1977, %v2007
        %v2026 = vsub.f32 %v1980, %v2010
        %v2027 = vsub.f32 %v1985, %v2013
        %v2028 = vsub.f32 %v1988, %v2016
        %v2029 = vsub.f32 %v1993, %v2019
        %v2030 = vsub.f32 %v1996, %v2022
        %v2031 = vmul.f32 %v2023, 1.442695
        %v2032 = vpow.pop %v2031
        %v2033 = vmul.f32 %v2024, 1.442695
        %v2034 = vpow.pop %v2033
        %v2035 = vmul.f32 %v2025, 1.442695
        %v2036 = vpow.pop %v2035
        %v2037 = vmul.f32 %v2026, 1.442695
        %v2038 = vpow.pop %v2037
        %v2039 = vmul.f32 %v2027, 1.442695
        %v2040 = vpow.pop %v2039
        %v2041 = vmul.f32 %v2028, 1.442695
        %v2042 = vpow.pop %v2041
        %v2043 = vmul.f32 %v2029, 1.442695
        %v2044 = vpow.pop %v2043
        %v2045 = vmul.f32 %v2030, 1.442695
        %v2046 = vpow.pop %v2045
        %v2047 = vsel %vm1712, %v2032, 0.0
        %2048 = vadd.xlane.f32.xlu0 %v2047
        %v2049 = vpop.xlane.xlu0 %2048
        %v2050 = vsel %vm1712, %v2034, 0.0
        %2051 = vadd.xlane.f32.xlu0 %v2050
        %v2052 = vpop.xlane.xlu0 %2051
        %v2053 = vsel %vm1712, %v2036, 0.0
        %2054 = vadd.xlane.f32.xlu0 %v2053
        %v2055 = vpop.xlane.xlu0 %2054
        %v2056 = vsel %vm1712, %v2038, 0.0
        %2057 = vadd.xlane.f32.xlu0 %v2056
        %v2058 = vpop.xlane.xlu0 %2057
        %v2059 = vsel %vm1712, %v2040, 0.0
        %2060 = vadd.xlane.f32.xlu0 %v2059
        %v2061 = vpop.xlane.xlu0 %2060
        %v2062 = vsel %vm1712, %v2042, 0.0
        %2063 = vadd.xlane.f32.xlu0 %v2062
        %v2064 = vpop.xlane.xlu0 %2063
        %v2065 = vsel %vm1712, %v2044, 0.0
        %2066 = vadd.xlane.f32.xlu0 %v2065
        %v2067 = vpop.xlane.xlu0 %2066
        %v2068 = vsel %vm1712, %v2046, 0.0
        %2069 = vadd.xlane.f32.xlu0 %v2068
        %v2070 = vpop.xlane.xlu0 %2069
        %v2071 = vrcp.pop %v2049
        %v2072 = vmul.f32 %v2032, %v2071
        %v2073 = vrcp.pop %v2052
        %v2074 = vmul.f32 %v2034, %v2073
        %v2075 = vrcp.pop %v2055
        %v2076 = vmul.f32 %v2036, %v2075
        %v2077 = vrcp.pop %v2058
        %v2078 = vmul.f32 %v2038, %v2077
        %v2079 = vrcp.pop %v2061
        %v2080 = vmul.f32 %v2040, %v2079
        %v2081 = vrcp.pop %v2064
        %v2082 = vmul.f32 %v2042, %v2081
        %v2083 = vrcp.pop %v2067
        %v2084 = vmul.f32 %v2044, %v2083
        %v2085 = vrcp.pop %v2070
        %v2086 = vmul.f32 %v2046, %v2085
        %v2087 = vpack.c.bf16 %v2074, %v2072
        %v2088 = vpack.c.bf16 %v2078, %v2076
        %v2089 = vpack.c.bf16 %v2082, %v2080
        %v2090 = vpack.c.bf16 %v2086, %v2084
        %2095 = vrot.lane.b32.xlu0 %v1618, 96
        %v2096 = vpop.permute.xlu0 %2095
        %2097 = vrot.lane.b32.xlu0 %v1619, 96
        %v2098 = vpop.permute.xlu0 %2097
        %2099 = vrot.lane.b32.xlu0 %v1620, 96
        %v2100 = vpop.permute.xlu0 %2099
        %2101 = vrot.lane.b32.xlu0 %v1621, 96
        %v2102 = vpop.permute.xlu0 %2101
        %v2108 = vsel %vm1712, %v2087, 0
        %v2111 = vsel %vm1712, %v2088, 0
        %v2114 = vsel %vm1712, %v2089, 0
        %v2117 = vsel %vm1712, %v2090, 0
        %2119 = vmatprep.subr.bf16.mxu0 0
        %2120 = vmatpush1.bf16.msra.mxu0 0
        %2121 = vmatprep.subr.bf16.mxu0 0
        %2122 = vmatpush1.bf16.msra.mxu0 0
        %2123 = vmatprep.subr.bf16.mxu0 0
        %2124 = vmatpush1.bf16.msra.mxu0 0
        %2125 = vmatprep.subr.bf16.mxu0 0
        %2126 = vmatpush1.bf16.msra.mxu0 0
        %2127 = vmatprep.subr.bf16.mxu0 0
        %2128 = vmatpush1.bf16.msra.mxu0 %v2102
        %2129 = vmatprep.subr.bf16.mxu0 0
        %2130 = vmatpush1.bf16.msra.mxu0 %v2100
        %2131 = vmatprep.subr.bf16.mxu0 0
        %2132 = vmatpush1.bf16.msra.mxu0 %v2098
        %2133 = vmatprep.subr.bf16.mxu0 0
        %2134 = vmatpush1.bf16.msra.mxu0 %v2096
        %2135 = vmatprep.subr.bf16.mxu0 0
        %2136 = vmatpush2.bf16.msra.mxu0 0
        %2137 = vmatprep.subr.bf16.mxu0 0
        %2138 = vmatpush2.bf16.msra.mxu0 0
        %2139 = vmatprep.subr.bf16.mxu0 0
        %2140 = vmatpush2.bf16.msra.mxu0 0
        %2141 = vmatprep.subr.bf16.mxu0 0
        %2142 = vmatpush2.bf16.msra.mxu0 0
        %2143 = vmatprep.subr.bf16.mxu0 0
        %2144 = vmatpush2.bf16.msra.mxu0 0
        %2145 = vmatprep.subr.bf16.mxu0 0
        %2146 = vmatpush2.bf16.msra.mxu0 0
        %2147 = vmatprep.subr.bf16.mxu0 0
        %2148 = vmatpush2.bf16.msra.mxu0 0
        %2149 = vmatprep.subr.bf16.mxu0 0
        %2150 = vmatpush2.bf16.msra.mxu0 0
        %2151 = vmatprep.mubr.bf16.mxu0 0
        %2152 = vmatmul.mubr.bf16.gmra.mxu0 %v2108
        %v2153 = vpop.f32.mrf.mxu0
        %v2154 = vadd.f32 0.0, %v2153
        %v2155 = vpop.f32.mrf.mxu0
        %v2156 = vpop.f32.mrf.mxu0
        %v2157 = vadd.f32 0.0, %v2156
        %v2158 = vpop.f32.mrf.mxu0
        %2159 = vmatprep.mubr.bf16.mxu0 0
        %2160 = vmatmul.mubr.bf16.gmra.mxu0 %v2111
        %v2161 = vpop.f32.mrf.mxu0
        %v2162 = vadd.f32 0.0, %v2161
        %v2163 = vpop.f32.mrf.mxu0
        %v2164 = vpop.f32.mrf.mxu0
        %v2165 = vadd.f32 0.0, %v2164
        %v2166 = vpop.f32.mrf.mxu0
        %2167 = vmatprep.mubr.bf16.mxu0 0
        %2168 = vmatmul.mubr.bf16.gmra.mxu0 %v2114
        %v2169 = vpop.f32.mrf.mxu0
        %v2170 = vadd.f32 0.0, %v2169
        %v2171 = vpop.f32.mrf.mxu0
        %v2172 = vpop.f32.mrf.mxu0
        %v2173 = vadd.f32 0.0, %v2172
        %v2174 = vpop.f32.mrf.mxu0
        %2175 = vmatprep.mubr.bf16.mxu0 0
        %2176 = vmatmul.mubr.bf16.gmra.mxu0 %v2117
        %v2177 = vpop.f32.mrf.mxu0
        %v2178 = vadd.f32 0.0, %v2177
        %v2179 = vpop.f32.mrf.mxu0
        %v2180 = vpop.f32.mrf.mxu0
        %v2181 = vadd.f32 0.0, %v2180
        %v2182 = vpop.f32.mrf.mxu0
        %2183 = vdwg.mxu0
        %v2184 = vpack.c.bf16 %v2157, %v2154
        %v2185 = vpack.c.bf16 %v2165, %v2162
        %v2186 = vpack.c.bf16 %v2173, %v2170
        %v2187 = vpack.c.bf16 %v2181, %v2178
        %v2192 = vunpack.c.l.b16 %v1598
        %v2193 = vunpack.c.l.b16 %v1599
        %v2194 = vunpack.c.l.b16 %v1600
        %v2195 = vunpack.c.l.b16 %v1601
        %v2196 = vpack.c.b16 %v2193, %v2192
        %v2197 = vpack.c.b16 %v2195, %v2194
        %v2201 = vsel %vm1622, %v2184, 0
        %v2204 = vsel %vm1622, %v2185, 0
        %v2207 = vsel %vm1622, %v2186, 0
        %v2210 = vsel %vm1622, %v2187, 0
        %2212 = vmatprep.subr.bf16.mxu0 0
        %2213 = vmatpush1.bf16.msra.mxu0 0
        %2214 = vmatprep.subr.bf16.mxu0 0
        %2215 = vmatpush1.bf16.msra.mxu0 0
        %2216 = vmatprep.subr.bf16.mxu0 0
        %2217 = vmatpush1.bf16.msra.mxu0 0
        %2218 = vmatprep.subr.bf16.mxu0 0
        %2219 = vmatpush1.bf16.msra.mxu0 0
        %2220 = vmatprep.subr.bf16.mxu0 0
        %2221 = vmatpush1.bf16.msra.mxu0 0
        %2222 = vmatprep.subr.bf16.mxu0 0
        %2223 = vmatpush1.bf16.msra.mxu0 0
        %2224 = vmatprep.subr.bf16.mxu0 0
        %2225 = vmatpush1.bf16.msra.mxu0 %v2197
        %2226 = vmatprep.subr.bf16.mxu0 0
        %2227 = vmatpush1.bf16.msra.mxu0 %v2196
        %2228 = vmatprep.subr.bf16.mxu0 0
        %2229 = vmatpush2.bf16.msra.mxu0 0
        %2230 = vmatprep.subr.bf16.mxu0 0
        %2231 = vmatpush2.bf16.msra.mxu0 0
        %2232 = vmatprep.subr.bf16.mxu0 0
        %2233 = vmatpush2.bf16.msra.mxu0 0
        %2234 = vmatprep.subr.bf16.mxu0 0
        %2235 = vmatpush2.bf16.msra.mxu0 0
        %2236 = vmatprep.subr.bf16.mxu0 0
        %2237 = vmatpush2.bf16.msra.mxu0 0
        %2238 = vmatprep.subr.bf16.mxu0 0
        %2239 = vmatpush2.bf16.msra.mxu0 0
        %2240 = vmatprep.subr.bf16.mxu0 0
        %2241 = vmatpush2.bf16.msra.mxu0 0
        %2242 = vmatprep.subr.bf16.mxu0 0
        %2243 = vmatpush2.bf16.msra.mxu0 0
        %2244 = vmatprep.mubr.bf16.mxu0 0
        %2245 = vmatmul.mubr.bf16.gmra.mxu0 %v2201
        %v2246 = vpop.f32.mrf.mxu0
        %v2247 = vadd.f32 0.0, %v2246
        %v2248 = vpop.f32.mrf.mxu0
        %v2249 = vpop.f32.mrf.mxu0
        %v2250 = vadd.f32 0.0, %v2249
        %v2251 = vpop.f32.mrf.mxu0
        %2252 = vmatprep.mubr.bf16.mxu0 0
        %2253 = vmatmul.mubr.bf16.gmra.mxu0 %v2204
        %v2254 = vpop.f32.mrf.mxu0
        %v2255 = vadd.f32 0.0, %v2254
        %v2256 = vpop.f32.mrf.mxu0
        %v2257 = vpop.f32.mrf.mxu0
        %v2258 = vadd.f32 0.0, %v2257
        %v2259 = vpop.f32.mrf.mxu0
        %2260 = vmatprep.mubr.bf16.mxu0 0
        %2261 = vmatmul.mubr.bf16.gmra.mxu0 %v2207
        %v2262 = vpop.f32.mrf.mxu0
        %v2263 = vadd.f32 0.0, %v2262
        %v2264 = vpop.f32.mrf.mxu0
        %v2265 = vpop.f32.mrf.mxu0
        %v2266 = vadd.f32 0.0, %v2265
        %v2267 = vpop.f32.mrf.mxu0
        %2268 = vmatprep.mubr.bf16.mxu0 0
        %2269 = vmatmul.mubr.bf16.gmra.mxu0 %v2210
        %v2270 = vpop.f32.mrf.mxu0
        %v2271 = vadd.f32 0.0, %v2270
        %v2272 = vpop.f32.mrf.mxu0
        %v2273 = vpop.f32.mrf.mxu0
        %v2274 = vadd.f32 0.0, %v2273
        %v2275 = vpop.f32.mrf.mxu0
        %2276 = vdwg.mxu0
        %v2281 = vunpack.c.l.b16 %v1594
        %v2282 = vunpack.c.l.b16 %v1595
        %v2283 = vunpack.c.l.b16 %v1596
        %v2284 = vunpack.c.l.b16 %v1597
        %v2285 = vpack.c.b16 %v2282, %v2281
        %v2286 = vpack.c.b16 %v2284, %v2283
        %v2290 = vsel %vm1622, %v1882, 0
        %v2293 = vsel %vm1622, %v1883, 0
        %v2296 = vsel %vm1622, %v1884, 0
        %v2299 = vsel %vm1622, %v1885, 0
        %2301 = vmatprep.subr.bf16.mxu0 0
        %2302 = vmatpush1.bf16.msra.mxu0 0
        %2303 = vmatprep.subr.bf16.mxu0 0
        %2304 = vmatpush1.bf16.msra.mxu0 0
        %2305 = vmatprep.subr.bf16.mxu0 0
        %2306 = vmatpush1.bf16.msra.mxu0 0
        %2307 = vmatprep.subr.bf16.mxu0 0
        %2308 = vmatpush1.bf16.msra.mxu0 0
        %2309 = vmatprep.subr.bf16.mxu0 0
        %2310 = vmatpush1.bf16.msra.mxu0 0
        %2311 = vmatprep.subr.bf16.mxu0 0
        %2312 = vmatpush1.bf16.msra.mxu0 0
        %2313 = vmatprep.subr.bf16.mxu0 0
        %2314 = vmatpush1.bf16.msra.mxu0 %v2286
        %2315 = vmatprep.subr.bf16.mxu0 0
        %2316 = vmatpush1.bf16.msra.mxu0 %v2285
        %2317 = vmatprep.subr.bf16.mxu0 0
        %2318 = vmatpush2.bf16.msra.mxu0 0
        %2319 = vmatprep.subr.bf16.mxu0 0
        %2320 = vmatpush2.bf16.msra.mxu0 0
        %2321 = vmatprep.subr.bf16.mxu0 0
        %2322 = vmatpush2.bf16.msra.mxu0 0
        %2323 = vmatprep.subr.bf16.mxu0 0
        %2324 = vmatpush2.bf16.msra.mxu0 0
        %2325 = vmatprep.subr.bf16.mxu0 0
        %2326 = vmatpush2.bf16.msra.mxu0 0
        %2327 = vmatprep.subr.bf16.mxu0 0
        %2328 = vmatpush2.bf16.msra.mxu0 0
        %2329 = vmatprep.subr.bf16.mxu0 0
        %2330 = vmatpush2.bf16.msra.mxu0 0
        %2331 = vmatprep.subr.bf16.mxu0 0
        %2332 = vmatpush2.bf16.msra.mxu0 0
        %2333 = vmatprep.mubr.bf16.mxu0 0
        %2334 = vmatmul.mubr.bf16.gmra.mxu0 %v2290
        %v2335 = vpop.f32.mrf.mxu0
        %v2336 = vadd.f32 %v2247, %v2335
        %v2337 = vpop.f32.mrf.mxu0
        %v2338 = vpop.f32.mrf.mxu0
        %v2339 = vadd.f32 %v2250, %v2338
        %v2340 = vpop.f32.mrf.mxu0
        %2341 = vmatprep.mubr.bf16.mxu0 0
        %2342 = vmatmul.mubr.bf16.gmra.mxu0 %v2293
        %v2343 = vpop.f32.mrf.mxu0
        %v2344 = vadd.f32 %v2255, %v2343
        %v2345 = vpop.f32.mrf.mxu0
        %v2346 = vpop.f32.mrf.mxu0
        %v2347 = vadd.f32 %v2258, %v2346
        %v2348 = vpop.f32.mrf.mxu0
        %2349 = vmatprep.mubr.bf16.mxu0 0
        %2350 = vmatmul.mubr.bf16.gmra.mxu0 %v2296
        %v2351 = vpop.f32.mrf.mxu0
        %v2352 = vadd.f32 %v2263, %v2351
        %v2353 = vpop.f32.mrf.mxu0
        %v2354 = vpop.f32.mrf.mxu0
        %v2355 = vadd.f32 %v2266, %v2354
        %v2356 = vpop.f32.mrf.mxu0
        %2357 = vmatprep.mubr.bf16.mxu0 0
        %2358 = vmatmul.mubr.bf16.gmra.mxu0 %v2299
        %v2359 = vpop.f32.mrf.mxu0
        %v2360 = vadd.f32 %v2271, %v2359
        %v2361 = vpop.f32.mrf.mxu0
        %v2362 = vpop.f32.mrf.mxu0
        %v2363 = vadd.f32 %v2274, %v2362
        %v2364 = vpop.f32.mrf.mxu0
        %2365 = vdwg.mxu0
        %2366 = vrot.lane.b32.xlu0 %v1610, 64
        %v2367 = vpop.permute.xlu0 %2366
        %2368 = vrot.lane.b32.xlu0 %v1611, 64
        %v2369 = vpop.permute.xlu0 %2368
        %2370 = vrot.lane.b32.xlu0 %v1612, 64
        %v2371 = vpop.permute.xlu0 %2370
        %2372 = vrot.lane.b32.xlu0 %v1613, 64
        %v2373 = vpop.permute.xlu0 %2372
        %2374 = vrot.lane.b32.xlu0 %v1614, 64
        %v2375 = vpop.permute.xlu0 %2374
        %2376 = vrot.lane.b32.xlu0 %v1615, 64
        %v2377 = vpop.permute.xlu0 %2376
        %2378 = vrot.lane.b32.xlu0 %v1616, 64
        %v2379 = vpop.permute.xlu0 %2378
        %2380 = vrot.lane.b32.xlu0 %v1617, 64
        %v2381 = vpop.permute.xlu0 %2380
        %v2383 = vsel %vm1622, %v2367, 0
        %v2386 = vsel %vm1622, %v2369, 0
        %v2389 = vsel %vm1622, %v2371, 0
        %v2392 = vsel %vm1622, %v2373, 0
        %v2395 = vsel %vm1622, %v2375, 0
        %v2398 = vsel %vm1622, %v2377, 0
        %v2401 = vsel %vm1622, %v2379, 0
        %v2404 = vsel %vm1622, %v2381, 0
        %2406 = vmatprep.subr.bf16.mxu0 0
        %2407 = vmatpush1.bf16.xpose.msra.mxu0 0
        %2408 = vmatprep.subr.bf16.mxu0 0
        %2409 = vmatpush1.bf16.xpose.msra.mxu0 0
        %2410 = vmatprep.subr.bf16.mxu0 0
        %2411 = vmatpush1.bf16.xpose.msra.mxu0 0
        %2412 = vmatprep.subr.bf16.mxu0 0
        %2413 = vmatpush1.bf16.xpose.msra.mxu0 0
        %2414 = vmatprep.subr.bf16.mxu0 0
        %2415 = vmatpush1.bf16.xpose.msra.mxu0 %v2404
        %2416 = vmatprep.subr.bf16.mxu0 0
        %2417 = vmatpush1.bf16.xpose.msra.mxu0 %v2401
        %2418 = vmatprep.subr.bf16.mxu0 0
        %2419 = vmatpush1.bf16.xpose.msra.mxu0 %v2398
        %2420 = vmatprep.subr.bf16.mxu0 0
        %2421 = vmatpush1.bf16.xpose.msra.mxu0 %v2395
        %2422 = vmatprep.subr.bf16.mxu0 0
        %2423 = vmatpush2.bf16.xpose.msra.mxu0 0
        %2424 = vmatprep.subr.bf16.mxu0 0
        %2425 = vmatpush2.bf16.xpose.msra.mxu0 0
        %2426 = vmatprep.subr.bf16.mxu0 0
        %2427 = vmatpush2.bf16.xpose.msra.mxu0 0
        %2428 = vmatprep.subr.bf16.mxu0 0
        %2429 = vmatpush2.bf16.xpose.msra.mxu0 0
        %2430 = vmatprep.subr.bf16.mxu0 0
        %2431 = vmatpush2.bf16.xpose.msra.mxu0 0
        %2432 = vmatprep.subr.bf16.mxu0 0
        %2433 = vmatpush2.bf16.xpose.msra.mxu0 0
        %2434 = vmatprep.subr.bf16.mxu0 0
        %2435 = vmatpush2.bf16.xpose.msra.mxu0 0
        %2436 = vmatprep.subr.bf16.mxu0 0
        %2437 = vmatpush2.bf16.xpose.msra.mxu0 0
        %2438 = vmatprep.mubr.bf16.mxu0 0
        %2439 = vmatmul.mubr.bf16.gmra.mxu0 %v2383
        %v2440 = vpop.f32.mrf.mxu0
        %v2441 = vadd.f32 %v1586, %v2440
        %v2442 = vpop.f32.mrf.mxu0
        %v2443 = vpop.f32.mrf.mxu0
        %v2444 = vadd.f32 %v1587, %v2443
        %v2445 = vpop.f32.mrf.mxu0
        %2446 = vmatprep.mubr.bf16.mxu0 0
        %2447 = vmatmul.mubr.bf16.gmra.mxu0 %v2386
        %v2448 = vpop.f32.mrf.mxu0
        %v2449 = vadd.f32 %v1588, %v2448
        %v2450 = vpop.f32.mrf.mxu0
        %v2451 = vpop.f32.mrf.mxu0
        %v2452 = vadd.f32 %v1589, %v2451
        %v2453 = vpop.f32.mrf.mxu0
        %2454 = vmatprep.mubr.bf16.mxu0 0
        %2455 = vmatmul.mubr.bf16.gmra.mxu0 %v2389
        %v2456 = vpop.f32.mrf.mxu0
        %v2457 = vadd.f32 %v1590, %v2456
        %v2458 = vpop.f32.mrf.mxu0
        %v2459 = vpop.f32.mrf.mxu0
        %v2460 = vadd.f32 %v1591, %v2459
        %v2461 = vpop.f32.mrf.mxu0
        %2462 = vmatprep.mubr.bf16.mxu0 0
        %2463 = vmatmul.mubr.bf16.gmra.mxu0 %v2392
        %v2464 = vpop.f32.mrf.mxu0
        %v2465 = vadd.f32 %v1592, %v2464
        %v2466 = vpop.f32.mrf.mxu0
        %v2467 = vpop.f32.mrf.mxu0
        %v2468 = vadd.f32 %v1593, %v2467
        %v2469 = vpop.f32.mrf.mxu0
        %2470 = vdwg.mxu0
        %v2471 = vsel %vm1712, %v2441, -inf
        %2472 = vmax.xlane.f32.xlu0 %v2471
        %v2473 = vpop.xlane.xlu0 %2472
        %v2474 = vsel %vm1712, %v2444, -inf
        %2475 = vmax.xlane.f32.xlu0 %v2474
        %v2476 = vpop.xlane.xlu0 %2475
        %v2477 = vsel %vm1712, %v2449, -inf
        %2478 = vmax.xlane.f32.xlu0 %v2477
        %v2479 = vpop.xlane.xlu0 %2478
        %v2480 = vsel %vm1712, %v2452, -inf
        %2481 = vmax.xlane.f32.xlu0 %v2480
        %v2482 = vpop.xlane.xlu0 %2481
        %v2483 = vsel %vm1712, %v2457, -inf
        %2484 = vmax.xlane.f32.xlu0 %v2483
        %v2485 = vpop.xlane.xlu0 %2484
        %v2486 = vsel %vm1712, %v2460, -inf
        %2487 = vmax.xlane.f32.xlu0 %v2486
        %v2488 = vpop.xlane.xlu0 %2487
        %v2489 = vsel %vm1712, %v2465, -inf
        %2490 = vmax.xlane.f32.xlu0 %v2489
        %v2491 = vpop.xlane.xlu0 %2490
        %v2492 = vsel %vm1712, %v2468, -inf
        %2493 = vmax.xlane.f32.xlu0 %v2492
        %v2494 = vpop.xlane.xlu0 %2493
        %v2495 = vsub.f32 %v2441, %v2473
        %v2496 = vsub.f32 %v2444, %v2476
        %v2497 = vsub.f32 %v2449, %v2479
        %v2498 = vsub.f32 %v2452, %v2482
        %v2499 = vsub.f32 %v2457, %v2485
        %v2500 = vsub.f32 %v2460, %v2488
        %v2501 = vsub.f32 %v2465, %v2491
        %v2502 = vsub.f32 %v2468, %v2494
        %v2503 = vmul.f32 %v2495, 1.442695
        %v2504 = vpow.pop %v2503
        %v2505 = vmul.f32 %v2496, 1.442695
        %v2506 = vpow.pop %v2505
        %v2507 = vmul.f32 %v2497, 1.442695
        %v2508 = vpow.pop %v2507
        %v2509 = vmul.f32 %v2498, 1.442695
        %v2510 = vpow.pop %v2509
        %v2511 = vmul.f32 %v2499, 1.442695
        %v2512 = vpow.pop %v2511
        %v2513 = vmul.f32 %v2500, 1.442695
        %v2514 = vpow.pop %v2513
        %v2515 = vmul.f32 %v2501, 1.442695
        %v2516 = vpow.pop %v2515
        %v2517 = vmul.f32 %v2502, 1.442695
        %v2518 = vpow.pop %v2517
        %v2519 = vsel %vm1712, %v2504, 0.0
        %2520 = vadd.xlane.f32.xlu0 %v2519
        %v2521 = vpop.xlane.xlu0 %2520
        %v2522 = vsel %vm1712, %v2506, 0.0
        %2523 = vadd.xlane.f32.xlu0 %v2522
        %v2524 = vpop.xlane.xlu0 %2523
        %v2525 = vsel %vm1712, %v2508, 0.0
        %2526 = vadd.xlane.f32.xlu0 %v2525
        %v2527 = vpop.xlane.xlu0 %2526
        %v2528 = vsel %vm1712, %v2510, 0.0
        %2529 = vadd.xlane.f32.xlu0 %v2528
        %v2530 = vpop.xlane.xlu0 %2529
        %v2531 = vsel %vm1712, %v2512, 0.0
        %2532 = vadd.xlane.f32.xlu0 %v2531
        %v2533 = vpop.xlane.xlu0 %2532
        %v2534 = vsel %vm1712, %v2514, 0.0
        %2535 = vadd.xlane.f32.xlu0 %v2534
        %v2536 = vpop.xlane.xlu0 %2535
        %v2537 = vsel %vm1712, %v2516, 0.0
        %2538 = vadd.xlane.f32.xlu0 %v2537
        %v2539 = vpop.xlane.xlu0 %2538
        %v2540 = vsel %vm1712, %v2518, 0.0
        %2541 = vadd.xlane.f32.xlu0 %v2540
        %v2542 = vpop.xlane.xlu0 %2541
        %v2543 = vrcp.pop %v2521
        %v2544 = vmul.f32 %v2504, %v2543
        %v2545 = vrcp.pop %v2524
        %v2546 = vmul.f32 %v2506, %v2545
        %v2547 = vrcp.pop %v2527
        %v2548 = vmul.f32 %v2508, %v2547
        %v2549 = vrcp.pop %v2530
        %v2550 = vmul.f32 %v2510, %v2549
        %v2551 = vrcp.pop %v2533
        %v2552 = vmul.f32 %v2512, %v2551
        %v2553 = vrcp.pop %v2536
        %v2554 = vmul.f32 %v2514, %v2553
        %v2555 = vrcp.pop %v2539
        %v2556 = vmul.f32 %v2516, %v2555
        %v2557 = vrcp.pop %v2542
        %v2558 = vmul.f32 %v2518, %v2557
        %v2559 = vpack.c.bf16 %v2546, %v2544
        %v2560 = vpack.c.bf16 %v2550, %v2548
        %v2561 = vpack.c.bf16 %v2554, %v2552
        %v2562 = vpack.c.bf16 %v2558, %v2556
        %2563 = vrot.lane.b32.xlu0 %v1618, 64
        %v2564 = vpop.permute.xlu0 %2563
        %2565 = vrot.lane.b32.xlu0 %v1619, 64
        %v2566 = vpop.permute.xlu0 %2565
        %2567 = vrot.lane.b32.xlu0 %v1620, 64
        %v2568 = vpop.permute.xlu0 %2567
        %2569 = vrot.lane.b32.xlu0 %v1621, 64
        %v2570 = vpop.permute.xlu0 %2569
        %v2576 = vsel %vm1712, %v2559, 0
        %v2579 = vsel %vm1712, %v2560, 0
        %v2582 = vsel %vm1712, %v2561, 0
        %v2585 = vsel %vm1712, %v2562, 0
        %2587 = vmatprep.subr.bf16.mxu0 0
        %2588 = vmatpush1.bf16.msra.mxu0 0
        %2589 = vmatprep.subr.bf16.mxu0 0
        %2590 = vmatpush1.bf16.msra.mxu0 0
        %2591 = vmatprep.subr.bf16.mxu0 0
        %2592 = vmatpush1.bf16.msra.mxu0 0
        %2593 = vmatprep.subr.bf16.mxu0 0
        %2594 = vmatpush1.bf16.msra.mxu0 0
        %2595 = vmatprep.subr.bf16.mxu0 0
        %2596 = vmatpush1.bf16.msra.mxu0 %v2570
        %2597 = vmatprep.subr.bf16.mxu0 0
        %2598 = vmatpush1.bf16.msra.mxu0 %v2568
        %2599 = vmatprep.subr.bf16.mxu0 0
        %2600 = vmatpush1.bf16.msra.mxu0 %v2566
        %2601 = vmatprep.subr.bf16.mxu0 0
        %2602 = vmatpush1.bf16.msra.mxu0 %v2564
        %2603 = vmatprep.subr.bf16.mxu0 0
        %2604 = vmatpush2.bf16.msra.mxu0 0
        %2605 = vmatprep.subr.bf16.mxu0 0
        %2606 = vmatpush2.bf16.msra.mxu0 0
        %2607 = vmatprep.subr.bf16.mxu0 0
        %2608 = vmatpush2.bf16.msra.mxu0 0
        %2609 = vmatprep.subr.bf16.mxu0 0
        %2610 = vmatpush2.bf16.msra.mxu0 0
        %2611 = vmatprep.subr.bf16.mxu0 0
        %2612 = vmatpush2.bf16.msra.mxu0 0
        %2613 = vmatprep.subr.bf16.mxu0 0
        %2614 = vmatpush2.bf16.msra.mxu0 0
        %2615 = vmatprep.subr.bf16.mxu0 0
        %2616 = vmatpush2.bf16.msra.mxu0 0
        %2617 = vmatprep.subr.bf16.mxu0 0
        %2618 = vmatpush2.bf16.msra.mxu0 0
        %2619 = vmatprep.mubr.bf16.mxu0 0
        %2620 = vmatmul.mubr.bf16.gmra.mxu0 %v2576
        %v2621 = vpop.f32.mrf.mxu0
        %v2622 = vadd.f32 0.0, %v2621
        %v2623 = vpop.f32.mrf.mxu0
        %v2624 = vpop.f32.mrf.mxu0
        %v2625 = vadd.f32 0.0, %v2624
        %v2626 = vpop.f32.mrf.mxu0
        %2627 = vmatprep.mubr.bf16.mxu0 0
        %2628 = vmatmul.mubr.bf16.gmra.mxu0 %v2579
        %v2629 = vpop.f32.mrf.mxu0
        %v2630 = vadd.f32 0.0, %v2629
        %v2631 = vpop.f32.mrf.mxu0
        %v2632 = vpop.f32.mrf.mxu0
        %v2633 = vadd.f32 0.0, %v2632
        %v2634 = vpop.f32.mrf.mxu0
        %2635 = vmatprep.mubr.bf16.mxu0 0
        %2636 = vmatmul.mubr.bf16.gmra.mxu0 %v2582
        %v2637 = vpop.f32.mrf.mxu0
        %v2638 = vadd.f32 0.0, %v2637
        %v2639 = vpop.f32.mrf.mxu0
        %v2640 = vpop.f32.mrf.mxu0
        %v2641 = vadd.f32 0.0, %v2640
        %v2642 = vpop.f32.mrf.mxu0
        %2643 = vmatprep.mubr.bf16.mxu0 0
        %2644 = vmatmul.mubr.bf16.gmra.mxu0 %v2585
        %v2645 = vpop.f32.mrf.mxu0
        %v2646 = vadd.f32 0.0, %v2645
        %v2647 = vpop.f32.mrf.mxu0
        %v2648 = vpop.f32.mrf.mxu0
        %v2649 = vadd.f32 0.0, %v2648
        %v2650 = vpop.f32.mrf.mxu0
        %2651 = vdwg.mxu0
        %v2652 = vpack.c.bf16 %v2625, %v2622
        %v2653 = vpack.c.bf16 %v2633, %v2630
        %v2654 = vpack.c.bf16 %v2641, %v2638
        %v2655 = vpack.c.bf16 %v2649, %v2646
        %v2660 = vunpack.c.l.b16 %v1602
        %v2661 = vunpack.c.l.b16 %v1603
        %v2662 = vunpack.c.l.b16 %v1604
        %v2663 = vunpack.c.l.b16 %v1605
        %v2664 = vpack.c.b16 %v2661, %v2660
        %v2665 = vpack.c.b16 %v2663, %v2662
        %v2669 = vsel %vm1622, %v2652, 0
        %v2672 = vsel %vm1622, %v2653, 0
        %v2675 = vsel %vm1622, %v2654, 0
        %v2678 = vsel %vm1622, %v2655, 0
        %2680 = vmatprep.subr.bf16.mxu0 0
        %2681 = vmatpush1.bf16.msra.mxu0 0
        %2682 = vmatprep.subr.bf16.mxu0 0
        %2683 = vmatpush1.bf16.msra.mxu0 0
        %2684 = vmatprep.subr.bf16.mxu0 0
        %2685 = vmatpush1.bf16.msra.mxu0 0
        %2686 = vmatprep.subr.bf16.mxu0 0
        %2687 = vmatpush1.bf16.msra.mxu0 0
        %2688 = vmatprep.subr.bf16.mxu0 0
        %2689 = vmatpush1.bf16.msra.mxu0 0
        %2690 = vmatprep.subr.bf16.mxu0 0
        %2691 = vmatpush1.bf16.msra.mxu0 0
        %2692 = vmatprep.subr.bf16.mxu0 0
        %2693 = vmatpush1.bf16.msra.mxu0 %v2665
        %2694 = vmatprep.subr.bf16.mxu0 0
        %2695 = vmatpush1.bf16.msra.mxu0 %v2664
        %2696 = vmatprep.subr.bf16.mxu0 0
        %2697 = vmatpush2.bf16.msra.mxu0 0
        %2698 = vmatprep.subr.bf16.mxu0 0
        %2699 = vmatpush2.bf16.msra.mxu0 0
        %2700 = vmatprep.subr.bf16.mxu0 0
        %2701 = vmatpush2.bf16.msra.mxu0 0
        %2702 = vmatprep.subr.bf16.mxu0 0
        %2703 = vmatpush2.bf16.msra.mxu0 0
        %2704 = vmatprep.subr.bf16.mxu0 0
        %2705 = vmatpush2.bf16.msra.mxu0 0
        %2706 = vmatprep.subr.bf16.mxu0 0
        %2707 = vmatpush2.bf16.msra.mxu0 0
        %2708 = vmatprep.subr.bf16.mxu0 0
        %2709 = vmatpush2.bf16.msra.mxu0 0
        %2710 = vmatprep.subr.bf16.mxu0 0
        %2711 = vmatpush2.bf16.msra.mxu0 0
        %2712 = vmatprep.mubr.bf16.mxu0 0
        %2713 = vmatmul.mubr.bf16.gmra.mxu0 %v2669
        %v2714 = vpop.f32.mrf.mxu0
        %v2715 = vadd.f32 0.0, %v2714
        %v2716 = vpop.f32.mrf.mxu0
        %v2717 = vpop.f32.mrf.mxu0
        %v2718 = vadd.f32 0.0, %v2717
        %v2719 = vpop.f32.mrf.mxu0
        %2720 = vmatprep.mubr.bf16.mxu0 0
        %2721 = vmatmul.mubr.bf16.gmra.mxu0 %v2672
        %v2722 = vpop.f32.mrf.mxu0
        %v2723 = vadd.f32 0.0, %v2722
        %v2724 = vpop.f32.mrf.mxu0
        %v2725 = vpop.f32.mrf.mxu0
        %v2726 = vadd.f32 0.0, %v2725
        %v2727 = vpop.f32.mrf.mxu0
        %2728 = vmatprep.mubr.bf16.mxu0 0
        %2729 = vmatmul.mubr.bf16.gmra.mxu0 %v2675
        %v2730 = vpop.f32.mrf.mxu0
        %v2731 = vadd.f32 0.0, %v2730
        %v2732 = vpop.f32.mrf.mxu0
        %v2733 = vpop.f32.mrf.mxu0
        %v2734 = vadd.f32 0.0, %v2733
        %v2735 = vpop.f32.mrf.mxu0
        %2736 = vmatprep.mubr.bf16.mxu0 0
        %2737 = vmatmul.mubr.bf16.gmra.mxu0 %v2678
        %v2738 = vpop.f32.mrf.mxu0
        %v2739 = vadd.f32 0.0, %v2738
        %v2740 = vpop.f32.mrf.mxu0
        %v2741 = vpop.f32.mrf.mxu0
        %v2742 = vadd.f32 0.0, %v2741
        %v2743 = vpop.f32.mrf.mxu0
        %2744 = vdwg.mxu0
        %v2745 = vadd.f32 %v2336, %v2715
        %v2746 = vadd.f32 %v2339, %v2718
        %v2747 = vadd.f32 %v2344, %v2723
        %v2748 = vadd.f32 %v2347, %v2726
        %v2749 = vadd.f32 %v2352, %v2731
        %v2750 = vadd.f32 %v2355, %v2734
        %v2751 = vadd.f32 %v2360, %v2739
        %v2752 = vadd.f32 %v2363, %v2742
        %2753 = vrot.lane.b32.xlu0 %v1610, 32
        %v2754 = vpop.permute.xlu0 %2753
        %2755 = vrot.lane.b32.xlu0 %v1611, 32
        %v2756 = vpop.permute.xlu0 %2755
        %2757 = vrot.lane.b32.xlu0 %v1612, 32
        %v2758 = vpop.permute.xlu0 %2757
        %2759 = vrot.lane.b32.xlu0 %v1613, 32
        %v2760 = vpop.permute.xlu0 %2759
        %2761 = vrot.lane.b32.xlu0 %v1614, 32
        %v2762 = vpop.permute.xlu0 %2761
        %2763 = vrot.lane.b32.xlu0 %v1615, 32
        %v2764 = vpop.permute.xlu0 %2763
        %2765 = vrot.lane.b32.xlu0 %v1616, 32
        %v2766 = vpop.permute.xlu0 %2765
        %2767 = vrot.lane.b32.xlu0 %v1617, 32
        %v2768 = vpop.permute.xlu0 %2767
        %v2770 = vsel %vm1622, %v2754, 0
        %v2773 = vsel %vm1622, %v2756, 0
        %v2776 = vsel %vm1622, %v2758, 0
        %v2779 = vsel %vm1622, %v2760, 0
        %v2782 = vsel %vm1622, %v2762, 0
        %v2785 = vsel %vm1622, %v2764, 0
        %v2788 = vsel %vm1622, %v2766, 0
        %v2791 = vsel %vm1622, %v2768, 0
        %2793 = vmatprep.subr.bf16.mxu0 0
        %2794 = vmatpush1.bf16.xpose.msra.mxu0 0
        %2795 = vmatprep.subr.bf16.mxu0 0
        %2796 = vmatpush1.bf16.xpose.msra.mxu0 0
        %2797 = vmatprep.subr.bf16.mxu0 0
        %2798 = vmatpush1.bf16.xpose.msra.mxu0 0
        %2799 = vmatprep.subr.bf16.mxu0 0
        %2800 = vmatpush1.bf16.xpose.msra.mxu0 0
        %2801 = vmatprep.subr.bf16.mxu0 0
        %2802 = vmatpush1.bf16.xpose.msra.mxu0 %v2791
        %2803 = vmatprep.subr.bf16.mxu0 0
        %2804 = vmatpush1.bf16.xpose.msra.mxu0 %v2788
        %2805 = vmatprep.subr.bf16.mxu0 0
        %2806 = vmatpush1.bf16.xpose.msra.mxu0 %v2785
        %2807 = vmatprep.subr.bf16.mxu0 0
        %2808 = vmatpush1.bf16.xpose.msra.mxu0 %v2782
        %2809 = vmatprep.subr.bf16.mxu0 0
        %2810 = vmatpush2.bf16.xpose.msra.mxu0 0
        %2811 = vmatprep.subr.bf16.mxu0 0
        %2812 = vmatpush2.bf16.xpose.msra.mxu0 0
        %2813 = vmatprep.subr.bf16.mxu0 0
        %2814 = vmatpush2.bf16.xpose.msra.mxu0 0
        %2815 = vmatprep.subr.bf16.mxu0 0
        %2816 = vmatpush2.bf16.xpose.msra.mxu0 0
        %2817 = vmatprep.subr.bf16.mxu0 0
        %2818 = vmatpush2.bf16.xpose.msra.mxu0 0
        %2819 = vmatprep.subr.bf16.mxu0 0
        %2820 = vmatpush2.bf16.xpose.msra.mxu0 0
        %2821 = vmatprep.subr.bf16.mxu0 0
        %2822 = vmatpush2.bf16.xpose.msra.mxu0 0
        %2823 = vmatprep.subr.bf16.mxu0 0
        %2824 = vmatpush2.bf16.xpose.msra.mxu0 0
        %2825 = vmatprep.mubr.bf16.mxu0 0
        %2826 = vmatmul.mubr.bf16.gmra.mxu0 %v2770
        %v2827 = vpop.f32.mrf.mxu0
        %v2828 = vadd.f32 %v1586, %v2827
        %v2829 = vpop.f32.mrf.mxu0
        %v2830 = vpop.f32.mrf.mxu0
        %v2831 = vadd.f32 %v1587, %v2830
        %v2832 = vpop.f32.mrf.mxu0
        %2833 = vmatprep.mubr.bf16.mxu0 0
        %2834 = vmatmul.mubr.bf16.gmra.mxu0 %v2773
        %v2835 = vpop.f32.mrf.mxu0
        %v2836 = vadd.f32 %v1588, %v2835
        %v2837 = vpop.f32.mrf.mxu0
        %v2838 = vpop.f32.mrf.mxu0
        %v2839 = vadd.f32 %v1589, %v2838
        %v2840 = vpop.f32.mrf.mxu0
        %2841 = vmatprep.mubr.bf16.mxu0 0
        %2842 = vmatmul.mubr.bf16.gmra.mxu0 %v2776
        %v2843 = vpop.f32.mrf.mxu0
        %v2844 = vadd.f32 %v1590, %v2843
        %v2845 = vpop.f32.mrf.mxu0
        %v2846 = vpop.f32.mrf.mxu0
        %v2847 = vadd.f32 %v1591, %v2846
        %v2848 = vpop.f32.mrf.mxu0
        %2849 = vmatprep.mubr.bf16.mxu0 0
        %2850 = vmatmul.mubr.bf16.gmra.mxu0 %v2779
        %v2851 = vpop.f32.mrf.mxu0
        %v2852 = vadd.f32 %v1592, %v2851
        %v2853 = vpop.f32.mrf.mxu0
        %v2854 = vpop.f32.mrf.mxu0
        %v2855 = vadd.f32 %v1593, %v2854
        %v2856 = vpop.f32.mrf.mxu0
        %2857 = vdwg.mxu0
        %v2858 = vsel %vm1712, %v2828, -inf
        %2859 = vmax.xlane.f32.xlu0 %v2858
        %v2860 = vpop.xlane.xlu0 %2859
        %v2861 = vsel %vm1712, %v2831, -inf
        %2862 = vmax.xlane.f32.xlu0 %v2861
        %v2863 = vpop.xlane.xlu0 %2862
        %v2864 = vsel %vm1712, %v2836, -inf
        %2865 = vmax.xlane.f32.xlu0 %v2864
        %v2866 = vpop.xlane.xlu0 %2865
        %v2867 = vsel %vm1712, %v2839, -inf
        %2868 = vmax.xlane.f32.xlu0 %v2867
        %v2869 = vpop.xlane.xlu0 %2868
        %v2870 = vsel %vm1712, %v2844, -inf
        %2871 = vmax.xlane.f32.xlu0 %v2870
        %v2872 = vpop.xlane.xlu0 %2871
        %v2873 = vsel %vm1712, %v2847, -inf
        %2874 = vmax.xlane.f32.xlu0 %v2873
        %v2875 = vpop.xlane.xlu0 %2874
        %v2876 = vsel %vm1712, %v2852, -inf
        %2877 = vmax.xlane.f32.xlu0 %v2876
        %v2878 = vpop.xlane.xlu0 %2877
        %v2879 = vsel %vm1712, %v2855, -inf
        %2880 = vmax.xlane.f32.xlu0 %v2879
        %v2881 = vpop.xlane.xlu0 %2880
        %v2882 = vsub.f32 %v2828, %v2860
        %v2883 = vsub.f32 %v2831, %v2863
        %v2884 = vsub.f32 %v2836, %v2866
        %v2885 = vsub.f32 %v2839, %v2869
        %v2886 = vsub.f32 %v2844, %v2872
        %v2887 = vsub.f32 %v2847, %v2875
        %v2888 = vsub.f32 %v2852, %v2878
        %v2889 = vsub.f32 %v2855, %v2881
        %v2890 = vmul.f32 %v2882, 1.442695
        %v2891 = vpow.pop %v2890
        %v2892 = vmul.f32 %v2883, 1.442695
        %v2893 = vpow.pop %v2892
        %v2894 = vmul.f32 %v2884, 1.442695
        %v2895 = vpow.pop %v2894
        %v2896 = vmul.f32 %v2885, 1.442695
        %v2897 = vpow.pop %v2896
        %v2898 = vmul.f32 %v2886, 1.442695
        %v2899 = vpow.pop %v2898
        %v2900 = vmul.f32 %v2887, 1.442695
        %v2901 = vpow.pop %v2900
        %v2902 = vmul.f32 %v2888, 1.442695
        %v2903 = vpow.pop %v2902
        %v2904 = vmul.f32 %v2889, 1.442695
        %v2905 = vpow.pop %v2904
        %v2906 = vsel %vm1712, %v2891, 0.0
        %2907 = vadd.xlane.f32.xlu0 %v2906
        %v2908 = vpop.xlane.xlu0 %2907
        %v2909 = vsel %vm1712, %v2893, 0.0
        %2910 = vadd.xlane.f32.xlu0 %v2909
        %v2911 = vpop.xlane.xlu0 %2910
        %v2912 = vsel %vm1712, %v2895, 0.0
        %2913 = vadd.xlane.f32.xlu0 %v2912
        %v2914 = vpop.xlane.xlu0 %2913
        %v2915 = vsel %vm1712, %v2897, 0.0
        %2916 = vadd.xlane.f32.xlu0 %v2915
        %v2917 = vpop.xlane.xlu0 %2916
        %v2918 = vsel %vm1712, %v2899, 0.0
        %2919 = vadd.xlane.f32.xlu0 %v2918
        %v2920 = vpop.xlane.xlu0 %2919
        %v2921 = vsel %vm1712, %v2901, 0.0
        %2922 = vadd.xlane.f32.xlu0 %v2921
        %v2923 = vpop.xlane.xlu0 %2922
        %v2924 = vsel %vm1712, %v2903, 0.0
        %2925 = vadd.xlane.f32.xlu0 %v2924
        %v2926 = vpop.xlane.xlu0 %2925
        %v2927 = vsel %vm1712, %v2905, 0.0
        %2928 = vadd.xlane.f32.xlu0 %v2927
        %v2929 = vpop.xlane.xlu0 %2928
        %v2930 = vrcp.pop %v2908
        %v2931 = vmul.f32 %v2891, %v2930
        %v2932 = vrcp.pop %v2911
        %v2933 = vmul.f32 %v2893, %v2932
        %v2934 = vrcp.pop %v2914
        %v2935 = vmul.f32 %v2895, %v2934
        %v2936 = vrcp.pop %v2917
        %v2937 = vmul.f32 %v2897, %v2936
        %v2938 = vrcp.pop %v2920
        %v2939 = vmul.f32 %v2899, %v2938
        %v2940 = vrcp.pop %v2923
        %v2941 = vmul.f32 %v2901, %v2940
        %v2942 = vrcp.pop %v2926
        %v2943 = vmul.f32 %v2903, %v2942
        %v2944 = vrcp.pop %v2929
        %v2945 = vmul.f32 %v2905, %v2944
        %v2946 = vpack.c.bf16 %v2933, %v2931
        %v2947 = vpack.c.bf16 %v2937, %v2935
        %v2948 = vpack.c.bf16 %v2941, %v2939
        %v2949 = vpack.c.bf16 %v2945, %v2943
        %2950 = vrot.lane.b32.xlu0 %v1618, 32
        %v2951 = vpop.permute.xlu0 %2950
        %2952 = vrot.lane.b32.xlu0 %v1619, 32
        %v2953 = vpop.permute.xlu0 %2952
        %2954 = vrot.lane.b32.xlu0 %v1620, 32
        %v2955 = vpop.permute.xlu0 %2954
        %2956 = vrot.lane.b32.xlu0 %v1621, 32
        %v2957 = vpop.permute.xlu0 %2956
        %v2963 = vsel %vm1712, %v2946, 0
        %v2966 = vsel %vm1712, %v2947, 0
        %v2969 = vsel %vm1712, %v2948, 0
        %v2972 = vsel %vm1712, %v2949, 0
        %2974 = vmatprep.subr.bf16.mxu0 0
        %2975 = vmatpush1.bf16.msra.mxu0 0
        %2976 = vmatprep.subr.bf16.mxu0 0
        %2977 = vmatpush1.bf16.msra.mxu0 0
        %2978 = vmatprep.subr.bf16.mxu0 0
        %2979 = vmatpush1.bf16.msra.mxu0 0
        %2980 = vmatprep.subr.bf16.mxu0 0
        %2981 = vmatpush1.bf16.msra.mxu0 0
        %2982 = vmatprep.subr.bf16.mxu0 0
        %2983 = vmatpush1.bf16.msra.mxu0 %v2957
        %2984 = vmatprep.subr.bf16.mxu0 0
        %2985 = vmatpush1.bf16.msra.mxu0 %v2955
        %2986 = vmatprep.subr.bf16.mxu0 0
        %2987 = vmatpush1.bf16.msra.mxu0 %v2953
        %2988 = vmatprep.subr.bf16.mxu0 0
        %2989 = vmatpush1.bf16.msra.mxu0 %v2951
        %2990 = vmatprep.subr.bf16.mxu0 0
        %2991 = vmatpush2.bf16.msra.mxu0 0
        %2992 = vmatprep.subr.bf16.mxu0 0
        %2993 = vmatpush2.bf16.msra.mxu0 0
        %2994 = vmatprep.subr.bf16.mxu0 0
        %2995 = vmatpush2.bf16.msra.mxu0 0
        %2996 = vmatprep.subr.bf16.mxu0 0
        %2997 = vmatpush2.bf16.msra.mxu0 0
        %2998 = vmatprep.subr.bf16.mxu0 0
        %2999 = vmatpush2.bf16.msra.mxu0 0
        %3000 = vmatprep.subr.bf16.mxu0 0
        %3001 = vmatpush2.bf16.msra.mxu0 0
        %3002 = vmatprep.subr.bf16.mxu0 0
        %3003 = vmatpush2.bf16.msra.mxu0 0
        %3004 = vmatprep.subr.bf16.mxu0 0
        %3005 = vmatpush2.bf16.msra.mxu0 0
        %3006 = vmatprep.mubr.bf16.mxu0 0
        %3007 = vmatmul.mubr.bf16.gmra.mxu0 %v2963
        %v3008 = vpop.f32.mrf.mxu0
        %v3009 = vadd.f32 0.0, %v3008
        %v3010 = vpop.f32.mrf.mxu0
        %v3011 = vpop.f32.mrf.mxu0
        %v3012 = vadd.f32 0.0, %v3011
        %v3013 = vpop.f32.mrf.mxu0
        %3014 = vmatprep.mubr.bf16.mxu0 0
        %3015 = vmatmul.mubr.bf16.gmra.mxu0 %v2966
        %v3016 = vpop.f32.mrf.mxu0
        %v3017 = vadd.f32 0.0, %v3016
        %v3018 = vpop.f32.mrf.mxu0
        %v3019 = vpop.f32.mrf.mxu0
        %v3020 = vadd.f32 0.0, %v3019
        %v3021 = vpop.f32.mrf.mxu0
        %3022 = vmatprep.mubr.bf16.mxu0 0
        %3023 = vmatmul.mubr.bf16.gmra.mxu0 %v2969
        %v3024 = vpop.f32.mrf.mxu0
        %v3025 = vadd.f32 0.0, %v3024
        %v3026 = vpop.f32.mrf.mxu0
        %v3027 = vpop.f32.mrf.mxu0
        %v3028 = vadd.f32 0.0, %v3027
        %v3029 = vpop.f32.mrf.mxu0
        %3030 = vmatprep.mubr.bf16.mxu0 0
        %3031 = vmatmul.mubr.bf16.gmra.mxu0 %v2972
        %v3032 = vpop.f32.mrf.mxu0
        %v3033 = vadd.f32 0.0, %v3032
        %v3034 = vpop.f32.mrf.mxu0
        %v3035 = vpop.f32.mrf.mxu0
        %v3036 = vadd.f32 0.0, %v3035
        %v3037 = vpop.f32.mrf.mxu0
        %3038 = vdwg.mxu0
        %v3039 = vpack.c.bf16 %v3012, %v3009
        %v3040 = vpack.c.bf16 %v3020, %v3017
        %v3041 = vpack.c.bf16 %v3028, %v3025
        %v3042 = vpack.c.bf16 %v3036, %v3033
        %v3047 = vunpack.c.l.b16 %v1606
        %v3048 = vunpack.c.l.b16 %v1607
        %v3049 = vunpack.c.l.b16 %v1608
        %v3050 = vunpack.c.l.b16 %v1609
        %v3051 = vpack.c.b16 %v3048, %v3047
        %v3052 = vpack.c.b16 %v3050, %v3049
        %v3056 = vsel %vm1622, %v3039, 0
        %v3059 = vsel %vm1622, %v3040, 0
        %v3062 = vsel %vm1622, %v3041, 0
        %v3065 = vsel %vm1622, %v3042, 0
        %3067 = vmatprep.subr.bf16.mxu0 0
        %3068 = vmatpush1.bf16.msra.mxu0 0
        %3069 = vmatprep.subr.bf16.mxu0 0
        %3070 = vmatpush1.bf16.msra.mxu0 0
        %3071 = vmatprep.subr.bf16.mxu0 0
        %3072 = vmatpush1.bf16.msra.mxu0 0
        %3073 = vmatprep.subr.bf16.mxu0 0
        %3074 = vmatpush1.bf16.msra.mxu0 0
        %3075 = vmatprep.subr.bf16.mxu0 0
        %3076 = vmatpush1.bf16.msra.mxu0 0
        %3077 = vmatprep.subr.bf16.mxu0 0
        %3078 = vmatpush1.bf16.msra.mxu0 0
        %3079 = vmatprep.subr.bf16.mxu0 0
        %3080 = vmatpush1.bf16.msra.mxu0 %v3052
        %3081 = vmatprep.subr.bf16.mxu0 0
        %3082 = vmatpush1.bf16.msra.mxu0 %v3051
        %3083 = vmatprep.subr.bf16.mxu0 0
        %3084 = vmatpush2.bf16.msra.mxu0 0
        %3085 = vmatprep.subr.bf16.mxu0 0
        %3086 = vmatpush2.bf16.msra.mxu0 0
        %3087 = vmatprep.subr.bf16.mxu0 0
        %3088 = vmatpush2.bf16.msra.mxu0 0
        %3089 = vmatprep.subr.bf16.mxu0 0
        %3090 = vmatpush2.bf16.msra.mxu0 0
        %3091 = vmatprep.subr.bf16.mxu0 0
        %3092 = vmatpush2.bf16.msra.mxu0 0
        %3093 = vmatprep.subr.bf16.mxu0 0
        %3094 = vmatpush2.bf16.msra.mxu0 0
        %3095 = vmatprep.subr.bf16.mxu0 0
        %3096 = vmatpush2.bf16.msra.mxu0 0
        %3097 = vmatprep.subr.bf16.mxu0 0
        %3098 = vmatpush2.bf16.msra.mxu0 0
        %3099 = vmatprep.mubr.bf16.mxu0 0
        %3100 = vmatmul.mubr.bf16.gmra.mxu0 %v3056
        %v3101 = vpop.f32.mrf.mxu0
        %v3102 = vadd.f32 0.0, %v3101
        %v3103 = vpop.f32.mrf.mxu0
        %v3104 = vpop.f32.mrf.mxu0
        %v3105 = vadd.f32 0.0, %v3104
        %v3106 = vpop.f32.mrf.mxu0
        %3107 = vmatprep.mubr.bf16.mxu0 0
        %3108 = vmatmul.mubr.bf16.gmra.mxu0 %v3059
        %v3109 = vpop.f32.mrf.mxu0
        %v3110 = vadd.f32 0.0, %v3109
        %v3111 = vpop.f32.mrf.mxu0
        %v3112 = vpop.f32.mrf.mxu0
        %v3113 = vadd.f32 0.0, %v3112
        %v3114 = vpop.f32.mrf.mxu0
        %3115 = vmatprep.mubr.bf16.mxu0 0
        %3116 = vmatmul.mubr.bf16.gmra.mxu0 %v3062
        %v3117 = vpop.f32.mrf.mxu0
        %v3118 = vadd.f32 0.0, %v3117
        %v3119 = vpop.f32.mrf.mxu0
        %v3120 = vpop.f32.mrf.mxu0
        %v3121 = vadd.f32 0.0, %v3120
        %v3122 = vpop.f32.mrf.mxu0
        %3123 = vmatprep.mubr.bf16.mxu0 0
        %3124 = vmatmul.mubr.bf16.gmra.mxu0 %v3065
        %v3125 = vpop.f32.mrf.mxu0
        %v3126 = vadd.f32 0.0, %v3125
        %v3127 = vpop.f32.mrf.mxu0
        %v3128 = vpop.f32.mrf.mxu0
        %v3129 = vadd.f32 0.0, %v3128
        %v3130 = vpop.f32.mrf.mxu0
        %3131 = vdwg.mxu0
        %v3132 = vadd.f32 %v2745, %v3102
        %v3133 = vadd.f32 %v2746, %v3105
        %v3134 = vadd.f32 %v2747, %v3110
        %v3135 = vadd.f32 %v2748, %v3113
        %v3136 = vadd.f32 %v2749, %v3118
        %v3137 = vadd.f32 %v2750, %v3121
        %v3138 = vadd.f32 %v2751, %v3126
        %v3139 = vadd.f32 %v2752, %v3129
        %v3140 = vpack.c.bf16 %v1455, %v1451
        %v3141 = vpack.c.bf16 %v1465, %v1461
        %v3142 = vpack.c.bf16 %v1475, %v1471
        %v3143 = vpack.c.bf16 %v1485, %v1481
        %v3144 = vpack.c.bf16 %v1457, %v1453
        %v3145 = vpack.c.bf16 %v1467, %v1463
        %v3146 = vpack.c.bf16 %v1477, %v1473
        %v3147 = vpack.c.bf16 %v1487, %v1483
        %v3148 = vpack.c.bf16 %v1559, %v1556
        %v3149 = vpack.c.bf16 %v1567, %v1564
        %v3150 = vpack.c.bf16 %v1575, %v1572
        %v3151 = vpack.c.bf16 %v1583, %v1580
        %v3153 = vsel %vm1622, %v3140, 0
        %v3156 = vsel %vm1622, %v3141, 0
        %v3159 = vsel %vm1622, %v3142, 0
        %v3162 = vsel %vm1622, %v3143, 0
        %v3165 = vsel %vm1622, %v3144, 0
        %v3168 = vsel %vm1622, %v3145, 0
        %v3171 = vsel %vm1622, %v3146, 0
        %v3174 = vsel %vm1622, %v3147, 0
        %3176 = vmatprep.subr.bf16.mxu0 0
        %3177 = vmatpush1.bf16.xpose.msra.mxu0 0
        %3178 = vmatprep.subr.bf16.mxu0 0
        %3179 = vmatpush1.bf16.xpose.msra.mxu0 0
        %3180 = vmatprep.subr.bf16.mxu0 0
        %3181 = vmatpush1.bf16.xpose.msra.mxu0 0
        %3182 = vmatprep.subr.bf16.mxu0 0
        %3183 = vmatpush1.bf16.xpose.msra.mxu0 0
        %3184 = vmatprep.subr.bf16.mxu0 0
        %3185 = vmatpush1.bf16.xpose.msra.mxu0 %v3174
        %3186 = vmatprep.subr.bf16.mxu0 0
        %3187 = vmatpush1.bf16.xpose.msra.mxu0 %v3171
        %3188 = vmatprep.subr.bf16.mxu0 0
        %3189 = vmatpush1.bf16.xpose.msra.mxu0 %v3168
        %3190 = vmatprep.subr.bf16.mxu0 0
        %3191 = vmatpush1.bf16.xpose.msra.mxu0 %v3165
        %3192 = vmatprep.subr.bf16.mxu0 0
        %3193 = vmatpush2.bf16.xpose.msra.mxu0 0
        %3194 = vmatprep.subr.bf16.mxu0 0
        %3195 = vmatpush2.bf16.xpose.msra.mxu0 0
        %3196 = vmatprep.subr.bf16.mxu0 0
        %3197 = vmatpush2.bf16.xpose.msra.mxu0 0
        %3198 = vmatprep.subr.bf16.mxu0 0
        %3199 = vmatpush2.bf16.xpose.msra.mxu0 0
        %3200 = vmatprep.subr.bf16.mxu0 0
        %3201 = vmatpush2.bf16.xpose.msra.mxu0 0
        %3202 = vmatprep.subr.bf16.mxu0 0
        %3203 = vmatpush2.bf16.xpose.msra.mxu0 0
        %3204 = vmatprep.subr.bf16.mxu0 0
        %3205 = vmatpush2.bf16.xpose.msra.mxu0 0
        %3206 = vmatprep.subr.bf16.mxu0 0
        %3207 = vmatpush2.bf16.xpose.msra.mxu0 0
        %3208 = vmatprep.mubr.bf16.mxu0 0
        %3209 = vmatmul.mubr.bf16.gmra.mxu0 %v3153
        %v3210 = vpop.f32.mrf.mxu0
        %v3211 = vadd.f32 %v1586, %v3210
        %v3212 = vpop.f32.mrf.mxu0
        %v3213 = vpop.f32.mrf.mxu0
        %v3214 = vadd.f32 %v1587, %v3213
        %v3215 = vpop.f32.mrf.mxu0
        %3216 = vmatprep.mubr.bf16.mxu0 0
        %3217 = vmatmul.mubr.bf16.gmra.mxu0 %v3156
        %v3218 = vpop.f32.mrf.mxu0
        %v3219 = vadd.f32 %v1588, %v3218
        %v3220 = vpop.f32.mrf.mxu0
        %v3221 = vpop.f32.mrf.mxu0
        %v3222 = vadd.f32 %v1589, %v3221
        %v3223 = vpop.f32.mrf.mxu0
        %3224 = vmatprep.mubr.bf16.mxu0 0
        %3225 = vmatmul.mubr.bf16.gmra.mxu0 %v3159
        %v3226 = vpop.f32.mrf.mxu0
        %v3227 = vadd.f32 %v1590, %v3226
        %v3228 = vpop.f32.mrf.mxu0
        %v3229 = vpop.f32.mrf.mxu0
        %v3230 = vadd.f32 %v1591, %v3229
        %v3231 = vpop.f32.mrf.mxu0
        %3232 = vmatprep.mubr.bf16.mxu0 0
        %3233 = vmatmul.mubr.bf16.gmra.mxu0 %v3162
        %v3234 = vpop.f32.mrf.mxu0
        %v3235 = vadd.f32 %v1592, %v3234
        %v3236 = vpop.f32.mrf.mxu0
        %v3237 = vpop.f32.mrf.mxu0
        %v3238 = vadd.f32 %v1593, %v3237
        %v3239 = vpop.f32.mrf.mxu0
        %3240 = vdwg.mxu0
        %v3241 = vsel %vm1712, %v3211, -inf
        %3242 = vmax.xlane.f32.xlu0 %v3241
        %v3243 = vpop.xlane.xlu0 %3242
        %v3244 = vsel %vm1712, %v3214, -inf
        %3245 = vmax.xlane.f32.xlu0 %v3244
        %v3246 = vpop.xlane.xlu0 %3245
        %v3247 = vsel %vm1712, %v3219, -inf
        %3248 = vmax.xlane.f32.xlu0 %v3247
        %v3249 = vpop.xlane.xlu0 %3248
        %v3250 = vsel %vm1712, %v3222, -inf
        %3251 = vmax.xlane.f32.xlu0 %v3250
        %v3252 = vpop.xlane.xlu0 %3251
        %v3253 = vsel %vm1712, %v3227, -inf
        %3254 = vmax.xlane.f32.xlu0 %v3253
        %v3255 = vpop.xlane.xlu0 %3254
        %v3256 = vsel %vm1712, %v3230, -inf
        %3257 = vmax.xlane.f32.xlu0 %v3256
        %v3258 = vpop.xlane.xlu0 %3257
        %v3259 = vsel %vm1712, %v3235, -inf
        %3260 = vmax.xlane.f32.xlu0 %v3259
        %v3261 = vpop.xlane.xlu0 %3260
        %v3262 = vsel %vm1712, %v3238, -inf
        %3263 = vmax.xlane.f32.xlu0 %v3262
        %v3264 = vpop.xlane.xlu0 %3263
        %v3265 = vsub.f32 %v3211, %v3243
        %v3266 = vsub.f32 %v3214, %v3246
        %v3267 = vsub.f32 %v3219, %v3249
        %v3268 = vsub.f32 %v3222, %v3252
        %v3269 = vsub.f32 %v3227, %v3255
        %v3270 = vsub.f32 %v3230, %v3258
        %v3271 = vsub.f32 %v3235, %v3261
        %v3272 = vsub.f32 %v3238, %v3264
        %v3273 = vmul.f32 %v3265, 1.442695
        %v3274 = vpow.pop %v3273
        %v3275 = vmul.f32 %v3266, 1.442695
        %v3276 = vpow.pop %v3275
        %v3277 = vmul.f32 %v3267, 1.442695
        %v3278 = vpow.pop %v3277
        %v3279 = vmul.f32 %v3268, 1.442695
        %v3280 = vpow.pop %v3279
        %v3281 = vmul.f32 %v3269, 1.442695
        %v3282 = vpow.pop %v3281
        %v3283 = vmul.f32 %v3270, 1.442695
        %v3284 = vpow.pop %v3283
        %v3285 = vmul.f32 %v3271, 1.442695
        %v3286 = vpow.pop %v3285
        %v3287 = vmul.f32 %v3272, 1.442695
        %v3288 = vpow.pop %v3287
        %v3289 = vsel %vm1712, %v3274, 0.0
        %3290 = vadd.xlane.f32.xlu0 %v3289
        %v3291 = vpop.xlane.xlu0 %3290
        %v3292 = vsel %vm1712, %v3276, 0.0
        %3293 = vadd.xlane.f32.xlu0 %v3292
        %v3294 = vpop.xlane.xlu0 %3293
        %v3295 = vsel %vm1712, %v3278, 0.0
        %3296 = vadd.xlane.f32.xlu0 %v3295
        %v3297 = vpop.xlane.xlu0 %3296
        %v3298 = vsel %vm1712, %v3280, 0.0
        %3299 = vadd.xlane.f32.xlu0 %v3298
        %v3300 = vpop.xlane.xlu0 %3299
        %v3301 = vsel %vm1712, %v3282, 0.0
        %3302 = vadd.xlane.f32.xlu0 %v3301
        %v3303 = vpop.xlane.xlu0 %3302
        %v3304 = vsel %vm1712, %v3284, 0.0
        %3305 = vadd.xlane.f32.xlu0 %v3304
        %v3306 = vpop.xlane.xlu0 %3305
        %v3307 = vsel %vm1712, %v3286, 0.0
        %3308 = vadd.xlane.f32.xlu0 %v3307
        %v3309 = vpop.xlane.xlu0 %3308
        %v3310 = vsel %vm1712, %v3288, 0.0
        %3311 = vadd.xlane.f32.xlu0 %v3310
        %v3312 = vpop.xlane.xlu0 %3311
        %v3313 = vrcp.pop %v3291
        %v3314 = vmul.f32 %v3274, %v3313
        %v3315 = vrcp.pop %v3294
        %v3316 = vmul.f32 %v3276, %v3315
        %v3317 = vrcp.pop %v3297
        %v3318 = vmul.f32 %v3278, %v3317
        %v3319 = vrcp.pop %v3300
        %v3320 = vmul.f32 %v3280, %v3319
        %v3321 = vrcp.pop %v3303
        %v3322 = vmul.f32 %v3282, %v3321
        %v3323 = vrcp.pop %v3306
        %v3324 = vmul.f32 %v3284, %v3323
        %v3325 = vrcp.pop %v3309
        %v3326 = vmul.f32 %v3286, %v3325
        %v3327 = vrcp.pop %v3312
        %v3328 = vmul.f32 %v3288, %v3327
        %v3329 = vpack.c.bf16 %v3316, %v3314
        %v3330 = vpack.c.bf16 %v3320, %v3318
        %v3331 = vpack.c.bf16 %v3324, %v3322
        %v3332 = vpack.c.bf16 %v3328, %v3326
        %v3334 = vsel %vm1712, %v3329, 0
        %v3337 = vsel %vm1712, %v3330, 0
        %v3340 = vsel %vm1712, %v3331, 0
        %v3343 = vsel %vm1712, %v3332, 0
        %3345 = vmatprep.subr.bf16.mxu0 0
        %3346 = vmatpush1.bf16.msra.mxu0 0
        %3347 = vmatprep.subr.bf16.mxu0 0
        %3348 = vmatpush1.bf16.msra.mxu0 0
        %3349 = vmatprep.subr.bf16.mxu0 0
        %3350 = vmatpush1.bf16.msra.mxu0 0
        %3351 = vmatprep.subr.bf16.mxu0 0
        %3352 = vmatpush1.bf16.msra.mxu0 0
        %3353 = vmatprep.subr.bf16.mxu0 0
        %3354 = vmatpush1.bf16.msra.mxu0 %v3151
        %3355 = vmatprep.subr.bf16.mxu0 0
        %3356 = vmatpush1.bf16.msra.mxu0 %v3150
        %3357 = vmatprep.subr.bf16.mxu0 0
        %3358 = vmatpush1.bf16.msra.mxu0 %v3149
        %3359 = vmatprep.subr.bf16.mxu0 0
        %3360 = vmatpush1.bf16.msra.mxu0 %v3148
        %3361 = vmatprep.subr.bf16.mxu0 0
        %3362 = vmatpush2.bf16.msra.mxu0 0
        %3363 = vmatprep.subr.bf16.mxu0 0
        %3364 = vmatpush2.bf16.msra.mxu0 0
        %3365 = vmatprep.subr.bf16.mxu0 0
        %3366 = vmatpush2.bf16.msra.mxu0 0
        %3367 = vmatprep.subr.bf16.mxu0 0
        %3368 = vmatpush2.bf16.msra.mxu0 0
        %3369 = vmatprep.subr.bf16.mxu0 0
        %3370 = vmatpush2.bf16.msra.mxu0 0
        %3371 = vmatprep.subr.bf16.mxu0 0
        %3372 = vmatpush2.bf16.msra.mxu0 0
        %3373 = vmatprep.subr.bf16.mxu0 0
        %3374 = vmatpush2.bf16.msra.mxu0 0
        %3375 = vmatprep.subr.bf16.mxu0 0
        %3376 = vmatpush2.bf16.msra.mxu0 0
        %3377 = vmatprep.mubr.bf16.mxu0 0
        %3378 = vmatmul.mubr.bf16.gmra.mxu0 %v3334
        %v3379 = vpop.f32.mrf.mxu0
        %v3380 = vadd.f32 0.0, %v3379
        %v3381 = vpop.f32.mrf.mxu0
        %v3382 = vpop.f32.mrf.mxu0
        %v3383 = vadd.f32 0.0, %v3382
        %v3384 = vpop.f32.mrf.mxu0
        %3385 = vmatprep.mubr.bf16.mxu0 0
        %3386 = vmatmul.mubr.bf16.gmra.mxu0 %v3337
        %v3387 = vpop.f32.mrf.mxu0
        %v3388 = vadd.f32 0.0, %v3387
        %v3389 = vpop.f32.mrf.mxu0
        %v3390 = vpop.f32.mrf.mxu0
        %v3391 = vadd.f32 0.0, %v3390
        %v3392 = vpop.f32.mrf.mxu0
        %3393 = vmatprep.mubr.bf16.mxu0 0
        %3394 = vmatmul.mubr.bf16.gmra.mxu0 %v3340
        %v3395 = vpop.f32.mrf.mxu0
        %v3396 = vadd.f32 0.0, %v3395
        %v3397 = vpop.f32.mrf.mxu0
        %v3398 = vpop.f32.mrf.mxu0
        %v3399 = vadd.f32 0.0, %v3398
        %v3400 = vpop.f32.mrf.mxu0
        %3401 = vmatprep.mubr.bf16.mxu0 0
        %3402 = vmatmul.mubr.bf16.gmra.mxu0 %v3343
        %v3403 = vpop.f32.mrf.mxu0
        %v3404 = vadd.f32 0.0, %v3403
        %v3405 = vpop.f32.mrf.mxu0
        %v3406 = vpop.f32.mrf.mxu0
        %v3407 = vadd.f32 0.0, %v3406
        %v3408 = vpop.f32.mrf.mxu0
        %3409 = vdwg.mxu0
        %v3410 = vpack.c.bf16 %v3383, %v3380
        %v3411 = vpack.c.bf16 %v3391, %v3388
        %v3412 = vpack.c.bf16 %v3399, %v3396
        %v3413 = vpack.c.bf16 %v3407, %v3404
        %3418 = vrot.lane.b32.xlu0 %v3140, 96
        %v3419 = vpop.permute.xlu0 %3418
        %3420 = vrot.lane.b32.xlu0 %v3141, 96
        %v3421 = vpop.permute.xlu0 %3420
        %3422 = vrot.lane.b32.xlu0 %v3142, 96
        %v3423 = vpop.permute.xlu0 %3422
        %3424 = vrot.lane.b32.xlu0 %v3143, 96
        %v3425 = vpop.permute.xlu0 %3424
        %3430 = vrot.lane.b32.xlu0 %v3144, 96
        %v3431 = vpop.permute.xlu0 %3430
        %3432 = vrot.lane.b32.xlu0 %v3145, 96
        %v3433 = vpop.permute.xlu0 %3432
        %3434 = vrot.lane.b32.xlu0 %v3146, 96
        %v3435 = vpop.permute.xlu0 %3434
        %3436 = vrot.lane.b32.xlu0 %v3147, 96
        %v3437 = vpop.permute.xlu0 %3436
        %v3439 = vsel %vm1622, %v3419, 0
        %v3442 = vsel %vm1622, %v3421, 0
        %v3445 = vsel %vm1622, %v3423, 0
        %v3448 = vsel %vm1622, %v3425, 0
        %v3451 = vsel %vm1622, %v3431, 0
        %v3454 = vsel %vm1622, %v3433, 0
        %v3457 = vsel %vm1622, %v3435, 0
        %v3460 = vsel %vm1622, %v3437, 0
        %3462 = vmatprep.subr.bf16.mxu0 0
        %3463 = vmatpush1.bf16.xpose.msra.mxu0 0
        %3464 = vmatprep.subr.bf16.mxu0 0
        %3465 = vmatpush1.bf16.xpose.msra.mxu0 0
        %3466 = vmatprep.subr.bf16.mxu0 0
        %3467 = vmatpush1.bf16.xpose.msra.mxu0 0
        %3468 = vmatprep.subr.bf16.mxu0 0
        %3469 = vmatpush1.bf16.xpose.msra.mxu0 0
        %3470 = vmatprep.subr.bf16.mxu0 0
        %3471 = vmatpush1.bf16.xpose.msra.mxu0 %v3460
        %3472 = vmatprep.subr.bf16.mxu0 0
        %3473 = vmatpush1.bf16.xpose.msra.mxu0 %v3457
        %3474 = vmatprep.subr.bf16.mxu0 0
        %3475 = vmatpush1.bf16.xpose.msra.mxu0 %v3454
        %3476 = vmatprep.subr.bf16.mxu0 0
        %3477 = vmatpush1.bf16.xpose.msra.mxu0 %v3451
        %3478 = vmatprep.subr.bf16.mxu0 0
        %3479 = vmatpush2.bf16.xpose.msra.mxu0 0
        %3480 = vmatprep.subr.bf16.mxu0 0
        %3481 = vmatpush2.bf16.xpose.msra.mxu0 0
        %3482 = vmatprep.subr.bf16.mxu0 0
        %3483 = vmatpush2.bf16.xpose.msra.mxu0 0
        %3484 = vmatprep.subr.bf16.mxu0 0
        %3485 = vmatpush2.bf16.xpose.msra.mxu0 0
        %3486 = vmatprep.subr.bf16.mxu0 0
        %3487 = vmatpush2.bf16.xpose.msra.mxu0 0
        %3488 = vmatprep.subr.bf16.mxu0 0
        %3489 = vmatpush2.bf16.xpose.msra.mxu0 0
        %3490 = vmatprep.subr.bf16.mxu0 0
        %3491 = vmatpush2.bf16.xpose.msra.mxu0 0
        %3492 = vmatprep.subr.bf16.mxu0 0
        %3493 = vmatpush2.bf16.xpose.msra.mxu0 0
        %3494 = vmatprep.mubr.bf16.mxu0 0
        %3495 = vmatmul.mubr.bf16.gmra.mxu0 %v3439
        %v3496 = vpop.f32.mrf.mxu0
        %v3497 = vadd.f32 %v1586, %v3496
        %v3498 = vpop.f32.mrf.mxu0
        %v3499 = vpop.f32.mrf.mxu0
        %v3500 = vadd.f32 %v1587, %v3499
        %v3501 = vpop.f32.mrf.mxu0
        %3502 = vmatprep.mubr.bf16.mxu0 0
        %3503 = vmatmul.mubr.bf16.gmra.mxu0 %v3442
        %v3504 = vpop.f32.mrf.mxu0
        %v3505 = vadd.f32 %v1588, %v3504
        %v3506 = vpop.f32.mrf.mxu0
        %v3507 = vpop.f32.mrf.mxu0
        %v3508 = vadd.f32 %v1589, %v3507
        %v3509 = vpop.f32.mrf.mxu0
        %3510 = vmatprep.mubr.bf16.mxu0 0
        %3511 = vmatmul.mubr.bf16.gmra.mxu0 %v3445
        %v3512 = vpop.f32.mrf.mxu0
        %v3513 = vadd.f32 %v1590, %v3512
        %v3514 = vpop.f32.mrf.mxu0
        %v3515 = vpop.f32.mrf.mxu0
        %v3516 = vadd.f32 %v1591, %v3515
        %v3517 = vpop.f32.mrf.mxu0
        %3518 = vmatprep.mubr.bf16.mxu0 0
        %3519 = vmatmul.mubr.bf16.gmra.mxu0 %v3448
        %v3520 = vpop.f32.mrf.mxu0
        %v3521 = vadd.f32 %v1592, %v3520
        %v3522 = vpop.f32.mrf.mxu0
        %v3523 = vpop.f32.mrf.mxu0
        %v3524 = vadd.f32 %v1593, %v3523
        %v3525 = vpop.f32.mrf.mxu0
        %3526 = vdwg.mxu0
        %v3527 = vsel %vm1712, %v3497, -inf
        %3528 = vmax.xlane.f32.xlu0 %v3527
        %v3529 = vpop.xlane.xlu0 %3528
        %v3530 = vsel %vm1712, %v3500, -inf
        %3531 = vmax.xlane.f32.xlu0 %v3530
        %v3532 = vpop.xlane.xlu0 %3531
        %v3533 = vsel %vm1712, %v3505, -inf
        %3534 = vmax.xlane.f32.xlu0 %v3533
        %v3535 = vpop.xlane.xlu0 %3534
        %v3536 = vsel %vm1712, %v3508, -inf
        %3537 = vmax.xlane.f32.xlu0 %v3536
        %v3538 = vpop.xlane.xlu0 %3537
        %v3539 = vsel %vm1712, %v3513, -inf
        %3540 = vmax.xlane.f32.xlu0 %v3539
        %v3541 = vpop.xlane.xlu0 %3540
        %v3542 = vsel %vm1712, %v3516, -inf
        %3543 = vmax.xlane.f32.xlu0 %v3542
        %v3544 = vpop.xlane.xlu0 %3543
        %v3545 = vsel %vm1712, %v3521, -inf
        %3546 = vmax.xlane.f32.xlu0 %v3545
        %v3547 = vpop.xlane.xlu0 %3546
        %v3548 = vsel %vm1712, %v3524, -inf
        %3549 = vmax.xlane.f32.xlu0 %v3548
        %v3550 = vpop.xlane.xlu0 %3549
        %v3551 = vsub.f32 %v3497, %v3529
        %v3552 = vsub.f32 %v3500, %v3532
        %v3553 = vsub.f32 %v3505, %v3535
        %v3554 = vsub.f32 %v3508, %v3538
        %v3555 = vsub.f32 %v3513, %v3541
        %v3556 = vsub.f32 %v3516, %v3544
        %v3557 = vsub.f32 %v3521, %v3547
        %v3558 = vsub.f32 %v3524, %v3550
        %v3559 = vmul.f32 %v3551, 1.442695
        %v3560 = vpow.pop %v3559
        %v3561 = vmul.f32 %v3552, 1.442695
        %v3562 = vpow.pop %v3561
        %v3563 = vmul.f32 %v3553, 1.442695
        %v3564 = vpow.pop %v3563
        %v3565 = vmul.f32 %v3554, 1.442695
        %v3566 = vpow.pop %v3565
        %v3567 = vmul.f32 %v3555, 1.442695
        %v3568 = vpow.pop %v3567
        %v3569 = vmul.f32 %v3556, 1.442695
        %v3570 = vpow.pop %v3569
        %v3571 = vmul.f32 %v3557, 1.442695
        %v3572 = vpow.pop %v3571
        %v3573 = vmul.f32 %v3558, 1.442695
        %v3574 = vpow.pop %v3573
        %v3575 = vsel %vm1712, %v3560, 0.0
        %3576 = vadd.xlane.f32.xlu0 %v3575
        %v3577 = vpop.xlane.xlu0 %3576
        %v3578 = vsel %vm1712, %v3562, 0.0
        %3579 = vadd.xlane.f32.xlu0 %v3578
        %v3580 = vpop.xlane.xlu0 %3579
        %v3581 = vsel %vm1712, %v3564, 0.0
        %3582 = vadd.xlane.f32.xlu0 %v3581
        %v3583 = vpop.xlane.xlu0 %3582
        %v3584 = vsel %vm1712, %v3566, 0.0
        %3585 = vadd.xlane.f32.xlu0 %v3584
        %v3586 = vpop.xlane.xlu0 %3585
        %v3587 = vsel %vm1712, %v3568, 0.0
        %3588 = vadd.xlane.f32.xlu0 %v3587
        %v3589 = vpop.xlane.xlu0 %3588
        %v3590 = vsel %vm1712, %v3570, 0.0
        %3591 = vadd.xlane.f32.xlu0 %v3590
        %v3592 = vpop.xlane.xlu0 %3591
        %v3593 = vsel %vm1712, %v3572, 0.0
        %3594 = vadd.xlane.f32.xlu0 %v3593
        %v3595 = vpop.xlane.xlu0 %3594
        %v3596 = vsel %vm1712, %v3574, 0.0
        %3597 = vadd.xlane.f32.xlu0 %v3596
        %v3598 = vpop.xlane.xlu0 %3597
        %v3599 = vrcp.pop %v3577
        %v3600 = vmul.f32 %v3560, %v3599
        %v3601 = vrcp.pop %v3580
        %v3602 = vmul.f32 %v3562, %v3601
        %v3603 = vrcp.pop %v3583
        %v3604 = vmul.f32 %v3564, %v3603
        %v3605 = vrcp.pop %v3586
        %v3606 = vmul.f32 %v3566, %v3605
        %v3607 = vrcp.pop %v3589
        %v3608 = vmul.f32 %v3568, %v3607
        %v3609 = vrcp.pop %v3592
        %v3610 = vmul.f32 %v3570, %v3609
        %v3611 = vrcp.pop %v3595
        %v3612 = vmul.f32 %v3572, %v3611
        %v3613 = vrcp.pop %v3598
        %v3614 = vmul.f32 %v3574, %v3613
        %v3615 = vpack.c.bf16 %v3602, %v3600
        %v3616 = vpack.c.bf16 %v3606, %v3604
        %v3617 = vpack.c.bf16 %v3610, %v3608
        %v3618 = vpack.c.bf16 %v3614, %v3612
        %3623 = vrot.lane.b32.xlu0 %v3148, 96
        %v3624 = vpop.permute.xlu0 %3623
        %3625 = vrot.lane.b32.xlu0 %v3149, 96
        %v3626 = vpop.permute.xlu0 %3625
        %3627 = vrot.lane.b32.xlu0 %v3150, 96
        %v3628 = vpop.permute.xlu0 %3627
        %3629 = vrot.lane.b32.xlu0 %v3151, 96
        %v3630 = vpop.permute.xlu0 %3629
        %v3636 = vsel %vm1712, %v3615, 0
        %v3639 = vsel %vm1712, %v3616, 0
        %v3642 = vsel %vm1712, %v3617, 0
        %v3645 = vsel %vm1712, %v3618, 0
        %3647 = vmatprep.subr.bf16.mxu0 0
        %3648 = vmatpush1.bf16.msra.mxu0 0
        %3649 = vmatprep.subr.bf16.mxu0 0
        %3650 = vmatpush1.bf16.msra.mxu0 0
        %3651 = vmatprep.subr.bf16.mxu0 0
        %3652 = vmatpush1.bf16.msra.mxu0 0
        %3653 = vmatprep.subr.bf16.mxu0 0
        %3654 = vmatpush1.bf16.msra.mxu0 0
        %3655 = vmatprep.subr.bf16.mxu0 0
        %3656 = vmatpush1.bf16.msra.mxu0 %v3630
        %3657 = vmatprep.subr.bf16.mxu0 0
        %3658 = vmatpush1.bf16.msra.mxu0 %v3628
        %3659 = vmatprep.subr.bf16.mxu0 0
        %3660 = vmatpush1.bf16.msra.mxu0 %v3626
        %3661 = vmatprep.subr.bf16.mxu0 0
        %3662 = vmatpush1.bf16.msra.mxu0 %v3624
        %3663 = vmatprep.subr.bf16.mxu0 0
        %3664 = vmatpush2.bf16.msra.mxu0 0
        %3665 = vmatprep.subr.bf16.mxu0 0
        %3666 = vmatpush2.bf16.msra.mxu0 0
        %3667 = vmatprep.subr.bf16.mxu0 0
        %3668 = vmatpush2.bf16.msra.mxu0 0
        %3669 = vmatprep.subr.bf16.mxu0 0
        %3670 = vmatpush2.bf16.msra.mxu0 0
        %3671 = vmatprep.subr.bf16.mxu0 0
        %3672 = vmatpush2.bf16.msra.mxu0 0
        %3673 = vmatprep.subr.bf16.mxu0 0
        %3674 = vmatpush2.bf16.msra.mxu0 0
        %3675 = vmatprep.subr.bf16.mxu0 0
        %3676 = vmatpush2.bf16.msra.mxu0 0
        %3677 = vmatprep.subr.bf16.mxu0 0
        %3678 = vmatpush2.bf16.msra.mxu0 0
        %3679 = vmatprep.mubr.bf16.mxu0 0
        %3680 = vmatmul.mubr.bf16.gmra.mxu0 %v3636
        %v3681 = vpop.f32.mrf.mxu0
        %v3682 = vadd.f32 0.0, %v3681
        %v3683 = vpop.f32.mrf.mxu0
        %v3684 = vpop.f32.mrf.mxu0
        %v3685 = vadd.f32 0.0, %v3684
        %v3686 = vpop.f32.mrf.mxu0
        %3687 = vmatprep.mubr.bf16.mxu0 0
        %3688 = vmatmul.mubr.bf16.gmra.mxu0 %v3639
        %v3689 = vpop.f32.mrf.mxu0
        %v3690 = vadd.f32 0.0, %v3689
        %v3691 = vpop.f32.mrf.mxu0
        %v3692 = vpop.f32.mrf.mxu0
        %v3693 = vadd.f32 0.0, %v3692
        %v3694 = vpop.f32.mrf.mxu0
        %3695 = vmatprep.mubr.bf16.mxu0 0
        %3696 = vmatmul.mubr.bf16.gmra.mxu0 %v3642
        %v3697 = vpop.f32.mrf.mxu0
        %v3698 = vadd.f32 0.0, %v3697
        %v3699 = vpop.f32.mrf.mxu0
        %v3700 = vpop.f32.mrf.mxu0
        %v3701 = vadd.f32 0.0, %v3700
        %v3702 = vpop.f32.mrf.mxu0
        %3703 = vmatprep.mubr.bf16.mxu0 0
        %3704 = vmatmul.mubr.bf16.gmra.mxu0 %v3645
        %v3705 = vpop.f32.mrf.mxu0
        %v3706 = vadd.f32 0.0, %v3705
        %v3707 = vpop.f32.mrf.mxu0
        %v3708 = vpop.f32.mrf.mxu0
        %v3709 = vadd.f32 0.0, %v3708
        %v3710 = vpop.f32.mrf.mxu0
        %3711 = vdwg.mxu0
        %v3712 = vpack.c.bf16 %v3685, %v3682
        %v3713 = vpack.c.bf16 %v3693, %v3690
        %v3714 = vpack.c.bf16 %v3701, %v3698
        %v3715 = vpack.c.bf16 %v3709, %v3706
        %v3717 = vsel %vm1622, %v3712, 0
        %v3720 = vsel %vm1622, %v3713, 0
        %v3723 = vsel %vm1622, %v3714, 0
        %v3726 = vsel %vm1622, %v3715, 0
        %3728 = vmatprep.subr.bf16.mxu0 0
        %3729 = vmatpush1.bf16.msra.mxu0 0
        %3730 = vmatprep.subr.bf16.mxu0 0
        %3731 = vmatpush1.bf16.msra.mxu0 0
        %3732 = vmatprep.subr.bf16.mxu0 0
        %3733 = vmatpush1.bf16.msra.mxu0 0
        %3734 = vmatprep.subr.bf16.mxu0 0
        %3735 = vmatpush1.bf16.msra.mxu0 0
        %3736 = vmatprep.subr.bf16.mxu0 0
        %3737 = vmatpush1.bf16.msra.mxu0 0
        %3738 = vmatprep.subr.bf16.mxu0 0
        %3739 = vmatpush1.bf16.msra.mxu0 0
        %3740 = vmatprep.subr.bf16.mxu0 0
        %3741 = vmatpush1.bf16.msra.mxu0 %v2197
        %3742 = vmatprep.subr.bf16.mxu0 0
        %3743 = vmatpush1.bf16.msra.mxu0 %v2196
        %3744 = vmatprep.subr.bf16.mxu0 0
        %3745 = vmatpush2.bf16.msra.mxu0 0
        %3746 = vmatprep.subr.bf16.mxu0 0
        %3747 = vmatpush2.bf16.msra.mxu0 0
        %3748 = vmatprep.subr.bf16.mxu0 0
        %3749 = vmatpush2.bf16.msra.mxu0 0
        %3750 = vmatprep.subr.bf16.mxu0 0
        %3751 = vmatpush2.bf16.msra.mxu0 0
        %3752 = vmatprep.subr.bf16.mxu0 0
        %3753 = vmatpush2.bf16.msra.mxu0 0
        %3754 = vmatprep.subr.bf16.mxu0 0
        %3755 = vmatpush2.bf16.msra.mxu0 0
        %3756 = vmatprep.subr.bf16.mxu0 0
        %3757 = vmatpush2.bf16.msra.mxu0 0
        %3758 = vmatprep.subr.bf16.mxu0 0
        %3759 = vmatpush2.bf16.msra.mxu0 0
        %3760 = vmatprep.mubr.bf16.mxu0 0
        %3761 = vmatmul.mubr.bf16.gmra.mxu0 %v3717
        %v3762 = vpop.f32.mrf.mxu0
        %v3763 = vadd.f32 0.0, %v3762
        %v3764 = vpop.f32.mrf.mxu0
        %v3765 = vpop.f32.mrf.mxu0
        %v3766 = vadd.f32 0.0, %v3765
        %v3767 = vpop.f32.mrf.mxu0
        %3768 = vmatprep.mubr.bf16.mxu0 0
        %3769 = vmatmul.mubr.bf16.gmra.mxu0 %v3720
        %v3770 = vpop.f32.mrf.mxu0
        %v3771 = vadd.f32 0.0, %v3770
        %v3772 = vpop.f32.mrf.mxu0
        %v3773 = vpop.f32.mrf.mxu0
        %v3774 = vadd.f32 0.0, %v3773
        %v3775 = vpop.f32.mrf.mxu0
        %3776 = vmatprep.mubr.bf16.mxu0 0
        %3777 = vmatmul.mubr.bf16.gmra.mxu0 %v3723
        %v3778 = vpop.f32.mrf.mxu0
        %v3779 = vadd.f32 0.0, %v3778
        %v3780 = vpop.f32.mrf.mxu0
        %v3781 = vpop.f32.mrf.mxu0
        %v3782 = vadd.f32 0.0, %v3781
        %v3783 = vpop.f32.mrf.mxu0
        %3784 = vmatprep.mubr.bf16.mxu0 0
        %3785 = vmatmul.mubr.bf16.gmra.mxu0 %v3726
        %v3786 = vpop.f32.mrf.mxu0
        %v3787 = vadd.f32 0.0, %v3786
        %v3788 = vpop.f32.mrf.mxu0
        %v3789 = vpop.f32.mrf.mxu0
        %v3790 = vadd.f32 0.0, %v3789
        %v3791 = vpop.f32.mrf.mxu0
        %3792 = vdwg.mxu0
        %v3794 = vsel %vm1622, %v3410, 0
        %v3797 = vsel %vm1622, %v3411, 0
        %v3800 = vsel %vm1622, %v3412, 0
        %v3803 = vsel %vm1622, %v3413, 0
        %3805 = vmatprep.subr.bf16.mxu0 0
        %3806 = vmatpush1.bf16.msra.mxu0 0
        %3807 = vmatprep.subr.bf16.mxu0 0
        %3808 = vmatpush1.bf16.msra.mxu0 0
        %3809 = vmatprep.subr.bf16.mxu0 0
        %3810 = vmatpush1.bf16.msra.mxu0 0
        %3811 = vmatprep.subr.bf16.mxu0 0
        %3812 = vmatpush1.bf16.msra.mxu0 0
        %3813 = vmatprep.subr.bf16.mxu0 0
        %3814 = vmatpush1.bf16.msra.mxu0 0
        %3815 = vmatprep.subr.bf16.mxu0 0
        %3816 = vmatpush1.bf16.msra.mxu0 0
        %3817 = vmatprep.subr.bf16.mxu0 0
        %3818 = vmatpush1.bf16.msra.mxu0 %v2286
        %3819 = vmatprep.subr.bf16.mxu0 0
        %3820 = vmatpush1.bf16.msra.mxu0 %v2285
        %3821 = vmatprep.subr.bf16.mxu0 0
        %3822 = vmatpush2.bf16.msra.mxu0 0
        %3823 = vmatprep.subr.bf16.mxu0 0
        %3824 = vmatpush2.bf16.msra.mxu0 0
        %3825 = vmatprep.subr.bf16.mxu0 0
        %3826 = vmatpush2.bf16.msra.mxu0 0
        %3827 = vmatprep.subr.bf16.mxu0 0
        %3828 = vmatpush2.bf16.msra.mxu0 0
        %3829 = vmatprep.subr.bf16.mxu0 0
        %3830 = vmatpush2.bf16.msra.mxu0 0
        %3831 = vmatprep.subr.bf16.mxu0 0
        %3832 = vmatpush2.bf16.msra.mxu0 0
        %3833 = vmatprep.subr.bf16.mxu0 0
        %3834 = vmatpush2.bf16.msra.mxu0 0
        %3835 = vmatprep.subr.bf16.mxu0 0
        %3836 = vmatpush2.bf16.msra.mxu0 0
        %3837 = vmatprep.mubr.bf16.mxu0 0
        %3838 = vmatmul.mubr.bf16.gmra.mxu0 %v3794
        %v3839 = vpop.f32.mrf.mxu0
        %v3840 = vadd.f32 %v3763, %v3839
        %v3841 = vpop.f32.mrf.mxu0
        %v3842 = vpop.f32.mrf.mxu0
        %v3843 = vadd.f32 %v3766, %v3842
        %v3844 = vpop.f32.mrf.mxu0
        %3845 = vmatprep.mubr.bf16.mxu0 0
        %3846 = vmatmul.mubr.bf16.gmra.mxu0 %v3797
        %v3847 = vpop.f32.mrf.mxu0
        %v3848 = vadd.f32 %v3771, %v3847
        %v3849 = vpop.f32.mrf.mxu0
        %v3850 = vpop.f32.mrf.mxu0
        %v3851 = vadd.f32 %v3774, %v3850
        %v3852 = vpop.f32.mrf.mxu0
        %3853 = vmatprep.mubr.bf16.mxu0 0
        %3854 = vmatmul.mubr.bf16.gmra.mxu0 %v3800
        %v3855 = vpop.f32.mrf.mxu0
        %v3856 = vadd.f32 %v3779, %v3855
        %v3857 = vpop.f32.mrf.mxu0
        %v3858 = vpop.f32.mrf.mxu0
        %v3859 = vadd.f32 %v3782, %v3858
        %v3860 = vpop.f32.mrf.mxu0
        %3861 = vmatprep.mubr.bf16.mxu0 0
        %3862 = vmatmul.mubr.bf16.gmra.mxu0 %v3803
        %v3863 = vpop.f32.mrf.mxu0
        %v3864 = vadd.f32 %v3787, %v3863
        %v3865 = vpop.f32.mrf.mxu0
        %v3866 = vpop.f32.mrf.mxu0
        %v3867 = vadd.f32 %v3790, %v3866
        %v3868 = vpop.f32.mrf.mxu0
        %3869 = vdwg.mxu0
        %3870 = vrot.lane.b32.xlu0 %v3140, 64
        %v3871 = vpop.permute.xlu0 %3870
        %3872 = vrot.lane.b32.xlu0 %v3141, 64
        %v3873 = vpop.permute.xlu0 %3872
        %3874 = vrot.lane.b32.xlu0 %v3142, 64
        %v3875 = vpop.permute.xlu0 %3874
        %3876 = vrot.lane.b32.xlu0 %v3143, 64
        %v3877 = vpop.permute.xlu0 %3876
        %3878 = vrot.lane.b32.xlu0 %v3144, 64
        %v3879 = vpop.permute.xlu0 %3878
        %3880 = vrot.lane.b32.xlu0 %v3145, 64
        %v3881 = vpop.permute.xlu0 %3880
        %3882 = vrot.lane.b32.xlu0 %v3146, 64
        %v3883 = vpop.permute.xlu0 %3882
        %3884 = vrot.lane.b32.xlu0 %v3147, 64
        %v3885 = vpop.permute.xlu0 %3884
        %v3887 = vsel %vm1622, %v3871, 0
        %v3890 = vsel %vm1622, %v3873, 0
        %v3893 = vsel %vm1622, %v3875, 0
        %v3896 = vsel %vm1622, %v3877, 0
        %v3899 = vsel %vm1622, %v3879, 0
        %v3902 = vsel %vm1622, %v3881, 0
        %v3905 = vsel %vm1622, %v3883, 0
        %v3908 = vsel %vm1622, %v3885, 0
        %3910 = vmatprep.subr.bf16.mxu0 0
        %3911 = vmatpush1.bf16.xpose.msra.mxu0 0
        %3912 = vmatprep.subr.bf16.mxu0 0
        %3913 = vmatpush1.bf16.xpose.msra.mxu0 0
        %3914 = vmatprep.subr.bf16.mxu0 0
        %3915 = vmatpush1.bf16.xpose.msra.mxu0 0
        %3916 = vmatprep.subr.bf16.mxu0 0
        %3917 = vmatpush1.bf16.xpose.msra.mxu0 0
        %3918 = vmatprep.subr.bf16.mxu0 0
        %3919 = vmatpush1.bf16.xpose.msra.mxu0 %v3908
        %3920 = vmatprep.subr.bf16.mxu0 0
        %3921 = vmatpush1.bf16.xpose.msra.mxu0 %v3905
        %3922 = vmatprep.subr.bf16.mxu0 0
        %3923 = vmatpush1.bf16.xpose.msra.mxu0 %v3902
        %3924 = vmatprep.subr.bf16.mxu0 0
        %3925 = vmatpush1.bf16.xpose.msra.mxu0 %v3899
        %3926 = vmatprep.subr.bf16.mxu0 0
        %3927 = vmatpush2.bf16.xpose.msra.mxu0 0
        %3928 = vmatprep.subr.bf16.mxu0 0
        %3929 = vmatpush2.bf16.xpose.msra.mxu0 0
        %3930 = vmatprep.subr.bf16.mxu0 0
        %3931 = vmatpush2.bf16.xpose.msra.mxu0 0
        %3932 = vmatprep.subr.bf16.mxu0 0
        %3933 = vmatpush2.bf16.xpose.msra.mxu0 0
        %3934 = vmatprep.subr.bf16.mxu0 0
        %3935 = vmatpush2.bf16.xpose.msra.mxu0 0
        %3936 = vmatprep.subr.bf16.mxu0 0
        %3937 = vmatpush2.bf16.xpose.msra.mxu0 0
        %3938 = vmatprep.subr.bf16.mxu0 0
        %3939 = vmatpush2.bf16.xpose.msra.mxu0 0
        %3940 = vmatprep.subr.bf16.mxu0 0
        %3941 = vmatpush2.bf16.xpose.msra.mxu0 0
        %3942 = vmatprep.mubr.bf16.mxu0 0
        %3943 = vmatmul.mubr.bf16.gmra.mxu0 %v3887
        %v3944 = vpop.f32.mrf.mxu0
        %v3945 = vadd.f32 %v1586, %v3944
        %v3946 = vpop.f32.mrf.mxu0
        %v3947 = vpop.f32.mrf.mxu0
        %v3948 = vadd.f32 %v1587, %v3947
        %v3949 = vpop.f32.mrf.mxu0
        %3950 = vmatprep.mubr.bf16.mxu0 0
        %3951 = vmatmul.mubr.bf16.gmra.mxu0 %v3890
        %v3952 = vpop.f32.mrf.mxu0
        %v3953 = vadd.f32 %v1588, %v3952
        %v3954 = vpop.f32.mrf.mxu0
        %v3955 = vpop.f32.mrf.mxu0
        %v3956 = vadd.f32 %v1589, %v3955
        %v3957 = vpop.f32.mrf.mxu0
        %3958 = vmatprep.mubr.bf16.mxu0 0
        %3959 = vmatmul.mubr.bf16.gmra.mxu0 %v3893
        %v3960 = vpop.f32.mrf.mxu0
        %v3961 = vadd.f32 %v1590, %v3960
        %v3962 = vpop.f32.mrf.mxu0
        %v3963 = vpop.f32.mrf.mxu0
        %v3964 = vadd.f32 %v1591, %v3963
        %v3965 = vpop.f32.mrf.mxu0
        %3966 = vmatprep.mubr.bf16.mxu0 0
        %3967 = vmatmul.mubr.bf16.gmra.mxu0 %v3896
        %v3968 = vpop.f32.mrf.mxu0
        %v3969 = vadd.f32 %v1592, %v3968
        %v3970 = vpop.f32.mrf.mxu0
        %v3971 = vpop.f32.mrf.mxu0
        %v3972 = vadd.f32 %v1593, %v3971
        %v3973 = vpop.f32.mrf.mxu0
        %3974 = vdwg.mxu0
        %v3975 = vsel %vm1712, %v3945, -inf
        %3976 = vmax.xlane.f32.xlu0 %v3975
        %v3977 = vpop.xlane.xlu0 %3976
        %v3978 = vsel %vm1712, %v3948, -inf
        %3979 = vmax.xlane.f32.xlu0 %v3978
        %v3980 = vpop.xlane.xlu0 %3979
        %v3981 = vsel %vm1712, %v3953, -inf
        %3982 = vmax.xlane.f32.xlu0 %v3981
        %v3983 = vpop.xlane.xlu0 %3982
        %v3984 = vsel %vm1712, %v3956, -inf
        %3985 = vmax.xlane.f32.xlu0 %v3984
        %v3986 = vpop.xlane.xlu0 %3985
        %v3987 = vsel %vm1712, %v3961, -inf
        %3988 = vmax.xlane.f32.xlu0 %v3987
        %v3989 = vpop.xlane.xlu0 %3988
        %v3990 = vsel %vm1712, %v3964, -inf
        %3991 = vmax.xlane.f32.xlu0 %v3990
        %v3992 = vpop.xlane.xlu0 %3991
        %v3993 = vsel %vm1712, %v3969, -inf
        %3994 = vmax.xlane.f32.xlu0 %v3993
        %v3995 = vpop.xlane.xlu0 %3994
        %v3996 = vsel %vm1712, %v3972, -inf
        %3997 = vmax.xlane.f32.xlu0 %v3996
        %v3998 = vpop.xlane.xlu0 %3997
        %v3999 = vsub.f32 %v3945, %v3977
        %v4000 = vsub.f32 %v3948, %v3980
        %v4001 = vsub.f32 %v3953, %v3983
        %v4002 = vsub.f32 %v3956, %v3986
        %v4003 = vsub.f32 %v3961, %v3989
        %v4004 = vsub.f32 %v3964, %v3992
        %v4005 = vsub.f32 %v3969, %v3995
        %v4006 = vsub.f32 %v3972, %v3998
        %v4007 = vmul.f32 %v3999, 1.442695
        %v4008 = vpow.pop %v4007
        %v4009 = vmul.f32 %v4000, 1.442695
        %v4010 = vpow.pop %v4009
        %v4011 = vmul.f32 %v4001, 1.442695
        %v4012 = vpow.pop %v4011
        %v4013 = vmul.f32 %v4002, 1.442695
        %v4014 = vpow.pop %v4013
        %v4015 = vmul.f32 %v4003, 1.442695
        %v4016 = vpow.pop %v4015
        %v4017 = vmul.f32 %v4004, 1.442695
        %v4018 = vpow.pop %v4017
        %v4019 = vmul.f32 %v4005, 1.442695
        %v4020 = vpow.pop %v4019
        %v4021 = vmul.f32 %v4006, 1.442695
        %v4022 = vpow.pop %v4021
        %v4023 = vsel %vm1712, %v4008, 0.0
        %4024 = vadd.xlane.f32.xlu0 %v4023
        %v4025 = vpop.xlane.xlu0 %4024
        %v4026 = vsel %vm1712, %v4010, 0.0
        %4027 = vadd.xlane.f32.xlu0 %v4026
        %v4028 = vpop.xlane.xlu0 %4027
        %v4029 = vsel %vm1712, %v4012, 0.0
        %4030 = vadd.xlane.f32.xlu0 %v4029
        %v4031 = vpop.xlane.xlu0 %4030
        %v4032 = vsel %vm1712, %v4014, 0.0
        %4033 = vadd.xlane.f32.xlu0 %v4032
        %v4034 = vpop.xlane.xlu0 %4033
        %v4035 = vsel %vm1712, %v4016, 0.0
        %4036 = vadd.xlane.f32.xlu0 %v4035
        %v4037 = vpop.xlane.xlu0 %4036
        %v4038 = vsel %vm1712, %v4018, 0.0
        %4039 = vadd.xlane.f32.xlu0 %v4038
        %v4040 = vpop.xlane.xlu0 %4039
        %v4041 = vsel %vm1712, %v4020, 0.0
        %4042 = vadd.xlane.f32.xlu0 %v4041
        %v4043 = vpop.xlane.xlu0 %4042
        %v4044 = vsel %vm1712, %v4022, 0.0
        %4045 = vadd.xlane.f32.xlu0 %v4044
        %v4046 = vpop.xlane.xlu0 %4045
        %v4047 = vrcp.pop %v4025
        %v4048 = vmul.f32 %v4008, %v4047
        %v4049 = vrcp.pop %v4028
        %v4050 = vmul.f32 %v4010, %v4049
        %v4051 = vrcp.pop %v4031
        %v4052 = vmul.f32 %v4012, %v4051
        %v4053 = vrcp.pop %v4034
        %v4054 = vmul.f32 %v4014, %v4053
        %v4055 = vrcp.pop %v4037
        %v4056 = vmul.f32 %v4016, %v4055
        %v4057 = vrcp.pop %v4040
        %v4058 = vmul.f32 %v4018, %v4057
        %v4059 = vrcp.pop %v4043
        %v4060 = vmul.f32 %v4020, %v4059
        %v4061 = vrcp.pop %v4046
        %v4062 = vmul.f32 %v4022, %v4061
        %v4063 = vpack.c.bf16 %v4050, %v4048
        %v4064 = vpack.c.bf16 %v4054, %v4052
        %v4065 = vpack.c.bf16 %v4058, %v4056
        %v4066 = vpack.c.bf16 %v4062, %v4060
        %4067 = vrot.lane.b32.xlu0 %v3148, 64
        %v4068 = vpop.permute.xlu0 %4067
        %4069 = vrot.lane.b32.xlu0 %v3149, 64
        %v4070 = vpop.permute.xlu0 %4069
        %4071 = vrot.lane.b32.xlu0 %v3150, 64
        %v4072 = vpop.permute.xlu0 %4071
        %4073 = vrot.lane.b32.xlu0 %v3151, 64
        %v4074 = vpop.permute.xlu0 %4073
        %v4080 = vsel %vm1712, %v4063, 0
        %v4083 = vsel %vm1712, %v4064, 0
        %v4086 = vsel %vm1712, %v4065, 0
        %v4089 = vsel %vm1712, %v4066, 0
        %4091 = vmatprep.subr.bf16.mxu0 0
        %4092 = vmatpush1.bf16.msra.mxu0 0
        %4093 = vmatprep.subr.bf16.mxu0 0
        %4094 = vmatpush1.bf16.msra.mxu0 0
        %4095 = vmatprep.subr.bf16.mxu0 0
        %4096 = vmatpush1.bf16.msra.mxu0 0
        %4097 = vmatprep.subr.bf16.mxu0 0
        %4098 = vmatpush1.bf16.msra.mxu0 0
        %4099 = vmatprep.subr.bf16.mxu0 0
        %4100 = vmatpush1.bf16.msra.mxu0 %v4074
        %4101 = vmatprep.subr.bf16.mxu0 0
        %4102 = vmatpush1.bf16.msra.mxu0 %v4072
        %4103 = vmatprep.subr.bf16.mxu0 0
        %4104 = vmatpush1.bf16.msra.mxu0 %v4070
        %4105 = vmatprep.subr.bf16.mxu0 0
        %4106 = vmatpush1.bf16.msra.mxu0 %v4068
        %4107 = vmatprep.subr.bf16.mxu0 0
        %4108 = vmatpush2.bf16.msra.mxu0 0
        %4109 = vmatprep.subr.bf16.mxu0 0
        %4110 = vmatpush2.bf16.msra.mxu0 0
        %4111 = vmatprep.subr.bf16.mxu0 0
        %4112 = vmatpush2.bf16.msra.mxu0 0
        %4113 = vmatprep.subr.bf16.mxu0 0
        %4114 = vmatpush2.bf16.msra.mxu0 0
        %4115 = vmatprep.subr.bf16.mxu0 0
        %4116 = vmatpush2.bf16.msra.mxu0 0
        %4117 = vmatprep.subr.bf16.mxu0 0
        %4118 = vmatpush2.bf16.msra.mxu0 0
        %4119 = vmatprep.subr.bf16.mxu0 0
        %4120 = vmatpush2.bf16.msra.mxu0 0
        %4121 = vmatprep.subr.bf16.mxu0 0
        %4122 = vmatpush2.bf16.msra.mxu0 0
        %4123 = vmatprep.mubr.bf16.mxu0 0
        %4124 = vmatmul.mubr.bf16.gmra.mxu0 %v4080
        %v4125 = vpop.f32.mrf.mxu0
        %v4126 = vadd.f32 0.0, %v4125
        %v4127 = vpop.f32.mrf.mxu0
        %v4128 = vpop.f32.mrf.mxu0
        %v4129 = vadd.f32 0.0, %v4128
        %v4130 = vpop.f32.mrf.mxu0
        %4131 = vmatprep.mubr.bf16.mxu0 0
        %4132 = vmatmul.mubr.bf16.gmra.mxu0 %v4083
        %v4133 = vpop.f32.mrf.mxu0
        %v4134 = vadd.f32 0.0, %v4133
        %v4135 = vpop.f32.mrf.mxu0
        %v4136 = vpop.f32.mrf.mxu0
        %v4137 = vadd.f32 0.0, %v4136
        %v4138 = vpop.f32.mrf.mxu0
        %4139 = vmatprep.mubr.bf16.mxu0 0
        %4140 = vmatmul.mubr.bf16.gmra.mxu0 %v4086
        %v4141 = vpop.f32.mrf.mxu0
        %v4142 = vadd.f32 0.0, %v4141
        %v4143 = vpop.f32.mrf.mxu0
        %v4144 = vpop.f32.mrf.mxu0
        %v4145 = vadd.f32 0.0, %v4144
        %v4146 = vpop.f32.mrf.mxu0
        %4147 = vmatprep.mubr.bf16.mxu0 0
        %4148 = vmatmul.mubr.bf16.gmra.mxu0 %v4089
        %v4149 = vpop.f32.mrf.mxu0
        %v4150 = vadd.f32 0.0, %v4149
        %v4151 = vpop.f32.mrf.mxu0
        %v4152 = vpop.f32.mrf.mxu0
        %v4153 = vadd.f32 0.0, %v4152
        %v4154 = vpop.f32.mrf.mxu0
        %4155 = vdwg.mxu0
        %v4156 = vpack.c.bf16 %v4129, %v4126
        %v4157 = vpack.c.bf16 %v4137, %v4134
        %v4158 = vpack.c.bf16 %v4145, %v4142
        %v4159 = vpack.c.bf16 %v4153, %v4150
        %v4161 = vsel %vm1622, %v4156, 0
        %v4164 = vsel %vm1622, %v4157, 0
        %v4167 = vsel %vm1622, %v4158, 0
        %v4170 = vsel %vm1622, %v4159, 0
        %4172 = vmatprep.subr.bf16.mxu0 0
        %4173 = vmatpush1.bf16.msra.mxu0 0
        %4174 = vmatprep.subr.bf16.mxu0 0
        %4175 = vmatpush1.bf16.msra.mxu0 0
        %4176 = vmatprep.subr.bf16.mxu0 0
        %4177 = vmatpush1.bf16.msra.mxu0 0
        %4178 = vmatprep.subr.bf16.mxu0 0
        %4179 = vmatpush1.bf16.msra.mxu0 0
        %4180 = vmatprep.subr.bf16.mxu0 0
        %4181 = vmatpush1.bf16.msra.mxu0 0
        %4182 = vmatprep.subr.bf16.mxu0 0
        %4183 = vmatpush1.bf16.msra.mxu0 0
        %4184 = vmatprep.subr.bf16.mxu0 0
        %4185 = vmatpush1.bf16.msra.mxu0 %v2665
        %4186 = vmatprep.subr.bf16.mxu0 0
        %4187 = vmatpush1.bf16.msra.mxu0 %v2664
        %4188 = vmatprep.subr.bf16.mxu0 0
        %4189 = vmatpush2.bf16.msra.mxu0 0
        %4190 = vmatprep.subr.bf16.mxu0 0
        %4191 = vmatpush2.bf16.msra.mxu0 0
        %4192 = vmatprep.subr.bf16.mxu0 0
        %4193 = vmatpush2.bf16.msra.mxu0 0
        %4194 = vmatprep.subr.bf16.mxu0 0
        %4195 = vmatpush2.bf16.msra.mxu0 0
        %4196 = vmatprep.subr.bf16.mxu0 0
        %4197 = vmatpush2.bf16.msra.mxu0 0
        %4198 = vmatprep.subr.bf16.mxu0 0
        %4199 = vmatpush2.bf16.msra.mxu0 0
        %4200 = vmatprep.subr.bf16.mxu0 0
        %4201 = vmatpush2.bf16.msra.mxu0 0
        %4202 = vmatprep.subr.bf16.mxu0 0
        %4203 = vmatpush2.bf16.msra.mxu0 0
        %4204 = vmatprep.mubr.bf16.mxu0 0
        %4205 = vmatmul.mubr.bf16.gmra.mxu0 %v4161
        %v4206 = vpop.f32.mrf.mxu0
        %v4207 = vadd.f32 0.0, %v4206
        %v4208 = vpop.f32.mrf.mxu0
        %v4209 = vpop.f32.mrf.mxu0
        %v4210 = vadd.f32 0.0, %v4209
        %v4211 = vpop.f32.mrf.mxu0
        %4212 = vmatprep.mubr.bf16.mxu0 0
        %4213 = vmatmul.mubr.bf16.gmra.mxu0 %v4164
        %v4214 = vpop.f32.mrf.mxu0
        %v4215 = vadd.f32 0.0, %v4214
        %v4216 = vpop.f32.mrf.mxu0
        %v4217 = vpop.f32.mrf.mxu0
        %v4218 = vadd.f32 0.0, %v4217
        %v4219 = vpop.f32.mrf.mxu0
        %4220 = vmatprep.mubr.bf16.mxu0 0
        %4221 = vmatmul.mubr.bf16.gmra.mxu0 %v4167
        %v4222 = vpop.f32.mrf.mxu0
        %v4223 = vadd.f32 0.0, %v4222
        %v4224 = vpop.f32.mrf.mxu0
        %v4225 = vpop.f32.mrf.mxu0
        %v4226 = vadd.f32 0.0, %v4225
        %v4227 = vpop.f32.mrf.mxu0
        %4228 = vmatprep.mubr.bf16.mxu0 0
        %4229 = vmatmul.mubr.bf16.gmra.mxu0 %v4170
        %v4230 = vpop.f32.mrf.mxu0
        %v4231 = vadd.f32 0.0, %v4230
        %v4232 = vpop.f32.mrf.mxu0
        %v4233 = vpop.f32.mrf.mxu0
        %v4234 = vadd.f32 0.0, %v4233
        %v4235 = vpop.f32.mrf.mxu0
        %4236 = vdwg.mxu0
        %v4237 = vadd.f32 %v3840, %v4207
        %v4238 = vadd.f32 %v3843, %v4210
        %v4239 = vadd.f32 %v3848, %v4215
        %v4240 = vadd.f32 %v3851, %v4218
        %v4241 = vadd.f32 %v3856, %v4223
        %v4242 = vadd.f32 %v3859, %v4226
        %v4243 = vadd.f32 %v3864, %v4231
        %v4244 = vadd.f32 %v3867, %v4234
        %4245 = vrot.lane.b32.xlu0 %v3140, 32
        %v4246 = vpop.permute.xlu0 %4245
        %4247 = vrot.lane.b32.xlu0 %v3141, 32
        %v4248 = vpop.permute.xlu0 %4247
        %4249 = vrot.lane.b32.xlu0 %v3142, 32
        %v4250 = vpop.permute.xlu0 %4249
        %4251 = vrot.lane.b32.xlu0 %v3143, 32
        %v4252 = vpop.permute.xlu0 %4251
        %4253 = vrot.lane.b32.xlu0 %v3144, 32
        %v4254 = vpop.permute.xlu0 %4253
        %4255 = vrot.lane.b32.xlu0 %v3145, 32
        %v4256 = vpop.permute.xlu0 %4255
        %4257 = vrot.lane.b32.xlu0 %v3146, 32
        %v4258 = vpop.permute.xlu0 %4257
        %4259 = vrot.lane.b32.xlu0 %v3147, 32
        %v4260 = vpop.permute.xlu0 %4259
        %v4262 = vsel %vm1622, %v4246, 0
        %v4265 = vsel %vm1622, %v4248, 0
        %v4268 = vsel %vm1622, %v4250, 0
        %v4271 = vsel %vm1622, %v4252, 0
        %v4274 = vsel %vm1622, %v4254, 0
        %v4277 = vsel %vm1622, %v4256, 0
        %v4280 = vsel %vm1622, %v4258, 0
        %v4283 = vsel %vm1622, %v4260, 0
        %4285 = vmatprep.subr.bf16.mxu0 0
        %4286 = vmatpush1.bf16.xpose.msra.mxu0 0
        %4287 = vmatprep.subr.bf16.mxu0 0
        %4288 = vmatpush1.bf16.xpose.msra.mxu0 0
        %4289 = vmatprep.subr.bf16.mxu0 0
        %4290 = vmatpush1.bf16.xpose.msra.mxu0 0
        %4291 = vmatprep.subr.bf16.mxu0 0
        %4292 = vmatpush1.bf16.xpose.msra.mxu0 0
        %4293 = vmatprep.subr.bf16.mxu0 0
        %4294 = vmatpush1.bf16.xpose.msra.mxu0 %v4283
        %4295 = vmatprep.subr.bf16.mxu0 0
        %4296 = vmatpush1.bf16.xpose.msra.mxu0 %v4280
        %4297 = vmatprep.subr.bf16.mxu0 0
        %4298 = vmatpush1.bf16.xpose.msra.mxu0 %v4277
        %4299 = vmatprep.subr.bf16.mxu0 0
        %4300 = vmatpush1.bf16.xpose.msra.mxu0 %v4274
        %4301 = vmatprep.subr.bf16.mxu0 0
        %4302 = vmatpush2.bf16.xpose.msra.mxu0 0
        %4303 = vmatprep.subr.bf16.mxu0 0
        %4304 = vmatpush2.bf16.xpose.msra.mxu0 0
        %4305 = vmatprep.subr.bf16.mxu0 0
        %4306 = vmatpush2.bf16.xpose.msra.mxu0 0
        %4307 = vmatprep.subr.bf16.mxu0 0
        %4308 = vmatpush2.bf16.xpose.msra.mxu0 0
        %4309 = vmatprep.subr.bf16.mxu0 0
        %4310 = vmatpush2.bf16.xpose.msra.mxu0 0
        %4311 = vmatprep.subr.bf16.mxu0 0
        %4312 = vmatpush2.bf16.xpose.msra.mxu0 0
        %4313 = vmatprep.subr.bf16.mxu0 0
        %4314 = vmatpush2.bf16.xpose.msra.mxu0 0
        %4315 = vmatprep.subr.bf16.mxu0 0
        %4316 = vmatpush2.bf16.xpose.msra.mxu0 0
        %4317 = vmatprep.mubr.bf16.mxu0 0
        %4318 = vmatmul.mubr.bf16.gmra.mxu0 %v4262
        %v4319 = vpop.f32.mrf.mxu0
        %v4320 = vadd.f32 %v1586, %v4319
        %v4321 = vpop.f32.mrf.mxu0
        %v4322 = vpop.f32.mrf.mxu0
        %v4323 = vadd.f32 %v1587, %v4322
        %v4324 = vpop.f32.mrf.mxu0
        %4325 = vmatprep.mubr.bf16.mxu0 0
        %4326 = vmatmul.mubr.bf16.gmra.mxu0 %v4265
        %v4327 = vpop.f32.mrf.mxu0
        %v4328 = vadd.f32 %v1588, %v4327
        %v4329 = vpop.f32.mrf.mxu0
        %v4330 = vpop.f32.mrf.mxu0
        %v4331 = vadd.f32 %v1589, %v4330
        %v4332 = vpop.f32.mrf.mxu0
        %4333 = vmatprep.mubr.bf16.mxu0 0
        %4334 = vmatmul.mubr.bf16.gmra.mxu0 %v4268
        %v4335 = vpop.f32.mrf.mxu0
        %v4336 = vadd.f32 %v1590, %v4335
        %v4337 = vpop.f32.mrf.mxu0
        %v4338 = vpop.f32.mrf.mxu0
        %v4339 = vadd.f32 %v1591, %v4338
        %v4340 = vpop.f32.mrf.mxu0
        %4341 = vmatprep.mubr.bf16.mxu0 0
        %4342 = vmatmul.mubr.bf16.gmra.mxu0 %v4271
        %v4343 = vpop.f32.mrf.mxu0
        %v4344 = vadd.f32 %v1592, %v4343
        %v4345 = vpop.f32.mrf.mxu0
        %v4346 = vpop.f32.mrf.mxu0
        %v4347 = vadd.f32 %v1593, %v4346
        %v4348 = vpop.f32.mrf.mxu0
        %4349 = vdwg.mxu0
        %v4350 = vsel %vm1712, %v4320, -inf
        %4351 = vmax.xlane.f32.xlu0 %v4350
        %v4352 = vpop.xlane.xlu0 %4351
        %v4353 = vsel %vm1712, %v4323, -inf
        %4354 = vmax.xlane.f32.xlu0 %v4353
        %v4355 = vpop.xlane.xlu0 %4354
        %v4356 = vsel %vm1712, %v4328, -inf
        %4357 = vmax.xlane.f32.xlu0 %v4356
        %v4358 = vpop.xlane.xlu0 %4357
        %v4359 = vsel %vm1712, %v4331, -inf
        %4360 = vmax.xlane.f32.xlu0 %v4359
        %v4361 = vpop.xlane.xlu0 %4360
        %v4362 = vsel %vm1712, %v4336, -inf
        %4363 = vmax.xlane.f32.xlu0 %v4362
        %v4364 = vpop.xlane.xlu0 %4363
        %v4365 = vsel %vm1712, %v4339, -inf
        %4366 = vmax.xlane.f32.xlu0 %v4365
        %v4367 = vpop.xlane.xlu0 %4366
        %v4368 = vsel %vm1712, %v4344, -inf
        %4369 = vmax.xlane.f32.xlu0 %v4368
        %v4370 = vpop.xlane.xlu0 %4369
        %v4371 = vsel %vm1712, %v4347, -inf
        %4372 = vmax.xlane.f32.xlu0 %v4371
        %v4373 = vpop.xlane.xlu0 %4372
        %v4374 = vsub.f32 %v4320, %v4352
        %v4375 = vsub.f32 %v4323, %v4355
        %v4376 = vsub.f32 %v4328, %v4358
        %v4377 = vsub.f32 %v4331, %v4361
        %v4378 = vsub.f32 %v4336, %v4364
        %v4379 = vsub.f32 %v4339, %v4367
        %v4380 = vsub.f32 %v4344, %v4370
        %v4381 = vsub.f32 %v4347, %v4373
        %v4382 = vmul.f32 %v4374, 1.442695
        %v4383 = vpow.pop %v4382
        %v4384 = vmul.f32 %v4375, 1.442695
        %v4385 = vpow.pop %v4384
        %v4386 = vmul.f32 %v4376, 1.442695
        %v4387 = vpow.pop %v4386
        %v4388 = vmul.f32 %v4377, 1.442695
        %v4389 = vpow.pop %v4388
        %v4390 = vmul.f32 %v4378, 1.442695
        %v4391 = vpow.pop %v4390
        %v4392 = vmul.f32 %v4379, 1.442695
        %v4393 = vpow.pop %v4392
        %v4394 = vmul.f32 %v4380, 1.442695
        %v4395 = vpow.pop %v4394
        %v4396 = vmul.f32 %v4381, 1.442695
        %v4397 = vpow.pop %v4396
        %v4398 = vsel %vm1712, %v4383, 0.0
        %4399 = vadd.xlane.f32.xlu0 %v4398
        %v4400 = vpop.xlane.xlu0 %4399
        %v4401 = vsel %vm1712, %v4385, 0.0
        %4402 = vadd.xlane.f32.xlu0 %v4401
        %v4403 = vpop.xlane.xlu0 %4402
        %v4404 = vsel %vm1712, %v4387, 0.0
        %4405 = vadd.xlane.f32.xlu0 %v4404
        %v4406 = vpop.xlane.xlu0 %4405
        %v4407 = vsel %vm1712, %v4389, 0.0
        %4408 = vadd.xlane.f32.xlu0 %v4407
        %v4409 = vpop.xlane.xlu0 %4408
        %v4410 = vsel %vm1712, %v4391, 0.0
        %4411 = vadd.xlane.f32.xlu0 %v4410
        %v4412 = vpop.xlane.xlu0 %4411
        %v4413 = vsel %vm1712, %v4393, 0.0
        %4414 = vadd.xlane.f32.xlu0 %v4413
        %v4415 = vpop.xlane.xlu0 %4414
        %v4416 = vsel %vm1712, %v4395, 0.0
        %4417 = vadd.xlane.f32.xlu0 %v4416
        %v4418 = vpop.xlane.xlu0 %4417
        %v4419 = vsel %vm1712, %v4397, 0.0
        %4420 = vadd.xlane.f32.xlu0 %v4419
        %v4421 = vpop.xlane.xlu0 %4420
        %v4422 = vrcp.pop %v4400
        %v4423 = vmul.f32 %v4383, %v4422
        %v4424 = vrcp.pop %v4403
        %v4425 = vmul.f32 %v4385, %v4424
        %v4426 = vrcp.pop %v4406
        %v4427 = vmul.f32 %v4387, %v4426
        %v4428 = vrcp.pop %v4409
        %v4429 = vmul.f32 %v4389, %v4428
        %v4430 = vrcp.pop %v4412
        %v4431 = vmul.f32 %v4391, %v4430
        %v4432 = vrcp.pop %v4415
        %v4433 = vmul.f32 %v4393, %v4432
        %v4434 = vrcp.pop %v4418
        %v4435 = vmul.f32 %v4395, %v4434
        %v4436 = vrcp.pop %v4421
        %v4437 = vmul.f32 %v4397, %v4436
        %v4438 = vpack.c.bf16 %v4425, %v4423
        %v4439 = vpack.c.bf16 %v4429, %v4427
        %v4440 = vpack.c.bf16 %v4433, %v4431
        %v4441 = vpack.c.bf16 %v4437, %v4435
        %4442 = vrot.lane.b32.xlu0 %v3148, 32
        %v4443 = vpop.permute.xlu0 %4442
        %4444 = vrot.lane.b32.xlu0 %v3149, 32
        %v4445 = vpop.permute.xlu0 %4444
        %4446 = vrot.lane.b32.xlu0 %v3150, 32
        %v4447 = vpop.permute.xlu0 %4446
        %4448 = vrot.lane.b32.xlu0 %v3151, 32
        %v4449 = vpop.permute.xlu0 %4448
        %v4455 = vsel %vm1712, %v4438, 0
        %v4458 = vsel %vm1712, %v4439, 0
        %v4461 = vsel %vm1712, %v4440, 0
        %v4464 = vsel %vm1712, %v4441, 0
        %4466 = vmatprep.subr.bf16.mxu0 0
        %4467 = vmatpush1.bf16.msra.mxu0 0
        %4468 = vmatprep.subr.bf16.mxu0 0
        %4469 = vmatpush1.bf16.msra.mxu0 0
        %4470 = vmatprep.subr.bf16.mxu0 0
        %4471 = vmatpush1.bf16.msra.mxu0 0
        %4472 = vmatprep.subr.bf16.mxu0 0
        %4473 = vmatpush1.bf16.msra.mxu0 0
        %4474 = vmatprep.subr.bf16.mxu0 0
        %4475 = vmatpush1.bf16.msra.mxu0 %v4449
        %4476 = vmatprep.subr.bf16.mxu0 0
        %4477 = vmatpush1.bf16.msra.mxu0 %v4447
        %4478 = vmatprep.subr.bf16.mxu0 0
        %4479 = vmatpush1.bf16.msra.mxu0 %v4445
        %4480 = vmatprep.subr.bf16.mxu0 0
        %4481 = vmatpush1.bf16.msra.mxu0 %v4443
        %4482 = vmatprep.subr.bf16.mxu0 0
        %4483 = vmatpush2.bf16.msra.mxu0 0
        %4484 = vmatprep.subr.bf16.mxu0 0
        %4485 = vmatpush2.bf16.msra.mxu0 0
        %4486 = vmatprep.subr.bf16.mxu0 0
        %4487 = vmatpush2.bf16.msra.mxu0 0
        %4488 = vmatprep.subr.bf16.mxu0 0
        %4489 = vmatpush2.bf16.msra.mxu0 0
        %4490 = vmatprep.subr.bf16.mxu0 0
        %4491 = vmatpush2.bf16.msra.mxu0 0
        %4492 = vmatprep.subr.bf16.mxu0 0
        %4493 = vmatpush2.bf16.msra.mxu0 0
        %4494 = vmatprep.subr.bf16.mxu0 0
        %4495 = vmatpush2.bf16.msra.mxu0 0
        %4496 = vmatprep.subr.bf16.mxu0 0
        %4497 = vmatpush2.bf16.msra.mxu0 0
        %4498 = vmatprep.mubr.bf16.mxu0 0
        %4499 = vmatmul.mubr.bf16.gmra.mxu0 %v4455
        %v4500 = vpop.f32.mrf.mxu0
        %v4501 = vadd.f32 0.0, %v4500
        %v4502 = vpop.f32.mrf.mxu0
        %v4503 = vpop.f32.mrf.mxu0
        %v4504 = vadd.f32 0.0, %v4503
        %v4505 = vpop.f32.mrf.mxu0
        %4506 = vmatprep.mubr.bf16.mxu0 0
        %4507 = vmatmul.mubr.bf16.gmra.mxu0 %v4458
        %v4508 = vpop.f32.mrf.mxu0
        %v4509 = vadd.f32 0.0, %v4508
        %v4510 = vpop.f32.mrf.mxu0
        %v4511 = vpop.f32.mrf.mxu0
        %v4512 = vadd.f32 0.0, %v4511
        %v4513 = vpop.f32.mrf.mxu0
        %4514 = vmatprep.mubr.bf16.mxu0 0
        %4515 = vmatmul.mubr.bf16.gmra.mxu0 %v4461
        %v4516 = vpop.f32.mrf.mxu0
        %v4517 = vadd.f32 0.0, %v4516
        %v4518 = vpop.f32.mrf.mxu0
        %v4519 = vpop.f32.mrf.mxu0
        %v4520 = vadd.f32 0.0, %v4519
        %v4521 = vpop.f32.mrf.mxu0
        %4522 = vmatprep.mubr.bf16.mxu0 0
        %4523 = vmatmul.mubr.bf16.gmra.mxu0 %v4464
        %v4524 = vpop.f32.mrf.mxu0
        %v4525 = vadd.f32 0.0, %v4524
        %v4526 = vpop.f32.mrf.mxu0
        %v4527 = vpop.f32.mrf.mxu0
        %v4528 = vadd.f32 0.0, %v4527
        %v4529 = vpop.f32.mrf.mxu0
        %4530 = vdwg.mxu0
        %v4531 = vpack.c.bf16 %v4504, %v4501
        %v4532 = vpack.c.bf16 %v4512, %v4509
        %v4533 = vpack.c.bf16 %v4520, %v4517
        %v4534 = vpack.c.bf16 %v4528, %v4525
        %v4536 = vsel %vm1622, %v4531, 0
        %v4539 = vsel %vm1622, %v4532, 0
        %v4542 = vsel %vm1622, %v4533, 0
        %v4545 = vsel %vm1622, %v4534, 0
        %4547 = vmatprep.subr.bf16.mxu0 0
        %4548 = vmatpush1.bf16.msra.mxu0 0
        %4549 = vmatprep.subr.bf16.mxu0 0
        %4550 = vmatpush1.bf16.msra.mxu0 0
        %4551 = vmatprep.subr.bf16.mxu0 0
        %4552 = vmatpush1.bf16.msra.mxu0 0
        %4553 = vmatprep.subr.bf16.mxu0 0
        %4554 = vmatpush1.bf16.msra.mxu0 0
        %4555 = vmatprep.subr.bf16.mxu0 0
        %4556 = vmatpush1.bf16.msra.mxu0 0
        %4557 = vmatprep.subr.bf16.mxu0 0
        %4558 = vmatpush1.bf16.msra.mxu0 0
        %4559 = vmatprep.subr.bf16.mxu0 0
        %4560 = vmatpush1.bf16.msra.mxu0 %v3052
        %4561 = vmatprep.subr.bf16.mxu0 0
        %4562 = vmatpush1.bf16.msra.mxu0 %v3051
        %4563 = vmatprep.subr.bf16.mxu0 0
        %4564 = vmatpush2.bf16.msra.mxu0 0
        %4565 = vmatprep.subr.bf16.mxu0 0
        %4566 = vmatpush2.bf16.msra.mxu0 0
        %4567 = vmatprep.subr.bf16.mxu0 0
        %4568 = vmatpush2.bf16.msra.mxu0 0
        %4569 = vmatprep.subr.bf16.mxu0 0
        %4570 = vmatpush2.bf16.msra.mxu0 0
        %4571 = vmatprep.subr.bf16.mxu0 0
        %4572 = vmatpush2.bf16.msra.mxu0 0
        %4573 = vmatprep.subr.bf16.mxu0 0
        %4574 = vmatpush2.bf16.msra.mxu0 0
        %4575 = vmatprep.subr.bf16.mxu0 0
        %4576 = vmatpush2.bf16.msra.mxu0 0
        %4577 = vmatprep.subr.bf16.mxu0 0
        %4578 = vmatpush2.bf16.msra.mxu0 0
        %4579 = vmatprep.mubr.bf16.mxu0 0
        %4580 = vmatmul.mubr.bf16.gmra.mxu0 %v4536
        %v4581 = vpop.f32.mrf.mxu0
        %v4582 = vadd.f32 0.0, %v4581
        %v4583 = vpop.f32.mrf.mxu0
        %v4584 = vpop.f32.mrf.mxu0
        %v4585 = vadd.f32 0.0, %v4584
        %v4586 = vpop.f32.mrf.mxu0
        %4587 = vmatprep.mubr.bf16.mxu0 0
        %4588 = vmatmul.mubr.bf16.gmra.mxu0 %v4539
        %v4589 = vpop.f32.mrf.mxu0
        %v4590 = vadd.f32 0.0, %v4589
        %v4591 = vpop.f32.mrf.mxu0
        %v4592 = vpop.f32.mrf.mxu0
        %v4593 = vadd.f32 0.0, %v4592
        %v4594 = vpop.f32.mrf.mxu0
        %4595 = vmatprep.mubr.bf16.mxu0 0
        %4596 = vmatmul.mubr.bf16.gmra.mxu0 %v4542
        %v4597 = vpop.f32.mrf.mxu0
        %v4598 = vadd.f32 0.0, %v4597
        %v4599 = vpop.f32.mrf.mxu0
        %v4600 = vpop.f32.mrf.mxu0
        %v4601 = vadd.f32 0.0, %v4600
        %v4602 = vpop.f32.mrf.mxu0
        %4603 = vmatprep.mubr.bf16.mxu0 0
        %4604 = vmatmul.mubr.bf16.gmra.mxu0 %v4545
        %v4605 = vpop.f32.mrf.mxu0
        %v4606 = vadd.f32 0.0, %v4605
        %v4607 = vpop.f32.mrf.mxu0
        %v4608 = vpop.f32.mrf.mxu0
        %v4609 = vadd.f32 0.0, %v4608
        %v4610 = vpop.f32.mrf.mxu0
        %4611 = vdwg.mxu0
        %v4612 = vadd.f32 %v4237, %v4582
        %v4613 = vadd.f32 %v4238, %v4585
        %v4614 = vadd.f32 %v4239, %v4590
        %v4615 = vadd.f32 %v4240, %v4593
        %v4616 = vadd.f32 %v4241, %v4598
        %v4617 = vadd.f32 %v4242, %v4601
        %v4618 = vadd.f32 %v4243, %v4606
        %v4619 = vadd.f32 %v4244, %v4609
        %v4620 = vld [vmem:[%s766] sm:$0x1]
        %v4622 = vlaneseq
        %v4623 = vshrl.u32 %v4622, 7
        %v4624 = vsub.s32 0, %v4623
        %v4625 = vrot.slane %v4620, %v4624
        %v4627 = vadd.f32 %v3132, %v4625
        %v4628 = vadd.f32 %v3133, %v4625
        %v4629 = vadd.f32 %v3134, %v4625
        %v4630 = vadd.f32 %v3135, %v4625
        %v4631 = vadd.f32 %v3136, %v4625
        %v4632 = vadd.f32 %v3137, %v4625
        %v4633 = vadd.f32 %v3138, %v4625
        %v4634 = vadd.f32 %v3139, %v4625
        %v4635 = vadd.f32 %v4612, %v4625
        %v4636 = vadd.f32 %v4613, %v4625
        %v4637 = vadd.f32 %v4614, %v4625
        %v4638 = vadd.f32 %v4615, %v4625
        %v4639 = vadd.f32 %v4616, %v4625
        %v4640 = vadd.f32 %v4617, %v4625
        %v4641 = vadd.f32 %v4618, %v4625
        %v4642 = vadd.f32 %v4619, %v4625
        %v4643 = vadd.f32 %v4627, %v952
        %v4644 = vadd.f32 %v4628, %v953
        %v4645 = vadd.f32 %v4629, %v954
        %v4646 = vadd.f32 %v4630, %v955
        %v4647 = vadd.f32 %v4631, %v956
        %v4648 = vadd.f32 %v4632, %v957
        %v4649 = vadd.f32 %v4633, %v958
        %v4650 = vadd.f32 %v4634, %v959
        %v4651 = vadd.f32 %v4635, %v960
        %v4652 = vadd.f32 %v4636, %v961
        %v4653 = vadd.f32 %v4637, %v962
        %v4654 = vadd.f32 %v4638, %v963
        %v4655 = vadd.f32 %v4639, %v964
        %v4656 = vadd.f32 %v4640, %v965
        %v4657 = vadd.f32 %v4641, %v966
        %v4658 = vadd.f32 %v4642, %v967
        %v4659 = vld [vmem:[%s774] sm:$0x1]
        %v4660 = vld [vmem:[%s782] sm:$0x1]
        %4661 = vadd.xlane.f32.xlu0 %v4643
        %v4662 = vpop.xlane.xlu0 %4661
        %4663 = vadd.xlane.f32.xlu0 %v4644
        %v4664 = vpop.xlane.xlu0 %4663
        %4665 = vadd.xlane.f32.xlu0 %v4645
        %v4666 = vpop.xlane.xlu0 %4665
        %4667 = vadd.xlane.f32.xlu0 %v4646
        %v4668 = vpop.xlane.xlu0 %4667
        %4669 = vadd.xlane.f32.xlu0 %v4647
        %v4670 = vpop.xlane.xlu0 %4669
        %4671 = vadd.xlane.f32.xlu0 %v4648
        %v4672 = vpop.xlane.xlu0 %4671
        %4673 = vadd.xlane.f32.xlu0 %v4649
        %v4674 = vpop.xlane.xlu0 %4673
        %4675 = vadd.xlane.f32.xlu0 %v4650
        %v4676 = vpop.xlane.xlu0 %4675
        %4677 = vadd.xlane.f32.xlu0 %v4651
        %v4678 = vpop.xlane.xlu0 %4677
        %4679 = vadd.xlane.f32.xlu0 %v4652
        %v4680 = vpop.xlane.xlu0 %4679
        %4681 = vadd.xlane.f32.xlu0 %v4653
        %v4682 = vpop.xlane.xlu0 %4681
        %4683 = vadd.xlane.f32.xlu0 %v4654
        %v4684 = vpop.xlane.xlu0 %4683
        %4685 = vadd.xlane.f32.xlu0 %v4655
        %v4686 = vpop.xlane.xlu0 %4685
        %4687 = vadd.xlane.f32.xlu0 %v4656
        %v4688 = vpop.xlane.xlu0 %4687
        %4689 = vadd.xlane.f32.xlu0 %v4657
        %v4690 = vpop.xlane.xlu0 %4689
        %4691 = vadd.xlane.f32.xlu0 %v4658
        %v4692 = vpop.xlane.xlu0 %4691
        %v4693 = vmul.f32 %v4662, %v1002
        %v4694 = vmul.f32 %v4664, %v1002
        %v4695 = vmul.f32 %v4666, %v1002
        %v4696 = vmul.f32 %v4668, %v1002
        %v4697 = vmul.f32 %v4670, %v1002
        %v4698 = vmul.f32 %v4672, %v1002
        %v4699 = vmul.f32 %v4674, %v1002
        %v4700 = vmul.f32 %v4676, %v1002
        %v4701 = vmul.f32 %v4678, %v1002
        %v4702 = vmul.f32 %v4680, %v1002
        %v4703 = vmul.f32 %v4682, %v1002
        %v4704 = vmul.f32 %v4684, %v1002
        %v4705 = vmul.f32 %v4686, %v1002
        %v4706 = vmul.f32 %v4688, %v1002
        %v4707 = vmul.f32 %v4690, %v1002
        %v4708 = vmul.f32 %v4692, %v1002
        %v4709 = vsub.f32 %v4643, %v4693
        %v4710 = vsub.f32 %v4644, %v4694
        %v4711 = vsub.f32 %v4645, %v4695
        %v4712 = vsub.f32 %v4646, %v4696
        %v4713 = vsub.f32 %v4647, %v4697
        %v4714 = vsub.f32 %v4648, %v4698
        %v4715 = vsub.f32 %v4649, %v4699
        %v4716 = vsub.f32 %v4650, %v4700
        %v4717 = vsub.f32 %v4651, %v4701
        %v4718 = vsub.f32 %v4652, %v4702
        %v4719 = vsub.f32 %v4653, %v4703
        %v4720 = vsub.f32 %v4654, %v4704
        %v4721 = vsub.f32 %v4655, %v4705
        %v4722 = vsub.f32 %v4656, %v4706
        %v4723 = vsub.f32 %v4657, %v4707
        %v4724 = vsub.f32 %v4658, %v4708
        %v4725 = vmul.f32 %v4709, %v4709
        %v4726 = vmul.f32 %v4710, %v4710
        %v4727 = vmul.f32 %v4711, %v4711
        %v4728 = vmul.f32 %v4712, %v4712
        %v4729 = vmul.f32 %v4713, %v4713
        %v4730 = vmul.f32 %v4714, %v4714
        %v4731 = vmul.f32 %v4715, %v4715
        %v4732 = vmul.f32 %v4716, %v4716
        %v4733 = vmul.f32 %v4717, %v4717
        %v4734 = vmul.f32 %v4718, %v4718
        %v4735 = vmul.f32 %v4719, %v4719
        %v4736 = vmul.f32 %v4720, %v4720
        %v4737 = vmul.f32 %v4721, %v4721
        %v4738 = vmul.f32 %v4722, %v4722
        %v4739 = vmul.f32 %v4723, %v4723
        %v4740 = vmul.f32 %v4724, %v4724
        %4741 = vadd.xlane.f32.xlu0 %v4725
        %v4742 = vpop.xlane.xlu0 %4741
        %4743 = vadd.xlane.f32.xlu0 %v4726
        %v4744 = vpop.xlane.xlu0 %4743
        %4745 = vadd.xlane.f32.xlu0 %v4727
        %v4746 = vpop.xlane.xlu0 %4745
        %4747 = vadd.xlane.f32.xlu0 %v4728
        %v4748 = vpop.xlane.xlu0 %4747
        %4749 = vadd.xlane.f32.xlu0 %v4729
        %v4750 = vpop.xlane.xlu0 %4749
        %4751 = vadd.xlane.f32.xlu0 %v4730
        %v4752 = vpop.xlane.xlu0 %4751
        %4753 = vadd.xlane.f32.xlu0 %v4731
        %v4754 = vpop.xlane.xlu0 %4753
        %4755 = vadd.xlane.f32.xlu0 %v4732
        %v4756 = vpop.xlane.xlu0 %4755
        %4757 = vadd.xlane.f32.xlu0 %v4733
        %v4758 = vpop.xlane.xlu0 %4757
        %4759 = vadd.xlane.f32.xlu0 %v4734
        %v4760 = vpop.xlane.xlu0 %4759
        %4761 = vadd.xlane.f32.xlu0 %v4735
        %v4762 = vpop.xlane.xlu0 %4761
        %4763 = vadd.xlane.f32.xlu0 %v4736
        %v4764 = vpop.xlane.xlu0 %4763
        %4765 = vadd.xlane.f32.xlu0 %v4737
        %v4766 = vpop.xlane.xlu0 %4765
        %4767 = vadd.xlane.f32.xlu0 %v4738
        %v4768 = vpop.xlane.xlu0 %4767
        %4769 = vadd.xlane.f32.xlu0 %v4739
        %v4770 = vpop.xlane.xlu0 %4769
        %4771 = vadd.xlane.f32.xlu0 %v4740
        %v4772 = vpop.xlane.xlu0 %4771
        %v4773 = vmul.f32 %v4742, %v1002
        %v4774 = vmul.f32 %v4744, %v1002
        %v4775 = vmul.f32 %v4746, %v1002
        %v4776 = vmul.f32 %v4748, %v1002
        %v4777 = vmul.f32 %v4750, %v1002
        %v4778 = vmul.f32 %v4752, %v1002
        %v4779 = vmul.f32 %v4754, %v1002
        %v4780 = vmul.f32 %v4756, %v1002
        %v4781 = vmul.f32 %v4758, %v1002
        %v4782 = vmul.f32 %v4760, %v1002
        %v4783 = vmul.f32 %v4762, %v1002
        %v4784 = vmul.f32 %v4764, %v1002
        %v4785 = vmul.f32 %v4766, %v1002
        %v4786 = vmul.f32 %v4768, %v1002
        %v4787 = vmul.f32 %v4770, %v1002
        %v4788 = vmul.f32 %v4772, %v1002
        %v4789 = vadd.f32 %v4773, 1e-05
        %v4790 = vadd.f32 %v4774, 1e-05
        %v4791 = vadd.f32 %v4775, 1e-05
        %v4792 = vadd.f32 %v4776, 1e-05
        %v4793 = vadd.f32 %v4777, 1e-05
        %v4794 = vadd.f32 %v4778, 1e-05
        %v4795 = vadd.f32 %v4779, 1e-05
        %v4796 = vadd.f32 %v4780, 1e-05
        %v4797 = vadd.f32 %v4781, 1e-05
        %v4798 = vadd.f32 %v4782, 1e-05
        %v4799 = vadd.f32 %v4783, 1e-05
        %v4800 = vadd.f32 %v4784, 1e-05
        %v4801 = vadd.f32 %v4785, 1e-05
        %v4802 = vadd.f32 %v4786, 1e-05
        %v4803 = vadd.f32 %v4787, 1e-05
        %v4804 = vadd.f32 %v4788, 1e-05
        %v4805 = vrsqrt.pop %v4789
        %v4806 = vrsqrt.pop %v4790
        %v4807 = vrsqrt.pop %v4791
        %v4808 = vrsqrt.pop %v4792
        %v4809 = vrsqrt.pop %v4793
        %v4810 = vrsqrt.pop %v4794
        %v4811 = vrsqrt.pop %v4795
        %v4812 = vrsqrt.pop %v4796
        %v4813 = vrsqrt.pop %v4797
        %v4814 = vrsqrt.pop %v4798
        %v4815 = vrsqrt.pop %v4799
        %v4816 = vrsqrt.pop %v4800
        %v4817 = vrsqrt.pop %v4801
        %v4818 = vrsqrt.pop %v4802
        %v4819 = vrsqrt.pop %v4803
        %v4820 = vrsqrt.pop %v4804
        %v4821 = vmul.f32 %v4709, %v4805
        %v4822 = vmul.f32 %v4710, %v4806
        %v4823 = vmul.f32 %v4711, %v4807
        %v4824 = vmul.f32 %v4712, %v4808
        %v4825 = vmul.f32 %v4713, %v4809
        %v4826 = vmul.f32 %v4714, %v4810
        %v4827 = vmul.f32 %v4715, %v4811
        %v4828 = vmul.f32 %v4716, %v4812
        %v4829 = vmul.f32 %v4717, %v4813
        %v4830 = vmul.f32 %v4718, %v4814
        %v4831 = vmul.f32 %v4719, %v4815
        %v4832 = vmul.f32 %v4720, %v4816
        %v4833 = vmul.f32 %v4721, %v4817
        %v4834 = vmul.f32 %v4722, %v4818
        %v4835 = vmul.f32 %v4723, %v4819
        %v4836 = vmul.f32 %v4724, %v4820
        %v4838 = vlaneseq
        %v4839 = vshrl.u32 %v4838, 7
        %v4840 = vsub.s32 0, %v4839
        %v4841 = vrot.slane %v4659, %v4840
        %v4843 = vmul.f32 %v4821, %v4841
        %v4844 = vmul.f32 %v4822, %v4841
        %v4845 = vmul.f32 %v4823, %v4841
        %v4846 = vmul.f32 %v4824, %v4841
        %v4847 = vmul.f32 %v4825, %v4841
        %v4848 = vmul.f32 %v4826, %v4841
        %v4849 = vmul.f32 %v4827, %v4841
        %v4850 = vmul.f32 %v4828, %v4841
        %v4851 = vmul.f32 %v4829, %v4841
        %v4852 = vmul.f32 %v4830, %v4841
        %v4853 = vmul.f32 %v4831, %v4841
        %v4854 = vmul.f32 %v4832, %v4841
        %v4855 = vmul.f32 %v4833, %v4841
        %v4856 = vmul.f32 %v4834, %v4841
        %v4857 = vmul.f32 %v4835, %v4841
        %v4858 = vmul.f32 %v4836, %v4841
        %v4860 = vlaneseq
        %v4861 = vshrl.u32 %v4860, 7
        %v4862 = vsub.s32 0, %v4861
        %v4863 = vrot.slane %v4660, %v4862
        %v4865 = vadd.f32 %v4843, %v4863
        %v4866 = vadd.f32 %v4844, %v4863
        %v4867 = vadd.f32 %v4845, %v4863
        %v4868 = vadd.f32 %v4846, %v4863
        %v4869 = vadd.f32 %v4847, %v4863
        %v4870 = vadd.f32 %v4848, %v4863
        %v4871 = vadd.f32 %v4849, %v4863
        %v4872 = vadd.f32 %v4850, %v4863
        %v4873 = vadd.f32 %v4851, %v4863
        %v4874 = vadd.f32 %v4852, %v4863
        %v4875 = vadd.f32 %v4853, %v4863
        %v4876 = vadd.f32 %v4854, %v4863
        %v4877 = vadd.f32 %v4855, %v4863
        %v4878 = vadd.f32 %v4856, %v4863
        %v4879 = vadd.f32 %v4857, %v4863
        %v4880 = vadd.f32 %v4858, %v4863
        %v4881 = vpack.c.bf16 %v4866, %v4865
        %v4882 = vpack.c.bf16 %v4868, %v4867
        %v4883 = vpack.c.bf16 %v4870, %v4869
        %v4884 = vpack.c.bf16 %v4872, %v4871
        %v4885 = vpack.c.bf16 %v4874, %v4873
        %v4886 = vpack.c.bf16 %v4876, %v4875
        %v4887 = vpack.c.bf16 %v4878, %v4877
        %v4888 = vpack.c.bf16 %v4880, %v4879
        %v4889 = vld [vmem:[%s791] sm:$0xff]
        %v4890 = vld [vmem:[%s791 + $0x8] sm:$0xff]
        %v4891 = vld [vmem:[%s791 + $0x10] sm:$0xff]
        %v4892 = vld [vmem:[%s791 + $0x18] sm:$0xff]
        %v4893 = vld [vmem:[%s791 + $0x20] sm:$0xff]
        %v4894 = vld [vmem:[%s791 + $0x28] sm:$0xff]
        %v4895 = vld [vmem:[%s791 + $0x30] sm:$0xff]
        %v4896 = vld [vmem:[%s791 + $0x38] sm:$0xff]
        %v4897 = vld [vmem:[%s791 + $0x40] sm:$0xff]
        %v4898 = vld [vmem:[%s791 + $0x48] sm:$0xff]
        %v4899 = vld [vmem:[%s791 + $0x50] sm:$0xff]
        %v4900 = vld [vmem:[%s791 + $0x58] sm:$0xff]
        %v4901 = vld [vmem:[%s791 + $0x60] sm:$0xff]
        %v4902 = vld [vmem:[%s791 + $0x68] sm:$0xff]
        %v4903 = vld [vmem:[%s791 + $0x70] sm:$0xff]
        %v4904 = vld [vmem:[%s791 + $0x78] sm:$0xff]
        %v4905 = vld [vmem:[%s791 + $0x80] sm:$0xff]
        %v4906 = vld [vmem:[%s791 + $0x88] sm:$0xff]
        %v4907 = vld [vmem:[%s791 + $0x90] sm:$0xff]
        %v4908 = vld [vmem:[%s791 + $0x98] sm:$0xff]
        %v4909 = vld [vmem:[%s791 + $0xa0] sm:$0xff]
        %v4910 = vld [vmem:[%s791 + $0xa8] sm:$0xff]
        %v4911 = vld [vmem:[%s791 + $0xb0] sm:$0xff]
        %v4912 = vld [vmem:[%s791 + $0xb8] sm:$0xff]
        %v4913 = vld [vmem:[%s791 + $0xc0] sm:$0xff]
        %v4914 = vld [vmem:[%s791 + $0xc8] sm:$0xff]
        %v4915 = vld [vmem:[%s791 + $0xd0] sm:$0xff]
        %v4916 = vld [vmem:[%s791 + $0xd8] sm:$0xff]
        %v4917 = vld [vmem:[%s791 + $0xe0] sm:$0xff]
        %v4918 = vld [vmem:[%s791 + $0xe8] sm:$0xff]
        %v4919 = vld [vmem:[%s791 + $0xf0] sm:$0xff]
        %v4920 = vld [vmem:[%s791 + $0xf8] sm:$0xff]
        %v4921 = vld [vmem:[%s910] sm:$0xf]
        %v4923 = vlaneseq
        %v4924 = vshrl.u32 %v4923, 7
        %v4925 = vsub.s32 0, %v4924
        %v4926 = vrot.slane %v4921, %v4925
        %v4927 = vlaneseq
        %v4928 = vshrl.u32 %v4927, 7
        %v4929 = vsub.s32 1, %v4928
        %v4930 = vrot.slane %v4921, %v4929
        %v4931 = vlaneseq
        %v4932 = vshrl.u32 %v4931, 7
        %v4933 = vsub.s32 2, %v4932
        %v4934 = vrot.slane %v4921, %v4933
        %v4935 = vlaneseq
        %v4936 = vshrl.u32 %v4935, 7
        %v4937 = vsub.s32 3, %v4936
        %v4938 = vrot.slane %v4921, %v4937
        %v4975 = vunpack.c.l.b16 %v4889
        %v4976 = vunpack.c.h.b16 %v4889
        %v4977 = vunpack.c.l.b16 %v4890
        %v4978 = vunpack.c.h.b16 %v4890
        %v4979 = vunpack.c.l.b16 %v4891
        %v4980 = vunpack.c.h.b16 %v4891
        %v4981 = vunpack.c.l.b16 %v4892
        %v4982 = vunpack.c.h.b16 %v4892
        %v4983 = vunpack.c.l.b16 %v4893
        %v4984 = vunpack.c.h.b16 %v4893
        %v4985 = vunpack.c.l.b16 %v4894
        %v4986 = vunpack.c.h.b16 %v4894
        %v4987 = vunpack.c.l.b16 %v4895
        %v4988 = vunpack.c.h.b16 %v4895
        %v4989 = vunpack.c.l.b16 %v4896
        %v4990 = vunpack.c.h.b16 %v4896
        %v4991 = vunpack.c.l.b16 %v4897
        %v4992 = vunpack.c.h.b16 %v4897
        %v4993 = vunpack.c.l.b16 %v4898
        %v4994 = vunpack.c.h.b16 %v4898
        %v4995 = vunpack.c.l.b16 %v4899
        %v4996 = vunpack.c.h.b16 %v4899
        %v4997 = vunpack.c.l.b16 %v4900
        %v4998 = vunpack.c.h.b16 %v4900
        %v4999 = vunpack.c.l.b16 %v4901
        %v5000 = vunpack.c.h.b16 %v4901
        %v5001 = vunpack.c.l.b16 %v4902
        %v5002 = vunpack.c.h.b16 %v4902
        %v5003 = vunpack.c.l.b16 %v4903
        %v5004 = vunpack.c.h.b16 %v4903
        %v5005 = vunpack.c.l.b16 %v4904
        %v5006 = vunpack.c.h.b16 %v4904
        %v5007 = vunpack.c.l.b16 %v4905
        %v5008 = vunpack.c.h.b16 %v4905
        %v5009 = vunpack.c.l.b16 %v4906
        %v5010 = vunpack.c.h.b16 %v4906
        %v5011 = vunpack.c.l.b16 %v4907
        %v5012 = vunpack.c.h.b16 %v4907
        %v5013 = vunpack.c.l.b16 %v4908
        %v5014 = vunpack.c.h.b16 %v4908
        %v5015 = vunpack.c.l.b16 %v4909
        %v5016 = vunpack.c.h.b16 %v4909
        %v5017 = vunpack.c.l.b16 %v4910
        %v5018 = vunpack.c.h.b16 %v4910
        %v5019 = vunpack.c.l.b16 %v4911
        %v5020 = vunpack.c.h.b16 %v4911
        %v5021 = vunpack.c.l.b16 %v4912
        %v5022 = vunpack.c.h.b16 %v4912
        %v5023 = vunpack.c.l.b16 %v4913
        %v5024 = vunpack.c.h.b16 %v4913
        %v5025 = vunpack.c.l.b16 %v4914
        %v5026 = vunpack.c.h.b16 %v4914
        %v5027 = vunpack.c.l.b16 %v4915
        %v5028 = vunpack.c.h.b16 %v4915
        %v5029 = vunpack.c.l.b16 %v4916
        %v5030 = vunpack.c.h.b16 %v4916
        %v5031 = vunpack.c.l.b16 %v4917
        %v5032 = vunpack.c.h.b16 %v4917
        %v5033 = vunpack.c.l.b16 %v4918
        %v5034 = vunpack.c.h.b16 %v4918
        %v5035 = vunpack.c.l.b16 %v4919
        %v5036 = vunpack.c.h.b16 %v4919
        %v5037 = vunpack.c.l.b16 %v4920
        %v5038 = vunpack.c.h.b16 %v4920
        %v5039 = vpack.c.b16 %v4979, %v4975
        %v5040 = vpack.c.b16 %v4980, %v4976
        %v5041 = vpack.c.b16 %v4981, %v4977
        %v5042 = vpack.c.b16 %v4982, %v4978
        %v5043 = vpack.c.b16 %v4987, %v4983
        %v5044 = vpack.c.b16 %v4988, %v4984
        %v5045 = vpack.c.b16 %v4989, %v4985
        %v5046 = vpack.c.b16 %v4990, %v4986
        %v5047 = vpack.c.b16 %v4995, %v4991
        %v5048 = vpack.c.b16 %v4996, %v4992
        %v5049 = vpack.c.b16 %v4997, %v4993
        %v5050 = vpack.c.b16 %v4998, %v4994
        %v5051 = vpack.c.b16 %v5003, %v4999
        %v5052 = vpack.c.b16 %v5004, %v5000
        %v5053 = vpack.c.b16 %v5005, %v5001
        %v5054 = vpack.c.b16 %v5006, %v5002
        %v5055 = vpack.c.b16 %v5011, %v5007
        %v5056 = vpack.c.b16 %v5012, %v5008
        %v5057 = vpack.c.b16 %v5013, %v5009
        %v5058 = vpack.c.b16 %v5014, %v5010
        %v5059 = vpack.c.b16 %v5019, %v5015
        %v5060 = vpack.c.b16 %v5020, %v5016
        %v5061 = vpack.c.b16 %v5021, %v5017
        %v5062 = vpack.c.b16 %v5022, %v5018
        %v5063 = vpack.c.b16 %v5027, %v5023
        %v5064 = vpack.c.b16 %v5028, %v5024
        %v5065 = vpack.c.b16 %v5029, %v5025
        %v5066 = vpack.c.b16 %v5030, %v5026
        %v5067 = vpack.c.b16 %v5035, %v5031
        %v5068 = vpack.c.b16 %v5036, %v5032
        %v5069 = vpack.c.b16 %v5037, %v5033
        %v5070 = vpack.c.b16 %v5038, %v5034
        %5103 = vmatprep.subr.bf16.mxu0 %v5068
        %5104 = vmatpush1.bf16.msra.mxu0 %v5067
        %5105 = vmatprep.subr.bf16.mxu0 %v5064
        %5106 = vmatpush1.bf16.msra.mxu0 %v5063
        %5107 = vmatprep.subr.bf16.mxu0 %v5060
        %5108 = vmatpush1.bf16.msra.mxu0 %v5059
        %5109 = vmatprep.subr.bf16.mxu0 %v5056
        %5110 = vmatpush1.bf16.msra.mxu0 %v5055
        %5111 = vmatprep.subr.bf16.mxu0 %v5052
        %5112 = vmatpush1.bf16.msra.mxu0 %v5051
        %5113 = vmatprep.subr.bf16.mxu0 %v5048
        %5114 = vmatpush1.bf16.msra.mxu0 %v5047
        %5115 = vmatprep.subr.bf16.mxu0 %v5044
        %5116 = vmatpush1.bf16.msra.mxu0 %v5043
        %5117 = vmatprep.subr.bf16.mxu0 %v5040
        %5118 = vmatpush1.bf16.msra.mxu0 %v5039
        %5119 = vmatprep.subr.bf16.mxu0 0
        %5120 = vmatpush2.bf16.msra.mxu0 0
        %5121 = vmatprep.subr.bf16.mxu0 0
        %5122 = vmatpush2.bf16.msra.mxu0 0
        %5123 = vmatprep.subr.bf16.mxu0 0
        %5124 = vmatpush2.bf16.msra.mxu0 0
        %5125 = vmatprep.subr.bf16.mxu0 0
        %5126 = vmatpush2.bf16.msra.mxu0 0
        %5127 = vmatprep.subr.bf16.mxu0 0
        %5128 = vmatpush2.bf16.msra.mxu0 0
        %5129 = vmatprep.subr.bf16.mxu0 0
        %5130 = vmatpush2.bf16.msra.mxu0 0
        %5131 = vmatprep.subr.bf16.mxu0 0
        %5132 = vmatpush2.bf16.msra.mxu0 0
        %5133 = vmatprep.subr.bf16.mxu0 0
        %5134 = vmatpush2.bf16.msra.mxu0 0
        %5135 = vmatprep.mubr.bf16.mxu0 0
        %5136 = vmatmul.mubr.bf16.gmra.mxu0 %v4881
        %v5137 = vpop.f32.mrf.mxu0
        %v5138 = vadd.f32 %v4926, %v5137
        %v5139 = vpop.f32.mrf.mxu0
        %v5140 = vadd.f32 %v4930, %v5139
        %v5141 = vpop.f32.mrf.mxu0
        %v5142 = vadd.f32 %v4926, %v5141
        %v5143 = vpop.f32.mrf.mxu0
        %v5144 = vadd.f32 %v4930, %v5143
        %5145 = vmatprep.mubr.bf16.mxu0 0
        %5146 = vmatmul.mubr.bf16.gmra.mxu0 %v4882
        %v5147 = vpop.f32.mrf.mxu0
        %v5148 = vadd.f32 %v4926, %v5147
        %v5149 = vpop.f32.mrf.mxu0
        %v5150 = vadd.f32 %v4930, %v5149
        %v5151 = vpop.f32.mrf.mxu0
        %v5152 = vadd.f32 %v4926, %v5151
        %v5153 = vpop.f32.mrf.mxu0
        %v5154 = vadd.f32 %v4930, %v5153
        %5155 = vmatprep.mubr.bf16.mxu0 0
        %5156 = vmatmul.mubr.bf16.gmra.mxu0 %v4883
        %v5157 = vpop.f32.mrf.mxu0
        %v5158 = vadd.f32 %v4926, %v5157
        %v5159 = vpop.f32.mrf.mxu0
        %v5160 = vadd.f32 %v4930, %v5159
        %v5161 = vpop.f32.mrf.mxu0
        %v5162 = vadd.f32 %v4926, %v5161
        %v5163 = vpop.f32.mrf.mxu0
        %v5164 = vadd.f32 %v4930, %v5163
        %5165 = vmatprep.mubr.bf16.mxu0 0
        %5166 = vmatmul.mubr.bf16.gmra.mxu0 %v4884
        %v5167 = vpop.f32.mrf.mxu0
        %v5168 = vadd.f32 %v4926, %v5167
        %v5169 = vpop.f32.mrf.mxu0
        %v5170 = vadd.f32 %v4930, %v5169
        %v5171 = vpop.f32.mrf.mxu0
        %v5172 = vadd.f32 %v4926, %v5171
        %v5173 = vpop.f32.mrf.mxu0
        %v5174 = vadd.f32 %v4930, %v5173
        %5175 = vmatprep.mubr.bf16.mxu0 0
        %5176 = vmatmul.mubr.bf16.gmra.mxu0 %v4885
        %v5177 = vpop.f32.mrf.mxu0
        %v5178 = vadd.f32 %v4926, %v5177
        %v5179 = vpop.f32.mrf.mxu0
        %v5180 = vadd.f32 %v4930, %v5179
        %v5181 = vpop.f32.mrf.mxu0
        %v5182 = vadd.f32 %v4926, %v5181
        %v5183 = vpop.f32.mrf.mxu0
        %v5184 = vadd.f32 %v4930, %v5183
        %5185 = vmatprep.mubr.bf16.mxu0 0
        %5186 = vmatmul.mubr.bf16.gmra.mxu0 %v4886
        %v5187 = vpop.f32.mrf.mxu0
        %v5188 = vadd.f32 %v4926, %v5187
        %v5189 = vpop.f32.mrf.mxu0
        %v5190 = vadd.f32 %v4930, %v5189
        %v5191 = vpop.f32.mrf.mxu0
        %v5192 = vadd.f32 %v4926, %v5191
        %v5193 = vpop.f32.mrf.mxu0
        %v5194 = vadd.f32 %v4930, %v5193
        %5195 = vmatprep.mubr.bf16.mxu0 0
        %5196 = vmatmul.mubr.bf16.gmra.mxu0 %v4887
        %v5197 = vpop.f32.mrf.mxu0
        %v5198 = vadd.f32 %v4926, %v5197
        %v5199 = vpop.f32.mrf.mxu0
        %v5200 = vadd.f32 %v4930, %v5199
        %v5201 = vpop.f32.mrf.mxu0
        %v5202 = vadd.f32 %v4926, %v5201
        %v5203 = vpop.f32.mrf.mxu0
        %v5204 = vadd.f32 %v4930, %v5203
        %5205 = vmatprep.mubr.bf16.mxu0 0
        %5206 = vmatmul.mubr.bf16.gmra.mxu0 %v4888
        %v5207 = vpop.f32.mrf.mxu0
        %v5208 = vadd.f32 %v4926, %v5207
        %v5209 = vpop.f32.mrf.mxu0
        %v5210 = vadd.f32 %v4930, %v5209
        %v5211 = vpop.f32.mrf.mxu0
        %v5212 = vadd.f32 %v4926, %v5211
        %v5213 = vpop.f32.mrf.mxu0
        %v5214 = vadd.f32 %v4930, %v5213
        %5215 = vdwg.mxu0
        %5216 = vmatprep.subr.bf16.mxu0 %v5070
        %5217 = vmatpush1.bf16.msra.mxu0 %v5069
        %5218 = vmatprep.subr.bf16.mxu0 %v5066
        %5219 = vmatpush1.bf16.msra.mxu0 %v5065
        %5220 = vmatprep.subr.bf16.mxu0 %v5062
        %5221 = vmatpush1.bf16.msra.mxu0 %v5061
        %5222 = vmatprep.subr.bf16.mxu0 %v5058
        %5223 = vmatpush1.bf16.msra.mxu0 %v5057
        %5224 = vmatprep.subr.bf16.mxu0 %v5054
        %5225 = vmatpush1.bf16.msra.mxu0 %v5053
        %5226 = vmatprep.subr.bf16.mxu0 %v5050
        %5227 = vmatpush1.bf16.msra.mxu0 %v5049
        %5228 = vmatprep.subr.bf16.mxu0 %v5046
        %5229 = vmatpush1.bf16.msra.mxu0 %v5045
        %5230 = vmatprep.subr.bf16.mxu0 %v5042
        %5231 = vmatpush1.bf16.msra.mxu0 %v5041
        %5232 = vmatprep.subr.bf16.mxu0 0
        %5233 = vmatpush2.bf16.msra.mxu0 0
        %5234 = vmatprep.subr.bf16.mxu0 0
        %5235 = vmatpush2.bf16.msra.mxu0 0
        %5236 = vmatprep.subr.bf16.mxu0 0
        %5237 = vmatpush2.bf16.msra.mxu0 0
        %5238 = vmatprep.subr.bf16.mxu0 0
        %5239 = vmatpush2.bf16.msra.mxu0 0
        %5240 = vmatprep.subr.bf16.mxu0 0
        %5241 = vmatpush2.bf16.msra.mxu0 0
        %5242 = vmatprep.subr.bf16.mxu0 0
        %5243 = vmatpush2.bf16.msra.mxu0 0
        %5244 = vmatprep.subr.bf16.mxu0 0
        %5245 = vmatpush2.bf16.msra.mxu0 0
        %5246 = vmatprep.subr.bf16.mxu0 0
        %5247 = vmatpush2.bf16.msra.mxu0 0
        %5248 = vmatprep.mubr.bf16.mxu0 0
        %5249 = vmatmul.mubr.bf16.gmra.mxu0 %v4881
        %v5250 = vpop.f32.mrf.mxu0
        %v5251 = vadd.f32 %v4934, %v5250
        %v5252 = vpop.f32.mrf.mxu0
        %v5253 = vadd.f32 %v4938, %v5252
        %v5254 = vpop.f32.mrf.mxu0
        %v5255 = vadd.f32 %v4934, %v5254
        %v5256 = vpop.f32.mrf.mxu0
        %v5257 = vadd.f32 %v4938, %v5256
        %5258 = vmatprep.mubr.bf16.mxu0 0
        %5259 = vmatmul.mubr.bf16.gmra.mxu0 %v4882
        %v5260 = vpop.f32.mrf.mxu0
        %v5261 = vadd.f32 %v4934, %v5260
        %v5262 = vpop.f32.mrf.mxu0
        %v5263 = vadd.f32 %v4938, %v5262
        %v5264 = vpop.f32.mrf.mxu0
        %v5265 = vadd.f32 %v4934, %v5264
        %v5266 = vpop.f32.mrf.mxu0
        %v5267 = vadd.f32 %v4938, %v5266
        %5268 = vmatprep.mubr.bf16.mxu0 0
        %5269 = vmatmul.mubr.bf16.gmra.mxu0 %v4883
        %v5270 = vpop.f32.mrf.mxu0
        %v5271 = vadd.f32 %v4934, %v5270
        %v5272 = vpop.f32.mrf.mxu0
        %v5273 = vadd.f32 %v4938, %v5272
        %v5274 = vpop.f32.mrf.mxu0
        %v5275 = vadd.f32 %v4934, %v5274
        %v5276 = vpop.f32.mrf.mxu0
        %v5277 = vadd.f32 %v4938, %v5276
        %5278 = vmatprep.mubr.bf16.mxu0 0
        %5279 = vmatmul.mubr.bf16.gmra.mxu0 %v4884
        %v5280 = vpop.f32.mrf.mxu0
        %v5281 = vadd.f32 %v4934, %v5280
        %v5282 = vpop.f32.mrf.mxu0
        %v5283 = vadd.f32 %v4938, %v5282
        %v5284 = vpop.f32.mrf.mxu0
        %v5285 = vadd.f32 %v4934, %v5284
        %v5286 = vpop.f32.mrf.mxu0
        %v5287 = vadd.f32 %v4938, %v5286
        %5288 = vmatprep.mubr.bf16.mxu0 0
        %5289 = vmatmul.mubr.bf16.gmra.mxu0 %v4885
        %v5290 = vpop.f32.mrf.mxu0
        %v5291 = vadd.f32 %v4934, %v5290
        %v5292 = vpop.f32.mrf.mxu0
        %v5293 = vadd.f32 %v4938, %v5292
        %v5294 = vpop.f32.mrf.mxu0
        %v5295 = vadd.f32 %v4934, %v5294
        %v5296 = vpop.f32.mrf.mxu0
        %v5297 = vadd.f32 %v4938, %v5296
        %5298 = vmatprep.mubr.bf16.mxu0 0
        %5299 = vmatmul.mubr.bf16.gmra.mxu0 %v4886
        %v5300 = vpop.f32.mrf.mxu0
        %v5301 = vadd.f32 %v4934, %v5300
        %v5302 = vpop.f32.mrf.mxu0
        %v5303 = vadd.f32 %v4938, %v5302
        %v5304 = vpop.f32.mrf.mxu0
        %v5305 = vadd.f32 %v4934, %v5304
        %v5306 = vpop.f32.mrf.mxu0
        %v5307 = vadd.f32 %v4938, %v5306
        %5308 = vmatprep.mubr.bf16.mxu0 0
        %5309 = vmatmul.mubr.bf16.gmra.mxu0 %v4887
        %v5310 = vpop.f32.mrf.mxu0
        %v5311 = vadd.f32 %v4934, %v5310
        %v5312 = vpop.f32.mrf.mxu0
        %v5313 = vadd.f32 %v4938, %v5312
        %v5314 = vpop.f32.mrf.mxu0
        %v5315 = vadd.f32 %v4934, %v5314
        %v5316 = vpop.f32.mrf.mxu0
        %v5317 = vadd.f32 %v4938, %v5316
        %5318 = vmatprep.mubr.bf16.mxu0 0
        %5319 = vmatmul.mubr.bf16.gmra.mxu0 %v4888
        %v5320 = vpop.f32.mrf.mxu0
        %v5321 = vadd.f32 %v4934, %v5320
        %v5322 = vpop.f32.mrf.mxu0
        %v5323 = vadd.f32 %v4938, %v5322
        %v5324 = vpop.f32.mrf.mxu0
        %v5325 = vadd.f32 %v4934, %v5324
        %v5326 = vpop.f32.mrf.mxu0
        %v5327 = vadd.f32 %v4938, %v5326
        %5328 = vdwg.mxu0
        %v5329 = vmul.f32 %v5138, 1.702
        %v5330 = vmul.f32 %v5140, 1.702
        %v5331 = vmul.f32 %v5251, 1.702
        %v5332 = vmul.f32 %v5253, 1.702
        %v5333 = vmul.f32 %v5142, 1.702
        %v5334 = vmul.f32 %v5144, 1.702
        %v5335 = vmul.f32 %v5255, 1.702
        %v5336 = vmul.f32 %v5257, 1.702
        %v5337 = vmul.f32 %v5148, 1.702
        %v5338 = vmul.f32 %v5150, 1.702
        %v5339 = vmul.f32 %v5261, 1.702
        %v5340 = vmul.f32 %v5263, 1.702
        %v5341 = vmul.f32 %v5152, 1.702
        %v5342 = vmul.f32 %v5154, 1.702
        %v5343 = vmul.f32 %v5265, 1.702
        %v5344 = vmul.f32 %v5267, 1.702
        %v5345 = vmul.f32 %v5158, 1.702
        %v5346 = vmul.f32 %v5160, 1.702
        %v5347 = vmul.f32 %v5271, 1.702
        %v5348 = vmul.f32 %v5273, 1.702
        %v5349 = vmul.f32 %v5162, 1.702
        %v5350 = vmul.f32 %v5164, 1.702
        %v5351 = vmul.f32 %v5275, 1.702
        %v5352 = vmul.f32 %v5277, 1.702
        %v5353 = vmul.f32 %v5168, 1.702
        %v5354 = vmul.f32 %v5170, 1.702
        %v5355 = vmul.f32 %v5281, 1.702
        %v5356 = vmul.f32 %v5283, 1.702
        %v5357 = vmul.f32 %v5172, 1.702
        %v5358 = vmul.f32 %v5174, 1.702
        %v5359 = vmul.f32 %v5285, 1.702
        %v5360 = vmul.f32 %v5287, 1.702
        %v5361 = vmul.f32 %v5178, 1.702
        %v5362 = vmul.f32 %v5180, 1.702
        %v5363 = vmul.f32 %v5291, 1.702
        %v5364 = vmul.f32 %v5293, 1.702
        %v5365 = vmul.f32 %v5182, 1.702
        %v5366 = vmul.f32 %v5184, 1.702
        %v5367 = vmul.f32 %v5295, 1.702
        %v5368 = vmul.f32 %v5297, 1.702
        %v5369 = vmul.f32 %v5188, 1.702
        %v5370 = vmul.f32 %v5190, 1.702
        %v5371 = vmul.f32 %v5301, 1.702
        %v5372 = vmul.f32 %v5303, 1.702
        %v5373 = vmul.f32 %v5192, 1.702
        %v5374 = vmul.f32 %v5194, 1.702
        %v5375 = vmul.f32 %v5305, 1.702
        %v5376 = vmul.f32 %v5307, 1.702
        %v5377 = vmul.f32 %v5198, 1.702
        %v5378 = vmul.f32 %v5200, 1.702
        %v5379 = vmul.f32 %v5311, 1.702
        %v5380 = vmul.f32 %v5313, 1.702
        %v5381 = vmul.f32 %v5202, 1.702
        %v5382 = vmul.f32 %v5204, 1.702
        %v5383 = vmul.f32 %v5315, 1.702
        %v5384 = vmul.f32 %v5317, 1.702
        %v5385 = vmul.f32 %v5208, 1.702
        %v5386 = vmul.f32 %v5210, 1.702
        %v5387 = vmul.f32 %v5321, 1.702
        %v5388 = vmul.f32 %v5323, 1.702
        %v5389 = vmul.f32 %v5212, 1.702
        %v5390 = vmul.f32 %v5214, 1.702
        %v5391 = vmul.f32 %v5325, 1.702
        %v5392 = vmul.f32 %v5327, 1.702
        %v5393 = vxor.u32 %v5329, 2147483648
        %v5394 = vxor.u32 %v5330, 2147483648
        %v5395 = vxor.u32 %v5331, 2147483648
        %v5396 = vxor.u32 %v5332, 2147483648
        %v5397 = vxor.u32 %v5333, 2147483648
        %v5398 = vxor.u32 %v5334, 2147483648
        %v5399 = vxor.u32 %v5335, 2147483648
        %v5400 = vxor.u32 %v5336, 2147483648
        %v5401 = vxor.u32 %v5337, 2147483648
        %v5402 = vxor.u32 %v5338, 2147483648
        %v5403 = vxor.u32 %v5339, 2147483648
        %v5404 = vxor.u32 %v5340, 2147483648
        %v5405 = vxor.u32 %v5341, 2147483648
        %v5406 = vxor.u32 %v5342, 2147483648
        %v5407 = vxor.u32 %v5343, 2147483648
        %v5408 = vxor.u32 %v5344, 2147483648
        %v5409 = vxor.u32 %v5345, 2147483648
        %v5410 = vxor.u32 %v5346, 2147483648
        %v5411 = vxor.u32 %v5347, 2147483648
        %v5412 = vxor.u32 %v5348, 2147483648
        %v5413 = vxor.u32 %v5349, 2147483648
        %v5414 = vxor.u32 %v5350, 2147483648
        %v5415 = vxor.u32 %v5351, 2147483648
        %v5416 = vxor.u32 %v5352, 2147483648
        %v5417 = vxor.u32 %v5353, 2147483648
        %v5418 = vxor.u32 %v5354, 2147483648
        %v5419 = vxor.u32 %v5355, 2147483648
        %v5420 = vxor.u32 %v5356, 2147483648
        %v5421 = vxor.u32 %v5357, 2147483648
        %v5422 = vxor.u32 %v5358, 2147483648
        %v5423 = vxor.u32 %v5359, 2147483648
        %v5424 = vxor.u32 %v5360, 2147483648
        %v5425 = vxor.u32 %v5361, 2147483648
        %v5426 = vxor.u32 %v5362, 2147483648
        %v5427 = vxor.u32 %v5363, 2147483648
        %v5428 = vxor.u32 %v5364, 2147483648
        %v5429 = vxor.u32 %v5365, 2147483648
        %v5430 = vxor.u32 %v5366, 2147483648
        %v5431 = vxor.u32 %v5367, 2147483648
        %v5432 = vxor.u32 %v5368, 2147483648
        %v5433 = vxor.u32 %v5369, 2147483648
        %v5434 = vxor.u32 %v5370, 2147483648
        %v5435 = vxor.u32 %v5371, 2147483648
        %v5436 = vxor.u32 %v5372, 2147483648
        %v5437 = vxor.u32 %v5373, 2147483648
        %v5438 = vxor.u32 %v5374, 2147483648
        %v5439 = vxor.u32 %v5375, 2147483648
        %v5440 = vxor.u32 %v5376, 2147483648
        %v5441 = vxor.u32 %v5377, 2147483648
        %v5442 = vxor.u32 %v5378, 2147483648
        %v5443 = vxor.u32 %v5379, 2147483648
        %v5444 = vxor.u32 %v5380, 2147483648
        %v5445 = vxor.u32 %v5381, 2147483648
        %v5446 = vxor.u32 %v5382, 2147483648
        %v5447 = vxor.u32 %v5383, 2147483648
        %v5448 = vxor.u32 %v5384, 2147483648
        %v5449 = vxor.u32 %v5385, 2147483648
        %v5450 = vxor.u32 %v5386, 2147483648
        %v5451 = vxor.u32 %v5387, 2147483648
        %v5452 = vxor.u32 %v5388, 2147483648
        %v5453 = vxor.u32 %v5389, 2147483648
        %v5454 = vxor.u32 %v5390, 2147483648
        %v5455 = vxor.u32 %v5391, 2147483648
        %v5456 = vxor.u32 %v5392, 2147483648
        %v5457 = vmul.f32 %v5393, 1.442695
        %v5458 = vpow.pop %v5457
        %v5459 = vmul.f32 %v5394, 1.442695
        %v5460 = vpow.pop %v5459
        %v5461 = vmul.f32 %v5395, 1.442695
        %v5462 = vpow.pop %v5461
        %v5463 = vmul.f32 %v5396, 1.442695
        %v5464 = vpow.pop %v5463
        %v5465 = vmul.f32 %v5397, 1.442695
        %v5466 = vpow.pop %v5465
        %v5467 = vmul.f32 %v5398, 1.442695
        %v5468 = vpow.pop %v5467
        %v5469 = vmul.f32 %v5399, 1.442695
        %v5470 = vpow.pop %v5469
        %v5471 = vmul.f32 %v5400, 1.442695
        %v5472 = vpow.pop %v5471
        %v5473 = vmul.f32 %v5401, 1.442695
        %v5474 = vpow.pop %v5473
        %v5475 = vmul.f32 %v5402, 1.442695
        %v5476 = vpow.pop %v5475
        %v5477 = vmul.f32 %v5403, 1.442695
        %v5478 = vpow.pop %v5477
        %v5479 = vmul.f32 %v5404, 1.442695
        %v5480 = vpow.pop %v5479
        %v5481 = vmul.f32 %v5405, 1.442695
        %v5482 = vpow.pop %v5481
        %v5483 = vmul.f32 %v5406, 1.442695
        %v5484 = vpow.pop %v5483
        %v5485 = vmul.f32 %v5407, 1.442695
        %v5486 = vpow.pop %v5485
        %v5487 = vmul.f32 %v5408, 1.442695
        %v5488 = vpow.pop %v5487
        %v5489 = vmul.f32 %v5409, 1.442695
        %v5490 = vpow.pop %v5489
        %v5491 = vmul.f32 %v5410, 1.442695
        %v5492 = vpow.pop %v5491
        %v5493 = vmul.f32 %v5411, 1.442695
        %v5494 = vpow.pop %v5493
        %v5495 = vmul.f32 %v5412, 1.442695
        %v5496 = vpow.pop %v5495
        %v5497 = vmul.f32 %v5413, 1.442695
        %v5498 = vpow.pop %v5497
        %v5499 = vmul.f32 %v5414, 1.442695
        %v5500 = vpow.pop %v5499
        %v5501 = vmul.f32 %v5415, 1.442695
        %v5502 = vpow.pop %v5501
        %v5503 = vmul.f32 %v5416, 1.442695
        %v5504 = vpow.pop %v5503
        %v5505 = vmul.f32 %v5417, 1.442695
        %v5506 = vpow.pop %v5505
        %v5507 = vmul.f32 %v5418, 1.442695
        %v5508 = vpow.pop %v5507
        %v5509 = vmul.f32 %v5419, 1.442695
        %v5510 = vpow.pop %v5509
        %v5511 = vmul.f32 %v5420, 1.442695
        %v5512 = vpow.pop %v5511
        %v5513 = vmul.f32 %v5421, 1.442695
        %v5514 = vpow.pop %v5513
        %v5515 = vmul.f32 %v5422, 1.442695
        %v5516 = vpow.pop %v5515
        %v5517 = vmul.f32 %v5423, 1.442695
        %v5518 = vpow.pop %v5517
        %v5519 = vmul.f32 %v5424, 1.442695
        %v5520 = vpow.pop %v5519
        %v5521 = vmul.f32 %v5425, 1.442695
        %v5522 = vpow.pop %v5521
        %v5523 = vmul.f32 %v5426, 1.442695
        %v5524 = vpow.pop %v5523
        %v5525 = vmul.f32 %v5427, 1.442695
        %v5526 = vpow.pop %v5525
        %v5527 = vmul.f32 %v5428, 1.442695
        %v5528 = vpow.pop %v5527
        %v5529 = vmul.f32 %v5429, 1.442695
        %v5530 = vpow.pop %v5529
        %v5531 = vmul.f32 %v5430, 1.442695
        %v5532 = vpow.pop %v5531
        %v5533 = vmul.f32 %v5431, 1.442695
        %v5534 = vpow.pop %v5533
        %v5535 = vmul.f32 %v5432, 1.442695
        %v5536 = vpow.pop %v5535
        %v5537 = vmul.f32 %v5433, 1.442695
        %v5538 = vpow.pop %v5537
        %v5539 = vmul.f32 %v5434, 1.442695
        %v5540 = vpow.pop %v5539
        %v5541 = vmul.f32 %v5435, 1.442695
        %v5542 = vpow.pop %v5541
        %v5543 = vmul.f32 %v5436, 1.442695
        %v5544 = vpow.pop %v5543
        %v5545 = vmul.f32 %v5437, 1.442695
        %v5546 = vpow.pop %v5545
        %v5547 = vmul.f32 %v5438, 1.442695
        %v5548 = vpow.pop %v5547
        %v5549 = vmul.f32 %v5439, 1.442695
        %v5550 = vpow.pop %v5549
        %v5551 = vmul.f32 %v5440, 1.442695
        %v5552 = vpow.pop %v5551
        %v5553 = vmul.f32 %v5441, 1.442695
        %v5554 = vpow.pop %v5553
        %v5555 = vmul.f32 %v5442, 1.442695
        %v5556 = vpow.pop %v5555
        %v5557 = vmul.f32 %v5443, 1.442695
        %v5558 = vpow.pop %v5557
        %v5559 = vmul.f32 %v5444, 1.442695
        %v5560 = vpow.pop %v5559
        %v5561 = vmul.f32 %v5445, 1.442695
        %v5562 = vpow.pop %v5561
        %v5563 = vmul.f32 %v5446, 1.442695
        %v5564 = vpow.pop %v5563
        %v5565 = vmul.f32 %v5447, 1.442695
        %v5566 = vpow.pop %v5565
        %v5567 = vmul.f32 %v5448, 1.442695
        %v5568 = vpow.pop %v5567
        %v5569 = vmul.f32 %v5449, 1.442695
        %v5570 = vpow.pop %v5569
        %v5571 = vmul.f32 %v5450, 1.442695
        %v5572 = vpow.pop %v5571
        %v5573 = vmul.f32 %v5451, 1.442695
        %v5574 = vpow.pop %v5573
        %v5575 = vmul.f32 %v5452, 1.442695
        %v5576 = vpow.pop %v5575
        %v5577 = vmul.f32 %v5453, 1.442695
        %v5578 = vpow.pop %v5577
        %v5579 = vmul.f32 %v5454, 1.442695
        %v5580 = vpow.pop %v5579
        %v5581 = vmul.f32 %v5455, 1.442695
        %v5582 = vpow.pop %v5581
        %v5583 = vmul.f32 %v5456, 1.442695
        %v5584 = vpow.pop %v5583
        %v5585 = vadd.f32 %v5458, 1.0
        %v5586 = vadd.f32 %v5460, 1.0
        %v5587 = vadd.f32 %v5462, 1.0
        %v5588 = vadd.f32 %v5464, 1.0
        %v5589 = vadd.f32 %v5466, 1.0
        %v5590 = vadd.f32 %v5468, 1.0
        %v5591 = vadd.f32 %v5470, 1.0
        %v5592 = vadd.f32 %v5472, 1.0
        %v5593 = vadd.f32 %v5474, 1.0
        %v5594 = vadd.f32 %v5476, 1.0
        %v5595 = vadd.f32 %v5478, 1.0
        %v5596 = vadd.f32 %v5480, 1.0
        %v5597 = vadd.f32 %v5482, 1.0
        %v5598 = vadd.f32 %v5484, 1.0
        %v5599 = vadd.f32 %v5486, 1.0
        %v5600 = vadd.f32 %v5488, 1.0
        %v5601 = vadd.f32 %v5490, 1.0
        %v5602 = vadd.f32 %v5492, 1.0
        %v5603 = vadd.f32 %v5494, 1.0
        %v5604 = vadd.f32 %v5496, 1.0
        %v5605 = vadd.f32 %v5498, 1.0
        %v5606 = vadd.f32 %v5500, 1.0
        %v5607 = vadd.f32 %v5502, 1.0
        %v5608 = vadd.f32 %v5504, 1.0
        %v5609 = vadd.f32 %v5506, 1.0
        %v5610 = vadd.f32 %v5508, 1.0
        %v5611 = vadd.f32 %v5510, 1.0
        %v5612 = vadd.f32 %v5512, 1.0
        %v5613 = vadd.f32 %v5514, 1.0
        %v5614 = vadd.f32 %v5516, 1.0
        %v5615 = vadd.f32 %v5518, 1.0
        %v5616 = vadd.f32 %v5520, 1.0
        %v5617 = vadd.f32 %v5522, 1.0
        %v5618 = vadd.f32 %v5524, 1.0
        %v5619 = vadd.f32 %v5526, 1.0
        %v5620 = vadd.f32 %v5528, 1.0
        %v5621 = vadd.f32 %v5530, 1.0
        %v5622 = vadd.f32 %v5532, 1.0
        %v5623 = vadd.f32 %v5534, 1.0
        %v5624 = vadd.f32 %v5536, 1.0
        %v5625 = vadd.f32 %v5538, 1.0
        %v5626 = vadd.f32 %v5540, 1.0
        %v5627 = vadd.f32 %v5542, 1.0
        %v5628 = vadd.f32 %v5544, 1.0
        %v5629 = vadd.f32 %v5546, 1.0
        %v5630 = vadd.f32 %v5548, 1.0
        %v5631 = vadd.f32 %v5550, 1.0
        %v5632 = vadd.f32 %v5552, 1.0
        %v5633 = vadd.f32 %v5554, 1.0
        %v5634 = vadd.f32 %v5556, 1.0
        %v5635 = vadd.f32 %v5558, 1.0
        %v5636 = vadd.f32 %v5560, 1.0
        %v5637 = vadd.f32 %v5562, 1.0
        %v5638 = vadd.f32 %v5564, 1.0
        %v5639 = vadd.f32 %v5566, 1.0
        %v5640 = vadd.f32 %v5568, 1.0
        %v5641 = vadd.f32 %v5570, 1.0
        %v5642 = vadd.f32 %v5572, 1.0
        %v5643 = vadd.f32 %v5574, 1.0
        %v5644 = vadd.f32 %v5576, 1.0
        %v5645 = vadd.f32 %v5578, 1.0
        %v5646 = vadd.f32 %v5580, 1.0
        %v5647 = vadd.f32 %v5582, 1.0
        %v5648 = vadd.f32 %v5584, 1.0
        %v5649 = vrcp.pop %v5585
        %v5650 = vmul.f32 1.0, %v5649
        %v5651 = vrcp.pop %v5586
        %v5652 = vmul.f32 1.0, %v5651
        %v5653 = vrcp.pop %v5587
        %v5654 = vmul.f32 1.0, %v5653
        %v5655 = vrcp.pop %v5588
        %v5656 = vmul.f32 1.0, %v5655
        %v5657 = vrcp.pop %v5589
        %v5658 = vmul.f32 1.0, %v5657
        %v5659 = vrcp.pop %v5590
        %v5660 = vmul.f32 1.0, %v5659
        %v5661 = vrcp.pop %v5591
        %v5662 = vmul.f32 1.0, %v5661
        %v5663 = vrcp.pop %v5592
        %v5664 = vmul.f32 1.0, %v5663
        %v5665 = vrcp.pop %v5593
        %v5666 = vmul.f32 1.0, %v5665
        %v5667 = vrcp.pop %v5594
        %v5668 = vmul.f32 1.0, %v5667
        %v5669 = vrcp.pop %v5595
        %v5670 = vmul.f32 1.0, %v5669
        %v5671 = vrcp.pop %v5596
        %v5672 = vmul.f32 1.0, %v5671
        %v5673 = vrcp.pop %v5597
        %v5674 = vmul.f32 1.0, %v5673
        %v5675 = vrcp.pop %v5598
        %v5676 = vmul.f32 1.0, %v5675
        %v5677 = vrcp.pop %v5599
        %v5678 = vmul.f32 1.0, %v5677
        %v5679 = vrcp.pop %v5600
        %v5680 = vmul.f32 1.0, %v5679
        %v5681 = vrcp.pop %v5601
        %v5682 = vmul.f32 1.0, %v5681
        %v5683 = vrcp.pop %v5602
        %v5684 = vmul.f32 1.0, %v5683
        %v5685 = vrcp.pop %v5603
        %v5686 = vmul.f32 1.0, %v5685
        %v5687 = vrcp.pop %v5604
        %v5688 = vmul.f32 1.0, %v5687
        %v5689 = vrcp.pop %v5605
        %v5690 = vmul.f32 1.0, %v5689
        %v5691 = vrcp.pop %v5606
        %v5692 = vmul.f32 1.0, %v5691
        %v5693 = vrcp.pop %v5607
        %v5694 = vmul.f32 1.0, %v5693
        %v5695 = vrcp.pop %v5608
        %v5696 = vmul.f32 1.0, %v5695
        %v5697 = vrcp.pop %v5609
        %v5698 = vmul.f32 1.0, %v5697
        %v5699 = vrcp.pop %v5610
        %v5700 = vmul.f32 1.0, %v5699
        %v5701 = vrcp.pop %v5611
        %v5702 = vmul.f32 1.0, %v5701
        %v5703 = vrcp.pop %v5612
        %v5704 = vmul.f32 1.0, %v5703
        %v5705 = vrcp.pop %v5613
        %v5706 = vmul.f32 1.0, %v5705
        %v5707 = vrcp.pop %v5614
        %v5708 = vmul.f32 1.0, %v5707
        %v5709 = vrcp.pop %v5615
        %v5710 = vmul.f32 1.0, %v5709
        %v5711 = vrcp.pop %v5616
        %v5712 = vmul.f32 1.0, %v5711
        %v5713 = vrcp.pop %v5617
        %v5714 = vmul.f32 1.0, %v5713
        %v5715 = vrcp.pop %v5618
        %v5716 = vmul.f32 1.0, %v5715
        %v5717 = vrcp.pop %v5619
        %v5718 = vmul.f32 1.0, %v5717
        %v5719 = vrcp.pop %v5620
        %v5720 = vmul.f32 1.0, %v5719
        %v5721 = vrcp.pop %v5621
        %v5722 = vmul.f32 1.0, %v5721
        %v5723 = vrcp.pop %v5622
        %v5724 = vmul.f32 1.0, %v5723
        %v5725 = vrcp.pop %v5623
        %v5726 = vmul.f32 1.0, %v5725
        %v5727 = vrcp.pop %v5624
        %v5728 = vmul.f32 1.0, %v5727
        %v5729 = vrcp.pop %v5625
        %v5730 = vmul.f32 1.0, %v5729
        %v5731 = vrcp.pop %v5626
        %v5732 = vmul.f32 1.0, %v5731
        %v5733 = vrcp.pop %v5627
        %v5734 = vmul.f32 1.0, %v5733
        %v5735 = vrcp.pop %v5628
        %v5736 = vmul.f32 1.0, %v5735
        %v5737 = vrcp.pop %v5629
        %v5738 = vmul.f32 1.0, %v5737
        %v5739 = vrcp.pop %v5630
        %v5740 = vmul.f32 1.0, %v5739
        %v5741 = vrcp.pop %v5631
        %v5742 = vmul.f32 1.0, %v5741
        %v5743 = vrcp.pop %v5632
        %v5744 = vmul.f32 1.0, %v5743
        %v5745 = vrcp.pop %v5633
        %v5746 = vmul.f32 1.0, %v5745
        %v5747 = vrcp.pop %v5634
        %v5748 = vmul.f32 1.0, %v5747
        %v5749 = vrcp.pop %v5635
        %v5750 = vmul.f32 1.0, %v5749
        %v5751 = vrcp.pop %v5636
        %v5752 = vmul.f32 1.0, %v5751
        %v5753 = vrcp.pop %v5637
        %v5754 = vmul.f32 1.0, %v5753
        %v5755 = vrcp.pop %v5638
        %v5756 = vmul.f32 1.0, %v5755
        %v5757 = vrcp.pop %v5639
        %v5758 = vmul.f32 1.0, %v5757
        %v5759 = vrcp.pop %v5640
        %v5760 = vmul.f32 1.0, %v5759
        %v5761 = vrcp.pop %v5641
        %v5762 = vmul.f32 1.0, %v5761
        %v5763 = vrcp.pop %v5642
        %v5764 = vmul.f32 1.0, %v5763
        %v5765 = vrcp.pop %v5643
        %v5766 = vmul.f32 1.0, %v5765
        %v5767 = vrcp.pop %v5644
        %v5768 = vmul.f32 1.0, %v5767
        %v5769 = vrcp.pop %v5645
        %v5770 = vmul.f32 1.0, %v5769
        %v5771 = vrcp.pop %v5646
        %v5772 = vmul.f32 1.0, %v5771
        %v5773 = vrcp.pop %v5647
        %v5774 = vmul.f32 1.0, %v5773
        %v5775 = vrcp.pop %v5648
        %v5776 = vmul.f32 1.0, %v5775
        %v5777 = vmul.f32 %v5138, %v5650
        %v5778 = vmul.f32 %v5140, %v5652
        %v5779 = vmul.f32 %v5251, %v5654
        %v5780 = vmul.f32 %v5253, %v5656
        %v5781 = vmul.f32 %v5142, %v5658
        %v5782 = vmul.f32 %v5144, %v5660
        %v5783 = vmul.f32 %v5255, %v5662
        %v5784 = vmul.f32 %v5257, %v5664
        %v5785 = vmul.f32 %v5148, %v5666
        %v5786 = vmul.f32 %v5150, %v5668
        %v5787 = vmul.f32 %v5261, %v5670
        %v5788 = vmul.f32 %v5263, %v5672
        %v5789 = vmul.f32 %v5152, %v5674
        %v5790 = vmul.f32 %v5154, %v5676
        %v5791 = vmul.f32 %v5265, %v5678
        %v5792 = vmul.f32 %v5267, %v5680
        %v5793 = vmul.f32 %v5158, %v5682
        %v5794 = vmul.f32 %v5160, %v5684
        %v5795 = vmul.f32 %v5271, %v5686
        %v5796 = vmul.f32 %v5273, %v5688
        %v5797 = vmul.f32 %v5162, %v5690
        %v5798 = vmul.f32 %v5164, %v5692
        %v5799 = vmul.f32 %v5275, %v5694
        %v5800 = vmul.f32 %v5277, %v5696
        %v5801 = vmul.f32 %v5168, %v5698
        %v5802 = vmul.f32 %v5170, %v5700
        %v5803 = vmul.f32 %v5281, %v5702
        %v5804 = vmul.f32 %v5283, %v5704
        %v5805 = vmul.f32 %v5172, %v5706
        %v5806 = vmul.f32 %v5174, %v5708
        %v5807 = vmul.f32 %v5285, %v5710
        %v5808 = vmul.f32 %v5287, %v5712
        %v5809 = vmul.f32 %v5178, %v5714
        %v5810 = vmul.f32 %v5180, %v5716
        %v5811 = vmul.f32 %v5291, %v5718
        %v5812 = vmul.f32 %v5293, %v5720
        %v5813 = vmul.f32 %v5182, %v5722
        %v5814 = vmul.f32 %v5184, %v5724
        %v5815 = vmul.f32 %v5295, %v5726
        %v5816 = vmul.f32 %v5297, %v5728
        %v5817 = vmul.f32 %v5188, %v5730
        %v5818 = vmul.f32 %v5190, %v5732
        %v5819 = vmul.f32 %v5301, %v5734
        %v5820 = vmul.f32 %v5303, %v5736
        %v5821 = vmul.f32 %v5192, %v5738
        %v5822 = vmul.f32 %v5194, %v5740
        %v5823 = vmul.f32 %v5305, %v5742
        %v5824 = vmul.f32 %v5307, %v5744
        %v5825 = vmul.f32 %v5198, %v5746
        %v5826 = vmul.f32 %v5200, %v5748
        %v5827 = vmul.f32 %v5311, %v5750
        %v5828 = vmul.f32 %v5313, %v5752
        %v5829 = vmul.f32 %v5202, %v5754
        %v5830 = vmul.f32 %v5204, %v5756
        %v5831 = vmul.f32 %v5315, %v5758
        %v5832 = vmul.f32 %v5317, %v5760
        %v5833 = vmul.f32 %v5208, %v5762
        %v5834 = vmul.f32 %v5210, %v5764
        %v5835 = vmul.f32 %v5321, %v5766
        %v5836 = vmul.f32 %v5323, %v5768
        %v5837 = vmul.f32 %v5212, %v5770
        %v5838 = vmul.f32 %v5214, %v5772
        %v5839 = vmul.f32 %v5325, %v5774
        %v5840 = vmul.f32 %v5327, %v5776
        %v5841 = vpack.c.bf16 %v5781, %v5777
        %v5842 = vpack.c.bf16 %v5782, %v5778
        %v5843 = vpack.c.bf16 %v5783, %v5779
        %v5844 = vpack.c.bf16 %v5784, %v5780
        %v5845 = vpack.c.bf16 %v5789, %v5785
        %v5846 = vpack.c.bf16 %v5790, %v5786
        %v5847 = vpack.c.bf16 %v5791, %v5787
        %v5848 = vpack.c.bf16 %v5792, %v5788
        %v5849 = vpack.c.bf16 %v5797, %v5793
        %v5850 = vpack.c.bf16 %v5798, %v5794
        %v5851 = vpack.c.bf16 %v5799, %v5795
        %v5852 = vpack.c.bf16 %v5800, %v5796
        %v5853 = vpack.c.bf16 %v5805, %v5801
        %v5854 = vpack.c.bf16 %v5806, %v5802
        %v5855 = vpack.c.bf16 %v5807, %v5803
        %v5856 = vpack.c.bf16 %v5808, %v5804
        %v5857 = vpack.c.bf16 %v5813, %v5809
        %v5858 = vpack.c.bf16 %v5814, %v5810
        %v5859 = vpack.c.bf16 %v5815, %v5811
        %v5860 = vpack.c.bf16 %v5816, %v5812
        %v5861 = vpack.c.bf16 %v5821, %v5817
        %v5862 = vpack.c.bf16 %v5822, %v5818
        %v5863 = vpack.c.bf16 %v5823, %v5819
        %v5864 = vpack.c.bf16 %v5824, %v5820
        %v5865 = vpack.c.bf16 %v5829, %v5825
        %v5866 = vpack.c.bf16 %v5830, %v5826
        %v5867 = vpack.c.bf16 %v5831, %v5827
        %v5868 = vpack.c.bf16 %v5832, %v5828
        %v5869 = vpack.c.bf16 %v5837, %v5833
        %v5870 = vpack.c.bf16 %v5838, %v5834
        %v5871 = vpack.c.bf16 %v5839, %v5835
        %v5872 = vpack.c.bf16 %v5840, %v5836
        %v5873 = vld [vmem:[%s800] sm:$0xf]
        %v5874 = vld [vmem:[%s800 + $0x4] sm:$0xf]
        %v5875 = vld [vmem:[%s800 + $0x8] sm:$0xf]
        %v5876 = vld [vmem:[%s800 + $0xc] sm:$0xf]
        %v5877 = vld [vmem:[%s800 + $0x10] sm:$0xf]
        %v5878 = vld [vmem:[%s800 + $0x14] sm:$0xf]
        %v5879 = vld [vmem:[%s800 + $0x18] sm:$0xf]
        %v5880 = vld [vmem:[%s800 + $0x1c] sm:$0xf]
        %v5881 = vld [vmem:[%s800 + $0x20] sm:$0xf]
        %v5882 = vld [vmem:[%s800 + $0x24] sm:$0xf]
        %v5883 = vld [vmem:[%s800 + $0x28] sm:$0xf]
        %v5884 = vld [vmem:[%s800 + $0x2c] sm:$0xf]
        %v5885 = vld [vmem:[%s800 + $0x30] sm:$0xf]
        %v5886 = vld [vmem:[%s800 + $0x34] sm:$0xf]
        %v5887 = vld [vmem:[%s800 + $0x38] sm:$0xf]
        %v5888 = vld [vmem:[%s800 + $0x3c] sm:$0xf]
        %v5889 = vld [vmem:[%s800 + $0x40] sm:$0xf]
        %v5890 = vld [vmem:[%s800 + $0x44] sm:$0xf]
        %v5891 = vld [vmem:[%s800 + $0x48] sm:$0xf]
        %v5892 = vld [vmem:[%s800 + $0x4c] sm:$0xf]
        %v5893 = vld [vmem:[%s800 + $0x50] sm:$0xf]
        %v5894 = vld [vmem:[%s800 + $0x54] sm:$0xf]
        %v5895 = vld [vmem:[%s800 + $0x58] sm:$0xf]
        %v5896 = vld [vmem:[%s800 + $0x5c] sm:$0xf]
        %v5897 = vld [vmem:[%s800 + $0x60] sm:$0xf]
        %v5898 = vld [vmem:[%s800 + $0x64] sm:$0xf]
        %v5899 = vld [vmem:[%s800 + $0x68] sm:$0xf]
        %v5900 = vld [vmem:[%s800 + $0x6c] sm:$0xf]
        %v5901 = vld [vmem:[%s800 + $0x70] sm:$0xf]
        %v5902 = vld [vmem:[%s800 + $0x74] sm:$0xf]
        %v5903 = vld [vmem:[%s800 + $0x78] sm:$0xf]
        %v5904 = vld [vmem:[%s800 + $0x7c] sm:$0xf]
        %v5905 = vld [vmem:[%s800 + $0x80] sm:$0xf]
        %v5906 = vld [vmem:[%s800 + $0x84] sm:$0xf]
        %v5907 = vld [vmem:[%s800 + $0x88] sm:$0xf]
        %v5908 = vld [vmem:[%s800 + $0x8c] sm:$0xf]
        %v5909 = vld [vmem:[%s800 + $0x90] sm:$0xf]
        %v5910 = vld [vmem:[%s800 + $0x94] sm:$0xf]
        %v5911 = vld [vmem:[%s800 + $0x98] sm:$0xf]
        %v5912 = vld [vmem:[%s800 + $0x9c] sm:$0xf]
        %v5913 = vld [vmem:[%s800 + $0xa0] sm:$0xf]
        %v5914 = vld [vmem:[%s800 + $0xa4] sm:$0xf]
        %v5915 = vld [vmem:[%s800 + $0xa8] sm:$0xf]
        %v5916 = vld [vmem:[%s800 + $0xac] sm:$0xf]
        %v5917 = vld [vmem:[%s800 + $0xb0] sm:$0xf]
        %v5918 = vld [vmem:[%s800 + $0xb4] sm:$0xf]
        %v5919 = vld [vmem:[%s800 + $0xb8] sm:$0xf]
        %v5920 = vld [vmem:[%s800 + $0xbc] sm:$0xf]
        %v5921 = vld [vmem:[%s800 + $0xc0] sm:$0xf]
        %v5922 = vld [vmem:[%s800 + $0xc4] sm:$0xf]
        %v5923 = vld [vmem:[%s800 + $0xc8] sm:$0xf]
        %v5924 = vld [vmem:[%s800 + $0xcc] sm:$0xf]
        %v5925 = vld [vmem:[%s800 + $0xd0] sm:$0xf]
        %v5926 = vld [vmem:[%s800 + $0xd4] sm:$0xf]
        %v5927 = vld [vmem:[%s800 + $0xd8] sm:$0xf]
        %v5928 = vld [vmem:[%s800 + $0xdc] sm:$0xf]
        %v5929 = vld [vmem:[%s800 + $0xe0] sm:$0xf]
        %v5930 = vld [vmem:[%s800 + $0xe4] sm:$0xf]
        %v5931 = vld [vmem:[%s800 + $0xe8] sm:$0xf]
        %v5932 = vld [vmem:[%s800 + $0xec] sm:$0xf]
        %v5933 = vld [vmem:[%s800 + $0xf0] sm:$0xf]
        %v5934 = vld [vmem:[%s800 + $0xf4] sm:$0xf]
        %v5935 = vld [vmem:[%s800 + $0xf8] sm:$0xf]
        %v5936 = vld [vmem:[%s800 + $0xfc] sm:$0xf]
        %v5937 = vld [vmem:[%s913] sm:$0x1]
        %v5939 = vlaneseq
        %v5940 = vshrl.u32 %v5939, 7
        %v5941 = vsub.s32 0, %v5940
        %v5942 = vrot.slane %v5937, %v5941
        %v6008 = vunpack.c.l.b16 %v5873
        %v6009 = vunpack.c.l.b16 %v5874
        %v6010 = vunpack.c.l.b16 %v5875
        %v6011 = vunpack.c.l.b16 %v5876
        %v6012 = vunpack.c.l.b16 %v5877
        %v6013 = vunpack.c.l.b16 %v5878
        %v6014 = vunpack.c.l.b16 %v5879
        %v6015 = vunpack.c.l.b16 %v5880
        %v6016 = vunpack.c.l.b16 %v5881
        %v6017 = vunpack.c.l.b16 %v5882
        %v6018 = vunpack.c.l.b16 %v5883
        %v6019 = vunpack.c.l.b16 %v5884
        %v6020 = vunpack.c.l.b16 %v5885
        %v6021 = vunpack.c.l.b16 %v5886
        %v6022 = vunpack.c.l.b16 %v5887
        %v6023 = vunpack.c.l.b16 %v5888
        %v6024 = vunpack.c.l.b16 %v5889
        %v6025 = vunpack.c.l.b16 %v5890
        %v6026 = vunpack.c.l.b16 %v5891
        %v6027 = vunpack.c.l.b16 %v5892
        %v6028 = vunpack.c.l.b16 %v5893
        %v6029 = vunpack.c.l.b16 %v5894
        %v6030 = vunpack.c.l.b16 %v5895
        %v6031 = vunpack.c.l.b16 %v5896
        %v6032 = vunpack.c.l.b16 %v5897
        %v6033 = vunpack.c.l.b16 %v5898
        %v6034 = vunpack.c.l.b16 %v5899
        %v6035 = vunpack.c.l.b16 %v5900
        %v6036 = vunpack.c.l.b16 %v5901
        %v6037 = vunpack.c.l.b16 %v5902
        %v6038 = vunpack.c.l.b16 %v5903
        %v6039 = vunpack.c.l.b16 %v5904
        %v6040 = vunpack.c.l.b16 %v5905
        %v6041 = vunpack.c.l.b16 %v5906
        %v6042 = vunpack.c.l.b16 %v5907
        %v6043 = vunpack.c.l.b16 %v5908
        %v6044 = vunpack.c.l.b16 %v5909
        %v6045 = vunpack.c.l.b16 %v5910
        %v6046 = vunpack.c.l.b16 %v5911
        %v6047 = vunpack.c.l.b16 %v5912
        %v6048 = vunpack.c.l.b16 %v5913
        %v6049 = vunpack.c.l.b16 %v5914
        %v6050 = vunpack.c.l.b16 %v5915
        %v6051 = vunpack.c.l.b16 %v5916
        %v6052 = vunpack.c.l.b16 %v5917
        %v6053 = vunpack.c.l.b16 %v5918
        %v6054 = vunpack.c.l.b16 %v5919
        %v6055 = vunpack.c.l.b16 %v5920
        %v6056 = vunpack.c.l.b16 %v5921
        %v6057 = vunpack.c.l.b16 %v5922
        %v6058 = vunpack.c.l.b16 %v5923
        %v6059 = vunpack.c.l.b16 %v5924
        %v6060 = vunpack.c.l.b16 %v5925
        %v6061 = vunpack.c.l.b16 %v5926
        %v6062 = vunpack.c.l.b16 %v5927
        %v6063 = vunpack.c.l.b16 %v5928
        %v6064 = vunpack.c.l.b16 %v5929
        %v6065 = vunpack.c.l.b16 %v5930
        %v6066 = vunpack.c.l.b16 %v5931
        %v6067 = vunpack.c.l.b16 %v5932
        %v6068 = vunpack.c.l.b16 %v5933
        %v6069 = vunpack.c.l.b16 %v5934
        %v6070 = vunpack.c.l.b16 %v5935
        %v6071 = vunpack.c.l.b16 %v5936
        %v6072 = vpack.c.b16 %v6009, %v6008
        %v6073 = vpack.c.b16 %v6011, %v6010
        %v6074 = vpack.c.b16 %v6013, %v6012
        %v6075 = vpack.c.b16 %v6015, %v6014
        %v6076 = vpack.c.b16 %v6017, %v6016
        %v6077 = vpack.c.b16 %v6019, %v6018
        %v6078 = vpack.c.b16 %v6021, %v6020
        %v6079 = vpack.c.b16 %v6023, %v6022
        %v6080 = vpack.c.b16 %v6025, %v6024
        %v6081 = vpack.c.b16 %v6027, %v6026
        %v6082 = vpack.c.b16 %v6029, %v6028
        %v6083 = vpack.c.b16 %v6031, %v6030
        %v6084 = vpack.c.b16 %v6033, %v6032
        %v6085 = vpack.c.b16 %v6035, %v6034
        %v6086 = vpack.c.b16 %v6037, %v6036
        %v6087 = vpack.c.b16 %v6039, %v6038
        %v6088 = vpack.c.b16 %v6041, %v6040
        %v6089 = vpack.c.b16 %v6043, %v6042
        %v6090 = vpack.c.b16 %v6045, %v6044
        %v6091 = vpack.c.b16 %v6047, %v6046
        %v6092 = vpack.c.b16 %v6049, %v6048
        %v6093 = vpack.c.b16 %v6051, %v6050
        %v6094 = vpack.c.b16 %v6053, %v6052
        %v6095 = vpack.c.b16 %v6055, %v6054
        %v6096 = vpack.c.b16 %v6057, %v6056
        %v6097 = vpack.c.b16 %v6059, %v6058
        %v6098 = vpack.c.b16 %v6061, %v6060
        %v6099 = vpack.c.b16 %v6063, %v6062
        %v6100 = vpack.c.b16 %v6065, %v6064
        %v6101 = vpack.c.b16 %v6067, %v6066
        %v6102 = vpack.c.b16 %v6069, %v6068
        %v6103 = vpack.c.b16 %v6071, %v6070
        %6136 = vmatprep.subr.bf16.mxu0 0
        %6137 = vmatpush1.bf16.msra.mxu0 %v6079
        %6138 = vmatprep.subr.bf16.mxu0 0
        %6139 = vmatpush1.bf16.msra.mxu0 %v6078
        %6140 = vmatprep.subr.bf16.mxu0 0
        %6141 = vmatpush1.bf16.msra.mxu0 %v6077
        %6142 = vmatprep.subr.bf16.mxu0 0
        %6143 = vmatpush1.bf16.msra.mxu0 %v6076
        %6144 = vmatprep.subr.bf16.mxu0 0
        %6145 = vmatpush1.bf16.msra.mxu0 %v6075
        %6146 = vmatprep.subr.bf16.mxu0 0
        %6147 = vmatpush1.bf16.msra.mxu0 %v6074
        %6148 = vmatprep.subr.bf16.mxu0 0
        %6149 = vmatpush1.bf16.msra.mxu0 %v6073
        %6150 = vmatprep.subr.bf16.mxu0 0
        %6151 = vmatpush1.bf16.msra.mxu0 %v6072
        %6152 = vmatprep.subr.bf16.mxu0 0
        %6153 = vmatpush2.bf16.msra.mxu0 %v6087
        %6154 = vmatprep.subr.bf16.mxu0 0
        %6155 = vmatpush2.bf16.msra.mxu0 %v6086
        %6156 = vmatprep.subr.bf16.mxu0 0
        %6157 = vmatpush2.bf16.msra.mxu0 %v6085
        %6158 = vmatprep.subr.bf16.mxu0 0
        %6159 = vmatpush2.bf16.msra.mxu0 %v6084
        %6160 = vmatprep.subr.bf16.mxu0 0
        %6161 = vmatpush2.bf16.msra.mxu0 %v6083
        %6162 = vmatprep.subr.bf16.mxu0 0
        %6163 = vmatpush2.bf16.msra.mxu0 %v6082
        %6164 = vmatprep.subr.bf16.mxu0 0
        %6165 = vmatpush2.bf16.msra.mxu0 %v6081
        %6166 = vmatprep.subr.bf16.mxu0 0
        %6167 = vmatpush2.bf16.msra.mxu0 %v6080
        %6168 = vmatprep.mubr.bf16.mxu0 %v5842
        %6169 = vmatmul.mubr.bf16.gmra.mxu0 %v5841
        %v6170 = vpop.f32.mrf.mxu0
        %v6171 = vadd.f32 %v5942, %v6170
        %v6172 = vpop.f32.mrf.mxu0
        %v6173 = vpop.f32.mrf.mxu0
        %v6174 = vadd.f32 %v5942, %v6173
        %v6175 = vpop.f32.mrf.mxu0
        %6176 = vmatprep.mubr.bf16.mxu0 %v5846
        %6177 = vmatmul.mubr.bf16.gmra.mxu0 %v5845
        %v6178 = vpop.f32.mrf.mxu0
        %v6179 = vadd.f32 %v5942, %v6178
        %v6180 = vpop.f32.mrf.mxu0
        %v6181 = vpop.f32.mrf.mxu0
        %v6182 = vadd.f32 %v5942, %v6181
        %v6183 = vpop.f32.mrf.mxu0
        %6184 = vmatprep.mubr.bf16.mxu0 %v5850
        %6185 = vmatmul.mubr.bf16.gmra.mxu0 %v5849
        %v6186 = vpop.f32.mrf.mxu0
        %v6187 = vadd.f32 %v5942, %v6186
        %v6188 = vpop.f32.mrf.mxu0
        %v6189 = vpop.f32.mrf.mxu0
        %v6190 = vadd.f32 %v5942, %v6189
        %v6191 = vpop.f32.mrf.mxu0
        %6192 = vmatprep.mubr.bf16.mxu0 %v5854
        %6193 = vmatmul.mubr.bf16.gmra.mxu0 %v5853
        %v6194 = vpop.f32.mrf.mxu0
        %v6195 = vadd.f32 %v5942, %v6194
        %v6196 = vpop.f32.mrf.mxu0
        %v6197 = vpop.f32.mrf.mxu0
        %v6198 = vadd.f32 %v5942, %v6197
        %v6199 = vpop.f32.mrf.mxu0
        %6200 = vmatprep.mubr.bf16.mxu0 %v5858
        %6201 = vmatmul.mubr.bf16.gmra.mxu0 %v5857
        %v6202 = vpop.f32.mrf.mxu0
        %v6203 = vadd.f32 %v5942, %v6202
        %v6204 = vpop.f32.mrf.mxu0
        %v6205 = vpop.f32.mrf.mxu0
        %v6206 = vadd.f32 %v5942, %v6205
        %v6207 = vpop.f32.mrf.mxu0
        %6208 = vmatprep.mubr.bf16.mxu0 %v5862
        %6209 = vmatmul.mubr.bf16.gmra.mxu0 %v5861
        %v6210 = vpop.f32.mrf.mxu0
        %v6211 = vadd.f32 %v5942, %v6210
        %v6212 = vpop.f32.mrf.mxu0
        %v6213 = vpop.f32.mrf.mxu0
        %v6214 = vadd.f32 %v5942, %v6213
        %v6215 = vpop.f32.mrf.mxu0
        %6216 = vmatprep.mubr.bf16.mxu0 %v5866
        %6217 = vmatmul.mubr.bf16.gmra.mxu0 %v5865
        %v6218 = vpop.f32.mrf.mxu0
        %v6219 = vadd.f32 %v5942, %v6218
        %v6220 = vpop.f32.mrf.mxu0
        %v6221 = vpop.f32.mrf.mxu0
        %v6222 = vadd.f32 %v5942, %v6221
        %v6223 = vpop.f32.mrf.mxu0
        %6224 = vmatprep.mubr.bf16.mxu0 %v5870
        %6225 = vmatmul.mubr.bf16.gmra.mxu0 %v5869
        %v6226 = vpop.f32.mrf.mxu0
        %v6227 = vadd.f32 %v5942, %v6226
        %v6228 = vpop.f32.mrf.mxu0
        %v6229 = vpop.f32.mrf.mxu0
        %v6230 = vadd.f32 %v5942, %v6229
        %v6231 = vpop.f32.mrf.mxu0
        %6232 = vdwg.mxu0
        %6233 = vmatprep.subr.bf16.mxu0 0
        %6234 = vmatpush1.bf16.msra.mxu0 %v6095
        %6235 = vmatprep.subr.bf16.mxu0 0
        %6236 = vmatpush1.bf16.msra.mxu0 %v6094
        %6237 = vmatprep.subr.bf16.mxu0 0
        %6238 = vmatpush1.bf16.msra.mxu0 %v6093
        %6239 = vmatprep.subr.bf16.mxu0 0
        %6240 = vmatpush1.bf16.msra.mxu0 %v6092
        %6241 = vmatprep.subr.bf16.mxu0 0
        %6242 = vmatpush1.bf16.msra.mxu0 %v6091
        %6243 = vmatprep.subr.bf16.mxu0 0
        %6244 = vmatpush1.bf16.msra.mxu0 %v6090
        %6245 = vmatprep.subr.bf16.mxu0 0
        %6246 = vmatpush1.bf16.msra.mxu0 %v6089
        %6247 = vmatprep.subr.bf16.mxu0 0
        %6248 = vmatpush1.bf16.msra.mxu0 %v6088
        %6249 = vmatprep.subr.bf16.mxu0 0
        %6250 = vmatpush2.bf16.msra.mxu0 %v6103
        %6251 = vmatprep.subr.bf16.mxu0 0
        %6252 = vmatpush2.bf16.msra.mxu0 %v6102
        %6253 = vmatprep.subr.bf16.mxu0 0
        %6254 = vmatpush2.bf16.msra.mxu0 %v6101
        %6255 = vmatprep.subr.bf16.mxu0 0
        %6256 = vmatpush2.bf16.msra.mxu0 %v6100
        %6257 = vmatprep.subr.bf16.mxu0 0
        %6258 = vmatpush2.bf16.msra.mxu0 %v6099
        %6259 = vmatprep.subr.bf16.mxu0 0
        %6260 = vmatpush2.bf16.msra.mxu0 %v6098
        %6261 = vmatprep.subr.bf16.mxu0 0
        %6262 = vmatpush2.bf16.msra.mxu0 %v6097
        %6263 = vmatprep.subr.bf16.mxu0 0
        %6264 = vmatpush2.bf16.msra.mxu0 %v6096
        %6265 = vmatprep.mubr.bf16.mxu0 %v5844
        %6266 = vmatmul.mubr.bf16.gmra.mxu0 %v5843
        %v6267 = vpop.f32.mrf.mxu0
        %v6268 = vadd.f32 %v6171, %v6267
        %v6269 = vpop.f32.mrf.mxu0
        %v6270 = vpop.f32.mrf.mxu0
        %v6271 = vadd.f32 %v6174, %v6270
        %v6272 = vpop.f32.mrf.mxu0
        %6273 = vmatprep.mubr.bf16.mxu0 %v5848
        %6274 = vmatmul.mubr.bf16.gmra.mxu0 %v5847
        %v6275 = vpop.f32.mrf.mxu0
        %v6276 = vadd.f32 %v6179, %v6275
        %v6277 = vpop.f32.mrf.mxu0
        %v6278 = vpop.f32.mrf.mxu0
        %v6279 = vadd.f32 %v6182, %v6278
        %v6280 = vpop.f32.mrf.mxu0
        %6281 = vmatprep.mubr.bf16.mxu0 %v5852
        %6282 = vmatmul.mubr.bf16.gmra.mxu0 %v5851
        %v6283 = vpop.f32.mrf.mxu0
        %v6284 = vadd.f32 %v6187, %v6283
        %v6285 = vpop.f32.mrf.mxu0
        %v6286 = vpop.f32.mrf.mxu0
        %v6287 = vadd.f32 %v6190, %v6286
        %v6288 = vpop.f32.mrf.mxu0
        %6289 = vmatprep.mubr.bf16.mxu0 %v5856
        %6290 = vmatmul.mubr.bf16.gmra.mxu0 %v5855
        %v6291 = vpop.f32.mrf.mxu0
        %v6292 = vadd.f32 %v6195, %v6291
        %v6293 = vpop.f32.mrf.mxu0
        %v6294 = vpop.f32.mrf.mxu0
        %v6295 = vadd.f32 %v6198, %v6294
        %v6296 = vpop.f32.mrf.mxu0
        %6297 = vmatprep.mubr.bf16.mxu0 %v5860
        %6298 = vmatmul.mubr.bf16.gmra.mxu0 %v5859
        %v6299 = vpop.f32.mrf.mxu0
        %v6300 = vadd.f32 %v6203, %v6299
        %v6301 = vpop.f32.mrf.mxu0
        %v6302 = vpop.f32.mrf.mxu0
        %v6303 = vadd.f32 %v6206, %v6302
        %v6304 = vpop.f32.mrf.mxu0
        %6305 = vmatprep.mubr.bf16.mxu0 %v5864
        %6306 = vmatmul.mubr.bf16.gmra.mxu0 %v5863
        %v6307 = vpop.f32.mrf.mxu0
        %v6308 = vadd.f32 %v6211, %v6307
        %v6309 = vpop.f32.mrf.mxu0
        %v6310 = vpop.f32.mrf.mxu0
        %v6311 = vadd.f32 %v6214, %v6310
        %v6312 = vpop.f32.mrf.mxu0
        %6313 = vmatprep.mubr.bf16.mxu0 %v5868
        %6314 = vmatmul.mubr.bf16.gmra.mxu0 %v5867
        %v6315 = vpop.f32.mrf.mxu0
        %v6316 = vadd.f32 %v6219, %v6315
        %v6317 = vpop.f32.mrf.mxu0
        %v6318 = vpop.f32.mrf.mxu0
        %v6319 = vadd.f32 %v6222, %v6318
        %v6320 = vpop.f32.mrf.mxu0
        %6321 = vmatprep.mubr.bf16.mxu0 %v5872
        %6322 = vmatmul.mubr.bf16.gmra.mxu0 %v5871
        %v6323 = vpop.f32.mrf.mxu0
        %v6324 = vadd.f32 %v6227, %v6323
        %v6325 = vpop.f32.mrf.mxu0
        %v6326 = vpop.f32.mrf.mxu0
        %v6327 = vadd.f32 %v6230, %v6326
        %v6328 = vpop.f32.mrf.mxu0
        %6329 = vdwg.mxu0
        %v6330 = vadd.f32 %v6268, %v4643
        %v6331 = vadd.f32 %v6271, %v4644
        %v6332 = vadd.f32 %v6276, %v4645
        %v6333 = vadd.f32 %v6279, %v4646
        %v6334 = vadd.f32 %v6284, %v4647
        %v6335 = vadd.f32 %v6287, %v4648
        %v6336 = vadd.f32 %v6292, %v4649
        %v6337 = vadd.f32 %v6295, %v4650
        %v6338 = vadd.f32 %v6300, %v4651
        %v6339 = vadd.f32 %v6303, %v4652
        %v6340 = vadd.f32 %v6308, %v4653
        %v6341 = vadd.f32 %v6311, %v4654
        %v6342 = vadd.f32 %v6316, %v4655
        %v6343 = vadd.f32 %v6319, %v4656
        %v6344 = vadd.f32 %v6324, %v4657
        %v6345 = vadd.f32 %v6327, %v4658
        %6346 = vst [vmem:[#allocation2] sm:$0xff] %v6330
        %6347 = vst [vmem:[#allocation2 + $0x8] sm:$0xff] %v6331
        %6348 = vst [vmem:[#allocation2 + $0x10] sm:$0xff] %v6332
        %6349 = vst [vmem:[#allocation2 + $0x18] sm:$0xff] %v6333
        %6350 = vst [vmem:[#allocation2 + $0x20] sm:$0xff] %v6334
        %6351 = vst [vmem:[#allocation2 + $0x28] sm:$0xff] %v6335
        %6352 = vst [vmem:[#allocation2 + $0x30] sm:$0xff] %v6336
        %6353 = vst [vmem:[#allocation2 + $0x38] sm:$0xff] %v6337
        %6354 = vst [vmem:[#allocation2 + $0x40] sm:$0xff] %v6338
        %6355 = vst [vmem:[#allocation2 + $0x48] sm:$0xff] %v6339
        %6356 = vst [vmem:[#allocation2 + $0x50] sm:$0xff] %v6340
        %6357 = vst [vmem:[#allocation2 + $0x58] sm:$0xff] %v6341
        %6358 = vst [vmem:[#allocation2 + $0x60] sm:$0xff] %v6342
        %6359 = vst [vmem:[#allocation2 + $0x68] sm:$0xff] %v6343
        %6360 = vst [vmem:[#allocation2 + $0x70] sm:$0xff] %v6344
        %6361 = vst [vmem:[#allocation2 + $0x78] sm:$0xff] %v6345
        %p6362 = scmp.eq.s32.totalorder %s51, 1
        // Predicated region
        $region129: #{tpu_custom_call.1} parent=83 // pred_check
          %p6363 = pneg %p6362
        $region130: #{tpu_custom_call.1} parent=83 // pred_check_branch
          %6365 = sbr.rel (%p6363) target = $region132
        $region131: #{tpu_custom_call.1} parent=83 // pred_region
          %v6366 = vld [vmem:[%s14] sm:$0x1]
          %v6367 = vld [vmem:[%s15] sm:$0x1]
          %6368 = vadd.xlane.f32.xlu0 %v6330
          %v6369 = vpop.xlane.xlu0 %6368
          %6370 = vadd.xlane.f32.xlu0 %v6331
          %v6371 = vpop.xlane.xlu0 %6370
          %6372 = vadd.xlane.f32.xlu0 %v6332
          %v6373 = vpop.xlane.xlu0 %6372
          %6374 = vadd.xlane.f32.xlu0 %v6333
          %v6375 = vpop.xlane.xlu0 %6374
          %6376 = vadd.xlane.f32.xlu0 %v6334
          %v6377 = vpop.xlane.xlu0 %6376
          %6378 = vadd.xlane.f32.xlu0 %v6335
          %v6379 = vpop.xlane.xlu0 %6378
          %6380 = vadd.xlane.f32.xlu0 %v6336
          %v6381 = vpop.xlane.xlu0 %6380
          %6382 = vadd.xlane.f32.xlu0 %v6337
          %v6383 = vpop.xlane.xlu0 %6382
          %6384 = vadd.xlane.f32.xlu0 %v6338
          %v6385 = vpop.xlane.xlu0 %6384
          %6386 = vadd.xlane.f32.xlu0 %v6339
          %v6387 = vpop.xlane.xlu0 %6386
          %6388 = vadd.xlane.f32.xlu0 %v6340
          %v6389 = vpop.xlane.xlu0 %6388
          %6390 = vadd.xlane.f32.xlu0 %v6341
          %v6391 = vpop.xlane.xlu0 %6390
          %6392 = vadd.xlane.f32.xlu0 %v6342
          %v6393 = vpop.xlane.xlu0 %6392
          %6394 = vadd.xlane.f32.xlu0 %v6343
          %v6395 = vpop.xlane.xlu0 %6394
          %6396 = vadd.xlane.f32.xlu0 %v6344
          %v6397 = vpop.xlane.xlu0 %6396
          %6398 = vadd.xlane.f32.xlu0 %v6345
          %v6399 = vpop.xlane.xlu0 %6398
          %v6400 = vmul.f32 %v6369, %v1002
          %v6401 = vmul.f32 %v6371, %v1002
          %v6402 = vmul.f32 %v6373, %v1002
          %v6403 = vmul.f32 %v6375, %v1002
          %v6404 = vmul.f32 %v6377, %v1002
          %v6405 = vmul.f32 %v6379, %v1002
          %v6406 = vmul.f32 %v6381, %v1002
          %v6407 = vmul.f32 %v6383, %v1002
          %v6408 = vmul.f32 %v6385, %v1002
          %v6409 = vmul.f32 %v6387, %v1002
          %v6410 = vmul.f32 %v6389, %v1002
          %v6411 = vmul.f32 %v6391, %v1002
          %v6412 = vmul.f32 %v6393, %v1002
          %v6413 = vmul.f32 %v6395, %v1002
          %v6414 = vmul.f32 %v6397, %v1002
          %v6415 = vmul.f32 %v6399, %v1002
          %v6416 = vsub.f32 %v6330, %v6400
          %v6417 = vsub.f32 %v6331, %v6401
          %v6418 = vsub.f32 %v6332, %v6402
          %v6419 = vsub.f32 %v6333, %v6403
          %v6420 = vsub.f32 %v6334, %v6404
          %v6421 = vsub.f32 %v6335, %v6405
          %v6422 = vsub.f32 %v6336, %v6406
          %v6423 = vsub.f32 %v6337, %v6407
          %v6424 = vsub.f32 %v6338, %v6408
          %v6425 = vsub.f32 %v6339, %v6409
          %v6426 = vsub.f32 %v6340, %v6410
          %v6427 = vsub.f32 %v6341, %v6411
          %v6428 = vsub.f32 %v6342, %v6412
          %v6429 = vsub.f32 %v6343, %v6413
          %v6430 = vsub.f32 %v6344, %v6414
          %v6431 = vsub.f32 %v6345, %v6415
          %v6432 = vmul.f32 %v6416, %v6416
          %v6433 = vmul.f32 %v6417, %v6417
          %v6434 = vmul.f32 %v6418, %v6418
          %v6435 = vmul.f32 %v6419, %v6419
          %v6436 = vmul.f32 %v6420, %v6420
          %v6437 = vmul.f32 %v6421, %v6421
          %v6438 = vmul.f32 %v6422, %v6422
          %v6439 = vmul.f32 %v6423, %v6423
          %v6440 = vmul.f32 %v6424, %v6424
          %v6441 = vmul.f32 %v6425, %v6425
          %v6442 = vmul.f32 %v6426, %v6426
          %v6443 = vmul.f32 %v6427, %v6427
          %v6444 = vmul.f32 %v6428, %v6428
          %v6445 = vmul.f32 %v6429, %v6429
          %v6446 = vmul.f32 %v6430, %v6430
          %v6447 = vmul.f32 %v6431, %v6431
          %6448 = vadd.xlane.f32.xlu0 %v6432
          %v6449 = vpop.xlane.xlu0 %6448
          %6450 = vadd.xlane.f32.xlu0 %v6433
          %v6451 = vpop.xlane.xlu0 %6450
          %6452 = vadd.xlane.f32.xlu0 %v6434
          %v6453 = vpop.xlane.xlu0 %6452
          %6454 = vadd.xlane.f32.xlu0 %v6435
          %v6455 = vpop.xlane.xlu0 %6454
          %6456 = vadd.xlane.f32.xlu0 %v6436
          %v6457 = vpop.xlane.xlu0 %6456
          %6458 = vadd.xlane.f32.xlu0 %v6437
          %v6459 = vpop.xlane.xlu0 %6458
          %6460 = vadd.xlane.f32.xlu0 %v6438
          %v6461 = vpop.xlane.xlu0 %6460
          %6462 = vadd.xlane.f32.xlu0 %v6439
          %v6463 = vpop.xlane.xlu0 %6462
          %6464 = vadd.xlane.f32.xlu0 %v6440
          %v6465 = vpop.xlane.xlu0 %6464
          %6466 = vadd.xlane.f32.xlu0 %v6441
          %v6467 = vpop.xlane.xlu0 %6466
          %6468 = vadd.xlane.f32.xlu0 %v6442
          %v6469 = vpop.xlane.xlu0 %6468
          %6470 = vadd.xlane.f32.xlu0 %v6443
          %v6471 = vpop.xlane.xlu0 %6470
          %6472 = vadd.xlane.f32.xlu0 %v6444
          %v6473 = vpop.xlane.xlu0 %6472
          %6474 = vadd.xlane.f32.xlu0 %v6445
          %v6475 = vpop.xlane.xlu0 %6474
          %6476 = vadd.xlane.f32.xlu0 %v6446
          %v6477 = vpop.xlane.xlu0 %6476
          %6478 = vadd.xlane.f32.xlu0 %v6447
          %v6479 = vpop.xlane.xlu0 %6478
          %v6480 = vmul.f32 %v6449, %v1002
          %v6481 = vmul.f32 %v6451, %v1002
          %v6482 = vmul.f32 %v6453, %v1002
          %v6483 = vmul.f32 %v6455, %v1002
          %v6484 = vmul.f32 %v6457, %v1002
          %v6485 = vmul.f32 %v6459, %v1002
          %v6486 = vmul.f32 %v6461, %v1002
          %v6487 = vmul.f32 %v6463, %v1002
          %v6488 = vmul.f32 %v6465, %v1002
          %v6489 = vmul.f32 %v6467, %v1002
          %v6490 = vmul.f32 %v6469, %v1002
          %v6491 = vmul.f32 %v6471, %v1002
          %v6492 = vmul.f32 %v6473, %v1002
          %v6493 = vmul.f32 %v6475, %v1002
          %v6494 = vmul.f32 %v6477, %v1002
          %v6495 = vmul.f32 %v6479, %v1002
          %v6496 = vadd.f32 %v6480, 1e-05
          %v6497 = vadd.f32 %v6481, 1e-05
          %v6498 = vadd.f32 %v6482, 1e-05
          %v6499 = vadd.f32 %v6483, 1e-05
          %v6500 = vadd.f32 %v6484, 1e-05
          %v6501 = vadd.f32 %v6485, 1e-05
          %v6502 = vadd.f32 %v6486, 1e-05
          %v6503 = vadd.f32 %v6487, 1e-05
          %v6504 = vadd.f32 %v6488, 1e-05
          %v6505 = vadd.f32 %v6489, 1e-05
          %v6506 = vadd.f32 %v6490, 1e-05
          %v6507 = vadd.f32 %v6491, 1e-05
          %v6508 = vadd.f32 %v6492, 1e-05
          %v6509 = vadd.f32 %v6493, 1e-05
          %v6510 = vadd.f32 %v6494, 1e-05
          %v6511 = vadd.f32 %v6495, 1e-05
          %v6512 = vrsqrt.pop %v6496
          %v6513 = vrsqrt.pop %v6497
          %v6514 = vrsqrt.pop %v6498
          %v6515 = vrsqrt.pop %v6499
          %v6516 = vrsqrt.pop %v6500
          %v6517 = vrsqrt.pop %v6501
          %v6518 = vrsqrt.pop %v6502
          %v6519 = vrsqrt.pop %v6503
          %v6520 = vrsqrt.pop %v6504
          %v6521 = vrsqrt.pop %v6505
          %v6522 = vrsqrt.pop %v6506
          %v6523 = vrsqrt.pop %v6507
          %v6524 = vrsqrt.pop %v6508
          %v6525 = vrsqrt.pop %v6509
          %v6526 = vrsqrt.pop %v6510
          %v6527 = vrsqrt.pop %v6511
          %v6528 = vmul.f32 %v6416, %v6512
          %v6529 = vmul.f32 %v6417, %v6513
          %v6530 = vmul.f32 %v6418, %v6514
          %v6531 = vmul.f32 %v6419, %v6515
          %v6532 = vmul.f32 %v6420, %v6516
          %v6533 = vmul.f32 %v6421, %v6517
          %v6534 = vmul.f32 %v6422, %v6518
          %v6535 = vmul.f32 %v6423, %v6519
          %v6536 = vmul.f32 %v6424, %v6520
          %v6537 = vmul.f32 %v6425, %v6521
          %v6538 = vmul.f32 %v6426, %v6522
          %v6539 = vmul.f32 %v6427, %v6523
          %v6540 = vmul.f32 %v6428, %v6524
          %v6541 = vmul.f32 %v6429, %v6525
          %v6542 = vmul.f32 %v6430, %v6526
          %v6543 = vmul.f32 %v6431, %v6527
          %v6545 = vlaneseq
          %v6546 = vshrl.u32 %v6545, 7
          %v6547 = vsub.s32 0, %v6546
          %v6548 = vrot.slane %v6366, %v6547
          %v6550 = vmul.f32 %v6528, %v6548
          %v6551 = vmul.f32 %v6529, %v6548
          %v6552 = vmul.f32 %v6530, %v6548
          %v6553 = vmul.f32 %v6531, %v6548
          %v6554 = vmul.f32 %v6532, %v6548
          %v6555 = vmul.f32 %v6533, %v6548
          %v6556 = vmul.f32 %v6534, %v6548
          %v6557 = vmul.f32 %v6535, %v6548
          %v6558 = vmul.f32 %v6536, %v6548
          %v6559 = vmul.f32 %v6537, %v6548
          %v6560 = vmul.f32 %v6538, %v6548
          %v6561 = vmul.f32 %v6539, %v6548
          %v6562 = vmul.f32 %v6540, %v6548
          %v6563 = vmul.f32 %v6541, %v6548
          %v6564 = vmul.f32 %v6542, %v6548
          %v6565 = vmul.f32 %v6543, %v6548
          %v6567 = vlaneseq
          %v6568 = vshrl.u32 %v6567, 7
          %v6569 = vsub.s32 0, %v6568
          %v6570 = vrot.slane %v6367, %v6569
          %v6572 = vadd.f32 %v6550, %v6570
          %v6573 = vadd.f32 %v6551, %v6570
          %v6574 = vadd.f32 %v6552, %v6570
          %v6575 = vadd.f32 %v6553, %v6570
          %v6576 = vadd.f32 %v6554, %v6570
          %v6577 = vadd.f32 %v6555, %v6570
          %v6578 = vadd.f32 %v6556, %v6570
          %v6579 = vadd.f32 %v6557, %v6570
          %v6580 = vadd.f32 %v6558, %v6570
          %v6581 = vadd.f32 %v6559, %v6570
          %v6582 = vadd.f32 %v6560, %v6570
          %v6583 = vadd.f32 %v6561, %v6570
          %v6584 = vadd.f32 %v6562, %v6570
          %v6585 = vadd.f32 %v6563, %v6570
          %v6586 = vadd.f32 %v6564, %v6570
          %v6587 = vadd.f32 %v6565, %v6570
          %6588 = vst [vmem:[%s898] sm:$0xff] %v6572
          %6589 = vst [vmem:[%s898 + $0x8] sm:$0xff] %v6573
          %6590 = vst [vmem:[%s898 + $0x10] sm:$0xff] %v6574
          %6591 = vst [vmem:[%s898 + $0x18] sm:$0xff] %v6575
          %6592 = vst [vmem:[%s898 + $0x20] sm:$0xff] %v6576
          %6593 = vst [vmem:[%s898 + $0x28] sm:$0xff] %v6577
          %6594 = vst [vmem:[%s898 + $0x30] sm:$0xff] %v6578
          %6595 = vst [vmem:[%s898 + $0x38] sm:$0xff] %v6579
          %6596 = vst [vmem:[%s898 + $0x40] sm:$0xff] %v6580
          %6597 = vst [vmem:[%s898 + $0x48] sm:$0xff] %v6581
          %6598 = vst [vmem:[%s898 + $0x50] sm:$0xff] %v6582
          %6599 = vst [vmem:[%s898 + $0x58] sm:$0xff] %v6583
          %6600 = vst [vmem:[%s898 + $0x60] sm:$0xff] %v6584
          %6601 = vst [vmem:[%s898 + $0x68] sm:$0xff] %v6585
          %6602 = vst [vmem:[%s898 + $0x70] sm:$0xff] %v6586
          %6603 = vst [vmem:[%s898 + $0x78] sm:$0xff] %v6587
        $region132: #{tpu_custom_call.1} parent=83 // pred_fallthru
          _
        %s6604 = sand.u32 %s467, 1
        %s6605 = scalar_lea.sflag [#allocation5], %s6604
        %s6606 = sand.u32 %s467, 1
        %s6607 = smul.addr %s6606, 128
        %s6608 = scalar_lea.vmem [#allocation20], %s6607
        // Predicated region
        $region133: #{tpu_custom_call.1} parent=83 // pred_check
          %p6609 = pneg %p477
        $region134: #{tpu_custom_call.1} parent=83 // pred_check_branch
          %6611 = sbr.rel (%p6609) target = $region136
        $region135: #{tpu_custom_call.1} parent=83 // pred_region
          %s6612 = smul.u32 16, %s50
          %s6614 = ssub.s32 2048, 2048
          %6615 = vsyncadd %s6605, %s6614
          %s6616 = smul.addr %s6612, 128
          %s6617 = scalar_lea.hbm %s16, %s6616
          %s6618 = sshll.u32 %s6608, 4
          %s6619 = int_to_ptr.vmem [resolvable:$true] %s6618
          %6624 = dma.vmem_to_hbm [thread:$0]  %s6619, 2048, %s6617, %s6605, 128, 128, 8
        $region136: #{tpu_custom_call.1} parent=83 // pred_fallthru
          _
      $region84: #{tpu_custom_call.1} parent=5 // pred_fallthru
        _
      %p6625 = scmp.le.s32.totalorder 2, %s41
      // Predicated region
      $region137: #{tpu_custom_call.1} parent=5 // pred_check
        %p6626 = pneg %p6625
      $region138: #{tpu_custom_call.1} parent=5 // pred_check_branch
        %6628 = sbr.rel (%p6626) target = $region140
      $region139: #{tpu_custom_call.1} parent=5 // pred_region
        %s6629 = ssub.s32 %s41, 2
        // Predicated region
        $region141: #{tpu_custom_call.1} parent=139 // pred_check
          %p6630 = pneg %p483
        $region142: #{tpu_custom_call.1} parent=139 // pred_check_branch
          %6632 = sbr.rel (%p6630) target = $region144
        $region143: #{tpu_custom_call.1} parent=139 // pred_region
          %s6633 = sand.u32 %s468, 1
          %s6634 = scalar_lea.sflag [#allocation5], %s6633
          %s6635 = sand.u32 %s468, 1
          %s6636 = smul.addr %s6635, 128
          %s6637 = scalar_lea.vmem [#allocation20], %s6636
          %6638 = dma.done %s6634, 2048
        $region144: #{tpu_custom_call.1} parent=139 // pred_fallthru
          _
      $region140: #{tpu_custom_call.1} parent=5 // pred_fallthru
        _
    $region6: #{tpu_custom_call.1} parent=1 // loop_footer
      %s45 = sadd.s32 1, %s41
    $region7: #{tpu_custom_call.1} parent=1 // loop_footer_branch
      %40 = sbr.rel target = $region3
    $region8: #{tpu_custom_call.1} parent=1 // loop_exit
      _
    %6639 = vsyncpa [#allocation4], 1
    %s6640 = scalar_lea.sflag [#allocation4], 1
    %6641 = vsyncpa %s6640, 1
    %6642 = vsyncpa [#allocation7], 1
    %s6643 = scalar_lea.sflag [#allocation7], 1
    %6644 = vsyncpa %s6643, 1
    %6645 = vsyncpa [#allocation10], 1
    %s6646 = scalar_lea.sflag [#allocation10], 1
    %6647 = vsyncpa %s6646, 1
    %6648 = vsyncpa [#allocation13], 1
    %s6649 = scalar_lea.sflag [#allocation13], 1
    %6650 = vsyncpa %s6649, 1
    %6651 = vsyncpa [#allocation16], 1
    %s6652 = scalar_lea.sflag [#allocation16], 1
    %6653 = vsyncpa %s6652, 1
    %6654 = vsyncpa [#allocation19], 1
    %s6655 = scalar_lea.sflag [#allocation19], 1
    %6656 = vsyncpa %s6655, 1
    %6657 = vsyncpa [#allocation5], 1
    %s6658 = scalar_lea.sflag [#allocation5], 1
    %6659 = vsyncpa %s6658, 1

</llo_original>
